<compile_context>
chip_gen: v6e
topology: v6e:2x2x1
jax: 0.10.0
libtpu: 0.0.40
codegen_flags: <defaults>
</compile_context>

<pallas_src>
import numpy as np
import jax
import jax.numpy as jnp
from jax.experimental import pallas as pl
from jax.experimental.pallas import tpu as pltpu


# ----------------------------------------------------------------------------
# Kernel 1: fused branch = (spatial chunk) matmul + global max pool.
#   x_ref : (1, ts, Kp)  bf16   current spatial chunk of one batch element
#   w_ref : (Kp, d)      bf16   fused branch weight (backbone-stub @ projection)
#   b_ref : (1, d)       f32    fused bias
#   o_ref : (1, 1, d)    f32    pooled output for this batch element
#   acc   : (1, 1, d)    f32    running max accumulator (VMEM scratch)
# Grid = (batch, spatial_chunks); batch "parallel", chunks "arbitrary".
# ----------------------------------------------------------------------------
def _branch_pool_kernel(x_ref, w_ref, b_ref, o_ref, acc_ref):
    @pl.when(pl.program_id(1) == 0)
    def _init():
        acc_ref[...] = jnp.full(acc_ref.shape, -jnp.inf, acc_ref.dtype)

    feat = jnp.dot(x_ref[0], w_ref[...],
                   preferred_element_type=jnp.float32)          # (ts, d) f32
    acc_ref[...] = jnp.maximum(acc_ref[...],
                               jnp.max(feat, axis=0).reshape(1, 1, -1))
    # bias commutes with the spatial max (per-channel constant) -> add at the end
    o_ref[...] = acc_ref[...] + b_ref[...].reshape(1, 1, -1)


def branch_pool(x_nsc, w, b, ts_max=1024):
    """x_nsc: (nb, S, K) f32, w: (K, d) f32, b: (d,) f32 -> (nb, d) f32 pooled."""
    nb, S, K = x_nsc.shape
    d = w.shape[1]

    # pad contraction dim to a sublane-friendly 8 (zeros -> exact)
    Kp = max(8, ((K + 7) // 8) * 8)
    if Kp != K:
        x_nsc = jnp.pad(x_nsc, ((0, 0), (0, 0), (0, Kp - K)))
        w = jnp.pad(w, ((0, Kp - K), (0, 0)))

    # spatial tile (multiple of 8); pad ragged tail by edge-replication,
    # which leaves the global max unchanged (exact).
    ts = min(ts_max, ((S + 7) // 8) * 8)
    S_pad = ((S + ts - 1) // ts) * ts
    if S_pad != S:
        x_nsc = jnp.pad(x_nsc, ((0, 0), (0, S_pad - S), (0, 0)), mode="edge")
    chunks = S_pad // ts

    out = pl.pallas_call(
        _branch_pool_kernel,
        out_shape=jax.ShapeDtypeStruct((nb, 1, d), jnp.float32),
        grid_spec=pltpu.PrefetchScalarGridSpec(
            num_scalar_prefetch=0,
            grid=(nb, chunks),
            in_specs=[
                pl.BlockSpec((1, ts, Kp), lambda bi, c: (bi, c, 0)),
                pl.BlockSpec((Kp, d), lambda bi, c: (0, 0)),
                pl.BlockSpec((1, d), lambda bi, c: (0, 0)),
            ],
            out_specs=pl.BlockSpec((1, 1, d), lambda bi, c: (bi, 0, 0)),
            scratch_shapes=[pltpu.VMEM((1, 1, d), jnp.float32)],
        ),
        compiler_params=pltpu.CompilerParams(
            dimension_semantics=("parallel", "arbitrary")),
    )(x_nsc.astype(jnp.bfloat16), w.astype(jnp.bfloat16),
      b.reshape(1, d).astype(jnp.float32))
    return out.reshape(nb, d)


# ----------------------------------------------------------------------------
# Kernel 2: classifier head on the pooled features = Linear/ReLU/Linear.
# Input is already globally max-pooled, so this is a tiny GEMM (gridless).
# ----------------------------------------------------------------------------
def _head_kernel(p_ref, w1_ref, b1_ref, w2_ref, b2_ref, o_ref):
    h = jnp.dot(p_ref[...], w1_ref[...],
                preferred_element_type=jnp.float32) + b1_ref[...]
    h = jnp.maximum(h, 0.0)  # ReLU
    # TODO(synk): nn.Dropout(p=0.5) is identity at inference; training RNG mask
    # is not modeled.
    o_ref[...] = jnp.dot(h.astype(w2_ref.dtype), w2_ref[...],
                         preferred_element_type=jnp.float32) + b2_ref[...]


def classifier_head(pooled, w1, b1, w2, b2):
    nb, C = pooled.shape
    H1 = w1.shape[1]
    N2 = w2.shape[1]
    # lane-pad the fc1 input channels and the fc2 output (zeros -> exact)
    Cp = ((C + 127) // 128) * 128
    N2p = ((N2 + 127) // 128) * 128
    if Cp != C:
        pooled = jnp.pad(pooled, ((0, 0), (0, Cp - C)))
        w1 = jnp.pad(w1, ((0, Cp - C), (0, 0)))
    if N2p != N2:
        w2 = jnp.pad(w2, ((0, 0), (0, N2p - N2)))
        b2 = jnp.pad(b2, ((0, N2p - N2),))

    out = pl.pallas_call(
        _head_kernel,
        out_shape=jax.ShapeDtypeStruct((nb, N2p), jnp.float32),
    )(pooled.astype(jnp.bfloat16),
      w1.astype(jnp.bfloat16), b1.reshape(1, H1).astype(jnp.float32),
      w2.astype(jnp.bfloat16), b2.reshape(1, N2p).astype(jnp.float32))
    return out[:, :N2]


# ----------------------------------------------------------------------------
# Full HAF forward (JAX glue + Pallas kernels)
# ----------------------------------------------------------------------------
def haf_forward(x_nchw, params):
    nb, cin, H, W = x_nchw.shape
    x_nhwc = jnp.transpose(x_nchw, (0, 2, 3, 1)).astype(jnp.float32)

    def fused_branch(stride, wb, bb, wp, bp):
        # backbone stub: strided 1x1 conv (spatial subsample + channel matmul);
        # fuse it with the HAF projection 1x1 conv and apply at low resolution.
        xs = x_nhwc[:, ::stride, ::stride, :]
        x2 = xs.reshape(nb, xs.shape[1] * xs.shape[2], cin)
        w_eff = wb @ wp                 # (cin, d)   -- exact 1x1-conv fusion
        b_eff = bb @ wp + bp            # (d,)
        # nearest upsample + global max == global max at low res (exact)
        return branch_pool(x2, w_eff, b_eff)       # (nb, d) pooled

    # names mirror the PyTorch forward: h_x=conv_1, m_x=conv_m, l_x=conv_h
    h_x = fused_branch(2, params["w_low"], params["b_low"],
                       params["w_p1"], params["b_p1"])
    m_x = fused_branch(4, params["w_mid"], params["b_mid"],
                       params["w_pm"], params["b_pm"])
    l_x = fused_branch(8, params["w_high"], params["b_high"],
                       params["w_ph"], params["b_ph"])

    pooled = jnp.concatenate([l_x, m_x, h_x], axis=-1)   # torch.cat((l_x,m_x,h_x),1)+gap
    return classifier_head(pooled, params["w_fc1"], params["b_fc1"],
                           params["w_fc2"], params["b_fc2"])


# ----------------------------------------------------------------------------
# Deterministic parameter init (PyTorch-style uniform(-1/sqrt(fan_in), +))
# ----------------------------------------------------------------------------
def _dense(key, fan_in, fan_out):
    kw, kb = jax.random.split(key)
    s = 1.0 / float(np.sqrt(fan_in))
    w = jax.random.uniform(kw, (fan_in, fan_out), jnp.float32, -s, s)
    b = jax.random.uniform(kb, (fan_out,), jnp.float32, -s, s)
    return w, b


def init_params(key, cin, d1, dm, dh):
    ks = jax.random.split(key, 8)
    p = {}
    p["w_low"], p["b_low"] = _dense(ks[0], cin, 256)    # lower_branch stub
    p["w_mid"], p["b_mid"] = _dense(ks[1], cin, 512)    # middle_branch stub
    p["w_high"], p["b_high"] = _dense(ks[2], cin, 512)  # higher_branch stub
    p["w_p1"], p["b_p1"] = _dense(ks[3], 256, d1)       # Conv2d(256, branch_1_dim, 1)
    p["w_pm"], p["b_pm"] = _dense(ks[4], 512, dm)       # Conv2d(512, branch_m_dim, 1)
    p["w_ph"], p["b_ph"] = _dense(ks[5], 512, dh)       # Conv2d(512, branch_h_dim, 1)
    p["w_fc1"], p["b_fc1"] = _dense(ks[6], dh + dm + d1, 2048)
    p["w_fc2"], p["b_fc2"] = _dense(ks[7], 2048, 1000)
    return p


# ----------------------------------------------------------------------------
# NumPy (float64) reference following the original (un-fused) module math:
# branch conv -> nearest upsample -> 1x1 projection -> concat -> global max -> MLP
# ----------------------------------------------------------------------------
def reference_forward(x_nchw, params):
    x = np.asarray(x_nchw, np.float64)
    P = {k: np.asarray(v, np.float64) for k, v in params.items()}
    nb, cin, H, W = x.shape
    xh = np.transpose(x, (0, 2, 3, 1))

    def branch(stride, wb, bb, wp, bp):
        xs = xh[:, ::stride, ::stride, :]
        f = xs @ wb + bb
        f = np.repeat(np.repeat(f, stride, axis=1), stride, axis=2)   # nearest up
        return f @ wp + bp

    h_x = branch(2, P["w_low"], P["b_low"], P["w_p1"], P["b_p1"])
    m_x = branch(4, P["w_mid"], P["b_mid"], P["w_pm"], P["b_pm"])
    l_x = branch(8, P["w_high"], P["b_high"], P["w_ph"], P["b_ph"])
    cat = np.concatenate([l_x, m_x, h_x], axis=-1)
    pooled = cat.reshape(nb, H * W, -1).max(axis=1)
    h = np.maximum(pooled @ P["w_fc1"] + P["b_fc1"], 0.0)
    return h @ P["w_fc2"] + P["b_fc2"]


if __name__ == "__main__":
    key = jax.random.PRNGKey(0)
    kx, kp = jax.random.split(key)

    # small shapes: batch=2, 3 input channels, 16x16 spatial (divisible by 8)
    x = jax.random.normal(kx, (2, 3, 16, 16), jnp.float32)
    # branch dims chosen small; total = 64 + 32 + 32 = 128 (lane-friendly)
    d1, dm, dh = 32, 32, 64
    params = init_params(kp, cin=3, d1=d1, dm=dm, dh=dh)

    fwd = jax.jit(haf_forward)
    out = jax.block_until_ready(fwd(x, params))
    assert out.shape == (2, 1000), out.shape

    ref = reference_forward(x, params)
    err = np.max(np.abs(np.asarray(out, np.float64) - ref))
    assert err < 2e-2, f"max abs error {err}"

    print("KERNEL_OK")
</pallas_src>

<mosaic_0001>
module attributes {stable_mosaic.version = 11 : i64} {
  func.func @_branch_pool_kernel(%arg0: i32, %arg1: i32, %arg2: memref<1x16x8xbf16, #tpu.memory_space<vmem>>, %arg3: memref<8x32xbf16, #tpu.memory_space<vmem>>, %arg4: memref<1x32xf32, #tpu.memory_space<vmem>>, %arg5: memref<1x1x32xf32, #tpu.memory_space<vmem>>, %arg6: memref<1x1x32xf32, #tpu.memory_space<vmem>>) attributes {dimension_semantics = [#tpu.dimension_semantics<parallel>, #tpu.dimension_semantics<arbitrary>], iteration_bounds = array<i64: 2, 1>, scalar_prefetch = 0 : i64, scratch_operands = 1 : i64, tpu.core_type = #tpu.core_type<tc>, window_params = [{transform_indices = @transform_0, window_bounds = array<i64: 1, 16, 8>}, {pipeline_mode = #tpu.pipeline_mode<synchronous>, transform_indices = @transform_1, window_bounds = array<i64: 8, 32>}, {pipeline_mode = #tpu.pipeline_mode<synchronous>, transform_indices = @transform_2, window_bounds = array<i64: 1, 32>}, {transform_indices = @transform_3, window_bounds = array<i64: 1, 1, 32>}]} {
    %c0_i32 = arith.constant 0 : i32
    %0 = arith.cmpi eq, %arg1, %c0_i32 : i32
    %1 = arith.extui %0 : i1 to i32
    %c0_i32_0 = arith.constant 0 : i32
    %2 = arith.cmpi ne, %1, %c0_i32_0 : i32
    scf.if %2 {
      %cst_20 = arith.constant 0xFF800000 : f32
      %17 = vector.broadcast %cst_20 : f32 to vector<1x1x32xf32>
      %c0_21 = arith.constant 0 : index
      %c0_22 = arith.constant 0 : index
      %c0_23 = arith.constant 0 : index
      %18 = vector.load %arg6[%c0_21, %c0_22, %c0_23] : memref<1x1x32xf32, #tpu.memory_space<vmem>>, vector<1x1x32xf32>
      tpu.vector_store %arg6[%c0_21, %c0_22, %c0_23], %17 {strides = array<i32>} : memref<1x1x32xf32, #tpu.memory_space<vmem>>, vector<1x1x32xf32>,
    } else {
    }
    %c0 = arith.constant 0 : index
    %c0_1 = arith.constant 0 : index
    %c0_2 = arith.constant 0 : index
    %3 = vector.load %arg2[%c0, %c0_1, %c0_2] : memref<1x16x8xbf16, #tpu.memory_space<vmem>>, vector<1x16x8xbf16>
    %4 = vector.shape_cast %3 : vector<1x16x8xbf16> to vector<16x8xbf16>
    %c0_3 = arith.constant 0 : index
    %c0_4 = arith.constant 0 : index
    %5 = vector.load %arg3[%c0_3, %c0_4] : memref<8x32xbf16, #tpu.memory_space<vmem>>, vector<8x32xbf16>
    %cst = arith.constant dense<0.000000e+00> : vector<16x32xf32>
    %6 = tpu.matmul %4, %5, %cst {dimension_numbers = #tpu.dot_dimension_numbers<[1], [0], [0], [1], [0, 0, 1, 1], [], []>} : vector<16x8xbf16>, vector<8x32xbf16>, vector<16x32xf32> -> vector<16x32xf32>
    %c0_5 = arith.constant 0 : index
    %c0_6 = arith.constant 0 : index
    %c0_7 = arith.constant 0 : index
    %7 = vector.load %arg6[%c0_5, %c0_6, %c0_7] : memref<1x1x32xf32, #tpu.memory_space<vmem>>, vector<1x1x32xf32>
    %cst_8 = arith.constant dense<0xFF800000> : vector<32xf32>
    %8 = vector.multi_reduction <maximumf>, %6, %cst_8 [0] : vector<16x32xf32> to vector<32xf32>
    %9 = vector.shape_cast %8 : vector<32xf32> to vector<1x1x32xf32>
    %10 = arith.maximumf %7, %9 : vector<1x1x32xf32>
    %c0_9 = arith.constant 0 : index
    %c0_10 = arith.constant 0 : index
    %c0_11 = arith.constant 0 : index
    %11 = vector.load %arg6[%c0_9, %c0_10, %c0_11] : memref<1x1x32xf32, #tpu.memory_space<vmem>>, vector<1x1x32xf32>
    tpu.vector_store %arg6[%c0_9, %c0_10, %c0_11], %10 {strides = array<i32>} : memref<1x1x32xf32, #tpu.memory_space<vmem>>, vector<1x1x32xf32>,
    %c0_12 = arith.constant 0 : index
    %c0_13 = arith.constant 0 : index
    %c0_14 = arith.constant 0 : index
    %12 = vector.load %arg6[%c0_12, %c0_13, %c0_14] : memref<1x1x32xf32, #tpu.memory_space<vmem>>, vector<1x1x32xf32>
    %c0_15 = arith.constant 0 : index
    %c0_16 = arith.constant 0 : index
    %13 = vector.load %arg4[%c0_15, %c0_16] : memref<1x32xf32, #tpu.memory_space<vmem>>, vector<1x32xf32>
    %14 = vector.shape_cast %13 : vector<1x32xf32> to vector<1x1x32xf32>
    %15 = arith.addf %12, %14 : vector<1x1x32xf32>
    %c0_17 = arith.constant 0 : index
    %c0_18 = arith.constant 0 : index
    %c0_19 = arith.constant 0 : index
    %16 = vector.load %arg5[%c0_17, %c0_18, %c0_19] : memref<1x1x32xf32, #tpu.memory_space<vmem>>, vector<1x1x32xf32>
    tpu.vector_store %arg5[%c0_17, %c0_18, %c0_19], %15 {strides = array<i32>} : memref<1x1x32xf32, #tpu.memory_space<vmem>>, vector<1x1x32xf32>,
    return
  }
  func.func @transform_0(%arg0: i32, %arg1: i32) -> (i32, i32, i32) {
    %c0_i32 = arith.constant 0 : i32
    %c0_i32_0 = arith.constant 0 : i32
    return %arg0, %arg1, %c0_i32 : i32, i32, i32
  }
  func.func @transform_1(%arg0: i32, %arg1: i32) -> (i32, i32) {
    %c0_i32 = arith.constant 0 : i32
    %c0_i32_0 = arith.constant 0 : i32
    %c0_i32_1 = arith.constant 0 : i32
    return %c0_i32, %c0_i32_0 : i32, i32
  }
  func.func @transform_2(%arg0: i32, %arg1: i32) -> (i32, i32) {
    %c0_i32 = arith.constant 0 : i32
    %c0_i32_0 = arith.constant 0 : i32
    %c0_i32_1 = arith.constant 0 : i32
    return %c0_i32, %c0_i32_0 : i32, i32
  }
  func.func @transform_3(%arg0: i32, %arg1: i32) -> (i32, i32, i32) {
    %c0_i32 = arith.constant 0 : i32
    %c0_i32_0 = arith.constant 0 : i32
    %c0_i32_1 = arith.constant 0 : i32
    return %arg0, %c0_i32, %c0_i32_0 : i32, i32, i32
  }
}

module attributes {stable_mosaic.version = 11 : i64} {
  func.func @_branch_pool_kernel(%arg0: i32, %arg1: i32, %arg2: memref<1x64x8xbf16, #tpu.memory_space<vmem>>, %arg3: memref<8x32xbf16, #tpu.memory_space<vmem>>, %arg4: memref<1x32xf32, #tpu.memory_space<vmem>>, %arg5: memref<1x1x32xf32, #tpu.memory_space<vmem>>, %arg6: memref<1x1x32xf32, #tpu.memory_space<vmem>>) attributes {dimension_semantics = [#tpu.dimension_semantics<parallel>, #tpu.dimension_semantics<arbitrary>], iteration_bounds = array<i64: 2, 1>, scalar_prefetch = 0 : i64, scratch_operands = 1 : i64, tpu.core_type = #tpu.core_type<tc>, window_params = [{transform_indices = @transform_0, window_bounds = array<i64: 1, 64, 8>}, {pipeline_mode = #tpu.pipeline_mode<synchronous>, transform_indices = @transform_1, window_bounds = array<i64: 8, 32>}, {pipeline_mode = #tpu.pipeline_mode<synchronous>, transform_indices = @transform_2, window_bounds = array<i64: 1, 32>}, {transform_indices = @transform_3, window_bounds = array<i64: 1, 1, 32>}]} {
    %c0_i32 = arith.constant 0 : i32
    %0 = arith.cmpi eq, %arg1, %c0_i32 : i32
    %1 = arith.extui %0 : i1 to i32
    %c0_i32_0 = arith.constant 0 : i32
    %2 = arith.cmpi ne, %1, %c0_i32_0 : i32
    scf.if %2 {
      %cst_20 = arith.constant 0xFF800000 : f32
      %17 = vector.broadcast %cst_20 : f32 to vector<1x1x32xf32>
      %c0_21 = arith.constant 0 : index
      %c0_22 = arith.constant 0 : index
      %c0_23 = arith.constant 0 : index
      %18 = vector.load %arg6[%c0_21, %c0_22, %c0_23] : memref<1x1x32xf32, #tpu.memory_space<vmem>>, vector<1x1x32xf32>
      tpu.vector_store %arg6[%c0_21, %c0_22, %c0_23], %17 {strides = array<i32>} : memref<1x1x32xf32, #tpu.memory_space<vmem>>, vector<1x1x32xf32>,
    } else {
    }
    %c0 = arith.constant 0 : index
    %c0_1 = arith.constant 0 : index
    %c0_2 = arith.constant 0 : index
    %3 = vector.load %arg2[%c0, %c0_1, %c0_2] : memref<1x64x8xbf16, #tpu.memory_space<vmem>>, vector<1x64x8xbf16>
    %4 = vector.shape_cast %3 : vector<1x64x8xbf16> to vector<64x8xbf16>
    %c0_3 = arith.constant 0 : index
    %c0_4 = arith.constant 0 : index
    %5 = vector.load %arg3[%c0_3, %c0_4] : memref<8x32xbf16, #tpu.memory_space<vmem>>, vector<8x32xbf16>
    %cst = arith.constant dense<0.000000e+00> : vector<64x32xf32>
    %6 = tpu.matmul %4, %5, %cst {dimension_numbers = #tpu.dot_dimension_numbers<[1], [0], [0], [1], [0, 0, 1, 1], [], []>} : vector<64x8xbf16>, vector<8x32xbf16>, vector<64x32xf32> -> vector<64x32xf32>
    %c0_5 = arith.constant 0 : index
    %c0_6 = arith.constant 0 : index
    %c0_7 = arith.constant 0 : index
    %7 = vector.load %arg6[%c0_5, %c0_6, %c0_7] : memref<1x1x32xf32, #tpu.memory_space<vmem>>, vector<1x1x32xf32>
    %cst_8 = arith.constant dense<0xFF800000> : vector<32xf32>
    %8 = vector.multi_reduction <maximumf>, %6, %cst_8 [0] : vector<64x32xf32> to vector<32xf32>
    %9 = vector.shape_cast %8 : vector<32xf32> to vector<1x1x32xf32>
    %10 = arith.maximumf %7, %9 : vector<1x1x32xf32>
    %c0_9 = arith.constant 0 : index
    %c0_10 = arith.constant 0 : index
    %c0_11 = arith.constant 0 : index
    %11 = vector.load %arg6[%c0_9, %c0_10, %c0_11] : memref<1x1x32xf32, #tpu.memory_space<vmem>>, vector<1x1x32xf32>
    tpu.vector_store %arg6[%c0_9, %c0_10, %c0_11], %10 {strides = array<i32>} : memref<1x1x32xf32, #tpu.memory_space<vmem>>, vector<1x1x32xf32>,
    %c0_12 = arith.constant 0 : index
    %c0_13 = arith.constant 0 : index
    %c0_14 = arith.constant 0 : index
    %12 = vector.load %arg6[%c0_12, %c0_13, %c0_14] : memref<1x1x32xf32, #tpu.memory_space<vmem>>, vector<1x1x32xf32>
    %c0_15 = arith.constant 0 : index
    %c0_16 = arith.constant 0 : index
    %13 = vector.load %arg4[%c0_15, %c0_16] : memref<1x32xf32, #tpu.memory_space<vmem>>, vector<1x32xf32>
    %14 = vector.shape_cast %13 : vector<1x32xf32> to vector<1x1x32xf32>
    %15 = arith.addf %12, %14 : vector<1x1x32xf32>
    %c0_17 = arith.constant 0 : index
    %c0_18 = arith.constant 0 : index
    %c0_19 = arith.constant 0 : index
    %16 = vector.load %arg5[%c0_17, %c0_18, %c0_19] : memref<1x1x32xf32, #tpu.memory_space<vmem>>, vector<1x1x32xf32>
    tpu.vector_store %arg5[%c0_17, %c0_18, %c0_19], %15 {strides = array<i32>} : memref<1x1x32xf32, #tpu.memory_space<vmem>>, vector<1x1x32xf32>,
    return
  }
  func.func @transform_0(%arg0: i32, %arg1: i32) -> (i32, i32, i32) {
    %c0_i32 = arith.constant 0 : i32
    %c0_i32_0 = arith.constant 0 : i32
    return %arg0, %arg1, %c0_i32 : i32, i32, i32
  }
  func.func @transform_1(%arg0: i32, %arg1: i32) -> (i32, i32) {
    %c0_i32 = arith.constant 0 : i32
    %c0_i32_0 = arith.constant 0 : i32
    %c0_i32_1 = arith.constant 0 : i32
    return %c0_i32, %c0_i32_0 : i32, i32
  }
  func.func @transform_2(%arg0: i32, %arg1: i32) -> (i32, i32) {
    %c0_i32 = arith.constant 0 : i32
    %c0_i32_0 = arith.constant 0 : i32
    %c0_i32_1 = arith.constant 0 : i32
    return %c0_i32, %c0_i32_0 : i32, i32
  }
  func.func @transform_3(%arg0: i32, %arg1: i32) -> (i32, i32, i32) {
    %c0_i32 = arith.constant 0 : i32
    %c0_i32_0 = arith.constant 0 : i32
    %c0_i32_1 = arith.constant 0 : i32
    return %arg0, %c0_i32, %c0_i32_0 : i32, i32, i32
  }
}

module attributes {stable_mosaic.version = 11 : i64} {
  func.func @_branch_pool_kernel(%arg0: i32, %arg1: i32, %arg2: memref<1x8x8xbf16, #tpu.memory_space<vmem>>, %arg3: memref<8x64xbf16, #tpu.memory_space<vmem>>, %arg4: memref<1x64xf32, #tpu.memory_space<vmem>>, %arg5: memref<1x1x64xf32, #tpu.memory_space<vmem>>, %arg6: memref<1x1x64xf32, #tpu.memory_space<vmem>>) attributes {dimension_semantics = [#tpu.dimension_semantics<parallel>, #tpu.dimension_semantics<arbitrary>], iteration_bounds = array<i64: 2, 1>, scalar_prefetch = 0 : i64, scratch_operands = 1 : i64, tpu.core_type = #tpu.core_type<tc>, window_params = [{transform_indices = @transform_0, window_bounds = array<i64: 1, 8, 8>}, {pipeline_mode = #tpu.pipeline_mode<synchronous>, transform_indices = @transform_1, window_bounds = array<i64: 8, 64>}, {pipeline_mode = #tpu.pipeline_mode<synchronous>, transform_indices = @transform_2, window_bounds = array<i64: 1, 64>}, {transform_indices = @transform_3, window_bounds = array<i64: 1, 1, 64>}]} {
    %c0_i32 = arith.constant 0 : i32
    %0 = arith.cmpi eq, %arg1, %c0_i32 : i32
    %1 = arith.extui %0 : i1 to i32
    %c0_i32_0 = arith.constant 0 : i32
    %2 = arith.cmpi ne, %1, %c0_i32_0 : i32
    scf.if %2 {
      %cst_20 = arith.constant 0xFF800000 : f32
      %17 = vector.broadcast %cst_20 : f32 to vector<1x1x64xf32>
      %c0_21 = arith.constant 0 : index
      %c0_22 = arith.constant 0 : index
      %c0_23 = arith.constant 0 : index
      %18 = vector.load %arg6[%c0_21, %c0_22, %c0_23] : memref<1x1x64xf32, #tpu.memory_space<vmem>>, vector<1x1x64xf32>
      tpu.vector_store %arg6[%c0_21, %c0_22, %c0_23], %17 {strides = array<i32>} : memref<1x1x64xf32, #tpu.memory_space<vmem>>, vector<1x1x64xf32>,
    } else {
    }
    %c0 = arith.constant 0 : index
    %c0_1 = arith.constant 0 : index
    %c0_2 = arith.constant 0 : index
    %3 = vector.load %arg2[%c0, %c0_1, %c0_2] : memref<1x8x8xbf16, #tpu.memory_space<vmem>>, vector<1x8x8xbf16>
    %4 = vector.shape_cast %3 : vector<1x8x8xbf16> to vector<8x8xbf16>
    %c0_3 = arith.constant 0 : index
    %c0_4 = arith.constant 0 : index
    %5 = vector.load %arg3[%c0_3, %c0_4] : memref<8x64xbf16, #tpu.memory_space<vmem>>, vector<8x64xbf16>
    %cst = arith.constant dense<0.000000e+00> : vector<8x64xf32>
    %6 = tpu.matmul %4, %5, %cst {dimension_numbers = #tpu.dot_dimension_numbers<[1], [0], [0], [1], [0, 0, 1, 1], [], []>} : vector<8x8xbf16>, vector<8x64xbf16>, vector<8x64xf32> -> vector<8x64xf32>
    %c0_5 = arith.constant 0 : index
    %c0_6 = arith.constant 0 : index
    %c0_7 = arith.constant 0 : index
    %7 = vector.load %arg6[%c0_5, %c0_6, %c0_7] : memref<1x1x64xf32, #tpu.memory_space<vmem>>, vector<1x1x64xf32>
    %cst_8 = arith.constant dense<0xFF800000> : vector<64xf32>
    %8 = vector.multi_reduction <maximumf>, %6, %cst_8 [0] : vector<8x64xf32> to vector<64xf32>
    %9 = vector.shape_cast %8 : vector<64xf32> to vector<1x1x64xf32>
    %10 = arith.maximumf %7, %9 : vector<1x1x64xf32>
    %c0_9 = arith.constant 0 : index
    %c0_10 = arith.constant 0 : index
    %c0_11 = arith.constant 0 : index
    %11 = vector.load %arg6[%c0_9, %c0_10, %c0_11] : memref<1x1x64xf32, #tpu.memory_space<vmem>>, vector<1x1x64xf32>
    tpu.vector_store %arg6[%c0_9, %c0_10, %c0_11], %10 {strides = array<i32>} : memref<1x1x64xf32, #tpu.memory_space<vmem>>, vector<1x1x64xf32>,
    %c0_12 = arith.constant 0 : index
    %c0_13 = arith.constant 0 : index
    %c0_14 = arith.constant 0 : index
    %12 = vector.load %arg6[%c0_12, %c0_13, %c0_14] : memref<1x1x64xf32, #tpu.memory_space<vmem>>, vector<1x1x64xf32>
    %c0_15 = arith.constant 0 : index
    %c0_16 = arith.constant 0 : index
    %13 = vector.load %arg4[%c0_15, %c0_16] : memref<1x64xf32, #tpu.memory_space<vmem>>, vector<1x64xf32>
    %14 = vector.shape_cast %13 : vector<1x64xf32> to vector<1x1x64xf32>
    %15 = arith.addf %12, %14 : vector<1x1x64xf32>
    %c0_17 = arith.constant 0 : index
    %c0_18 = arith.constant 0 : index
    %c0_19 = arith.constant 0 : index
    %16 = vector.load %arg5[%c0_17, %c0_18, %c0_19] : memref<1x1x64xf32, #tpu.memory_space<vmem>>, vector<1x1x64xf32>
    tpu.vector_store %arg5[%c0_17, %c0_18, %c0_19], %15 {strides = array<i32>} : memref<1x1x64xf32, #tpu.memory_space<vmem>>, vector<1x1x64xf32>,
    return
  }
  func.func @transform_0(%arg0: i32, %arg1: i32) -> (i32, i32, i32) {
    %c0_i32 = arith.constant 0 : i32
    %c0_i32_0 = arith.constant 0 : i32
    return %arg0, %arg1, %c0_i32 : i32, i32, i32
  }
  func.func @transform_1(%arg0: i32, %arg1: i32) -> (i32, i32) {
    %c0_i32 = arith.constant 0 : i32
    %c0_i32_0 = arith.constant 0 : i32
    %c0_i32_1 = arith.constant 0 : i32
    return %c0_i32, %c0_i32_0 : i32, i32
  }
  func.func @transform_2(%arg0: i32, %arg1: i32) -> (i32, i32) {
    %c0_i32 = arith.constant 0 : i32
    %c0_i32_0 = arith.constant 0 : i32
    %c0_i32_1 = arith.constant 0 : i32
    return %c0_i32, %c0_i32_0 : i32, i32
  }
  func.func @transform_3(%arg0: i32, %arg1: i32) -> (i32, i32, i32) {
    %c0_i32 = arith.constant 0 : i32
    %c0_i32_0 = arith.constant 0 : i32
    %c0_i32_1 = arith.constant 0 : i32
    return %arg0, %c0_i32, %c0_i32_0 : i32, i32, i32
  }
}

module attributes {stable_mosaic.version = 11 : i64} {
  func.func @_head_kernel(%arg0: memref<2x128xbf16, #tpu.memory_space<vmem>>, %arg1: memref<128x2048xbf16, #tpu.memory_space<vmem>>, %arg2: memref<1x2048xf32, #tpu.memory_space<vmem>>, %arg3: memref<2048x1024xbf16, #tpu.memory_space<vmem>>, %arg4: memref<1x1024xf32, #tpu.memory_space<vmem>>, %arg5: memref<2x1024xf32, #tpu.memory_space<vmem>>) attributes {dimension_semantics = [], scalar_prefetch = 0 : i64, scratch_operands = 0 : i64, tpu.core_type = #tpu.core_type<tc>} {
    %c0 = arith.constant 0 : index
    %c0_0 = arith.constant 0 : index
    %0 = vector.load %arg0[%c0, %c0_0] : memref<2x128xbf16, #tpu.memory_space<vmem>>, vector<2x128xbf16>
    %c0_1 = arith.constant 0 : index
    %c0_2 = arith.constant 0 : index
    %1 = vector.load %arg1[%c0_1, %c0_2] : memref<128x2048xbf16, #tpu.memory_space<vmem>>, vector<128x2048xbf16>
    %cst = arith.constant dense<0.000000e+00> : vector<2x2048xf32>
    %2 = tpu.matmul %0, %1, %cst {dimension_numbers = #tpu.dot_dimension_numbers<[1], [0], [0], [1], [0, 0, 1, 1], [], []>} : vector<2x128xbf16>, vector<128x2048xbf16>, vector<2x2048xf32> -> vector<2x2048xf32>
    %c0_3 = arith.constant 0 : index
    %c0_4 = arith.constant 0 : index
    %3 = vector.load %arg2[%c0_3, %c0_4] : memref<1x2048xf32, #tpu.memory_space<vmem>>, vector<1x2048xf32>
    %4 = vector.broadcast %3 : vector<1x2048xf32> to vector<2x2048xf32>
    %5 = arith.addf %2, %4 : vector<2x2048xf32>
    %cst_5 = arith.constant 0.000000e+00 : f32
    %6 = vector.broadcast %cst_5 : f32 to vector<2x2048xf32>
    %7 = arith.maximumf %5, %6 : vector<2x2048xf32>
    %8 = arith.truncf %7 : vector<2x2048xf32> to vector<2x2048xbf16>
    %c0_6 = arith.constant 0 : index
    %c0_7 = arith.constant 0 : index
    %9 = vector.load %arg3[%c0_6, %c0_7] : memref<2048x1024xbf16, #tpu.memory_space<vmem>>, vector<2048x1024xbf16>
    %cst_8 = arith.constant dense<0.000000e+00> : vector<2x1024xf32>
    %10 = tpu.matmul %8, %9, %cst_8 {dimension_numbers = #tpu.dot_dimension_numbers<[1], [0], [0], [1], [0, 0, 1, 1], [], []>} : vector<2x2048xbf16>, vector<2048x1024xbf16>, vector<2x1024xf32> -> vector<2x1024xf32>
    %c0_9 = arith.constant 0 : index
    %c0_10 = arith.constant 0 : index
    %11 = vector.load %arg4[%c0_9, %c0_10] : memref<1x1024xf32, #tpu.memory_space<vmem>>, vector<1x1024xf32>
    %12 = vector.broadcast %11 : vector<1x1024xf32> to vector<2x1024xf32>
    %13 = arith.addf %10, %12 : vector<2x1024xf32>
    %c0_11 = arith.constant 0 : index
    %c0_12 = arith.constant 0 : index
    %14 = vector.load %arg5[%c0_11, %c0_12] : memref<2x1024xf32, #tpu.memory_space<vmem>>, vector<2x1024xf32>
    tpu.vector_store %arg5[%c0_11, %c0_12], %13 {strides = array<i32>} : memref<2x1024xf32, #tpu.memory_space<vmem>>, vector<2x1024xf32>,
    return
  }
}

</mosaic_0001>

<llo_original>
// kernel: haf_forward.5
$region0: #{haf_forward.5}
  #allocation0 [shape = 'u32[]', space=smem, size = 0x4, offset = 0x4, fixed_abs, tag = 'smem constant byte address 0x4 - core index']
  #allocation1 [shape = 'u32[144,128]{1,0:T(1,128)}', space=vmem, size = 0x12000, scoped, tag = 'internal scratch']
  #allocation2 [shape = 'f32[1,1,32]{2,1,0:T(1,128)}', space=vmem, size = 0x200, scoped, tag = 'scratch operand']
  %s0 = inlined_call_operand.vmem [shape: bf16[2,16,8], index: 0, kind: input, shape index: {}]
  %s1 = inlined_call_operand.vmem [shape: bf16[8,32], index: 1, kind: input, shape index: {}]
  %s2 = inlined_call_operand.vmem [shape: f32[1,32], index: 2, kind: input, shape index: {}]
  %s3 = inlined_call_operand.vmem [shape: f32[2,1,32], index: 3, kind: output, shape index: {}]
  %s4 = sld [smem:[#allocation0]]
  $region49: #{haf_forward.5} parent=0
    _
  %s6 = ssub.s32 1, %s4
  %s7 = scalar_select 0, %s6, %s4
  loop: start=0, step=1, limit=4
  $region2: #{haf_forward.5} parent=0 // loop_pre_header
    _
  $region3: #{haf_forward.5} parent=0 // loop_header
    %s9 = sphi 0, %s13
    %p10 = scmp.ge.s32.totalorder %s9, 4
    %s16 = sphi 0, %s28
    %s17 = sphi 0, %s24
    %s18 = sphi 0, %s16
    %s19 = sphi 0, %s17
    %s20 = sphi 0, %s18
    %s21 = sphi 0, %s19
    %s33 = sphi 0, %s35
    %s36 = sphi 0, %s33
    %s37 = sphi 0, %s36
    %s53 = sphi 0, %s37
    %s57 = sphi 0, %s57
    %s59 = sphi 0, %s57
    %s60 = sphi 0, %s59
    %s74 = sphi 0, %s60
    %s78 = sphi 0, %s78
    %s80 = sphi 0, %s78
    %s81 = sphi 0, %s80
    %s95 = sphi 0, %s81
    %s101 = sphi 0, %s103
    %s104 = sphi 0, %s101
    %s105 = sphi 0, %s104
    %s121 = sphi 0, %s105
  $region4: #{haf_forward.5} parent=0 // loop_header_branch
    %12 = sbr.rel (%p10) target = $region8
  $region5: #{haf_forward.5} parent=0 // loop_body
    %s14 = ssub.s32 %s9, 1
    %s15 = ssub.s32 %s9, 2
    %s22 = sadd.s32 1, %s17
    %p23 = scmp.ge.s32.totalorder %s22, 1
    %s24 = scalar_select %p23, 0, %s22
    %s25 = sadd.s32 1, %s16
    %s26 = scalar_select %p23, %s25, %s16
    %p27 = scmp.ge.s32.totalorder %s26, 2
    %s28 = scalar_select %p27, 0, %s26
    %s29 = ssub.s32 %s16, %s28
    %s30 = ssub.s32 %s17, %s24
    %s31 = sor.u32 %s29, %s30
    %p32 = scmp.eq.s32.totalorder %s31, 0
    %s34 = sadd.s32 %s33, 1
    %s35 = scalar_select %p32, %s33, %s34
    %p38 = pneg %p32
    %p39 = scmp.eq.s32.totalorder %s9, 1
    %p40 = por %p38, %p39
    %p41 = scmp.ne.s32.totalorder %s33, %s36
    %p42 = scmp.eq.s32.totalorder %s9, 0
    %p43 = por %p41, %p42
    %p44 = scmp.ne.s32.totalorder %s33, %s36
    %p45 = scmp.eq.s32.totalorder %s14, 1
    %p46 = por %p44, %p45
    %p47 = scmp.ne.s32.totalorder %s36, %s37
    %p48 = scmp.eq.s32.totalorder %s14, 0
    %p49 = por %p47, %p48
    %p50 = scmp.ne.s32.totalorder %s36, %s37
    %p51 = scmp.eq.s32.totalorder %s15, 1
    %p52 = por %p50, %p51
    %p54 = scmp.ne.s32.totalorder %s37, %s53
    %p55 = scmp.eq.s32.totalorder %s15, 0
    %p56 = por %p54, %p55
    %s58 = sadd.s32 %s57, 1
    %p61 = scmp.eq.s32.totalorder %s9, 1
    %p62 = scmp.ne.s32.totalorder %s57, %s59
    %p63 = scmp.eq.s32.totalorder %s9, 0
    %p64 = por %p62, %p63
    %p65 = scmp.ne.s32.totalorder %s57, %s59
    %p66 = scmp.eq.s32.totalorder %s14, 1
    %p67 = por %p65, %p66
    %p68 = scmp.ne.s32.totalorder %s59, %s60
    %p69 = scmp.eq.s32.totalorder %s14, 0
    %p70 = por %p68, %p69
    %p71 = scmp.ne.s32.totalorder %s59, %s60
    %p72 = scmp.eq.s32.totalorder %s15, 1
    %p73 = por %p71, %p72
    %p75 = scmp.ne.s32.totalorder %s60, %s74
    %p76 = scmp.eq.s32.totalorder %s15, 0
    %p77 = por %p75, %p76
    %s79 = sadd.s32 %s78, 1
    %p82 = scmp.eq.s32.totalorder %s9, 1
    %p83 = scmp.ne.s32.totalorder %s78, %s80
    %p84 = scmp.eq.s32.totalorder %s9, 0
    %p85 = por %p83, %p84
    %p86 = scmp.ne.s32.totalorder %s78, %s80
    %p87 = scmp.eq.s32.totalorder %s14, 1
    %p88 = por %p86, %p87
    %p89 = scmp.ne.s32.totalorder %s80, %s81
    %p90 = scmp.eq.s32.totalorder %s14, 0
    %p91 = por %p89, %p90
    %p92 = scmp.ne.s32.totalorder %s80, %s81
    %p93 = scmp.eq.s32.totalorder %s15, 1
    %p94 = por %p92, %p93
    %p96 = scmp.ne.s32.totalorder %s81, %s95
    %p97 = scmp.eq.s32.totalorder %s15, 0
    %p98 = por %p96, %p97
    %s99 = ssub.s32 %s16, %s28
    %p100 = scmp.eq.s32.totalorder %s99, 0
    %s102 = sadd.s32 %s101, 1
    %s103 = scalar_select %p100, %s101, %s102
    %p106 = pneg %p100
    %p107 = scmp.eq.s32.totalorder %s9, 1
    %p108 = por %p106, %p107
    %p109 = scmp.ne.s32.totalorder %s101, %s104
    %p110 = scmp.eq.s32.totalorder %s9, 0
    %p111 = por %p109, %p110
    %p112 = scmp.ne.s32.totalorder %s101, %s104
    %p113 = scmp.eq.s32.totalorder %s14, 1
    %p114 = por %p112, %p113
    %p115 = scmp.ne.s32.totalorder %s104, %s105
    %p116 = scmp.eq.s32.totalorder %s14, 0
    %p117 = por %p115, %p116
    %p118 = scmp.ne.s32.totalorder %s104, %s105
    %p119 = scmp.eq.s32.totalorder %s15, 1
    %p120 = por %p118, %p119
    %p122 = scmp.ne.s32.totalorder %s105, %s121
    %p123 = scmp.eq.s32.totalorder %s15, 0
    %p124 = por %p122, %p123
    %p125 = scmp.le.s32.totalorder 1, %s9
    %p126 = scmp.lt.s32.totalorder %s9, 3
    %p127 = pnand %p125, %p126
    %p128 = pneg %p127
    // Predicated region
    $region9: #{haf_forward.5} parent=5 // pred_check
      _
    $region10: #{haf_forward.5} parent=5 // pred_check_branch
      %130 = sbr.rel (%p127) target = $region12
    $region11: #{haf_forward.5} parent=5 // pred_region
      %s131 = ssub.s32 %s9, 1
      // Predicated region
      $region13: #{haf_forward.5} parent=11 // pred_check
        %p132 = pneg %p70
      $region14: #{haf_forward.5} parent=11 // pred_check_branch
        %134 = sbr.rel (%p132) target = $region16
      $region15: #{haf_forward.5} parent=11 // pred_region
        _
      $region16: #{haf_forward.5} parent=11 // pred_fallthru
        _
      // Predicated region
      $region17: #{haf_forward.5} parent=11 // pred_check
        %p135 = pneg %p91
      $region18: #{haf_forward.5} parent=11 // pred_check_branch
        %137 = sbr.rel (%p135) target = $region20
      $region19: #{haf_forward.5} parent=11 // pred_region
        _
      $region20: #{haf_forward.5} parent=11 // pred_fallthru
        _
    $region12: #{haf_forward.5} parent=5 // pred_fallthru
      _
    %p138 = scmp.lt.s32.totalorder %s9, 2
    // Predicated region
    $region21: #{haf_forward.5} parent=5 // pred_check
      %p139 = pneg %p138
    $region22: #{haf_forward.5} parent=5 // pred_check_branch
      %141 = sbr.rel (%p139) target = $region24
    $region23: #{haf_forward.5} parent=5 // pred_region
      // Predicated region
      $region25: #{haf_forward.5} parent=23 // pred_check
        %p142 = pneg %p43
      $region26: #{haf_forward.5} parent=23 // pred_check_branch
        %144 = sbr.rel (%p142) target = $region28
      $region27: #{haf_forward.5} parent=23 // pred_region
        %s145 = smul.u32 2, %s17
        %p146 = scmp.lt.s32.totalorder %s16, 1
        %s147 = scalar_select %p146, %s16, 1
        %p148 = scmp.lt.s32.totalorder %s145, 1
        %s149 = scalar_select %p148, %s145, 1
        %s150 = smul.addr %s147, 2
        %s151 = sadd.s32 %s149, %s150
        %s152 = smul.addr %s151, 4
        %s153 = scalar_lea.vmem %s0, %s152
        %s154 = smul.u32 2, %s17
      $region28: #{haf_forward.5} parent=23 // pred_fallthru
        _
    $region24: #{haf_forward.5} parent=5 // pred_fallthru
      _
    %p155 = scmp.le.s32.totalorder 1, %s9
    %p156 = scmp.lt.s32.totalorder %s9, 3
    %p157 = pnand %p155, %p156
    %p158 = pneg %p157
    // Predicated region
    $region29: #{haf_forward.5} parent=5 // pred_check
      _
    $region30: #{haf_forward.5} parent=5 // pred_check_branch
      %160 = sbr.rel (%p157) target = $region32
    $region31: #{haf_forward.5} parent=5 // pred_region
      %s161 = ssub.s32 %s9, 1
      %s162 = smul.u32 2, %s19
      %p163 = scmp.lt.s32.totalorder %s18, 1
      %s164 = scalar_select %p163, %s18, 1
      %p165 = scmp.lt.s32.totalorder %s162, 1
      %s166 = scalar_select %p165, %s162, 1
      %s167 = smul.addr %s164, 2
      %s168 = sadd.s32 %s166, %s167
      %s169 = smul.addr %s168, 4
      %s170 = scalar_lea.vmem %s0, %s169
      %p171 = pneg %p49
      %p172 = pneg %p46
      %p173 = pneg %p70
      %p174 = pneg %p67
      %p175 = pneg %p91
      %p176 = pneg %p88
      %p177 = pneg %p117
      %p178 = pneg %p114
      %p179 = scmp.lt.s32.totalorder %s18, 1
      %s180 = scalar_select %p179, %s18, 1
      %s181 = scalar_lea.vmem %s3, %s180
      %s182 = smul.u32 2, %s19
      %p183 = scmp.lt.s32.totalorder %s18, 1
      %s184 = scalar_select %p183, %s18, 1
      %p185 = scmp.lt.s32.totalorder %s182, 1
      %s186 = scalar_select %p185, %s182, 1
      %s187 = smul.addr %s184, 2
      %s188 = sadd.s32 %s186, %s187
      %s189 = smul.addr %s188, 4
      %s190 = scalar_lea.vmem %s0, %s189
      %s191 = smul.u32 2, %s19
      %p192 = scmp.lt.s32.totalorder %s18, 1
      %s193 = scalar_select %p192, %s18, 1
      %s194 = scalar_lea.vmem %s3, %s193
      %p196 = scmp.eq.s32.totalorder %s19, 0
      // Predicated region
      $region33: #{haf_forward.5} parent=31 // pred_check
        %p197 = pneg %p196
      $region34: #{haf_forward.5} parent=31 // pred_check_branch
        %199 = sbr.rel (%p197) target = $region36
      $region35: #{haf_forward.5} parent=31 // pred_region
        %vm200 = vcmask 253952
        %201 = vst.msk [vmem:[#allocation2] sm:$0x1] %vm200, -inf
      $region36: #{haf_forward.5} parent=31 // pred_fallthru
        _
      %v202 = vld [vmem:[%s190] sm:$0xf]
      %v203 = vld [vmem:[%s190 + $0x4] sm:$0xf]
      %v204 = vld [vmem:[%s1] sm:$0xf]
      %v207 = vunpack.c.l.b16 %v202
      %v208 = vunpack.c.l.b16 %v203
      %v209 = vpack.c.b16 %v208, %v207
      %vm210 = vcmask 64512
      %v212 = vsel %vm210, %v209, 0
      %vm214 = vcmask 1043456
      %v216 = vsel %vm214, %v204, 0
      %218 = vmatprep.subr.bf16.mxu0 0
      %219 = vmatpush1.bf16.msra.mxu0 0
      %220 = vmatprep.subr.bf16.mxu0 0
      %221 = vmatpush1.bf16.msra.mxu0 0
      %222 = vmatprep.subr.bf16.mxu0 0
      %223 = vmatpush1.bf16.msra.mxu0 0
      %224 = vmatprep.subr.bf16.mxu0 0
      %225 = vmatpush1.bf16.msra.mxu0 0
      %226 = vmatprep.subr.bf16.mxu0 0
      %227 = vmatpush1.bf16.msra.mxu0 0
      %228 = vmatprep.subr.bf16.mxu0 0
      %229 = vmatpush1.bf16.msra.mxu0 0
      %230 = vmatprep.subr.bf16.mxu0 0
      %231 = vmatpush1.bf16.msra.mxu0 0
      %232 = vmatprep.subr.bf16.mxu0 0
      %233 = vmatpush1.bf16.msra.mxu0 %v216
      %234 = vmatprep.subr.bf16.mxu0 0
      %235 = vmatpush2.bf16.msra.mxu0 0
      %236 = vmatprep.subr.bf16.mxu0 0
      %237 = vmatpush2.bf16.msra.mxu0 0
      %238 = vmatprep.subr.bf16.mxu0 0
      %239 = vmatpush2.bf16.msra.mxu0 0
      %240 = vmatprep.subr.bf16.mxu0 0
      %241 = vmatpush2.bf16.msra.mxu0 0
      %242 = vmatprep.subr.bf16.mxu0 0
      %243 = vmatpush2.bf16.msra.mxu0 0
      %244 = vmatprep.subr.bf16.mxu0 0
      %245 = vmatpush2.bf16.msra.mxu0 0
      %246 = vmatprep.subr.bf16.mxu0 0
      %247 = vmatpush2.bf16.msra.mxu0 0
      %248 = vmatprep.subr.bf16.mxu0 0
      %249 = vmatpush2.bf16.msra.mxu0 0
      %250 = vmatprep.mubr.bf16.mxu0 0
      %251 = vmatmul.mubr.bf16.gmra.mxu0 %v212
      %v252 = vpop.f32.mrf.mxu0
      %v253 = vadd.f32 0.0, %v252
      %v254 = vpop.f32.mrf.mxu0
      %v255 = vpop.f32.mrf.mxu0
      %v256 = vadd.f32 0.0, %v255
      %v257 = vpop.f32.mrf.mxu0
      %258 = vdwg.mxu0
      %v259 = vld [vmem:[#allocation2] sm:$0x1]
      %vm260 = vcmask 261120
      %v261 = vsel %vm260, %v253, -inf
      %v262 = vsel %vm260, %v256, -inf
      %v263 = vmax.f32 %v261, %v262
      %v264 = vrot.slane %v263, 4
      %v265 = vmax.f32 %v263, %v264
      %v266 = vrot.slane %v265, 2
      %v267 = vmax.f32 %v265, %v266
      %v268 = vrot.slane %v267, 1
      %v269 = vmax.f32 %v267, %v268
      %v270 = vmax.f32 %v259, %v269
      %vm271 = vcmask 253952
      %272 = vst.msk [vmem:[#allocation2] sm:$0x1] %vm271, %v270
      %v273 = vld [vmem:[#allocation2] sm:$0x1]
      %v274 = vld [vmem:[%s2] sm:$0x1]
      %v275 = vadd.f32 %v273, %v274
      %276 = vst.msk [vmem:[%s194] sm:$0x1] %vm271, %v275
      %p277 = scmp.lt.s32.totalorder %s18, 1
      %s278 = scalar_select %p277, %s18, 1
      %s279 = scalar_lea.vmem %s3, %s278
      // Predicated region
      $region37: #{haf_forward.5} parent=31 // pred_check
        %p280 = pneg %p114
      $region38: #{haf_forward.5} parent=31 // pred_check_branch
        %282 = sbr.rel (%p280) target = $region40
      $region39: #{haf_forward.5} parent=31 // pred_region
        _
      $region40: #{haf_forward.5} parent=31 // pred_fallthru
        _
    $region32: #{haf_forward.5} parent=5 // pred_fallthru
      _
    %p283 = scmp.le.s32.totalorder 2, %s9
    // Predicated region
    $region41: #{haf_forward.5} parent=5 // pred_check
      %p284 = pneg %p283
    $region42: #{haf_forward.5} parent=5 // pred_check_branch
      %286 = sbr.rel (%p284) target = $region44
    $region43: #{haf_forward.5} parent=5 // pred_region
      %s287 = ssub.s32 %s9, 2
      // Predicated region
      $region45: #{haf_forward.5} parent=43 // pred_check
        %p288 = pneg %p120
      $region46: #{haf_forward.5} parent=43 // pred_check_branch
        %290 = sbr.rel (%p288) target = $region48
      $region47: #{haf_forward.5} parent=43 // pred_region
        %p291 = scmp.lt.s32.totalorder %s20, 1
        %s292 = scalar_select %p291, %s20, 1
        %s293 = scalar_lea.vmem %s3, %s292
      $region48: #{haf_forward.5} parent=43 // pred_fallthru
        _
    $region44: #{haf_forward.5} parent=5 // pred_fallthru
      _
  $region6: #{haf_forward.5} parent=0 // loop_footer
    %s13 = sadd.s32 1, %s9
  $region7: #{haf_forward.5} parent=0 // loop_footer_branch
    %8 = sbr.rel target = $region3
  $region8: #{haf_forward.5} parent=0 // loop_exit
    _

// kernel: haf_forward.4
$region0: #{haf_forward.4}
  #allocation0 [shape = 'u32[]', space=smem, size = 0x4, offset = 0x4, fixed_abs, tag = 'smem constant byte address 0x4 - core index']
  #allocation1 [shape = 'u32[144,128]{1,0:T(1,128)}', space=vmem, size = 0x12000, scoped, tag = 'internal scratch']
  #allocation2 [shape = 'f32[1,1,32]{2,1,0:T(1,128)}', space=vmem, size = 0x200, scoped, tag = 'scratch operand']
  %s0 = inlined_call_operand.vmem [shape: bf16[2,64,8], index: 0, kind: input, shape index: {}]
  %s1 = inlined_call_operand.vmem [shape: bf16[8,32], index: 1, kind: input, shape index: {}]
  %s2 = inlined_call_operand.vmem [shape: f32[1,32], index: 2, kind: input, shape index: {}]
  %s3 = inlined_call_operand.vmem [shape: f32[2,1,32], index: 3, kind: output, shape index: {}]
  %s4 = sld [smem:[#allocation0]]
  $region49: #{haf_forward.4} parent=0
    _
  %s6 = ssub.s32 1, %s4
  %s7 = scalar_select 0, %s6, %s4
  loop: start=0, step=1, limit=4
  $region2: #{haf_forward.4} parent=0 // loop_pre_header
    _
  $region3: #{haf_forward.4} parent=0 // loop_header
    %s9 = sphi 0, %s13
    %p10 = scmp.ge.s32.totalorder %s9, 4
    %s16 = sphi 0, %s28
    %s17 = sphi 0, %s24
    %s18 = sphi 0, %s16
    %s19 = sphi 0, %s17
    %s20 = sphi 0, %s18
    %s21 = sphi 0, %s19
    %s33 = sphi 0, %s35
    %s36 = sphi 0, %s33
    %s37 = sphi 0, %s36
    %s53 = sphi 0, %s37
    %s57 = sphi 0, %s57
    %s59 = sphi 0, %s57
    %s60 = sphi 0, %s59
    %s74 = sphi 0, %s60
    %s78 = sphi 0, %s78
    %s80 = sphi 0, %s78
    %s81 = sphi 0, %s80
    %s95 = sphi 0, %s81
    %s101 = sphi 0, %s103
    %s104 = sphi 0, %s101
    %s105 = sphi 0, %s104
    %s121 = sphi 0, %s105
  $region4: #{haf_forward.4} parent=0 // loop_header_branch
    %12 = sbr.rel (%p10) target = $region8
  $region5: #{haf_forward.4} parent=0 // loop_body
    %s14 = ssub.s32 %s9, 1
    %s15 = ssub.s32 %s9, 2
    %s22 = sadd.s32 1, %s17
    %p23 = scmp.ge.s32.totalorder %s22, 1
    %s24 = scalar_select %p23, 0, %s22
    %s25 = sadd.s32 1, %s16
    %s26 = scalar_select %p23, %s25, %s16
    %p27 = scmp.ge.s32.totalorder %s26, 2
    %s28 = scalar_select %p27, 0, %s26
    %s29 = ssub.s32 %s16, %s28
    %s30 = ssub.s32 %s17, %s24
    %s31 = sor.u32 %s29, %s30
    %p32 = scmp.eq.s32.totalorder %s31, 0
    %s34 = sadd.s32 %s33, 1
    %s35 = scalar_select %p32, %s33, %s34
    %p38 = pneg %p32
    %p39 = scmp.eq.s32.totalorder %s9, 1
    %p40 = por %p38, %p39
    %p41 = scmp.ne.s32.totalorder %s33, %s36
    %p42 = scmp.eq.s32.totalorder %s9, 0
    %p43 = por %p41, %p42
    %p44 = scmp.ne.s32.totalorder %s33, %s36
    %p45 = scmp.eq.s32.totalorder %s14, 1
    %p46 = por %p44, %p45
    %p47 = scmp.ne.s32.totalorder %s36, %s37
    %p48 = scmp.eq.s32.totalorder %s14, 0
    %p49 = por %p47, %p48
    %p50 = scmp.ne.s32.totalorder %s36, %s37
    %p51 = scmp.eq.s32.totalorder %s15, 1
    %p52 = por %p50, %p51
    %p54 = scmp.ne.s32.totalorder %s37, %s53
    %p55 = scmp.eq.s32.totalorder %s15, 0
    %p56 = por %p54, %p55
    %s58 = sadd.s32 %s57, 1
    %p61 = scmp.eq.s32.totalorder %s9, 1
    %p62 = scmp.ne.s32.totalorder %s57, %s59
    %p63 = scmp.eq.s32.totalorder %s9, 0
    %p64 = por %p62, %p63
    %p65 = scmp.ne.s32.totalorder %s57, %s59
    %p66 = scmp.eq.s32.totalorder %s14, 1
    %p67 = por %p65, %p66
    %p68 = scmp.ne.s32.totalorder %s59, %s60
    %p69 = scmp.eq.s32.totalorder %s14, 0
    %p70 = por %p68, %p69
    %p71 = scmp.ne.s32.totalorder %s59, %s60
    %p72 = scmp.eq.s32.totalorder %s15, 1
    %p73 = por %p71, %p72
    %p75 = scmp.ne.s32.totalorder %s60, %s74
    %p76 = scmp.eq.s32.totalorder %s15, 0
    %p77 = por %p75, %p76
    %s79 = sadd.s32 %s78, 1
    %p82 = scmp.eq.s32.totalorder %s9, 1
    %p83 = scmp.ne.s32.totalorder %s78, %s80
    %p84 = scmp.eq.s32.totalorder %s9, 0
    %p85 = por %p83, %p84
    %p86 = scmp.ne.s32.totalorder %s78, %s80
    %p87 = scmp.eq.s32.totalorder %s14, 1
    %p88 = por %p86, %p87
    %p89 = scmp.ne.s32.totalorder %s80, %s81
    %p90 = scmp.eq.s32.totalorder %s14, 0
    %p91 = por %p89, %p90
    %p92 = scmp.ne.s32.totalorder %s80, %s81
    %p93 = scmp.eq.s32.totalorder %s15, 1
    %p94 = por %p92, %p93
    %p96 = scmp.ne.s32.totalorder %s81, %s95
    %p97 = scmp.eq.s32.totalorder %s15, 0
    %p98 = por %p96, %p97
    %s99 = ssub.s32 %s16, %s28
    %p100 = scmp.eq.s32.totalorder %s99, 0
    %s102 = sadd.s32 %s101, 1
    %s103 = scalar_select %p100, %s101, %s102
    %p106 = pneg %p100
    %p107 = scmp.eq.s32.totalorder %s9, 1
    %p108 = por %p106, %p107
    %p109 = scmp.ne.s32.totalorder %s101, %s104
    %p110 = scmp.eq.s32.totalorder %s9, 0
    %p111 = por %p109, %p110
    %p112 = scmp.ne.s32.totalorder %s101, %s104
    %p113 = scmp.eq.s32.totalorder %s14, 1
    %p114 = por %p112, %p113
    %p115 = scmp.ne.s32.totalorder %s104, %s105
    %p116 = scmp.eq.s32.totalorder %s14, 0
    %p117 = por %p115, %p116
    %p118 = scmp.ne.s32.totalorder %s104, %s105
    %p119 = scmp.eq.s32.totalorder %s15, 1
    %p120 = por %p118, %p119
    %p122 = scmp.ne.s32.totalorder %s105, %s121
    %p123 = scmp.eq.s32.totalorder %s15, 0
    %p124 = por %p122, %p123
    %p125 = scmp.le.s32.totalorder 1, %s9
    %p126 = scmp.lt.s32.totalorder %s9, 3
    %p127 = pnand %p125, %p126
    %p128 = pneg %p127
    // Predicated region
    $region9: #{haf_forward.4} parent=5 // pred_check
      _
    $region10: #{haf_forward.4} parent=5 // pred_check_branch
      %130 = sbr.rel (%p127) target = $region12
    $region11: #{haf_forward.4} parent=5 // pred_region
      %s131 = ssub.s32 %s9, 1
      // Predicated region
      $region13: #{haf_forward.4} parent=11 // pred_check
        %p132 = pneg %p70
      $region14: #{haf_forward.4} parent=11 // pred_check_branch
        %134 = sbr.rel (%p132) target = $region16
      $region15: #{haf_forward.4} parent=11 // pred_region
        _
      $region16: #{haf_forward.4} parent=11 // pred_fallthru
        _
      // Predicated region
      $region17: #{haf_forward.4} parent=11 // pred_check
        %p135 = pneg %p91
      $region18: #{haf_forward.4} parent=11 // pred_check_branch
        %137 = sbr.rel (%p135) target = $region20
      $region19: #{haf_forward.4} parent=11 // pred_region
        _
      $region20: #{haf_forward.4} parent=11 // pred_fallthru
        _
    $region12: #{haf_forward.4} parent=5 // pred_fallthru
      _
    %p138 = scmp.lt.s32.totalorder %s9, 2
    // Predicated region
    $region21: #{haf_forward.4} parent=5 // pred_check
      %p139 = pneg %p138
    $region22: #{haf_forward.4} parent=5 // pred_check_branch
      %141 = sbr.rel (%p139) target = $region24
    $region23: #{haf_forward.4} parent=5 // pred_region
      // Predicated region
      $region25: #{haf_forward.4} parent=23 // pred_check
        %p142 = pneg %p43
      $region26: #{haf_forward.4} parent=23 // pred_check_branch
        %144 = sbr.rel (%p142) target = $region28
      $region27: #{haf_forward.4} parent=23 // pred_region
        %s145 = smul.u32 8, %s17
        %p146 = scmp.lt.s32.totalorder %s16, 1
        %s147 = scalar_select %p146, %s16, 1
        %p148 = scmp.lt.s32.totalorder %s145, 7
        %s149 = scalar_select %p148, %s145, 7
        %s150 = smul.addr %s147, 8
        %s151 = sadd.s32 %s149, %s150
        %s152 = smul.addr %s151, 4
        %s153 = scalar_lea.vmem %s0, %s152
        %s154 = smul.u32 8, %s17
      $region28: #{haf_forward.4} parent=23 // pred_fallthru
        _
    $region24: #{haf_forward.4} parent=5 // pred_fallthru
      _
    %p155 = scmp.le.s32.totalorder 1, %s9
    %p156 = scmp.lt.s32.totalorder %s9, 3
    %p157 = pnand %p155, %p156
    %p158 = pneg %p157
    // Predicated region
    $region29: #{haf_forward.4} parent=5 // pred_check
      _
    $region30: #{haf_forward.4} parent=5 // pred_check_branch
      %160 = sbr.rel (%p157) target = $region32
    $region31: #{haf_forward.4} parent=5 // pred_region
      %s161 = ssub.s32 %s9, 1
      %s162 = smul.u32 8, %s19
      %p163 = scmp.lt.s32.totalorder %s18, 1
      %s164 = scalar_select %p163, %s18, 1
      %p165 = scmp.lt.s32.totalorder %s162, 7
      %s166 = scalar_select %p165, %s162, 7
      %s167 = smul.addr %s164, 8
      %s168 = sadd.s32 %s166, %s167
      %s169 = smul.addr %s168, 4
      %s170 = scalar_lea.vmem %s0, %s169
      %p171 = pneg %p49
      %p172 = pneg %p46
      %p173 = pneg %p70
      %p174 = pneg %p67
      %p175 = pneg %p91
      %p176 = pneg %p88
      %p177 = pneg %p117
      %p178 = pneg %p114
      %p179 = scmp.lt.s32.totalorder %s18, 1
      %s180 = scalar_select %p179, %s18, 1
      %s181 = scalar_lea.vmem %s3, %s180
      %s182 = smul.u32 8, %s19
      %p183 = scmp.lt.s32.totalorder %s18, 1
      %s184 = scalar_select %p183, %s18, 1
      %p185 = scmp.lt.s32.totalorder %s182, 7
      %s186 = scalar_select %p185, %s182, 7
      %s187 = smul.addr %s184, 8
      %s188 = sadd.s32 %s186, %s187
      %s189 = smul.addr %s188, 4
      %s190 = scalar_lea.vmem %s0, %s189
      %s191 = smul.u32 8, %s19
      %p192 = scmp.lt.s32.totalorder %s18, 1
      %s193 = scalar_select %p192, %s18, 1
      %s194 = scalar_lea.vmem %s3, %s193
      %p196 = scmp.eq.s32.totalorder %s19, 0
      // Predicated region
      $region33: #{haf_forward.4} parent=31 // pred_check
        %p197 = pneg %p196
      $region34: #{haf_forward.4} parent=31 // pred_check_branch
        %199 = sbr.rel (%p197) target = $region36
      $region35: #{haf_forward.4} parent=31 // pred_region
        %vm200 = vcmask 253952
        %201 = vst.msk [vmem:[#allocation2] sm:$0x1] %vm200, -inf
      $region36: #{haf_forward.4} parent=31 // pred_fallthru
        _
      %v202 = vld [vmem:[%s190] sm:$0xf]
      %v203 = vld [vmem:[%s190 + $0x4] sm:$0xf]
      %v204 = vld [vmem:[%s190 + $0x8] sm:$0xf]
      %v205 = vld [vmem:[%s190 + $0xc] sm:$0xf]
      %v206 = vld [vmem:[%s190 + $0x10] sm:$0xf]
      %v207 = vld [vmem:[%s190 + $0x14] sm:$0xf]
      %v208 = vld [vmem:[%s190 + $0x18] sm:$0xf]
      %v209 = vld [vmem:[%s190 + $0x1c] sm:$0xf]
      %v210 = vld [vmem:[%s1] sm:$0xf]
      %v219 = vunpack.c.l.b16 %v202
      %v220 = vunpack.c.l.b16 %v203
      %v221 = vunpack.c.l.b16 %v204
      %v222 = vunpack.c.l.b16 %v205
      %v223 = vunpack.c.l.b16 %v206
      %v224 = vunpack.c.l.b16 %v207
      %v225 = vunpack.c.l.b16 %v208
      %v226 = vunpack.c.l.b16 %v209
      %v227 = vpack.c.b16 %v220, %v219
      %v228 = vpack.c.b16 %v222, %v221
      %v229 = vpack.c.b16 %v224, %v223
      %v230 = vpack.c.b16 %v226, %v225
      %vm231 = vcmask 64512
      %v233 = vsel %vm231, %v227, 0
      %v236 = vsel %vm231, %v228, 0
      %v239 = vsel %vm231, %v229, 0
      %v242 = vsel %vm231, %v230, 0
      %vm244 = vcmask 1043456
      %v246 = vsel %vm244, %v210, 0
      %248 = vmatprep.subr.bf16.mxu0 0
      %249 = vmatpush1.bf16.msra.mxu0 0
      %250 = vmatprep.subr.bf16.mxu0 0
      %251 = vmatpush1.bf16.msra.mxu0 0
      %252 = vmatprep.subr.bf16.mxu0 0
      %253 = vmatpush1.bf16.msra.mxu0 0
      %254 = vmatprep.subr.bf16.mxu0 0
      %255 = vmatpush1.bf16.msra.mxu0 0
      %256 = vmatprep.subr.bf16.mxu0 0
      %257 = vmatpush1.bf16.msra.mxu0 0
      %258 = vmatprep.subr.bf16.mxu0 0
      %259 = vmatpush1.bf16.msra.mxu0 0
      %260 = vmatprep.subr.bf16.mxu0 0
      %261 = vmatpush1.bf16.msra.mxu0 0
      %262 = vmatprep.subr.bf16.mxu0 0
      %263 = vmatpush1.bf16.msra.mxu0 %v246
      %264 = vmatprep.subr.bf16.mxu0 0
      %265 = vmatpush2.bf16.msra.mxu0 0
      %266 = vmatprep.subr.bf16.mxu0 0
      %267 = vmatpush2.bf16.msra.mxu0 0
      %268 = vmatprep.subr.bf16.mxu0 0
      %269 = vmatpush2.bf16.msra.mxu0 0
      %270 = vmatprep.subr.bf16.mxu0 0
      %271 = vmatpush2.bf16.msra.mxu0 0
      %272 = vmatprep.subr.bf16.mxu0 0
      %273 = vmatpush2.bf16.msra.mxu0 0
      %274 = vmatprep.subr.bf16.mxu0 0
      %275 = vmatpush2.bf16.msra.mxu0 0
      %276 = vmatprep.subr.bf16.mxu0 0
      %277 = vmatpush2.bf16.msra.mxu0 0
      %278 = vmatprep.subr.bf16.mxu0 0
      %279 = vmatpush2.bf16.msra.mxu0 0
      %280 = vmatprep.mubr.bf16.mxu0 0
      %281 = vmatmul.mubr.bf16.gmra.mxu0 %v233
      %v282 = vpop.f32.mrf.mxu0
      %v283 = vadd.f32 0.0, %v282
      %v284 = vpop.f32.mrf.mxu0
      %v285 = vpop.f32.mrf.mxu0
      %v286 = vadd.f32 0.0, %v285
      %v287 = vpop.f32.mrf.mxu0
      %288 = vmatprep.mubr.bf16.mxu0 0
      %289 = vmatmul.mubr.bf16.gmra.mxu0 %v236
      %v290 = vpop.f32.mrf.mxu0
      %v291 = vadd.f32 0.0, %v290
      %v292 = vpop.f32.mrf.mxu0
      %v293 = vpop.f32.mrf.mxu0
      %v294 = vadd.f32 0.0, %v293
      %v295 = vpop.f32.mrf.mxu0
      %296 = vmatprep.mubr.bf16.mxu0 0
      %297 = vmatmul.mubr.bf16.gmra.mxu0 %v239
      %v298 = vpop.f32.mrf.mxu0
      %v299 = vadd.f32 0.0, %v298
      %v300 = vpop.f32.mrf.mxu0
      %v301 = vpop.f32.mrf.mxu0
      %v302 = vadd.f32 0.0, %v301
      %v303 = vpop.f32.mrf.mxu0
      %304 = vmatprep.mubr.bf16.mxu0 0
      %305 = vmatmul.mubr.bf16.gmra.mxu0 %v242
      %v306 = vpop.f32.mrf.mxu0
      %v307 = vadd.f32 0.0, %v306
      %v308 = vpop.f32.mrf.mxu0
      %v309 = vpop.f32.mrf.mxu0
      %v310 = vadd.f32 0.0, %v309
      %v311 = vpop.f32.mrf.mxu0
      %312 = vdwg.mxu0
      %v313 = vld [vmem:[#allocation2] sm:$0x1]
      %vm314 = vcmask 261120
      %v315 = vsel %vm314, %v283, -inf
      %v316 = vsel %vm314, %v286, -inf
      %v317 = vsel %vm314, %v291, -inf
      %v318 = vsel %vm314, %v294, -inf
      %v319 = vsel %vm314, %v299, -inf
      %v320 = vmax.f32 %v315, %v319
      %v321 = vsel %vm314, %v302, -inf
      %v322 = vmax.f32 %v316, %v321
      %v323 = vsel %vm314, %v307, -inf
      %v324 = vmax.f32 %v317, %v323
      %v325 = vsel %vm314, %v310, -inf
      %v326 = vmax.f32 %v318, %v325
      %v327 = vmax.f32 %v320, %v322
      %v328 = vmax.f32 %v324, %v326
      %v329 = vmax.f32 %v327, %v328
      %v330 = vrot.slane %v329, 4
      %v331 = vmax.f32 %v329, %v330
      %v332 = vrot.slane %v331, 2
      %v333 = vmax.f32 %v331, %v332
      %v334 = vrot.slane %v333, 1
      %v335 = vmax.f32 %v333, %v334
      %v336 = vmax.f32 %v313, %v335
      %vm337 = vcmask 253952
      %338 = vst.msk [vmem:[#allocation2] sm:$0x1] %vm337, %v336
      %v339 = vld [vmem:[#allocation2] sm:$0x1]
      %v340 = vld [vmem:[%s2] sm:$0x1]
      %v341 = vadd.f32 %v339, %v340
      %342 = vst.msk [vmem:[%s194] sm:$0x1] %vm337, %v341
      %p343 = scmp.lt.s32.totalorder %s18, 1
      %s344 = scalar_select %p343, %s18, 1
      %s345 = scalar_lea.vmem %s3, %s344
      // Predicated region
      $region37: #{haf_forward.4} parent=31 // pred_check
        %p346 = pneg %p114
      $region38: #{haf_forward.4} parent=31 // pred_check_branch
        %348 = sbr.rel (%p346) target = $region40
      $region39: #{haf_forward.4} parent=31 // pred_region
        _
      $region40: #{haf_forward.4} parent=31 // pred_fallthru
        _
    $region32: #{haf_forward.4} parent=5 // pred_fallthru
      _
    %p349 = scmp.le.s32.totalorder 2, %s9
    // Predicated region
    $region41: #{haf_forward.4} parent=5 // pred_check
      %p350 = pneg %p349
    $region42: #{haf_forward.4} parent=5 // pred_check_branch
      %352 = sbr.rel (%p350) target = $region44
    $region43: #{haf_forward.4} parent=5 // pred_region
      %s353 = ssub.s32 %s9, 2
      // Predicated region
      $region45: #{haf_forward.4} parent=43 // pred_check
        %p354 = pneg %p120
      $region46: #{haf_forward.4} parent=43 // pred_check_branch
        %356 = sbr.rel (%p354) target = $region48
      $region47: #{haf_forward.4} parent=43 // pred_region
        %p357 = scmp.lt.s32.totalorder %s20, 1
        %s358 = scalar_select %p357, %s20, 1
        %s359 = scalar_lea.vmem %s3, %s358
      $region48: #{haf_forward.4} parent=43 // pred_fallthru
        _
    $region44: #{haf_forward.4} parent=5 // pred_fallthru
      _
  $region6: #{haf_forward.4} parent=0 // loop_footer
    %s13 = sadd.s32 1, %s9
  $region7: #{haf_forward.4} parent=0 // loop_footer_branch
    %8 = sbr.rel target = $region3
  $region8: #{haf_forward.4} parent=0 // loop_exit
    _

// kernel: haf_forward.6
$region0: #{haf_forward.6}
  #allocation0 [shape = 'u32[]', space=smem, size = 0x4, offset = 0x4, fixed_abs, tag = 'smem constant byte address 0x4 - core index']
  #allocation1 [shape = 'u32[144,128]{1,0:T(1,128)}', space=vmem, size = 0x12000, scoped, tag = 'internal scratch']
  #allocation2 [shape = 'f32[1,1,64]{2,1,0:T(1,128)}', space=vmem, size = 0x200, scoped, tag = 'scratch operand']
  %s0 = inlined_call_operand.vmem [shape: bf16[2,8,8], index: 0, kind: input, shape index: {}]
  %s1 = inlined_call_operand.vmem [shape: bf16[8,64], index: 1, kind: input, shape index: {}]
  %s2 = inlined_call_operand.vmem [shape: f32[1,64], index: 2, kind: input, shape index: {}]
  %s3 = inlined_call_operand.vmem [shape: f32[2,1,64], index: 3, kind: output, shape index: {}]
  %s4 = sld [smem:[#allocation0]]
  $region49: #{haf_forward.6} parent=0
    _
  %s6 = ssub.s32 1, %s4
  %s7 = scalar_select 0, %s6, %s4
  loop: start=0, step=1, limit=4
  $region2: #{haf_forward.6} parent=0 // loop_pre_header
    _
  $region3: #{haf_forward.6} parent=0 // loop_header
    %s9 = sphi 0, %s13
    %p10 = scmp.ge.s32.totalorder %s9, 4
    %s16 = sphi 0, %s28
    %s17 = sphi 0, %s24
    %s18 = sphi 0, %s16
    %s19 = sphi 0, %s17
    %s20 = sphi 0, %s18
    %s21 = sphi 0, %s19
    %s33 = sphi 0, %s35
    %s36 = sphi 0, %s33
    %s37 = sphi 0, %s36
    %s53 = sphi 0, %s37
    %s57 = sphi 0, %s57
    %s59 = sphi 0, %s57
    %s60 = sphi 0, %s59
    %s74 = sphi 0, %s60
    %s78 = sphi 0, %s78
    %s80 = sphi 0, %s78
    %s81 = sphi 0, %s80
    %s95 = sphi 0, %s81
    %s101 = sphi 0, %s103
    %s104 = sphi 0, %s101
    %s105 = sphi 0, %s104
    %s121 = sphi 0, %s105
  $region4: #{haf_forward.6} parent=0 // loop_header_branch
    %12 = sbr.rel (%p10) target = $region8
  $region5: #{haf_forward.6} parent=0 // loop_body
    %s14 = ssub.s32 %s9, 1
    %s15 = ssub.s32 %s9, 2
    %s22 = sadd.s32 1, %s17
    %p23 = scmp.ge.s32.totalorder %s22, 1
    %s24 = scalar_select %p23, 0, %s22
    %s25 = sadd.s32 1, %s16
    %s26 = scalar_select %p23, %s25, %s16
    %p27 = scmp.ge.s32.totalorder %s26, 2
    %s28 = scalar_select %p27, 0, %s26
    %s29 = ssub.s32 %s16, %s28
    %s30 = ssub.s32 %s17, %s24
    %s31 = sor.u32 %s29, %s30
    %p32 = scmp.eq.s32.totalorder %s31, 0
    %s34 = sadd.s32 %s33, 1
    %s35 = scalar_select %p32, %s33, %s34
    %p38 = pneg %p32
    %p39 = scmp.eq.s32.totalorder %s9, 1
    %p40 = por %p38, %p39
    %p41 = scmp.ne.s32.totalorder %s33, %s36
    %p42 = scmp.eq.s32.totalorder %s9, 0
    %p43 = por %p41, %p42
    %p44 = scmp.ne.s32.totalorder %s33, %s36
    %p45 = scmp.eq.s32.totalorder %s14, 1
    %p46 = por %p44, %p45
    %p47 = scmp.ne.s32.totalorder %s36, %s37
    %p48 = scmp.eq.s32.totalorder %s14, 0
    %p49 = por %p47, %p48
    %p50 = scmp.ne.s32.totalorder %s36, %s37
    %p51 = scmp.eq.s32.totalorder %s15, 1
    %p52 = por %p50, %p51
    %p54 = scmp.ne.s32.totalorder %s37, %s53
    %p55 = scmp.eq.s32.totalorder %s15, 0
    %p56 = por %p54, %p55
    %s58 = sadd.s32 %s57, 1
    %p61 = scmp.eq.s32.totalorder %s9, 1
    %p62 = scmp.ne.s32.totalorder %s57, %s59
    %p63 = scmp.eq.s32.totalorder %s9, 0
    %p64 = por %p62, %p63
    %p65 = scmp.ne.s32.totalorder %s57, %s59
    %p66 = scmp.eq.s32.totalorder %s14, 1
    %p67 = por %p65, %p66
    %p68 = scmp.ne.s32.totalorder %s59, %s60
    %p69 = scmp.eq.s32.totalorder %s14, 0
    %p70 = por %p68, %p69
    %p71 = scmp.ne.s32.totalorder %s59, %s60
    %p72 = scmp.eq.s32.totalorder %s15, 1
    %p73 = por %p71, %p72
    %p75 = scmp.ne.s32.totalorder %s60, %s74
    %p76 = scmp.eq.s32.totalorder %s15, 0
    %p77 = por %p75, %p76
    %s79 = sadd.s32 %s78, 1
    %p82 = scmp.eq.s32.totalorder %s9, 1
    %p83 = scmp.ne.s32.totalorder %s78, %s80
    %p84 = scmp.eq.s32.totalorder %s9, 0
    %p85 = por %p83, %p84
    %p86 = scmp.ne.s32.totalorder %s78, %s80
    %p87 = scmp.eq.s32.totalorder %s14, 1
    %p88 = por %p86, %p87
    %p89 = scmp.ne.s32.totalorder %s80, %s81
    %p90 = scmp.eq.s32.totalorder %s14, 0
    %p91 = por %p89, %p90
    %p92 = scmp.ne.s32.totalorder %s80, %s81
    %p93 = scmp.eq.s32.totalorder %s15, 1
    %p94 = por %p92, %p93
    %p96 = scmp.ne.s32.totalorder %s81, %s95
    %p97 = scmp.eq.s32.totalorder %s15, 0
    %p98 = por %p96, %p97
    %s99 = ssub.s32 %s16, %s28
    %p100 = scmp.eq.s32.totalorder %s99, 0
    %s102 = sadd.s32 %s101, 1
    %s103 = scalar_select %p100, %s101, %s102
    %p106 = pneg %p100
    %p107 = scmp.eq.s32.totalorder %s9, 1
    %p108 = por %p106, %p107
    %p109 = scmp.ne.s32.totalorder %s101, %s104
    %p110 = scmp.eq.s32.totalorder %s9, 0
    %p111 = por %p109, %p110
    %p112 = scmp.ne.s32.totalorder %s101, %s104
    %p113 = scmp.eq.s32.totalorder %s14, 1
    %p114 = por %p112, %p113
    %p115 = scmp.ne.s32.totalorder %s104, %s105
    %p116 = scmp.eq.s32.totalorder %s14, 0
    %p117 = por %p115, %p116
    %p118 = scmp.ne.s32.totalorder %s104, %s105
    %p119 = scmp.eq.s32.totalorder %s15, 1
    %p120 = por %p118, %p119
    %p122 = scmp.ne.s32.totalorder %s105, %s121
    %p123 = scmp.eq.s32.totalorder %s15, 0
    %p124 = por %p122, %p123
    %p125 = scmp.le.s32.totalorder 1, %s9
    %p126 = scmp.lt.s32.totalorder %s9, 3
    %p127 = pnand %p125, %p126
    %p128 = pneg %p127
    // Predicated region
    $region9: #{haf_forward.6} parent=5 // pred_check
      _
    $region10: #{haf_forward.6} parent=5 // pred_check_branch
      %130 = sbr.rel (%p127) target = $region12
    $region11: #{haf_forward.6} parent=5 // pred_region
      %s131 = ssub.s32 %s9, 1
      // Predicated region
      $region13: #{haf_forward.6} parent=11 // pred_check
        %p132 = pneg %p70
      $region14: #{haf_forward.6} parent=11 // pred_check_branch
        %134 = sbr.rel (%p132) target = $region16
      $region15: #{haf_forward.6} parent=11 // pred_region
        _
      $region16: #{haf_forward.6} parent=11 // pred_fallthru
        _
      // Predicated region
      $region17: #{haf_forward.6} parent=11 // pred_check
        %p135 = pneg %p91
      $region18: #{haf_forward.6} parent=11 // pred_check_branch
        %137 = sbr.rel (%p135) target = $region20
      $region19: #{haf_forward.6} parent=11 // pred_region
        _
      $region20: #{haf_forward.6} parent=11 // pred_fallthru
        _
    $region12: #{haf_forward.6} parent=5 // pred_fallthru
      _
    %p138 = scmp.lt.s32.totalorder %s9, 2
    // Predicated region
    $region21: #{haf_forward.6} parent=5 // pred_check
      %p139 = pneg %p138
    $region22: #{haf_forward.6} parent=5 // pred_check_branch
      %141 = sbr.rel (%p139) target = $region24
    $region23: #{haf_forward.6} parent=5 // pred_region
      // Predicated region
      $region25: #{haf_forward.6} parent=23 // pred_check
        %p142 = pneg %p43
      $region26: #{haf_forward.6} parent=23 // pred_check_branch
        %144 = sbr.rel (%p142) target = $region28
      $region27: #{haf_forward.6} parent=23 // pred_region
        %p145 = scmp.lt.s32.totalorder %s16, 1
        %s146 = scalar_select %p145, %s16, 1
        %p147 = scmp.lt.s32.totalorder %s17, 0
        %s148 = scalar_select %p147, %s17, 0
        %s149 = sadd.s32 %s148, %s146
        %s150 = smul.addr %s149, 4
        %s151 = scalar_lea.vmem %s0, %s150
      $region28: #{haf_forward.6} parent=23 // pred_fallthru
        _
    $region24: #{haf_forward.6} parent=5 // pred_fallthru
      _
    %p152 = scmp.le.s32.totalorder 1, %s9
    %p153 = scmp.lt.s32.totalorder %s9, 3
    %p154 = pnand %p152, %p153
    %p155 = pneg %p154
    // Predicated region
    $region29: #{haf_forward.6} parent=5 // pred_check
      _
    $region30: #{haf_forward.6} parent=5 // pred_check_branch
      %157 = sbr.rel (%p154) target = $region32
    $region31: #{haf_forward.6} parent=5 // pred_region
      %s158 = ssub.s32 %s9, 1
      %p159 = scmp.lt.s32.totalorder %s18, 1
      %s160 = scalar_select %p159, %s18, 1
      %p161 = scmp.lt.s32.totalorder %s19, 0
      %s162 = scalar_select %p161, %s19, 0
      %s163 = sadd.s32 %s162, %s160
      %s164 = smul.addr %s163, 4
      %s165 = scalar_lea.vmem %s0, %s164
      %p166 = pneg %p49
      %p167 = pneg %p46
      %p168 = pneg %p70
      %p169 = pneg %p67
      %p170 = pneg %p91
      %p171 = pneg %p88
      %p172 = pneg %p117
      %p173 = pneg %p114
      %p174 = scmp.lt.s32.totalorder %s18, 1
      %s175 = scalar_select %p174, %s18, 1
      %s176 = scalar_lea.vmem %s3, %s175
      %p177 = scmp.lt.s32.totalorder %s18, 1
      %s178 = scalar_select %p177, %s18, 1
      %p179 = scmp.lt.s32.totalorder %s19, 0
      %s180 = scalar_select %p179, %s19, 0
      %s181 = sadd.s32 %s180, %s178
      %s182 = smul.addr %s181, 4
      %s183 = scalar_lea.vmem %s0, %s182
      %p184 = scmp.lt.s32.totalorder %s18, 1
      %s185 = scalar_select %p184, %s18, 1
      %s186 = scalar_lea.vmem %s3, %s185
      %p188 = scmp.eq.s32.totalorder %s19, 0
      // Predicated region
      $region33: #{haf_forward.6} parent=31 // pred_check
        %p189 = pneg %p188
      $region34: #{haf_forward.6} parent=31 // pred_check_branch
        %191 = sbr.rel (%p189) target = $region36
      $region35: #{haf_forward.6} parent=31 // pred_region
        %vm192 = vcmask 516096
        %193 = vst.msk [vmem:[#allocation2] sm:$0x1] %vm192, -inf
      $region36: #{haf_forward.6} parent=31 // pred_fallthru
        _
      %v194 = vld [vmem:[%s183] sm:$0xf]
      %v195 = vld [vmem:[%s1] sm:$0xf]
      %vm196 = vcmask 64512
      %v198 = vsel %vm196, %v194, 0
      %vm200 = vcmask 1043456
      %v202 = vsel %vm200, %v195, 0
      %204 = vmatprep.subr.bf16.mxu0 0
      %205 = vmatpush1.bf16.msra.mxu0 0
      %206 = vmatprep.subr.bf16.mxu0 0
      %207 = vmatpush1.bf16.msra.mxu0 0
      %208 = vmatprep.subr.bf16.mxu0 0
      %209 = vmatpush1.bf16.msra.mxu0 0
      %210 = vmatprep.subr.bf16.mxu0 0
      %211 = vmatpush1.bf16.msra.mxu0 0
      %212 = vmatprep.subr.bf16.mxu0 0
      %213 = vmatpush1.bf16.msra.mxu0 0
      %214 = vmatprep.subr.bf16.mxu0 0
      %215 = vmatpush1.bf16.msra.mxu0 0
      %216 = vmatprep.subr.bf16.mxu0 0
      %217 = vmatpush1.bf16.msra.mxu0 0
      %218 = vmatprep.subr.bf16.mxu0 0
      %219 = vmatpush1.bf16.msra.mxu0 %v202
      %220 = vmatprep.subr.bf16.mxu0 0
      %221 = vmatpush2.bf16.msra.mxu0 0
      %222 = vmatprep.subr.bf16.mxu0 0
      %223 = vmatpush2.bf16.msra.mxu0 0
      %224 = vmatprep.subr.bf16.mxu0 0
      %225 = vmatpush2.bf16.msra.mxu0 0
      %226 = vmatprep.subr.bf16.mxu0 0
      %227 = vmatpush2.bf16.msra.mxu0 0
      %228 = vmatprep.subr.bf16.mxu0 0
      %229 = vmatpush2.bf16.msra.mxu0 0
      %230 = vmatprep.subr.bf16.mxu0 0
      %231 = vmatpush2.bf16.msra.mxu0 0
      %232 = vmatprep.subr.bf16.mxu0 0
      %233 = vmatpush2.bf16.msra.mxu0 0
      %234 = vmatprep.subr.bf16.mxu0 0
      %235 = vmatpush2.bf16.msra.mxu0 0
      %236 = vmatprep.mubr.bf16.mxu0 0
      %237 = vmatmul.mubr.bf16.gmra.mxu0 %v198
      %v238 = vpop.f32.mrf.mxu0
      %v239 = vadd.f32 0.0, %v238
      %v240 = vpop.f32.mrf.mxu0
      %v241 = vpop.f32.mrf.mxu0
      %v242 = vpop.f32.mrf.mxu0
      %243 = vdwg.mxu0
      %v244 = vld [vmem:[#allocation2] sm:$0x1]
      %vm245 = vcmask 523264
      %v246 = vsel %vm245, %v239, -inf
      %v247 = vrot.slane %v246, 4
      %v248 = vmax.f32 %v246, %v247
      %v249 = vrot.slane %v248, 2
      %v250 = vmax.f32 %v248, %v249
      %v251 = vrot.slane %v250, 1
      %v252 = vmax.f32 %v250, %v251
      %v253 = vmax.f32 %v244, %v252
      %vm254 = vcmask 516096
      %255 = vst.msk [vmem:[#allocation2] sm:$0x1] %vm254, %v253
      %v256 = vld [vmem:[#allocation2] sm:$0x1]
      %v257 = vld [vmem:[%s2] sm:$0x1]
      %v258 = vadd.f32 %v256, %v257
      %259 = vst.msk [vmem:[%s186] sm:$0x1] %vm254, %v258
      %p260 = scmp.lt.s32.totalorder %s18, 1
      %s261 = scalar_select %p260, %s18, 1
      %s262 = scalar_lea.vmem %s3, %s261
      // Predicated region
      $region37: #{haf_forward.6} parent=31 // pred_check
        %p263 = pneg %p114
      $region38: #{haf_forward.6} parent=31 // pred_check_branch
        %265 = sbr.rel (%p263) target = $region40
      $region39: #{haf_forward.6} parent=31 // pred_region
        _
      $region40: #{haf_forward.6} parent=31 // pred_fallthru
        _
    $region32: #{haf_forward.6} parent=5 // pred_fallthru
      _
    %p266 = scmp.le.s32.totalorder 2, %s9
    // Predicated region
    $region41: #{haf_forward.6} parent=5 // pred_check
      %p267 = pneg %p266
    $region42: #{haf_forward.6} parent=5 // pred_check_branch
      %269 = sbr.rel (%p267) target = $region44
    $region43: #{haf_forward.6} parent=5 // pred_region
      %s270 = ssub.s32 %s9, 2
      // Predicated region
      $region45: #{haf_forward.6} parent=43 // pred_check
        %p271 = pneg %p120
      $region46: #{haf_forward.6} parent=43 // pred_check_branch
        %273 = sbr.rel (%p271) target = $region48
      $region47: #{haf_forward.6} parent=43 // pred_region
        %p274 = scmp.lt.s32.totalorder %s20, 1
        %s275 = scalar_select %p274, %s20, 1
        %s276 = scalar_lea.vmem %s3, %s275
      $region48: #{haf_forward.6} parent=43 // pred_fallthru
        _
    $region44: #{haf_forward.6} parent=5 // pred_fallthru
      _
  $region6: #{haf_forward.6} parent=0 // loop_footer
    %s13 = sadd.s32 1, %s9
  $region7: #{haf_forward.6} parent=0 // loop_footer_branch
    %8 = sbr.rel target = $region3
  $region8: #{haf_forward.6} parent=0 // loop_exit
    _

// kernel: haf_forward.7
$region0: #{haf_forward.7}
  #allocation0 [shape = 'u32[]', space=smem, size = 0x4, offset = 0x4, fixed_abs, tag = 'smem constant byte address 0x4 - core index']
  #allocation1 [shape = 'u32[144,128]{1,0:T(1,128)}', space=vmem, size = 0x12000, scoped, tag = 'internal scratch']
  %s0 = inlined_call_operand.vmem [shape: bf16[2,128], index: 0, kind: input, shape index: {}]
  %s1 = inlined_call_operand.vmem [shape: bf16[128,2048], index: 1, kind: input, shape index: {}]
  %s2 = inlined_call_operand.vmem [shape: f32[1,2048], index: 2, kind: input, shape index: {}]
  %s3 = inlined_call_operand.vmem [shape: bf16[2048,1024], index: 3, kind: input, shape index: {}]
  %s4 = inlined_call_operand.vmem [shape: f32[1,1024], index: 4, kind: input, shape index: {}]
  %s5 = inlined_call_operand.hbm [shape: f32[2,1024], index: 5, kind: output, shape index: {}]
  %s6 = sld [smem:[#allocation0]]
  $region30: #{haf_forward.7} parent=0
    _
  %s8 = ssub.s32 1, %s6
  %s9 = scalar_select 0, %s8, %s6
  $region1: #{haf_forward.7} parent=0
    #allocation2 [shape = 'u8[8192]{0}', space=vmem, size = 0x2000, scoped, tag = 'output window, operand 0, single buffered']
    #allocation3 [shape = 's32[1]{0}', space=sflag, size = 0x4, scoped, tag = 'scoped memory for haf_forward.7']
    %10 = vsyncpa [#allocation3], 0
    // Predicated region
    $region2: #{haf_forward.7} parent=1 // pred_check
      _
    $region3: #{haf_forward.7} parent=1 // pred_check_branch
      %12 = sbr.rel (0) target = $region5
    $region4: #{haf_forward.7} parent=1 // pred_region
      _
    $region5: #{haf_forward.7} parent=1 // pred_fallthru
      _
    // Predicated region
    $region6: #{haf_forward.7} parent=1 // pred_check
      _
    $region7: #{haf_forward.7} parent=1 // pred_check_branch
      %14 = sbr.rel (0) target = $region9
    $region8: #{haf_forward.7} parent=1 // pred_region
      _
    $region9: #{haf_forward.7} parent=1 // pred_fallthru
      _
    // Predicated region
    $region10: #{haf_forward.7} parent=1 // pred_check
      _
    $region11: #{haf_forward.7} parent=1 // pred_check_branch
      %16 = sbr.rel (0) target = $region13
    $region12: #{haf_forward.7} parent=1 // pred_region
      _
    $region13: #{haf_forward.7} parent=1 // pred_fallthru
      _
    // Predicated region
    $region14: #{haf_forward.7} parent=1 // pred_check
      _
    $region15: #{haf_forward.7} parent=1 // pred_check_branch
      %18 = sbr.rel (0) target = $region17
    $region16: #{haf_forward.7} parent=1 // pred_region
      _
    $region17: #{haf_forward.7} parent=1 // pred_fallthru
      _
    // Predicated region
    $region18: #{haf_forward.7} parent=1 // pred_check
      _
    $region19: #{haf_forward.7} parent=1 // pred_check_branch
      %20 = sbr.rel (0) target = $region21
    $region20: #{haf_forward.7} parent=1 // pred_region
      _
    $region21: #{haf_forward.7} parent=1 // pred_fallthru
      _
    %v22 = vld [vmem:[%s0] sm:$0x1]
    %v23 = vld [vmem:[%s1] sm:$0xff]
    %v24 = vld [vmem:[%s1 + $0x8] sm:$0xff]
    %v25 = vld [vmem:[%s1 + $0x10] sm:$0xff]
    %v26 = vld [vmem:[%s1 + $0x18] sm:$0xff]
    %v27 = vld [vmem:[%s1 + $0x20] sm:$0xff]
    %v28 = vld [vmem:[%s1 + $0x28] sm:$0xff]
    %v29 = vld [vmem:[%s1 + $0x30] sm:$0xff]
    %v30 = vld [vmem:[%s1 + $0x38] sm:$0xff]
    %v31 = vld [vmem:[%s1 + $0x40] sm:$0xff]
    %v32 = vld [vmem:[%s1 + $0x48] sm:$0xff]
    %v33 = vld [vmem:[%s1 + $0x50] sm:$0xff]
    %v34 = vld [vmem:[%s1 + $0x58] sm:$0xff]
    %v35 = vld [vmem:[%s1 + $0x60] sm:$0xff]
    %v36 = vld [vmem:[%s1 + $0x68] sm:$0xff]
    %v37 = vld [vmem:[%s1 + $0x70] sm:$0xff]
    %v38 = vld [vmem:[%s1 + $0x78] sm:$0xff]
    %v39 = vld [vmem:[%s1 + $0x80] sm:$0xff]
    %v40 = vld [vmem:[%s1 + $0x88] sm:$0xff]
    %v41 = vld [vmem:[%s1 + $0x90] sm:$0xff]
    %v42 = vld [vmem:[%s1 + $0x98] sm:$0xff]
    %v43 = vld [vmem:[%s1 + $0xa0] sm:$0xff]
    %v44 = vld [vmem:[%s1 + $0xa8] sm:$0xff]
    %v45 = vld [vmem:[%s1 + $0xb0] sm:$0xff]
    %v46 = vld [vmem:[%s1 + $0xb8] sm:$0xff]
    %v47 = vld [vmem:[%s1 + $0xc0] sm:$0xff]
    %v48 = vld [vmem:[%s1 + $0xc8] sm:$0xff]
    %v49 = vld [vmem:[%s1 + $0xd0] sm:$0xff]
    %v50 = vld [vmem:[%s1 + $0xd8] sm:$0xff]
    %v51 = vld [vmem:[%s1 + $0xe0] sm:$0xff]
    %v52 = vld [vmem:[%s1 + $0xe8] sm:$0xff]
    %v53 = vld [vmem:[%s1 + $0xf0] sm:$0xff]
    %v54 = vld [vmem:[%s1 + $0xf8] sm:$0xff]
    %v55 = vld [vmem:[%s1 + $0x100] sm:$0xff]
    %v56 = vld [vmem:[%s1 + $0x108] sm:$0xff]
    %v57 = vld [vmem:[%s1 + $0x110] sm:$0xff]
    %v58 = vld [vmem:[%s1 + $0x118] sm:$0xff]
    %v59 = vld [vmem:[%s1 + $0x120] sm:$0xff]
    %v60 = vld [vmem:[%s1 + $0x128] sm:$0xff]
    %v61 = vld [vmem:[%s1 + $0x130] sm:$0xff]
    %v62 = vld [vmem:[%s1 + $0x138] sm:$0xff]
    %v63 = vld [vmem:[%s1 + $0x140] sm:$0xff]
    %v64 = vld [vmem:[%s1 + $0x148] sm:$0xff]
    %v65 = vld [vmem:[%s1 + $0x150] sm:$0xff]
    %v66 = vld [vmem:[%s1 + $0x158] sm:$0xff]
    %v67 = vld [vmem:[%s1 + $0x160] sm:$0xff]
    %v68 = vld [vmem:[%s1 + $0x168] sm:$0xff]
    %v69 = vld [vmem:[%s1 + $0x170] sm:$0xff]
    %v70 = vld [vmem:[%s1 + $0x178] sm:$0xff]
    %v71 = vld [vmem:[%s1 + $0x180] sm:$0xff]
    %v72 = vld [vmem:[%s1 + $0x188] sm:$0xff]
    %v73 = vld [vmem:[%s1 + $0x190] sm:$0xff]
    %v74 = vld [vmem:[%s1 + $0x198] sm:$0xff]
    %v75 = vld [vmem:[%s1 + $0x1a0] sm:$0xff]
    %v76 = vld [vmem:[%s1 + $0x1a8] sm:$0xff]
    %v77 = vld [vmem:[%s1 + $0x1b0] sm:$0xff]
    %v78 = vld [vmem:[%s1 + $0x1b8] sm:$0xff]
    %v79 = vld [vmem:[%s1 + $0x1c0] sm:$0xff]
    %v80 = vld [vmem:[%s1 + $0x1c8] sm:$0xff]
    %v81 = vld [vmem:[%s1 + $0x1d0] sm:$0xff]
    %v82 = vld [vmem:[%s1 + $0x1d8] sm:$0xff]
    %v83 = vld [vmem:[%s1 + $0x1e0] sm:$0xff]
    %v84 = vld [vmem:[%s1 + $0x1e8] sm:$0xff]
    %v85 = vld [vmem:[%s1 + $0x1f0] sm:$0xff]
    %v86 = vld [vmem:[%s1 + $0x1f8] sm:$0xff]
    %v87 = vld [vmem:[%s1 + $0x200] sm:$0xff]
    %v88 = vld [vmem:[%s1 + $0x208] sm:$0xff]
    %v89 = vld [vmem:[%s1 + $0x210] sm:$0xff]
    %v90 = vld [vmem:[%s1 + $0x218] sm:$0xff]
    %v91 = vld [vmem:[%s1 + $0x220] sm:$0xff]
    %v92 = vld [vmem:[%s1 + $0x228] sm:$0xff]
    %v93 = vld [vmem:[%s1 + $0x230] sm:$0xff]
    %v94 = vld [vmem:[%s1 + $0x238] sm:$0xff]
    %v95 = vld [vmem:[%s1 + $0x240] sm:$0xff]
    %v96 = vld [vmem:[%s1 + $0x248] sm:$0xff]
    %v97 = vld [vmem:[%s1 + $0x250] sm:$0xff]
    %v98 = vld [vmem:[%s1 + $0x258] sm:$0xff]
    %v99 = vld [vmem:[%s1 + $0x260] sm:$0xff]
    %v100 = vld [vmem:[%s1 + $0x268] sm:$0xff]
    %v101 = vld [vmem:[%s1 + $0x270] sm:$0xff]
    %v102 = vld [vmem:[%s1 + $0x278] sm:$0xff]
    %v103 = vld [vmem:[%s1 + $0x280] sm:$0xff]
    %v104 = vld [vmem:[%s1 + $0x288] sm:$0xff]
    %v105 = vld [vmem:[%s1 + $0x290] sm:$0xff]
    %v106 = vld [vmem:[%s1 + $0x298] sm:$0xff]
    %v107 = vld [vmem:[%s1 + $0x2a0] sm:$0xff]
    %v108 = vld [vmem:[%s1 + $0x2a8] sm:$0xff]
    %v109 = vld [vmem:[%s1 + $0x2b0] sm:$0xff]
    %v110 = vld [vmem:[%s1 + $0x2b8] sm:$0xff]
    %v111 = vld [vmem:[%s1 + $0x2c0] sm:$0xff]
    %v112 = vld [vmem:[%s1 + $0x2c8] sm:$0xff]
    %v113 = vld [vmem:[%s1 + $0x2d0] sm:$0xff]
    %v114 = vld [vmem:[%s1 + $0x2d8] sm:$0xff]
    %v115 = vld [vmem:[%s1 + $0x2e0] sm:$0xff]
    %v116 = vld [vmem:[%s1 + $0x2e8] sm:$0xff]
    %v117 = vld [vmem:[%s1 + $0x2f0] sm:$0xff]
    %v118 = vld [vmem:[%s1 + $0x2f8] sm:$0xff]
    %v119 = vld [vmem:[%s1 + $0x300] sm:$0xff]
    %v120 = vld [vmem:[%s1 + $0x308] sm:$0xff]
    %v121 = vld [vmem:[%s1 + $0x310] sm:$0xff]
    %v122 = vld [vmem:[%s1 + $0x318] sm:$0xff]
    %v123 = vld [vmem:[%s1 + $0x320] sm:$0xff]
    %v124 = vld [vmem:[%s1 + $0x328] sm:$0xff]
    %v125 = vld [vmem:[%s1 + $0x330] sm:$0xff]
    %v126 = vld [vmem:[%s1 + $0x338] sm:$0xff]
    %v127 = vld [vmem:[%s1 + $0x340] sm:$0xff]
    %v128 = vld [vmem:[%s1 + $0x348] sm:$0xff]
    %v129 = vld [vmem:[%s1 + $0x350] sm:$0xff]
    %v130 = vld [vmem:[%s1 + $0x358] sm:$0xff]
    %v131 = vld [vmem:[%s1 + $0x360] sm:$0xff]
    %v132 = vld [vmem:[%s1 + $0x368] sm:$0xff]
    %v133 = vld [vmem:[%s1 + $0x370] sm:$0xff]
    %v134 = vld [vmem:[%s1 + $0x378] sm:$0xff]
    %v135 = vld [vmem:[%s1 + $0x380] sm:$0xff]
    %v136 = vld [vmem:[%s1 + $0x388] sm:$0xff]
    %v137 = vld [vmem:[%s1 + $0x390] sm:$0xff]
    %v138 = vld [vmem:[%s1 + $0x398] sm:$0xff]
    %v139 = vld [vmem:[%s1 + $0x3a0] sm:$0xff]
    %v140 = vld [vmem:[%s1 + $0x3a8] sm:$0xff]
    %v141 = vld [vmem:[%s1 + $0x3b0] sm:$0xff]
    %v142 = vld [vmem:[%s1 + $0x3b8] sm:$0xff]
    %v143 = vld [vmem:[%s1 + $0x3c0] sm:$0xff]
    %v144 = vld [vmem:[%s1 + $0x3c8] sm:$0xff]
    %v145 = vld [vmem:[%s1 + $0x3d0] sm:$0xff]
    %v146 = vld [vmem:[%s1 + $0x3d8] sm:$0xff]
    %v147 = vld [vmem:[%s1 + $0x3e0] sm:$0xff]
    %v148 = vld [vmem:[%s1 + $0x3e8] sm:$0xff]
    %v149 = vld [vmem:[%s1 + $0x3f0] sm:$0xff]
    %v150 = vld [vmem:[%s1 + $0x3f8] sm:$0xff]
    %v151 = vld [vmem:[%s2] sm:$0xff]
    %v152 = vld [vmem:[%s2 + $0x8] sm:$0xff]
    %v155 = vlaneseq
    %v156 = vshrl.u32 %v155, 7
    %v157 = vsub.s32 0, %v156
    %v158 = vrot.slane %v151, %v157
    %v159 = vlaneseq
    %v160 = vshrl.u32 %v159, 7
    %v161 = vsub.s32 1, %v160
    %v162 = vrot.slane %v151, %v161
    %v163 = vlaneseq
    %v164 = vshrl.u32 %v163, 7
    %v165 = vsub.s32 2, %v164
    %v166 = vrot.slane %v151, %v165
    %v167 = vlaneseq
    %v168 = vshrl.u32 %v167, 7
    %v169 = vsub.s32 3, %v168
    %v170 = vrot.slane %v151, %v169
    %v171 = vlaneseq
    %v172 = vshrl.u32 %v171, 7
    %v173 = vsub.s32 4, %v172
    %v174 = vrot.slane %v151, %v173
    %v175 = vlaneseq
    %v176 = vshrl.u32 %v175, 7
    %v177 = vsub.s32 5, %v176
    %v178 = vrot.slane %v151, %v177
    %v179 = vlaneseq
    %v180 = vshrl.u32 %v179, 7
    %v181 = vsub.s32 6, %v180
    %v182 = vrot.slane %v151, %v181
    %v183 = vlaneseq
    %v184 = vshrl.u32 %v183, 7
    %v185 = vsub.s32 7, %v184
    %v186 = vrot.slane %v151, %v185
    %v187 = vlaneseq
    %v188 = vshrl.u32 %v187, 7
    %v189 = vsub.s32 0, %v188
    %v190 = vrot.slane %v152, %v189
    %v191 = vlaneseq
    %v192 = vshrl.u32 %v191, 7
    %v193 = vsub.s32 1, %v192
    %v194 = vrot.slane %v152, %v193
    %v195 = vlaneseq
    %v196 = vshrl.u32 %v195, 7
    %v197 = vsub.s32 2, %v196
    %v198 = vrot.slane %v152, %v197
    %v199 = vlaneseq
    %v200 = vshrl.u32 %v199, 7
    %v201 = vsub.s32 3, %v200
    %v202 = vrot.slane %v152, %v201
    %v203 = vlaneseq
    %v204 = vshrl.u32 %v203, 7
    %v205 = vsub.s32 4, %v204
    %v206 = vrot.slane %v152, %v205
    %v207 = vlaneseq
    %v208 = vshrl.u32 %v207, 7
    %v209 = vsub.s32 5, %v208
    %v210 = vrot.slane %v152, %v209
    %v211 = vlaneseq
    %v212 = vshrl.u32 %v211, 7
    %v213 = vsub.s32 6, %v212
    %v214 = vrot.slane %v152, %v213
    %v215 = vlaneseq
    %v216 = vshrl.u32 %v215, 7
    %v217 = vsub.s32 7, %v216
    %v218 = vrot.slane %v152, %v217
    %v363 = vunpack.c.l.b16 %v23
    %v364 = vunpack.c.h.b16 %v23
    %v365 = vunpack.c.l.b16 %v24
    %v366 = vunpack.c.h.b16 %v24
    %v367 = vunpack.c.l.b16 %v25
    %v368 = vunpack.c.h.b16 %v25
    %v369 = vunpack.c.l.b16 %v26
    %v370 = vunpack.c.h.b16 %v26
    %v371 = vunpack.c.l.b16 %v27
    %v372 = vunpack.c.h.b16 %v27
    %v373 = vunpack.c.l.b16 %v28
    %v374 = vunpack.c.h.b16 %v28
    %v375 = vunpack.c.l.b16 %v29
    %v376 = vunpack.c.h.b16 %v29
    %v377 = vunpack.c.l.b16 %v30
    %v378 = vunpack.c.h.b16 %v30
    %v379 = vunpack.c.l.b16 %v31
    %v380 = vunpack.c.h.b16 %v31
    %v381 = vunpack.c.l.b16 %v32
    %v382 = vunpack.c.h.b16 %v32
    %v383 = vunpack.c.l.b16 %v33
    %v384 = vunpack.c.h.b16 %v33
    %v385 = vunpack.c.l.b16 %v34
    %v386 = vunpack.c.h.b16 %v34
    %v387 = vunpack.c.l.b16 %v35
    %v388 = vunpack.c.h.b16 %v35
    %v389 = vunpack.c.l.b16 %v36
    %v390 = vunpack.c.h.b16 %v36
    %v391 = vunpack.c.l.b16 %v37
    %v392 = vunpack.c.h.b16 %v37
    %v393 = vunpack.c.l.b16 %v38
    %v394 = vunpack.c.h.b16 %v38
    %v395 = vunpack.c.l.b16 %v39
    %v396 = vunpack.c.h.b16 %v39
    %v397 = vunpack.c.l.b16 %v40
    %v398 = vunpack.c.h.b16 %v40
    %v399 = vunpack.c.l.b16 %v41
    %v400 = vunpack.c.h.b16 %v41
    %v401 = vunpack.c.l.b16 %v42
    %v402 = vunpack.c.h.b16 %v42
    %v403 = vunpack.c.l.b16 %v43
    %v404 = vunpack.c.h.b16 %v43
    %v405 = vunpack.c.l.b16 %v44
    %v406 = vunpack.c.h.b16 %v44
    %v407 = vunpack.c.l.b16 %v45
    %v408 = vunpack.c.h.b16 %v45
    %v409 = vunpack.c.l.b16 %v46
    %v410 = vunpack.c.h.b16 %v46
    %v411 = vunpack.c.l.b16 %v47
    %v412 = vunpack.c.h.b16 %v47
    %v413 = vunpack.c.l.b16 %v48
    %v414 = vunpack.c.h.b16 %v48
    %v415 = vunpack.c.l.b16 %v49
    %v416 = vunpack.c.h.b16 %v49
    %v417 = vunpack.c.l.b16 %v50
    %v418 = vunpack.c.h.b16 %v50
    %v419 = vunpack.c.l.b16 %v51
    %v420 = vunpack.c.h.b16 %v51
    %v421 = vunpack.c.l.b16 %v52
    %v422 = vunpack.c.h.b16 %v52
    %v423 = vunpack.c.l.b16 %v53
    %v424 = vunpack.c.h.b16 %v53
    %v425 = vunpack.c.l.b16 %v54
    %v426 = vunpack.c.h.b16 %v54
    %v427 = vunpack.c.l.b16 %v55
    %v428 = vunpack.c.h.b16 %v55
    %v429 = vunpack.c.l.b16 %v56
    %v430 = vunpack.c.h.b16 %v56
    %v431 = vunpack.c.l.b16 %v57
    %v432 = vunpack.c.h.b16 %v57
    %v433 = vunpack.c.l.b16 %v58
    %v434 = vunpack.c.h.b16 %v58
    %v435 = vunpack.c.l.b16 %v59
    %v436 = vunpack.c.h.b16 %v59
    %v437 = vunpack.c.l.b16 %v60
    %v438 = vunpack.c.h.b16 %v60
    %v439 = vunpack.c.l.b16 %v61
    %v440 = vunpack.c.h.b16 %v61
    %v441 = vunpack.c.l.b16 %v62
    %v442 = vunpack.c.h.b16 %v62
    %v443 = vunpack.c.l.b16 %v63
    %v444 = vunpack.c.h.b16 %v63
    %v445 = vunpack.c.l.b16 %v64
    %v446 = vunpack.c.h.b16 %v64
    %v447 = vunpack.c.l.b16 %v65
    %v448 = vunpack.c.h.b16 %v65
    %v449 = vunpack.c.l.b16 %v66
    %v450 = vunpack.c.h.b16 %v66
    %v451 = vunpack.c.l.b16 %v67
    %v452 = vunpack.c.h.b16 %v67
    %v453 = vunpack.c.l.b16 %v68
    %v454 = vunpack.c.h.b16 %v68
    %v455 = vunpack.c.l.b16 %v69
    %v456 = vunpack.c.h.b16 %v69
    %v457 = vunpack.c.l.b16 %v70
    %v458 = vunpack.c.h.b16 %v70
    %v459 = vunpack.c.l.b16 %v71
    %v460 = vunpack.c.h.b16 %v71
    %v461 = vunpack.c.l.b16 %v72
    %v462 = vunpack.c.h.b16 %v72
    %v463 = vunpack.c.l.b16 %v73
    %v464 = vunpack.c.h.b16 %v73
    %v465 = vunpack.c.l.b16 %v74
    %v466 = vunpack.c.h.b16 %v74
    %v467 = vunpack.c.l.b16 %v75
    %v468 = vunpack.c.h.b16 %v75
    %v469 = vunpack.c.l.b16 %v76
    %v470 = vunpack.c.h.b16 %v76
    %v471 = vunpack.c.l.b16 %v77
    %v472 = vunpack.c.h.b16 %v77
    %v473 = vunpack.c.l.b16 %v78
    %v474 = vunpack.c.h.b16 %v78
    %v475 = vunpack.c.l.b16 %v79
    %v476 = vunpack.c.h.b16 %v79
    %v477 = vunpack.c.l.b16 %v80
    %v478 = vunpack.c.h.b16 %v80
    %v479 = vunpack.c.l.b16 %v81
    %v480 = vunpack.c.h.b16 %v81
    %v481 = vunpack.c.l.b16 %v82
    %v482 = vunpack.c.h.b16 %v82
    %v483 = vunpack.c.l.b16 %v83
    %v484 = vunpack.c.h.b16 %v83
    %v485 = vunpack.c.l.b16 %v84
    %v486 = vunpack.c.h.b16 %v84
    %v487 = vunpack.c.l.b16 %v85
    %v488 = vunpack.c.h.b16 %v85
    %v489 = vunpack.c.l.b16 %v86
    %v490 = vunpack.c.h.b16 %v86
    %v491 = vunpack.c.l.b16 %v87
    %v492 = vunpack.c.h.b16 %v87
    %v493 = vunpack.c.l.b16 %v88
    %v494 = vunpack.c.h.b16 %v88
    %v495 = vunpack.c.l.b16 %v89
    %v496 = vunpack.c.h.b16 %v89
    %v497 = vunpack.c.l.b16 %v90
    %v498 = vunpack.c.h.b16 %v90
    %v499 = vunpack.c.l.b16 %v91
    %v500 = vunpack.c.h.b16 %v91
    %v501 = vunpack.c.l.b16 %v92
    %v502 = vunpack.c.h.b16 %v92
    %v503 = vunpack.c.l.b16 %v93
    %v504 = vunpack.c.h.b16 %v93
    %v505 = vunpack.c.l.b16 %v94
    %v506 = vunpack.c.h.b16 %v94
    %v507 = vunpack.c.l.b16 %v95
    %v508 = vunpack.c.h.b16 %v95
    %v509 = vunpack.c.l.b16 %v96
    %v510 = vunpack.c.h.b16 %v96
    %v511 = vunpack.c.l.b16 %v97
    %v512 = vunpack.c.h.b16 %v97
    %v513 = vunpack.c.l.b16 %v98
    %v514 = vunpack.c.h.b16 %v98
    %v515 = vunpack.c.l.b16 %v99
    %v516 = vunpack.c.h.b16 %v99
    %v517 = vunpack.c.l.b16 %v100
    %v518 = vunpack.c.h.b16 %v100
    %v519 = vunpack.c.l.b16 %v101
    %v520 = vunpack.c.h.b16 %v101
    %v521 = vunpack.c.l.b16 %v102
    %v522 = vunpack.c.h.b16 %v102
    %v523 = vunpack.c.l.b16 %v103
    %v524 = vunpack.c.h.b16 %v103
    %v525 = vunpack.c.l.b16 %v104
    %v526 = vunpack.c.h.b16 %v104
    %v527 = vunpack.c.l.b16 %v105
    %v528 = vunpack.c.h.b16 %v105
    %v529 = vunpack.c.l.b16 %v106
    %v530 = vunpack.c.h.b16 %v106
    %v531 = vunpack.c.l.b16 %v107
    %v532 = vunpack.c.h.b16 %v107
    %v533 = vunpack.c.l.b16 %v108
    %v534 = vunpack.c.h.b16 %v108
    %v535 = vunpack.c.l.b16 %v109
    %v536 = vunpack.c.h.b16 %v109
    %v537 = vunpack.c.l.b16 %v110
    %v538 = vunpack.c.h.b16 %v110
    %v539 = vunpack.c.l.b16 %v111
    %v540 = vunpack.c.h.b16 %v111
    %v541 = vunpack.c.l.b16 %v112
    %v542 = vunpack.c.h.b16 %v112
    %v543 = vunpack.c.l.b16 %v113
    %v544 = vunpack.c.h.b16 %v113
    %v545 = vunpack.c.l.b16 %v114
    %v546 = vunpack.c.h.b16 %v114
    %v547 = vunpack.c.l.b16 %v115
    %v548 = vunpack.c.h.b16 %v115
    %v549 = vunpack.c.l.b16 %v116
    %v550 = vunpack.c.h.b16 %v116
    %v551 = vunpack.c.l.b16 %v117
    %v552 = vunpack.c.h.b16 %v117
    %v553 = vunpack.c.l.b16 %v118
    %v554 = vunpack.c.h.b16 %v118
    %v555 = vunpack.c.l.b16 %v119
    %v556 = vunpack.c.h.b16 %v119
    %v557 = vunpack.c.l.b16 %v120
    %v558 = vunpack.c.h.b16 %v120
    %v559 = vunpack.c.l.b16 %v121
    %v560 = vunpack.c.h.b16 %v121
    %v561 = vunpack.c.l.b16 %v122
    %v562 = vunpack.c.h.b16 %v122
    %v563 = vunpack.c.l.b16 %v123
    %v564 = vunpack.c.h.b16 %v123
    %v565 = vunpack.c.l.b16 %v124
    %v566 = vunpack.c.h.b16 %v124
    %v567 = vunpack.c.l.b16 %v125
    %v568 = vunpack.c.h.b16 %v125
    %v569 = vunpack.c.l.b16 %v126
    %v570 = vunpack.c.h.b16 %v126
    %v571 = vunpack.c.l.b16 %v127
    %v572 = vunpack.c.h.b16 %v127
    %v573 = vunpack.c.l.b16 %v128
    %v574 = vunpack.c.h.b16 %v128
    %v575 = vunpack.c.l.b16 %v129
    %v576 = vunpack.c.h.b16 %v129
    %v577 = vunpack.c.l.b16 %v130
    %v578 = vunpack.c.h.b16 %v130
    %v579 = vunpack.c.l.b16 %v131
    %v580 = vunpack.c.h.b16 %v131
    %v581 = vunpack.c.l.b16 %v132
    %v582 = vunpack.c.h.b16 %v132
    %v583 = vunpack.c.l.b16 %v133
    %v584 = vunpack.c.h.b16 %v133
    %v585 = vunpack.c.l.b16 %v134
    %v586 = vunpack.c.h.b16 %v134
    %v587 = vunpack.c.l.b16 %v135
    %v588 = vunpack.c.h.b16 %v135
    %v589 = vunpack.c.l.b16 %v136
    %v590 = vunpack.c.h.b16 %v136
    %v591 = vunpack.c.l.b16 %v137
    %v592 = vunpack.c.h.b16 %v137
    %v593 = vunpack.c.l.b16 %v138
    %v594 = vunpack.c.h.b16 %v138
    %v595 = vunpack.c.l.b16 %v139
    %v596 = vunpack.c.h.b16 %v139
    %v597 = vunpack.c.l.b16 %v140
    %v598 = vunpack.c.h.b16 %v140
    %v599 = vunpack.c.l.b16 %v141
    %v600 = vunpack.c.h.b16 %v141
    %v601 = vunpack.c.l.b16 %v142
    %v602 = vunpack.c.h.b16 %v142
    %v603 = vunpack.c.l.b16 %v143
    %v604 = vunpack.c.h.b16 %v143
    %v605 = vunpack.c.l.b16 %v144
    %v606 = vunpack.c.h.b16 %v144
    %v607 = vunpack.c.l.b16 %v145
    %v608 = vunpack.c.h.b16 %v145
    %v609 = vunpack.c.l.b16 %v146
    %v610 = vunpack.c.h.b16 %v146
    %v611 = vunpack.c.l.b16 %v147
    %v612 = vunpack.c.h.b16 %v147
    %v613 = vunpack.c.l.b16 %v148
    %v614 = vunpack.c.h.b16 %v148
    %v615 = vunpack.c.l.b16 %v149
    %v616 = vunpack.c.h.b16 %v149
    %v617 = vunpack.c.l.b16 %v150
    %v618 = vunpack.c.h.b16 %v150
    %v619 = vpack.c.b16 %v379, %v363
    %v620 = vpack.c.b16 %v380, %v364
    %v621 = vpack.c.b16 %v381, %v365
    %v622 = vpack.c.b16 %v382, %v366
    %v623 = vpack.c.b16 %v383, %v367
    %v624 = vpack.c.b16 %v384, %v368
    %v625 = vpack.c.b16 %v385, %v369
    %v626 = vpack.c.b16 %v386, %v370
    %v627 = vpack.c.b16 %v387, %v371
    %v628 = vpack.c.b16 %v388, %v372
    %v629 = vpack.c.b16 %v389, %v373
    %v630 = vpack.c.b16 %v390, %v374
    %v631 = vpack.c.b16 %v391, %v375
    %v632 = vpack.c.b16 %v392, %v376
    %v633 = vpack.c.b16 %v393, %v377
    %v634 = vpack.c.b16 %v394, %v378
    %v635 = vpack.c.b16 %v411, %v395
    %v636 = vpack.c.b16 %v412, %v396
    %v637 = vpack.c.b16 %v413, %v397
    %v638 = vpack.c.b16 %v414, %v398
    %v639 = vpack.c.b16 %v415, %v399
    %v640 = vpack.c.b16 %v416, %v400
    %v641 = vpack.c.b16 %v417, %v401
    %v642 = vpack.c.b16 %v418, %v402
    %v643 = vpack.c.b16 %v419, %v403
    %v644 = vpack.c.b16 %v420, %v404
    %v645 = vpack.c.b16 %v421, %v405
    %v646 = vpack.c.b16 %v422, %v406
    %v647 = vpack.c.b16 %v423, %v407
    %v648 = vpack.c.b16 %v424, %v408
    %v649 = vpack.c.b16 %v425, %v409
    %v650 = vpack.c.b16 %v426, %v410
    %v651 = vpack.c.b16 %v443, %v427
    %v652 = vpack.c.b16 %v444, %v428
    %v653 = vpack.c.b16 %v445, %v429
    %v654 = vpack.c.b16 %v446, %v430
    %v655 = vpack.c.b16 %v447, %v431
    %v656 = vpack.c.b16 %v448, %v432
    %v657 = vpack.c.b16 %v449, %v433
    %v658 = vpack.c.b16 %v450, %v434
    %v659 = vpack.c.b16 %v451, %v435
    %v660 = vpack.c.b16 %v452, %v436
    %v661 = vpack.c.b16 %v453, %v437
    %v662 = vpack.c.b16 %v454, %v438
    %v663 = vpack.c.b16 %v455, %v439
    %v664 = vpack.c.b16 %v456, %v440
    %v665 = vpack.c.b16 %v457, %v441
    %v666 = vpack.c.b16 %v458, %v442
    %v667 = vpack.c.b16 %v475, %v459
    %v668 = vpack.c.b16 %v476, %v460
    %v669 = vpack.c.b16 %v477, %v461
    %v670 = vpack.c.b16 %v478, %v462
    %v671 = vpack.c.b16 %v479, %v463
    %v672 = vpack.c.b16 %v480, %v464
    %v673 = vpack.c.b16 %v481, %v465
    %v674 = vpack.c.b16 %v482, %v466
    %v675 = vpack.c.b16 %v483, %v467
    %v676 = vpack.c.b16 %v484, %v468
    %v677 = vpack.c.b16 %v485, %v469
    %v678 = vpack.c.b16 %v486, %v470
    %v679 = vpack.c.b16 %v487, %v471
    %v680 = vpack.c.b16 %v488, %v472
    %v681 = vpack.c.b16 %v489, %v473
    %v682 = vpack.c.b16 %v490, %v474
    %v683 = vpack.c.b16 %v507, %v491
    %v684 = vpack.c.b16 %v508, %v492
    %v685 = vpack.c.b16 %v509, %v493
    %v686 = vpack.c.b16 %v510, %v494
    %v687 = vpack.c.b16 %v511, %v495
    %v688 = vpack.c.b16 %v512, %v496
    %v689 = vpack.c.b16 %v513, %v497
    %v690 = vpack.c.b16 %v514, %v498
    %v691 = vpack.c.b16 %v515, %v499
    %v692 = vpack.c.b16 %v516, %v500
    %v693 = vpack.c.b16 %v517, %v501
    %v694 = vpack.c.b16 %v518, %v502
    %v695 = vpack.c.b16 %v519, %v503
    %v696 = vpack.c.b16 %v520, %v504
    %v697 = vpack.c.b16 %v521, %v505
    %v698 = vpack.c.b16 %v522, %v506
    %v699 = vpack.c.b16 %v539, %v523
    %v700 = vpack.c.b16 %v540, %v524
    %v701 = vpack.c.b16 %v541, %v525
    %v702 = vpack.c.b16 %v542, %v526
    %v703 = vpack.c.b16 %v543, %v527
    %v704 = vpack.c.b16 %v544, %v528
    %v705 = vpack.c.b16 %v545, %v529
    %v706 = vpack.c.b16 %v546, %v530
    %v707 = vpack.c.b16 %v547, %v531
    %v708 = vpack.c.b16 %v548, %v532
    %v709 = vpack.c.b16 %v549, %v533
    %v710 = vpack.c.b16 %v550, %v534
    %v711 = vpack.c.b16 %v551, %v535
    %v712 = vpack.c.b16 %v552, %v536
    %v713 = vpack.c.b16 %v553, %v537
    %v714 = vpack.c.b16 %v554, %v538
    %v715 = vpack.c.b16 %v571, %v555
    %v716 = vpack.c.b16 %v572, %v556
    %v717 = vpack.c.b16 %v573, %v557
    %v718 = vpack.c.b16 %v574, %v558
    %v719 = vpack.c.b16 %v575, %v559
    %v720 = vpack.c.b16 %v576, %v560
    %v721 = vpack.c.b16 %v577, %v561
    %v722 = vpack.c.b16 %v578, %v562
    %v723 = vpack.c.b16 %v579, %v563
    %v724 = vpack.c.b16 %v580, %v564
    %v725 = vpack.c.b16 %v581, %v565
    %v726 = vpack.c.b16 %v582, %v566
    %v727 = vpack.c.b16 %v583, %v567
    %v728 = vpack.c.b16 %v584, %v568
    %v729 = vpack.c.b16 %v585, %v569
    %v730 = vpack.c.b16 %v586, %v570
    %v731 = vpack.c.b16 %v603, %v587
    %v732 = vpack.c.b16 %v604, %v588
    %v733 = vpack.c.b16 %v605, %v589
    %v734 = vpack.c.b16 %v606, %v590
    %v735 = vpack.c.b16 %v607, %v591
    %v736 = vpack.c.b16 %v608, %v592
    %v737 = vpack.c.b16 %v609, %v593
    %v738 = vpack.c.b16 %v610, %v594
    %v739 = vpack.c.b16 %v611, %v595
    %v740 = vpack.c.b16 %v612, %v596
    %v741 = vpack.c.b16 %v613, %v597
    %v742 = vpack.c.b16 %v614, %v598
    %v743 = vpack.c.b16 %v615, %v599
    %v744 = vpack.c.b16 %v616, %v600
    %v745 = vpack.c.b16 %v617, %v601
    %v746 = vpack.c.b16 %v618, %v602
    %875 = vmatprep.subr.bf16.mxu0 %v732
    %876 = vmatpush1.bf16.msra.mxu0 %v731
    %877 = vmatprep.subr.bf16.mxu0 %v716
    %878 = vmatpush1.bf16.msra.mxu0 %v715
    %879 = vmatprep.subr.bf16.mxu0 %v700
    %880 = vmatpush1.bf16.msra.mxu0 %v699
    %881 = vmatprep.subr.bf16.mxu0 %v684
    %882 = vmatpush1.bf16.msra.mxu0 %v683
    %883 = vmatprep.subr.bf16.mxu0 %v668
    %884 = vmatpush1.bf16.msra.mxu0 %v667
    %885 = vmatprep.subr.bf16.mxu0 %v652
    %886 = vmatpush1.bf16.msra.mxu0 %v651
    %887 = vmatprep.subr.bf16.mxu0 %v636
    %888 = vmatpush1.bf16.msra.mxu0 %v635
    %889 = vmatprep.subr.bf16.mxu0 %v620
    %890 = vmatpush1.bf16.msra.mxu0 %v619
    %891 = vmatprep.subr.bf16.mxu0 0
    %892 = vmatpush2.bf16.msra.mxu0 0
    %893 = vmatprep.subr.bf16.mxu0 0
    %894 = vmatpush2.bf16.msra.mxu0 0
    %895 = vmatprep.subr.bf16.mxu0 0
    %896 = vmatpush2.bf16.msra.mxu0 0
    %897 = vmatprep.subr.bf16.mxu0 0
    %898 = vmatpush2.bf16.msra.mxu0 0
    %899 = vmatprep.subr.bf16.mxu0 0
    %900 = vmatpush2.bf16.msra.mxu0 0
    %901 = vmatprep.subr.bf16.mxu0 0
    %902 = vmatpush2.bf16.msra.mxu0 0
    %903 = vmatprep.subr.bf16.mxu0 0
    %904 = vmatpush2.bf16.msra.mxu0 0
    %905 = vmatprep.subr.bf16.mxu0 0
    %906 = vmatpush2.bf16.msra.mxu0 0
    %907 = vmatprep.mubr.bf16.mxu0 0
    %908 = vmatmul.mubr.bf16.gmra.mxu0 %v22
    %v909 = vpop.f32.mrf.mxu0
    %v910 = vadd.f32 %v158, %v909
    %v911 = vpop.f32.mrf.mxu0
    %v912 = vadd.f32 %v162, %v911
    %v913 = vpop.f32.mrf.mxu0
    %v914 = vpop.f32.mrf.mxu0
    %915 = vdwg.mxu0
    %916 = vmatprep.subr.bf16.mxu0 %v734
    %917 = vmatpush1.bf16.msra.mxu0 %v733
    %918 = vmatprep.subr.bf16.mxu0 %v718
    %919 = vmatpush1.bf16.msra.mxu0 %v717
    %920 = vmatprep.subr.bf16.mxu0 %v702
    %921 = vmatpush1.bf16.msra.mxu0 %v701
    %922 = vmatprep.subr.bf16.mxu0 %v686
    %923 = vmatpush1.bf16.msra.mxu0 %v685
    %924 = vmatprep.subr.bf16.mxu0 %v670
    %925 = vmatpush1.bf16.msra.mxu0 %v669
    %926 = vmatprep.subr.bf16.mxu0 %v654
    %927 = vmatpush1.bf16.msra.mxu0 %v653
    %928 = vmatprep.subr.bf16.mxu0 %v638
    %929 = vmatpush1.bf16.msra.mxu0 %v637
    %930 = vmatprep.subr.bf16.mxu0 %v622
    %931 = vmatpush1.bf16.msra.mxu0 %v621
    %932 = vmatprep.subr.bf16.mxu0 0
    %933 = vmatpush2.bf16.msra.mxu0 0
    %934 = vmatprep.subr.bf16.mxu0 0
    %935 = vmatpush2.bf16.msra.mxu0 0
    %936 = vmatprep.subr.bf16.mxu0 0
    %937 = vmatpush2.bf16.msra.mxu0 0
    %938 = vmatprep.subr.bf16.mxu0 0
    %939 = vmatpush2.bf16.msra.mxu0 0
    %940 = vmatprep.subr.bf16.mxu0 0
    %941 = vmatpush2.bf16.msra.mxu0 0
    %942 = vmatprep.subr.bf16.mxu0 0
    %943 = vmatpush2.bf16.msra.mxu0 0
    %944 = vmatprep.subr.bf16.mxu0 0
    %945 = vmatpush2.bf16.msra.mxu0 0
    %946 = vmatprep.subr.bf16.mxu0 0
    %947 = vmatpush2.bf16.msra.mxu0 0
    %948 = vmatprep.mubr.bf16.mxu0 0
    %949 = vmatmul.mubr.bf16.gmra.mxu0 %v22
    %v950 = vpop.f32.mrf.mxu0
    %v951 = vadd.f32 %v166, %v950
    %v952 = vpop.f32.mrf.mxu0
    %v953 = vadd.f32 %v170, %v952
    %v954 = vpop.f32.mrf.mxu0
    %v955 = vpop.f32.mrf.mxu0
    %956 = vdwg.mxu0
    %957 = vmatprep.subr.bf16.mxu0 %v736
    %958 = vmatpush1.bf16.msra.mxu0 %v735
    %959 = vmatprep.subr.bf16.mxu0 %v720
    %960 = vmatpush1.bf16.msra.mxu0 %v719
    %961 = vmatprep.subr.bf16.mxu0 %v704
    %962 = vmatpush1.bf16.msra.mxu0 %v703
    %963 = vmatprep.subr.bf16.mxu0 %v688
    %964 = vmatpush1.bf16.msra.mxu0 %v687
    %965 = vmatprep.subr.bf16.mxu0 %v672
    %966 = vmatpush1.bf16.msra.mxu0 %v671
    %967 = vmatprep.subr.bf16.mxu0 %v656
    %968 = vmatpush1.bf16.msra.mxu0 %v655
    %969 = vmatprep.subr.bf16.mxu0 %v640
    %970 = vmatpush1.bf16.msra.mxu0 %v639
    %971 = vmatprep.subr.bf16.mxu0 %v624
    %972 = vmatpush1.bf16.msra.mxu0 %v623
    %973 = vmatprep.subr.bf16.mxu0 0
    %974 = vmatpush2.bf16.msra.mxu0 0
    %975 = vmatprep.subr.bf16.mxu0 0
    %976 = vmatpush2.bf16.msra.mxu0 0
    %977 = vmatprep.subr.bf16.mxu0 0
    %978 = vmatpush2.bf16.msra.mxu0 0
    %979 = vmatprep.subr.bf16.mxu0 0
    %980 = vmatpush2.bf16.msra.mxu0 0
    %981 = vmatprep.subr.bf16.mxu0 0
    %982 = vmatpush2.bf16.msra.mxu0 0
    %983 = vmatprep.subr.bf16.mxu0 0
    %984 = vmatpush2.bf16.msra.mxu0 0
    %985 = vmatprep.subr.bf16.mxu0 0
    %986 = vmatpush2.bf16.msra.mxu0 0
    %987 = vmatprep.subr.bf16.mxu0 0
    %988 = vmatpush2.bf16.msra.mxu0 0
    %989 = vmatprep.mubr.bf16.mxu0 0
    %990 = vmatmul.mubr.bf16.gmra.mxu0 %v22
    %v991 = vpop.f32.mrf.mxu0
    %v992 = vadd.f32 %v174, %v991
    %v993 = vpop.f32.mrf.mxu0
    %v994 = vadd.f32 %v178, %v993
    %v995 = vpop.f32.mrf.mxu0
    %v996 = vpop.f32.mrf.mxu0
    %997 = vdwg.mxu0
    %998 = vmatprep.subr.bf16.mxu0 %v738
    %999 = vmatpush1.bf16.msra.mxu0 %v737
    %1000 = vmatprep.subr.bf16.mxu0 %v722
    %1001 = vmatpush1.bf16.msra.mxu0 %v721
    %1002 = vmatprep.subr.bf16.mxu0 %v706
    %1003 = vmatpush1.bf16.msra.mxu0 %v705
    %1004 = vmatprep.subr.bf16.mxu0 %v690
    %1005 = vmatpush1.bf16.msra.mxu0 %v689
    %1006 = vmatprep.subr.bf16.mxu0 %v674
    %1007 = vmatpush1.bf16.msra.mxu0 %v673
    %1008 = vmatprep.subr.bf16.mxu0 %v658
    %1009 = vmatpush1.bf16.msra.mxu0 %v657
    %1010 = vmatprep.subr.bf16.mxu0 %v642
    %1011 = vmatpush1.bf16.msra.mxu0 %v641
    %1012 = vmatprep.subr.bf16.mxu0 %v626
    %1013 = vmatpush1.bf16.msra.mxu0 %v625
    %1014 = vmatprep.subr.bf16.mxu0 0
    %1015 = vmatpush2.bf16.msra.mxu0 0
    %1016 = vmatprep.subr.bf16.mxu0 0
    %1017 = vmatpush2.bf16.msra.mxu0 0
    %1018 = vmatprep.subr.bf16.mxu0 0
    %1019 = vmatpush2.bf16.msra.mxu0 0
    %1020 = vmatprep.subr.bf16.mxu0 0
    %1021 = vmatpush2.bf16.msra.mxu0 0
    %1022 = vmatprep.subr.bf16.mxu0 0
    %1023 = vmatpush2.bf16.msra.mxu0 0
    %1024 = vmatprep.subr.bf16.mxu0 0
    %1025 = vmatpush2.bf16.msra.mxu0 0
    %1026 = vmatprep.subr.bf16.mxu0 0
    %1027 = vmatpush2.bf16.msra.mxu0 0
    %1028 = vmatprep.subr.bf16.mxu0 0
    %1029 = vmatpush2.bf16.msra.mxu0 0
    %1030 = vmatprep.mubr.bf16.mxu0 0
    %1031 = vmatmul.mubr.bf16.gmra.mxu0 %v22
    %v1032 = vpop.f32.mrf.mxu0
    %v1033 = vadd.f32 %v182, %v1032
    %v1034 = vpop.f32.mrf.mxu0
    %v1035 = vadd.f32 %v186, %v1034
    %v1036 = vpop.f32.mrf.mxu0
    %v1037 = vpop.f32.mrf.mxu0
    %1038 = vdwg.mxu0
    %1039 = vmatprep.subr.bf16.mxu0 %v740
    %1040 = vmatpush1.bf16.msra.mxu0 %v739
    %1041 = vmatprep.subr.bf16.mxu0 %v724
    %1042 = vmatpush1.bf16.msra.mxu0 %v723
    %1043 = vmatprep.subr.bf16.mxu0 %v708
    %1044 = vmatpush1.bf16.msra.mxu0 %v707
    %1045 = vmatprep.subr.bf16.mxu0 %v692
    %1046 = vmatpush1.bf16.msra.mxu0 %v691
    %1047 = vmatprep.subr.bf16.mxu0 %v676
    %1048 = vmatpush1.bf16.msra.mxu0 %v675
    %1049 = vmatprep.subr.bf16.mxu0 %v660
    %1050 = vmatpush1.bf16.msra.mxu0 %v659
    %1051 = vmatprep.subr.bf16.mxu0 %v644
    %1052 = vmatpush1.bf16.msra.mxu0 %v643
    %1053 = vmatprep.subr.bf16.mxu0 %v628
    %1054 = vmatpush1.bf16.msra.mxu0 %v627
    %1055 = vmatprep.subr.bf16.mxu0 0
    %1056 = vmatpush2.bf16.msra.mxu0 0
    %1057 = vmatprep.subr.bf16.mxu0 0
    %1058 = vmatpush2.bf16.msra.mxu0 0
    %1059 = vmatprep.subr.bf16.mxu0 0
    %1060 = vmatpush2.bf16.msra.mxu0 0
    %1061 = vmatprep.subr.bf16.mxu0 0
    %1062 = vmatpush2.bf16.msra.mxu0 0
    %1063 = vmatprep.subr.bf16.mxu0 0
    %1064 = vmatpush2.bf16.msra.mxu0 0
    %1065 = vmatprep.subr.bf16.mxu0 0
    %1066 = vmatpush2.bf16.msra.mxu0 0
    %1067 = vmatprep.subr.bf16.mxu0 0
    %1068 = vmatpush2.bf16.msra.mxu0 0
    %1069 = vmatprep.subr.bf16.mxu0 0
    %1070 = vmatpush2.bf16.msra.mxu0 0
    %1071 = vmatprep.mubr.bf16.mxu0 0
    %1072 = vmatmul.mubr.bf16.gmra.mxu0 %v22
    %v1073 = vpop.f32.mrf.mxu0
    %v1074 = vadd.f32 %v190, %v1073
    %v1075 = vpop.f32.mrf.mxu0
    %v1076 = vadd.f32 %v194, %v1075
    %v1077 = vpop.f32.mrf.mxu0
    %v1078 = vpop.f32.mrf.mxu0
    %1079 = vdwg.mxu0
    %1080 = vmatprep.subr.bf16.mxu0 %v742
    %1081 = vmatpush1.bf16.msra.mxu0 %v741
    %1082 = vmatprep.subr.bf16.mxu0 %v726
    %1083 = vmatpush1.bf16.msra.mxu0 %v725
    %1084 = vmatprep.subr.bf16.mxu0 %v710
    %1085 = vmatpush1.bf16.msra.mxu0 %v709
    %1086 = vmatprep.subr.bf16.mxu0 %v694
    %1087 = vmatpush1.bf16.msra.mxu0 %v693
    %1088 = vmatprep.subr.bf16.mxu0 %v678
    %1089 = vmatpush1.bf16.msra.mxu0 %v677
    %1090 = vmatprep.subr.bf16.mxu0 %v662
    %1091 = vmatpush1.bf16.msra.mxu0 %v661
    %1092 = vmatprep.subr.bf16.mxu0 %v646
    %1093 = vmatpush1.bf16.msra.mxu0 %v645
    %1094 = vmatprep.subr.bf16.mxu0 %v630
    %1095 = vmatpush1.bf16.msra.mxu0 %v629
    %1096 = vmatprep.subr.bf16.mxu0 0
    %1097 = vmatpush2.bf16.msra.mxu0 0
    %1098 = vmatprep.subr.bf16.mxu0 0
    %1099 = vmatpush2.bf16.msra.mxu0 0
    %1100 = vmatprep.subr.bf16.mxu0 0
    %1101 = vmatpush2.bf16.msra.mxu0 0
    %1102 = vmatprep.subr.bf16.mxu0 0
    %1103 = vmatpush2.bf16.msra.mxu0 0
    %1104 = vmatprep.subr.bf16.mxu0 0
    %1105 = vmatpush2.bf16.msra.mxu0 0
    %1106 = vmatprep.subr.bf16.mxu0 0
    %1107 = vmatpush2.bf16.msra.mxu0 0
    %1108 = vmatprep.subr.bf16.mxu0 0
    %1109 = vmatpush2.bf16.msra.mxu0 0
    %1110 = vmatprep.subr.bf16.mxu0 0
    %1111 = vmatpush2.bf16.msra.mxu0 0
    %1112 = vmatprep.mubr.bf16.mxu0 0
    %1113 = vmatmul.mubr.bf16.gmra.mxu0 %v22
    %v1114 = vpop.f32.mrf.mxu0
    %v1115 = vadd.f32 %v198, %v1114
    %v1116 = vpop.f32.mrf.mxu0
    %v1117 = vadd.f32 %v202, %v1116
    %v1118 = vpop.f32.mrf.mxu0
    %v1119 = vpop.f32.mrf.mxu0
    %1120 = vdwg.mxu0
    %1121 = vmatprep.subr.bf16.mxu0 %v744
    %1122 = vmatpush1.bf16.msra.mxu0 %v743
    %1123 = vmatprep.subr.bf16.mxu0 %v728
    %1124 = vmatpush1.bf16.msra.mxu0 %v727
    %1125 = vmatprep.subr.bf16.mxu0 %v712
    %1126 = vmatpush1.bf16.msra.mxu0 %v711
    %1127 = vmatprep.subr.bf16.mxu0 %v696
    %1128 = vmatpush1.bf16.msra.mxu0 %v695
    %1129 = vmatprep.subr.bf16.mxu0 %v680
    %1130 = vmatpush1.bf16.msra.mxu0 %v679
    %1131 = vmatprep.subr.bf16.mxu0 %v664
    %1132 = vmatpush1.bf16.msra.mxu0 %v663
    %1133 = vmatprep.subr.bf16.mxu0 %v648
    %1134 = vmatpush1.bf16.msra.mxu0 %v647
    %1135 = vmatprep.subr.bf16.mxu0 %v632
    %1136 = vmatpush1.bf16.msra.mxu0 %v631
    %1137 = vmatprep.subr.bf16.mxu0 0
    %1138 = vmatpush2.bf16.msra.mxu0 0
    %1139 = vmatprep.subr.bf16.mxu0 0
    %1140 = vmatpush2.bf16.msra.mxu0 0
    %1141 = vmatprep.subr.bf16.mxu0 0
    %1142 = vmatpush2.bf16.msra.mxu0 0
    %1143 = vmatprep.subr.bf16.mxu0 0
    %1144 = vmatpush2.bf16.msra.mxu0 0
    %1145 = vmatprep.subr.bf16.mxu0 0
    %1146 = vmatpush2.bf16.msra.mxu0 0
    %1147 = vmatprep.subr.bf16.mxu0 0
    %1148 = vmatpush2.bf16.msra.mxu0 0
    %1149 = vmatprep.subr.bf16.mxu0 0
    %1150 = vmatpush2.bf16.msra.mxu0 0
    %1151 = vmatprep.subr.bf16.mxu0 0
    %1152 = vmatpush2.bf16.msra.mxu0 0
    %1153 = vmatprep.mubr.bf16.mxu0 0
    %1154 = vmatmul.mubr.bf16.gmra.mxu0 %v22
    %v1155 = vpop.f32.mrf.mxu0
    %v1156 = vadd.f32 %v206, %v1155
    %v1157 = vpop.f32.mrf.mxu0
    %v1158 = vadd.f32 %v210, %v1157
    %v1159 = vpop.f32.mrf.mxu0
    %v1160 = vpop.f32.mrf.mxu0
    %1161 = vdwg.mxu0
    %1162 = vmatprep.subr.bf16.mxu0 %v746
    %1163 = vmatpush1.bf16.msra.mxu0 %v745
    %1164 = vmatprep.subr.bf16.mxu0 %v730
    %1165 = vmatpush1.bf16.msra.mxu0 %v729
    %1166 = vmatprep.subr.bf16.mxu0 %v714
    %1167 = vmatpush1.bf16.msra.mxu0 %v713
    %1168 = vmatprep.subr.bf16.mxu0 %v698
    %1169 = vmatpush1.bf16.msra.mxu0 %v697
    %1170 = vmatprep.subr.bf16.mxu0 %v682
    %1171 = vmatpush1.bf16.msra.mxu0 %v681
    %1172 = vmatprep.subr.bf16.mxu0 %v666
    %1173 = vmatpush1.bf16.msra.mxu0 %v665
    %1174 = vmatprep.subr.bf16.mxu0 %v650
    %1175 = vmatpush1.bf16.msra.mxu0 %v649
    %1176 = vmatprep.subr.bf16.mxu0 %v634
    %1177 = vmatpush1.bf16.msra.mxu0 %v633
    %1178 = vmatprep.subr.bf16.mxu0 0
    %1179 = vmatpush2.bf16.msra.mxu0 0
    %1180 = vmatprep.subr.bf16.mxu0 0
    %1181 = vmatpush2.bf16.msra.mxu0 0
    %1182 = vmatprep.subr.bf16.mxu0 0
    %1183 = vmatpush2.bf16.msra.mxu0 0
    %1184 = vmatprep.subr.bf16.mxu0 0
    %1185 = vmatpush2.bf16.msra.mxu0 0
    %1186 = vmatprep.subr.bf16.mxu0 0
    %1187 = vmatpush2.bf16.msra.mxu0 0
    %1188 = vmatprep.subr.bf16.mxu0 0
    %1189 = vmatpush2.bf16.msra.mxu0 0
    %1190 = vmatprep.subr.bf16.mxu0 0
    %1191 = vmatpush2.bf16.msra.mxu0 0
    %1192 = vmatprep.subr.bf16.mxu0 0
    %1193 = vmatpush2.bf16.msra.mxu0 0
    %1194 = vmatprep.mubr.bf16.mxu0 0
    %1195 = vmatmul.mubr.bf16.gmra.mxu0 %v22
    %v1196 = vpop.f32.mrf.mxu0
    %v1197 = vadd.f32 %v214, %v1196
    %v1198 = vpop.f32.mrf.mxu0
    %v1199 = vadd.f32 %v218, %v1198
    %v1200 = vpop.f32.mrf.mxu0
    %v1201 = vpop.f32.mrf.mxu0
    %1202 = vdwg.mxu0
    %v1203 = vmax.f32 %v910, 0.0
    %v1204 = vmax.f32 %v912, 0.0
    %v1205 = vmax.f32 %v951, 0.0
    %v1206 = vmax.f32 %v953, 0.0
    %v1207 = vmax.f32 %v992, 0.0
    %v1208 = vmax.f32 %v994, 0.0
    %v1209 = vmax.f32 %v1033, 0.0
    %v1210 = vmax.f32 %v1035, 0.0
    %v1211 = vmax.f32 %v1074, 0.0
    %v1212 = vmax.f32 %v1076, 0.0
    %v1213 = vmax.f32 %v1115, 0.0
    %v1214 = vmax.f32 %v1117, 0.0
    %v1215 = vmax.f32 %v1156, 0.0
    %v1216 = vmax.f32 %v1158, 0.0
    %v1217 = vmax.f32 %v1197, 0.0
    %v1218 = vmax.f32 %v1199, 0.0
    %v1219 = vpack.c.bf16 %v1203, %v1203
    %v1220 = vpack.c.bf16 %v1204, %v1204
    %v1221 = vpack.c.bf16 %v1205, %v1205
    %v1222 = vpack.c.bf16 %v1206, %v1206
    %v1223 = vpack.c.bf16 %v1207, %v1207
    %v1224 = vpack.c.bf16 %v1208, %v1208
    %v1225 = vpack.c.bf16 %v1209, %v1209
    %v1226 = vpack.c.bf16 %v1210, %v1210
    %v1227 = vpack.c.bf16 %v1211, %v1211
    %v1228 = vpack.c.bf16 %v1212, %v1212
    %v1229 = vpack.c.bf16 %v1213, %v1213
    %v1230 = vpack.c.bf16 %v1214, %v1214
    %v1231 = vpack.c.bf16 %v1215, %v1215
    %v1232 = vpack.c.bf16 %v1216, %v1216
    %v1233 = vpack.c.bf16 %v1217, %v1217
    %v1234 = vpack.c.bf16 %v1218, %v1218
    %v1235 = vld [vmem:[%s3] sm:$0xff]
    %v1236 = vld [vmem:[%s3 + $0x8] sm:$0xff]
    %v1237 = vld [vmem:[%s3 + $0x10] sm:$0xff]
    %v1238 = vld [vmem:[%s3 + $0x18] sm:$0xff]
    %v1239 = vld [vmem:[%s3 + $0x20] sm:$0xff]
    %v1240 = vld [vmem:[%s3 + $0x28] sm:$0xff]
    %v1241 = vld [vmem:[%s3 + $0x30] sm:$0xff]
    %v1242 = vld [vmem:[%s3 + $0x38] sm:$0xff]
    %v1243 = vld [vmem:[%s3 + $0x40] sm:$0xff]
    %v1244 = vld [vmem:[%s3 + $0x48] sm:$0xff]
    %v1245 = vld [vmem:[%s3 + $0x50] sm:$0xff]
    %v1246 = vld [vmem:[%s3 + $0x58] sm:$0xff]
    %v1247 = vld [vmem:[%s3 + $0x60] sm:$0xff]
    %v1248 = vld [vmem:[%s3 + $0x68] sm:$0xff]
    %v1249 = vld [vmem:[%s3 + $0x70] sm:$0xff]
    %v1250 = vld [vmem:[%s3 + $0x78] sm:$0xff]
    %v1251 = vld [vmem:[%s3 + $0x80] sm:$0xff]
    %v1252 = vld [vmem:[%s3 + $0x88] sm:$0xff]
    %v1253 = vld [vmem:[%s3 + $0x90] sm:$0xff]
    %v1254 = vld [vmem:[%s3 + $0x98] sm:$0xff]
    %v1255 = vld [vmem:[%s3 + $0xa0] sm:$0xff]
    %v1256 = vld [vmem:[%s3 + $0xa8] sm:$0xff]
    %v1257 = vld [vmem:[%s3 + $0xb0] sm:$0xff]
    %v1258 = vld [vmem:[%s3 + $0xb8] sm:$0xff]
    %v1259 = vld [vmem:[%s3 + $0xc0] sm:$0xff]
    %v1260 = vld [vmem:[%s3 + $0xc8] sm:$0xff]
    %v1261 = vld [vmem:[%s3 + $0xd0] sm:$0xff]
    %v1262 = vld [vmem:[%s3 + $0xd8] sm:$0xff]
    %v1263 = vld [vmem:[%s3 + $0xe0] sm:$0xff]
    %v1264 = vld [vmem:[%s3 + $0xe8] sm:$0xff]
    %v1265 = vld [vmem:[%s3 + $0xf0] sm:$0xff]
    %v1266 = vld [vmem:[%s3 + $0xf8] sm:$0xff]
    %v1267 = vld [vmem:[%s3 + $0x100] sm:$0xff]
    %v1268 = vld [vmem:[%s3 + $0x108] sm:$0xff]
    %v1269 = vld [vmem:[%s3 + $0x110] sm:$0xff]
    %v1270 = vld [vmem:[%s3 + $0x118] sm:$0xff]
    %v1271 = vld [vmem:[%s3 + $0x120] sm:$0xff]
    %v1272 = vld [vmem:[%s3 + $0x128] sm:$0xff]
    %v1273 = vld [vmem:[%s3 + $0x130] sm:$0xff]
    %v1274 = vld [vmem:[%s3 + $0x138] sm:$0xff]
    %v1275 = vld [vmem:[%s3 + $0x140] sm:$0xff]
    %v1276 = vld [vmem:[%s3 + $0x148] sm:$0xff]
    %v1277 = vld [vmem:[%s3 + $0x150] sm:$0xff]
    %v1278 = vld [vmem:[%s3 + $0x158] sm:$0xff]
    %v1279 = vld [vmem:[%s3 + $0x160] sm:$0xff]
    %v1280 = vld [vmem:[%s3 + $0x168] sm:$0xff]
    %v1281 = vld [vmem:[%s3 + $0x170] sm:$0xff]
    %v1282 = vld [vmem:[%s3 + $0x178] sm:$0xff]
    %v1283 = vld [vmem:[%s3 + $0x180] sm:$0xff]
    %v1284 = vld [vmem:[%s3 + $0x188] sm:$0xff]
    %v1285 = vld [vmem:[%s3 + $0x190] sm:$0xff]
    %v1286 = vld [vmem:[%s3 + $0x198] sm:$0xff]
    %v1287 = vld [vmem:[%s3 + $0x1a0] sm:$0xff]
    %v1288 = vld [vmem:[%s3 + $0x1a8] sm:$0xff]
    %v1289 = vld [vmem:[%s3 + $0x1b0] sm:$0xff]
    %v1290 = vld [vmem:[%s3 + $0x1b8] sm:$0xff]
    %v1291 = vld [vmem:[%s3 + $0x1c0] sm:$0xff]
    %v1292 = vld [vmem:[%s3 + $0x1c8] sm:$0xff]
    %v1293 = vld [vmem:[%s3 + $0x1d0] sm:$0xff]
    %v1294 = vld [vmem:[%s3 + $0x1d8] sm:$0xff]
    %v1295 = vld [vmem:[%s3 + $0x1e0] sm:$0xff]
    %v1296 = vld [vmem:[%s3 + $0x1e8] sm:$0xff]
    %v1297 = vld [vmem:[%s3 + $0x1f0] sm:$0xff]
    %v1298 = vld [vmem:[%s3 + $0x1f8] sm:$0xff]
    %v1299 = vld [vmem:[%s3 + $0x200] sm:$0xff]
    %v1300 = vld [vmem:[%s3 + $0x208] sm:$0xff]
    %v1301 = vld [vmem:[%s3 + $0x210] sm:$0xff]
    %v1302 = vld [vmem:[%s3 + $0x218] sm:$0xff]
    %v1303 = vld [vmem:[%s3 + $0x220] sm:$0xff]
    %v1304 = vld [vmem:[%s3 + $0x228] sm:$0xff]
    %v1305 = vld [vmem:[%s3 + $0x230] sm:$0xff]
    %v1306 = vld [vmem:[%s3 + $0x238] sm:$0xff]
    %v1307 = vld [vmem:[%s3 + $0x240] sm:$0xff]
    %v1308 = vld [vmem:[%s3 + $0x248] sm:$0xff]
    %v1309 = vld [vmem:[%s3 + $0x250] sm:$0xff]
    %v1310 = vld [vmem:[%s3 + $0x258] sm:$0xff]
    %v1311 = vld [vmem:[%s3 + $0x260] sm:$0xff]
    %v1312 = vld [vmem:[%s3 + $0x268] sm:$0xff]
    %v1313 = vld [vmem:[%s3 + $0x270] sm:$0xff]
    %v1314 = vld [vmem:[%s3 + $0x278] sm:$0xff]
    %v1315 = vld [vmem:[%s3 + $0x280] sm:$0xff]
    %v1316 = vld [vmem:[%s3 + $0x288] sm:$0xff]
    %v1317 = vld [vmem:[%s3 + $0x290] sm:$0xff]
    %v1318 = vld [vmem:[%s3 + $0x298] sm:$0xff]
    %v1319 = vld [vmem:[%s3 + $0x2a0] sm:$0xff]
    %v1320 = vld [vmem:[%s3 + $0x2a8] sm:$0xff]
    %v1321 = vld [vmem:[%s3 + $0x2b0] sm:$0xff]
    %v1322 = vld [vmem:[%s3 + $0x2b8] sm:$0xff]
    %v1323 = vld [vmem:[%s3 + $0x2c0] sm:$0xff]
    %v1324 = vld [vmem:[%s3 + $0x2c8] sm:$0xff]
    %v1325 = vld [vmem:[%s3 + $0x2d0] sm:$0xff]
    %v1326 = vld [vmem:[%s3 + $0x2d8] sm:$0xff]
    %v1327 = vld [vmem:[%s3 + $0x2e0] sm:$0xff]
    %v1328 = vld [vmem:[%s3 + $0x2e8] sm:$0xff]
    %v1329 = vld [vmem:[%s3 + $0x2f0] sm:$0xff]
    %v1330 = vld [vmem:[%s3 + $0x2f8] sm:$0xff]
    %v1331 = vld [vmem:[%s3 + $0x300] sm:$0xff]
    %v1332 = vld [vmem:[%s3 + $0x308] sm:$0xff]
    %v1333 = vld [vmem:[%s3 + $0x310] sm:$0xff]
    %v1334 = vld [vmem:[%s3 + $0x318] sm:$0xff]
    %v1335 = vld [vmem:[%s3 + $0x320] sm:$0xff]
    %v1336 = vld [vmem:[%s3 + $0x328] sm:$0xff]
    %v1337 = vld [vmem:[%s3 + $0x330] sm:$0xff]
    %v1338 = vld [vmem:[%s3 + $0x338] sm:$0xff]
    %v1339 = vld [vmem:[%s3 + $0x340] sm:$0xff]
    %v1340 = vld [vmem:[%s3 + $0x348] sm:$0xff]
    %v1341 = vld [vmem:[%s3 + $0x350] sm:$0xff]
    %v1342 = vld [vmem:[%s3 + $0x358] sm:$0xff]
    %v1343 = vld [vmem:[%s3 + $0x360] sm:$0xff]
    %v1344 = vld [vmem:[%s3 + $0x368] sm:$0xff]
    %v1345 = vld [vmem:[%s3 + $0x370] sm:$0xff]
    %v1346 = vld [vmem:[%s3 + $0x378] sm:$0xff]
    %v1347 = vld [vmem:[%s3 + $0x380] sm:$0xff]
    %v1348 = vld [vmem:[%s3 + $0x388] sm:$0xff]
    %v1349 = vld [vmem:[%s3 + $0x390] sm:$0xff]
    %v1350 = vld [vmem:[%s3 + $0x398] sm:$0xff]
    %v1351 = vld [vmem:[%s3 + $0x3a0] sm:$0xff]
    %v1352 = vld [vmem:[%s3 + $0x3a8] sm:$0xff]
    %v1353 = vld [vmem:[%s3 + $0x3b0] sm:$0xff]
    %v1354 = vld [vmem:[%s3 + $0x3b8] sm:$0xff]
    %v1355 = vld [vmem:[%s3 + $0x3c0] sm:$0xff]
    %v1356 = vld [vmem:[%s3 + $0x3c8] sm:$0xff]
    %v1357 = vld [vmem:[%s3 + $0x3d0] sm:$0xff]
    %v1358 = vld [vmem:[%s3 + $0x3d8] sm:$0xff]
    %v1359 = vld [vmem:[%s3 + $0x3e0] sm:$0xff]
    %v1360 = vld [vmem:[%s3 + $0x3e8] sm:$0xff]
    %v1361 = vld [vmem:[%s3 + $0x3f0] sm:$0xff]
    %v1362 = vld [vmem:[%s3 + $0x3f8] sm:$0xff]
    %v1363 = vld [vmem:[%s3 + $0x400] sm:$0xff]
    %v1364 = vld [vmem:[%s3 + $0x408] sm:$0xff]
    %v1365 = vld [vmem:[%s3 + $0x410] sm:$0xff]
    %v1366 = vld [vmem:[%s3 + $0x418] sm:$0xff]
    %v1367 = vld [vmem:[%s3 + $0x420] sm:$0xff]
    %v1368 = vld [vmem:[%s3 + $0x428] sm:$0xff]
    %v1369 = vld [vmem:[%s3 + $0x430] sm:$0xff]
    %v1370 = vld [vmem:[%s3 + $0x438] sm:$0xff]
    %v1371 = vld [vmem:[%s3 + $0x440] sm:$0xff]
    %v1372 = vld [vmem:[%s3 + $0x448] sm:$0xff]
    %v1373 = vld [vmem:[%s3 + $0x450] sm:$0xff]
    %v1374 = vld [vmem:[%s3 + $0x458] sm:$0xff]
    %v1375 = vld [vmem:[%s3 + $0x460] sm:$0xff]
    %v1376 = vld [vmem:[%s3 + $0x468] sm:$0xff]
    %v1377 = vld [vmem:[%s3 + $0x470] sm:$0xff]
    %v1378 = vld [vmem:[%s3 + $0x478] sm:$0xff]
    %v1379 = vld [vmem:[%s3 + $0x480] sm:$0xff]
    %v1380 = vld [vmem:[%s3 + $0x488] sm:$0xff]
    %v1381 = vld [vmem:[%s3 + $0x490] sm:$0xff]
    %v1382 = vld [vmem:[%s3 + $0x498] sm:$0xff]
    %v1383 = vld [vmem:[%s3 + $0x4a0] sm:$0xff]
    %v1384 = vld [vmem:[%s3 + $0x4a8] sm:$0xff]
    %v1385 = vld [vmem:[%s3 + $0x4b0] sm:$0xff]
    %v1386 = vld [vmem:[%s3 + $0x4b8] sm:$0xff]
    %v1387 = vld [vmem:[%s3 + $0x4c0] sm:$0xff]
    %v1388 = vld [vmem:[%s3 + $0x4c8] sm:$0xff]
    %v1389 = vld [vmem:[%s3 + $0x4d0] sm:$0xff]
    %v1390 = vld [vmem:[%s3 + $0x4d8] sm:$0xff]
    %v1391 = vld [vmem:[%s3 + $0x4e0] sm:$0xff]
    %v1392 = vld [vmem:[%s3 + $0x4e8] sm:$0xff]
    %v1393 = vld [vmem:[%s3 + $0x4f0] sm:$0xff]
    %v1394 = vld [vmem:[%s3 + $0x4f8] sm:$0xff]
    %v1395 = vld [vmem:[%s3 + $0x500] sm:$0xff]
    %v1396 = vld [vmem:[%s3 + $0x508] sm:$0xff]
    %v1397 = vld [vmem:[%s3 + $0x510] sm:$0xff]
    %v1398 = vld [vmem:[%s3 + $0x518] sm:$0xff]
    %v1399 = vld [vmem:[%s3 + $0x520] sm:$0xff]
    %v1400 = vld [vmem:[%s3 + $0x528] sm:$0xff]
    %v1401 = vld [vmem:[%s3 + $0x530] sm:$0xff]
    %v1402 = vld [vmem:[%s3 + $0x538] sm:$0xff]
    %v1403 = vld [vmem:[%s3 + $0x540] sm:$0xff]
    %v1404 = vld [vmem:[%s3 + $0x548] sm:$0xff]
    %v1405 = vld [vmem:[%s3 + $0x550] sm:$0xff]
    %v1406 = vld [vmem:[%s3 + $0x558] sm:$0xff]
    %v1407 = vld [vmem:[%s3 + $0x560] sm:$0xff]
    %v1408 = vld [vmem:[%s3 + $0x568] sm:$0xff]
    %v1409 = vld [vmem:[%s3 + $0x570] sm:$0xff]
    %v1410 = vld [vmem:[%s3 + $0x578] sm:$0xff]
    %v1411 = vld [vmem:[%s3 + $0x580] sm:$0xff]
    %v1412 = vld [vmem:[%s3 + $0x588] sm:$0xff]
    %v1413 = vld [vmem:[%s3 + $0x590] sm:$0xff]
    %v1414 = vld [vmem:[%s3 + $0x598] sm:$0xff]
    %v1415 = vld [vmem:[%s3 + $0x5a0] sm:$0xff]
    %v1416 = vld [vmem:[%s3 + $0x5a8] sm:$0xff]
    %v1417 = vld [vmem:[%s3 + $0x5b0] sm:$0xff]
    %v1418 = vld [vmem:[%s3 + $0x5b8] sm:$0xff]
    %v1419 = vld [vmem:[%s3 + $0x5c0] sm:$0xff]
    %v1420 = vld [vmem:[%s3 + $0x5c8] sm:$0xff]
    %v1421 = vld [vmem:[%s3 + $0x5d0] sm:$0xff]
    %v1422 = vld [vmem:[%s3 + $0x5d8] sm:$0xff]
    %v1423 = vld [vmem:[%s3 + $0x5e0] sm:$0xff]
    %v1424 = vld [vmem:[%s3 + $0x5e8] sm:$0xff]
    %v1425 = vld [vmem:[%s3 + $0x5f0] sm:$0xff]
    %v1426 = vld [vmem:[%s3 + $0x5f8] sm:$0xff]
    %v1427 = vld [vmem:[%s3 + $0x600] sm:$0xff]
    %v1428 = vld [vmem:[%s3 + $0x608] sm:$0xff]
    %v1429 = vld [vmem:[%s3 + $0x610] sm:$0xff]
    %v1430 = vld [vmem:[%s3 + $0x618] sm:$0xff]
    %v1431 = vld [vmem:[%s3 + $0x620] sm:$0xff]
    %v1432 = vld [vmem:[%s3 + $0x628] sm:$0xff]
    %v1433 = vld [vmem:[%s3 + $0x630] sm:$0xff]
    %v1434 = vld [vmem:[%s3 + $0x638] sm:$0xff]
    %v1435 = vld [vmem:[%s3 + $0x640] sm:$0xff]
    %v1436 = vld [vmem:[%s3 + $0x648] sm:$0xff]
    %v1437 = vld [vmem:[%s3 + $0x650] sm:$0xff]
    %v1438 = vld [vmem:[%s3 + $0x658] sm:$0xff]
    %v1439 = vld [vmem:[%s3 + $0x660] sm:$0xff]
    %v1440 = vld [vmem:[%s3 + $0x668] sm:$0xff]
    %v1441 = vld [vmem:[%s3 + $0x670] sm:$0xff]
    %v1442 = vld [vmem:[%s3 + $0x678] sm:$0xff]
    %v1443 = vld [vmem:[%s3 + $0x680] sm:$0xff]
    %v1444 = vld [vmem:[%s3 + $0x688] sm:$0xff]
    %v1445 = vld [vmem:[%s3 + $0x690] sm:$0xff]
    %v1446 = vld [vmem:[%s3 + $0x698] sm:$0xff]
    %v1447 = vld [vmem:[%s3 + $0x6a0] sm:$0xff]
    %v1448 = vld [vmem:[%s3 + $0x6a8] sm:$0xff]
    %v1449 = vld [vmem:[%s3 + $0x6b0] sm:$0xff]
    %v1450 = vld [vmem:[%s3 + $0x6b8] sm:$0xff]
    %v1451 = vld [vmem:[%s3 + $0x6c0] sm:$0xff]
    %v1452 = vld [vmem:[%s3 + $0x6c8] sm:$0xff]
    %v1453 = vld [vmem:[%s3 + $0x6d0] sm:$0xff]
    %v1454 = vld [vmem:[%s3 + $0x6d8] sm:$0xff]
    %v1455 = vld [vmem:[%s3 + $0x6e0] sm:$0xff]
    %v1456 = vld [vmem:[%s3 + $0x6e8] sm:$0xff]
    %v1457 = vld [vmem:[%s3 + $0x6f0] sm:$0xff]
    %v1458 = vld [vmem:[%s3 + $0x6f8] sm:$0xff]
    %v1459 = vld [vmem:[%s3 + $0x700] sm:$0xff]
    %v1460 = vld [vmem:[%s3 + $0x708] sm:$0xff]
    %v1461 = vld [vmem:[%s3 + $0x710] sm:$0xff]
    %v1462 = vld [vmem:[%s3 + $0x718] sm:$0xff]
    %v1463 = vld [vmem:[%s3 + $0x720] sm:$0xff]
    %v1464 = vld [vmem:[%s3 + $0x728] sm:$0xff]
    %v1465 = vld [vmem:[%s3 + $0x730] sm:$0xff]
    %v1466 = vld [vmem:[%s3 + $0x738] sm:$0xff]
    %v1467 = vld [vmem:[%s3 + $0x740] sm:$0xff]
    %v1468 = vld [vmem:[%s3 + $0x748] sm:$0xff]
    %v1469 = vld [vmem:[%s3 + $0x750] sm:$0xff]
    %v1470 = vld [vmem:[%s3 + $0x758] sm:$0xff]
    %v1471 = vld [vmem:[%s3 + $0x760] sm:$0xff]
    %v1472 = vld [vmem:[%s3 + $0x768] sm:$0xff]
    %v1473 = vld [vmem:[%s3 + $0x770] sm:$0xff]
    %v1474 = vld [vmem:[%s3 + $0x778] sm:$0xff]
    %v1475 = vld [vmem:[%s3 + $0x780] sm:$0xff]
    %v1476 = vld [vmem:[%s3 + $0x788] sm:$0xff]
    %v1477 = vld [vmem:[%s3 + $0x790] sm:$0xff]
    %v1478 = vld [vmem:[%s3 + $0x798] sm:$0xff]
    %v1479 = vld [vmem:[%s3 + $0x7a0] sm:$0xff]
    %v1480 = vld [vmem:[%s3 + $0x7a8] sm:$0xff]
    %v1481 = vld [vmem:[%s3 + $0x7b0] sm:$0xff]
    %v1482 = vld [vmem:[%s3 + $0x7b8] sm:$0xff]
    %v1483 = vld [vmem:[%s3 + $0x7c0] sm:$0xff]
    %v1484 = vld [vmem:[%s3 + $0x7c8] sm:$0xff]
    %v1485 = vld [vmem:[%s3 + $0x7d0] sm:$0xff]
    %v1486 = vld [vmem:[%s3 + $0x7d8] sm:$0xff]
    %v1487 = vld [vmem:[%s3 + $0x7e0] sm:$0xff]
    %v1488 = vld [vmem:[%s3 + $0x7e8] sm:$0xff]
    %v1489 = vld [vmem:[%s3 + $0x7f0] sm:$0xff]
    %v1490 = vld [vmem:[%s3 + $0x7f8] sm:$0xff]
    %v1491 = vld [vmem:[%s3 + $0x800] sm:$0xff]
    %v1492 = vld [vmem:[%s3 + $0x808] sm:$0xff]
    %v1493 = vld [vmem:[%s3 + $0x810] sm:$0xff]
    %v1494 = vld [vmem:[%s3 + $0x818] sm:$0xff]
    %v1495 = vld [vmem:[%s3 + $0x820] sm:$0xff]
    %v1496 = vld [vmem:[%s3 + $0x828] sm:$0xff]
    %v1497 = vld [vmem:[%s3 + $0x830] sm:$0xff]
    %v1498 = vld [vmem:[%s3 + $0x838] sm:$0xff]
    %v1499 = vld [vmem:[%s3 + $0x840] sm:$0xff]
    %v1500 = vld [vmem:[%s3 + $0x848] sm:$0xff]
    %v1501 = vld [vmem:[%s3 + $0x850] sm:$0xff]
    %v1502 = vld [vmem:[%s3 + $0x858] sm:$0xff]
    %v1503 = vld [vmem:[%s3 + $0x860] sm:$0xff]
    %v1504 = vld [vmem:[%s3 + $0x868] sm:$0xff]
    %v1505 = vld [vmem:[%s3 + $0x870] sm:$0xff]
    %v1506 = vld [vmem:[%s3 + $0x878] sm:$0xff]
    %v1507 = vld [vmem:[%s3 + $0x880] sm:$0xff]
    %v1508 = vld [vmem:[%s3 + $0x888] sm:$0xff]
    %v1509 = vld [vmem:[%s3 + $0x890] sm:$0xff]
    %v1510 = vld [vmem:[%s3 + $0x898] sm:$0xff]
    %v1511 = vld [vmem:[%s3 + $0x8a0] sm:$0xff]
    %v1512 = vld [vmem:[%s3 + $0x8a8] sm:$0xff]
    %v1513 = vld [vmem:[%s3 + $0x8b0] sm:$0xff]
    %v1514 = vld [vmem:[%s3 + $0x8b8] sm:$0xff]
    %v1515 = vld [vmem:[%s3 + $0x8c0] sm:$0xff]
    %v1516 = vld [vmem:[%s3 + $0x8c8] sm:$0xff]
    %v1517 = vld [vmem:[%s3 + $0x8d0] sm:$0xff]
    %v1518 = vld [vmem:[%s3 + $0x8d8] sm:$0xff]
    %v1519 = vld [vmem:[%s3 + $0x8e0] sm:$0xff]
    %v1520 = vld [vmem:[%s3 + $0x8e8] sm:$0xff]
    %v1521 = vld [vmem:[%s3 + $0x8f0] sm:$0xff]
    %v1522 = vld [vmem:[%s3 + $0x8f8] sm:$0xff]
    %v1523 = vld [vmem:[%s3 + $0x900] sm:$0xff]
    %v1524 = vld [vmem:[%s3 + $0x908] sm:$0xff]
    %v1525 = vld [vmem:[%s3 + $0x910] sm:$0xff]
    %v1526 = vld [vmem:[%s3 + $0x918] sm:$0xff]
    %v1527 = vld [vmem:[%s3 + $0x920] sm:$0xff]
    %v1528 = vld [vmem:[%s3 + $0x928] sm:$0xff]
    %v1529 = vld [vmem:[%s3 + $0x930] sm:$0xff]
    %v1530 = vld [vmem:[%s3 + $0x938] sm:$0xff]
    %v1531 = vld [vmem:[%s3 + $0x940] sm:$0xff]
    %v1532 = vld [vmem:[%s3 + $0x948] sm:$0xff]
    %v1533 = vld [vmem:[%s3 + $0x950] sm:$0xff]
    %v1534 = vld [vmem:[%s3 + $0x958] sm:$0xff]
    %v1535 = vld [vmem:[%s3 + $0x960] sm:$0xff]
    %v1536 = vld [vmem:[%s3 + $0x968] sm:$0xff]
    %v1537 = vld [vmem:[%s3 + $0x970] sm:$0xff]
    %v1538 = vld [vmem:[%s3 + $0x978] sm:$0xff]
    %v1539 = vld [vmem:[%s3 + $0x980] sm:$0xff]
    %v1540 = vld [vmem:[%s3 + $0x988] sm:$0xff]
    %v1541 = vld [vmem:[%s3 + $0x990] sm:$0xff]
    %v1542 = vld [vmem:[%s3 + $0x998] sm:$0xff]
    %v1543 = vld [vmem:[%s3 + $0x9a0] sm:$0xff]
    %v1544 = vld [vmem:[%s3 + $0x9a8] sm:$0xff]
    %v1545 = vld [vmem:[%s3 + $0x9b0] sm:$0xff]
    %v1546 = vld [vmem:[%s3 + $0x9b8] sm:$0xff]
    %v1547 = vld [vmem:[%s3 + $0x9c0] sm:$0xff]
    %v1548 = vld [vmem:[%s3 + $0x9c8] sm:$0xff]
    %v1549 = vld [vmem:[%s3 + $0x9d0] sm:$0xff]
    %v1550 = vld [vmem:[%s3 + $0x9d8] sm:$0xff]
    %v1551 = vld [vmem:[%s3 + $0x9e0] sm:$0xff]
    %v1552 = vld [vmem:[%s3 + $0x9e8] sm:$0xff]
    %v1553 = vld [vmem:[%s3 + $0x9f0] sm:$0xff]
    %v1554 = vld [vmem:[%s3 + $0x9f8] sm:$0xff]
    %v1555 = vld [vmem:[%s3 + $0xa00] sm:$0xff]
    %v1556 = vld [vmem:[%s3 + $0xa08] sm:$0xff]
    %v1557 = vld [vmem:[%s3 + $0xa10] sm:$0xff]
    %v1558 = vld [vmem:[%s3 + $0xa18] sm:$0xff]
    %v1559 = vld [vmem:[%s3 + $0xa20] sm:$0xff]
    %v1560 = vld [vmem:[%s3 + $0xa28] sm:$0xff]
    %v1561 = vld [vmem:[%s3 + $0xa30] sm:$0xff]
    %v1562 = vld [vmem:[%s3 + $0xa38] sm:$0xff]
    %v1563 = vld [vmem:[%s3 + $0xa40] sm:$0xff]
    %v1564 = vld [vmem:[%s3 + $0xa48] sm:$0xff]
    %v1565 = vld [vmem:[%s3 + $0xa50] sm:$0xff]
    %v1566 = vld [vmem:[%s3 + $0xa58] sm:$0xff]
    %v1567 = vld [vmem:[%s3 + $0xa60] sm:$0xff]
    %v1568 = vld [vmem:[%s3 + $0xa68] sm:$0xff]
    %v1569 = vld [vmem:[%s3 + $0xa70] sm:$0xff]
    %v1570 = vld [vmem:[%s3 + $0xa78] sm:$0xff]
    %v1571 = vld [vmem:[%s3 + $0xa80] sm:$0xff]
    %v1572 = vld [vmem:[%s3 + $0xa88] sm:$0xff]
    %v1573 = vld [vmem:[%s3 + $0xa90] sm:$0xff]
    %v1574 = vld [vmem:[%s3 + $0xa98] sm:$0xff]
    %v1575 = vld [vmem:[%s3 + $0xaa0] sm:$0xff]
    %v1576 = vld [vmem:[%s3 + $0xaa8] sm:$0xff]
    %v1577 = vld [vmem:[%s3 + $0xab0] sm:$0xff]
    %v1578 = vld [vmem:[%s3 + $0xab8] sm:$0xff]
    %v1579 = vld [vmem:[%s3 + $0xac0] sm:$0xff]
    %v1580 = vld [vmem:[%s3 + $0xac8] sm:$0xff]
    %v1581 = vld [vmem:[%s3 + $0xad0] sm:$0xff]
    %v1582 = vld [vmem:[%s3 + $0xad8] sm:$0xff]
    %v1583 = vld [vmem:[%s3 + $0xae0] sm:$0xff]
    %v1584 = vld [vmem:[%s3 + $0xae8] sm:$0xff]
    %v1585 = vld [vmem:[%s3 + $0xaf0] sm:$0xff]
    %v1586 = vld [vmem:[%s3 + $0xaf8] sm:$0xff]
    %v1587 = vld [vmem:[%s3 + $0xb00] sm:$0xff]
    %v1588 = vld [vmem:[%s3 + $0xb08] sm:$0xff]
    %v1589 = vld [vmem:[%s3 + $0xb10] sm:$0xff]
    %v1590 = vld [vmem:[%s3 + $0xb18] sm:$0xff]
    %v1591 = vld [vmem:[%s3 + $0xb20] sm:$0xff]
    %v1592 = vld [vmem:[%s3 + $0xb28] sm:$0xff]
    %v1593 = vld [vmem:[%s3 + $0xb30] sm:$0xff]
    %v1594 = vld [vmem:[%s3 + $0xb38] sm:$0xff]
    %v1595 = vld [vmem:[%s3 + $0xb40] sm:$0xff]
    %v1596 = vld [vmem:[%s3 + $0xb48] sm:$0xff]
    %v1597 = vld [vmem:[%s3 + $0xb50] sm:$0xff]
    %v1598 = vld [vmem:[%s3 + $0xb58] sm:$0xff]
    %v1599 = vld [vmem:[%s3 + $0xb60] sm:$0xff]
    %v1600 = vld [vmem:[%s3 + $0xb68] sm:$0xff]
    %v1601 = vld [vmem:[%s3 + $0xb70] sm:$0xff]
    %v1602 = vld [vmem:[%s3 + $0xb78] sm:$0xff]
    %v1603 = vld [vmem:[%s3 + $0xb80] sm:$0xff]
    %v1604 = vld [vmem:[%s3 + $0xb88] sm:$0xff]
    %v1605 = vld [vmem:[%s3 + $0xb90] sm:$0xff]
    %v1606 = vld [vmem:[%s3 + $0xb98] sm:$0xff]
    %v1607 = vld [vmem:[%s3 + $0xba0] sm:$0xff]
    %v1608 = vld [vmem:[%s3 + $0xba8] sm:$0xff]
    %v1609 = vld [vmem:[%s3 + $0xbb0] sm:$0xff]
    %v1610 = vld [vmem:[%s3 + $0xbb8] sm:$0xff]
    %v1611 = vld [vmem:[%s3 + $0xbc0] sm:$0xff]
    %v1612 = vld [vmem:[%s3 + $0xbc8] sm:$0xff]
    %v1613 = vld [vmem:[%s3 + $0xbd0] sm:$0xff]
    %v1614 = vld [vmem:[%s3 + $0xbd8] sm:$0xff]
    %v1615 = vld [vmem:[%s3 + $0xbe0] sm:$0xff]
    %v1616 = vld [vmem:[%s3 + $0xbe8] sm:$0xff]
    %v1617 = vld [vmem:[%s3 + $0xbf0] sm:$0xff]
    %v1618 = vld [vmem:[%s3 + $0xbf8] sm:$0xff]
    %v1619 = vld [vmem:[%s3 + $0xc00] sm:$0xff]
    %v1620 = vld [vmem:[%s3 + $0xc08] sm:$0xff]
    %v1621 = vld [vmem:[%s3 + $0xc10] sm:$0xff]
    %v1622 = vld [vmem:[%s3 + $0xc18] sm:$0xff]
    %v1623 = vld [vmem:[%s3 + $0xc20] sm:$0xff]
    %v1624 = vld [vmem:[%s3 + $0xc28] sm:$0xff]
    %v1625 = vld [vmem:[%s3 + $0xc30] sm:$0xff]
    %v1626 = vld [vmem:[%s3 + $0xc38] sm:$0xff]
    %v1627 = vld [vmem:[%s3 + $0xc40] sm:$0xff]
    %v1628 = vld [vmem:[%s3 + $0xc48] sm:$0xff]
    %v1629 = vld [vmem:[%s3 + $0xc50] sm:$0xff]
    %v1630 = vld [vmem:[%s3 + $0xc58] sm:$0xff]
    %v1631 = vld [vmem:[%s3 + $0xc60] sm:$0xff]
    %v1632 = vld [vmem:[%s3 + $0xc68] sm:$0xff]
    %v1633 = vld [vmem:[%s3 + $0xc70] sm:$0xff]
    %v1634 = vld [vmem:[%s3 + $0xc78] sm:$0xff]
    %v1635 = vld [vmem:[%s3 + $0xc80] sm:$0xff]
    %v1636 = vld [vmem:[%s3 + $0xc88] sm:$0xff]
    %v1637 = vld [vmem:[%s3 + $0xc90] sm:$0xff]
    %v1638 = vld [vmem:[%s3 + $0xc98] sm:$0xff]
    %v1639 = vld [vmem:[%s3 + $0xca0] sm:$0xff]
    %v1640 = vld [vmem:[%s3 + $0xca8] sm:$0xff]
    %v1641 = vld [vmem:[%s3 + $0xcb0] sm:$0xff]
    %v1642 = vld [vmem:[%s3 + $0xcb8] sm:$0xff]
    %v1643 = vld [vmem:[%s3 + $0xcc0] sm:$0xff]
    %v1644 = vld [vmem:[%s3 + $0xcc8] sm:$0xff]
    %v1645 = vld [vmem:[%s3 + $0xcd0] sm:$0xff]
    %v1646 = vld [vmem:[%s3 + $0xcd8] sm:$0xff]
    %v1647 = vld [vmem:[%s3 + $0xce0] sm:$0xff]
    %v1648 = vld [vmem:[%s3 + $0xce8] sm:$0xff]
    %v1649 = vld [vmem:[%s3 + $0xcf0] sm:$0xff]
    %v1650 = vld [vmem:[%s3 + $0xcf8] sm:$0xff]
    %v1651 = vld [vmem:[%s3 + $0xd00] sm:$0xff]
    %v1652 = vld [vmem:[%s3 + $0xd08] sm:$0xff]
    %v1653 = vld [vmem:[%s3 + $0xd10] sm:$0xff]
    %v1654 = vld [vmem:[%s3 + $0xd18] sm:$0xff]
    %v1655 = vld [vmem:[%s3 + $0xd20] sm:$0xff]
    %v1656 = vld [vmem:[%s3 + $0xd28] sm:$0xff]
    %v1657 = vld [vmem:[%s3 + $0xd30] sm:$0xff]
    %v1658 = vld [vmem:[%s3 + $0xd38] sm:$0xff]
    %v1659 = vld [vmem:[%s3 + $0xd40] sm:$0xff]
    %v1660 = vld [vmem:[%s3 + $0xd48] sm:$0xff]
    %v1661 = vld [vmem:[%s3 + $0xd50] sm:$0xff]
    %v1662 = vld [vmem:[%s3 + $0xd58] sm:$0xff]
    %v1663 = vld [vmem:[%s3 + $0xd60] sm:$0xff]
    %v1664 = vld [vmem:[%s3 + $0xd68] sm:$0xff]
    %v1665 = vld [vmem:[%s3 + $0xd70] sm:$0xff]
    %v1666 = vld [vmem:[%s3 + $0xd78] sm:$0xff]
    %v1667 = vld [vmem:[%s3 + $0xd80] sm:$0xff]
    %v1668 = vld [vmem:[%s3 + $0xd88] sm:$0xff]
    %v1669 = vld [vmem:[%s3 + $0xd90] sm:$0xff]
    %v1670 = vld [vmem:[%s3 + $0xd98] sm:$0xff]
    %v1671 = vld [vmem:[%s3 + $0xda0] sm:$0xff]
    %v1672 = vld [vmem:[%s3 + $0xda8] sm:$0xff]
    %v1673 = vld [vmem:[%s3 + $0xdb0] sm:$0xff]
    %v1674 = vld [vmem:[%s3 + $0xdb8] sm:$0xff]
    %v1675 = vld [vmem:[%s3 + $0xdc0] sm:$0xff]
    %v1676 = vld [vmem:[%s3 + $0xdc8] sm:$0xff]
    %v1677 = vld [vmem:[%s3 + $0xdd0] sm:$0xff]
    %v1678 = vld [vmem:[%s3 + $0xdd8] sm:$0xff]
    %v1679 = vld [vmem:[%s3 + $0xde0] sm:$0xff]
    %v1680 = vld [vmem:[%s3 + $0xde8] sm:$0xff]
    %v1681 = vld [vmem:[%s3 + $0xdf0] sm:$0xff]
    %v1682 = vld [vmem:[%s3 + $0xdf8] sm:$0xff]
    %v1683 = vld [vmem:[%s3 + $0xe00] sm:$0xff]
    %v1684 = vld [vmem:[%s3 + $0xe08] sm:$0xff]
    %v1685 = vld [vmem:[%s3 + $0xe10] sm:$0xff]
    %v1686 = vld [vmem:[%s3 + $0xe18] sm:$0xff]
    %v1687 = vld [vmem:[%s3 + $0xe20] sm:$0xff]
    %v1688 = vld [vmem:[%s3 + $0xe28] sm:$0xff]
    %v1689 = vld [vmem:[%s3 + $0xe30] sm:$0xff]
    %v1690 = vld [vmem:[%s3 + $0xe38] sm:$0xff]
    %v1691 = vld [vmem:[%s3 + $0xe40] sm:$0xff]
    %v1692 = vld [vmem:[%s3 + $0xe48] sm:$0xff]
    %v1693 = vld [vmem:[%s3 + $0xe50] sm:$0xff]
    %v1694 = vld [vmem:[%s3 + $0xe58] sm:$0xff]
    %v1695 = vld [vmem:[%s3 + $0xe60] sm:$0xff]
    %v1696 = vld [vmem:[%s3 + $0xe68] sm:$0xff]
    %v1697 = vld [vmem:[%s3 + $0xe70] sm:$0xff]
    %v1698 = vld [vmem:[%s3 + $0xe78] sm:$0xff]
    %v1699 = vld [vmem:[%s3 + $0xe80] sm:$0xff]
    %v1700 = vld [vmem:[%s3 + $0xe88] sm:$0xff]
    %v1701 = vld [vmem:[%s3 + $0xe90] sm:$0xff]
    %v1702 = vld [vmem:[%s3 + $0xe98] sm:$0xff]
    %v1703 = vld [vmem:[%s3 + $0xea0] sm:$0xff]
    %v1704 = vld [vmem:[%s3 + $0xea8] sm:$0xff]
    %v1705 = vld [vmem:[%s3 + $0xeb0] sm:$0xff]
    %v1706 = vld [vmem:[%s3 + $0xeb8] sm:$0xff]
    %v1707 = vld [vmem:[%s3 + $0xec0] sm:$0xff]
    %v1708 = vld [vmem:[%s3 + $0xec8] sm:$0xff]
    %v1709 = vld [vmem:[%s3 + $0xed0] sm:$0xff]
    %v1710 = vld [vmem:[%s3 + $0xed8] sm:$0xff]
    %v1711 = vld [vmem:[%s3 + $0xee0] sm:$0xff]
    %v1712 = vld [vmem:[%s3 + $0xee8] sm:$0xff]
    %v1713 = vld [vmem:[%s3 + $0xef0] sm:$0xff]
    %v1714 = vld [vmem:[%s3 + $0xef8] sm:$0xff]
    %v1715 = vld [vmem:[%s3 + $0xf00] sm:$0xff]
    %v1716 = vld [vmem:[%s3 + $0xf08] sm:$0xff]
    %v1717 = vld [vmem:[%s3 + $0xf10] sm:$0xff]
    %v1718 = vld [vmem:[%s3 + $0xf18] sm:$0xff]
    %v1719 = vld [vmem:[%s3 + $0xf20] sm:$0xff]
    %v1720 = vld [vmem:[%s3 + $0xf28] sm:$0xff]
    %v1721 = vld [vmem:[%s3 + $0xf30] sm:$0xff]
    %v1722 = vld [vmem:[%s3 + $0xf38] sm:$0xff]
    %v1723 = vld [vmem:[%s3 + $0xf40] sm:$0xff]
    %v1724 = vld [vmem:[%s3 + $0xf48] sm:$0xff]
    %v1725 = vld [vmem:[%s3 + $0xf50] sm:$0xff]
    %v1726 = vld [vmem:[%s3 + $0xf58] sm:$0xff]
    %v1727 = vld [vmem:[%s3 + $0xf60] sm:$0xff]
    %v1728 = vld [vmem:[%s3 + $0xf68] sm:$0xff]
    %v1729 = vld [vmem:[%s3 + $0xf70] sm:$0xff]
    %v1730 = vld [vmem:[%s3 + $0xf78] sm:$0xff]
    %v1731 = vld [vmem:[%s3 + $0xf80] sm:$0xff]
    %v1732 = vld [vmem:[%s3 + $0xf88] sm:$0xff]
    %v1733 = vld [vmem:[%s3 + $0xf90] sm:$0xff]
    %v1734 = vld [vmem:[%s3 + $0xf98] sm:$0xff]
    %v1735 = vld [vmem:[%s3 + $0xfa0] sm:$0xff]
    %v1736 = vld [vmem:[%s3 + $0xfa8] sm:$0xff]
    %v1737 = vld [vmem:[%s3 + $0xfb0] sm:$0xff]
    %v1738 = vld [vmem:[%s3 + $0xfb8] sm:$0xff]
    %v1739 = vld [vmem:[%s3 + $0xfc0] sm:$0xff]
    %v1740 = vld [vmem:[%s3 + $0xfc8] sm:$0xff]
    %v1741 = vld [vmem:[%s3 + $0xfd0] sm:$0xff]
    %v1742 = vld [vmem:[%s3 + $0xfd8] sm:$0xff]
    %v1743 = vld [vmem:[%s3 + $0xfe0] sm:$0xff]
    %v1744 = vld [vmem:[%s3 + $0xfe8] sm:$0xff]
    %v1745 = vld [vmem:[%s3 + $0xff0] sm:$0xff]
    %v1746 = vld [vmem:[%s3 + $0xff8] sm:$0xff]
    %v1747 = vld [vmem:[%s3 + $0x1000] sm:$0xff]
    %v1748 = vld [vmem:[%s3 + $0x1008] sm:$0xff]
    %v1749 = vld [vmem:[%s3 + $0x1010] sm:$0xff]
    %v1750 = vld [vmem:[%s3 + $0x1018] sm:$0xff]
    %v1751 = vld [vmem:[%s3 + $0x1020] sm:$0xff]
    %v1752 = vld [vmem:[%s3 + $0x1028] sm:$0xff]
    %v1753 = vld [vmem:[%s3 + $0x1030] sm:$0xff]
    %v1754 = vld [vmem:[%s3 + $0x1038] sm:$0xff]
    %v1755 = vld [vmem:[%s3 + $0x1040] sm:$0xff]
    %v1756 = vld [vmem:[%s3 + $0x1048] sm:$0xff]
    %v1757 = vld [vmem:[%s3 + $0x1050] sm:$0xff]
    %v1758 = vld [vmem:[%s3 + $0x1058] sm:$0xff]
    %v1759 = vld [vmem:[%s3 + $0x1060] sm:$0xff]
    %v1760 = vld [vmem:[%s3 + $0x1068] sm:$0xff]
    %v1761 = vld [vmem:[%s3 + $0x1070] sm:$0xff]
    %v1762 = vld [vmem:[%s3 + $0x1078] sm:$0xff]
    %v1763 = vld [vmem:[%s3 + $0x1080] sm:$0xff]
    %v1764 = vld [vmem:[%s3 + $0x1088] sm:$0xff]
    %v1765 = vld [vmem:[%s3 + $0x1090] sm:$0xff]
    %v1766 = vld [vmem:[%s3 + $0x1098] sm:$0xff]
    %v1767 = vld [vmem:[%s3 + $0x10a0] sm:$0xff]
    %v1768 = vld [vmem:[%s3 + $0x10a8] sm:$0xff]
    %v1769 = vld [vmem:[%s3 + $0x10b0] sm:$0xff]
    %v1770 = vld [vmem:[%s3 + $0x10b8] sm:$0xff]
    %v1771 = vld [vmem:[%s3 + $0x10c0] sm:$0xff]
    %v1772 = vld [vmem:[%s3 + $0x10c8] sm:$0xff]
    %v1773 = vld [vmem:[%s3 + $0x10d0] sm:$0xff]
    %v1774 = vld [vmem:[%s3 + $0x10d8] sm:$0xff]
    %v1775 = vld [vmem:[%s3 + $0x10e0] sm:$0xff]
    %v1776 = vld [vmem:[%s3 + $0x10e8] sm:$0xff]
    %v1777 = vld [vmem:[%s3 + $0x10f0] sm:$0xff]
    %v1778 = vld [vmem:[%s3 + $0x10f8] sm:$0xff]
    %v1779 = vld [vmem:[%s3 + $0x1100] sm:$0xff]
    %v1780 = vld [vmem:[%s3 + $0x1108] sm:$0xff]
    %v1781 = vld [vmem:[%s3 + $0x1110] sm:$0xff]
    %v1782 = vld [vmem:[%s3 + $0x1118] sm:$0xff]
    %v1783 = vld [vmem:[%s3 + $0x1120] sm:$0xff]
    %v1784 = vld [vmem:[%s3 + $0x1128] sm:$0xff]
    %v1785 = vld [vmem:[%s3 + $0x1130] sm:$0xff]
    %v1786 = vld [vmem:[%s3 + $0x1138] sm:$0xff]
    %v1787 = vld [vmem:[%s3 + $0x1140] sm:$0xff]
    %v1788 = vld [vmem:[%s3 + $0x1148] sm:$0xff]
    %v1789 = vld [vmem:[%s3 + $0x1150] sm:$0xff]
    %v1790 = vld [vmem:[%s3 + $0x1158] sm:$0xff]
    %v1791 = vld [vmem:[%s3 + $0x1160] sm:$0xff]
    %v1792 = vld [vmem:[%s3 + $0x1168] sm:$0xff]
    %v1793 = vld [vmem:[%s3 + $0x1170] sm:$0xff]
    %v1794 = vld [vmem:[%s3 + $0x1178] sm:$0xff]
    %v1795 = vld [vmem:[%s3 + $0x1180] sm:$0xff]
    %v1796 = vld [vmem:[%s3 + $0x1188] sm:$0xff]
    %v1797 = vld [vmem:[%s3 + $0x1190] sm:$0xff]
    %v1798 = vld [vmem:[%s3 + $0x1198] sm:$0xff]
    %v1799 = vld [vmem:[%s3 + $0x11a0] sm:$0xff]
    %v1800 = vld [vmem:[%s3 + $0x11a8] sm:$0xff]
    %v1801 = vld [vmem:[%s3 + $0x11b0] sm:$0xff]
    %v1802 = vld [vmem:[%s3 + $0x11b8] sm:$0xff]
    %v1803 = vld [vmem:[%s3 + $0x11c0] sm:$0xff]
    %v1804 = vld [vmem:[%s3 + $0x11c8] sm:$0xff]
    %v1805 = vld [vmem:[%s3 + $0x11d0] sm:$0xff]
    %v1806 = vld [vmem:[%s3 + $0x11d8] sm:$0xff]
    %v1807 = vld [vmem:[%s3 + $0x11e0] sm:$0xff]
    %v1808 = vld [vmem:[%s3 + $0x11e8] sm:$0xff]
    %v1809 = vld [vmem:[%s3 + $0x11f0] sm:$0xff]
    %v1810 = vld [vmem:[%s3 + $0x11f8] sm:$0xff]
    %v1811 = vld [vmem:[%s3 + $0x1200] sm:$0xff]
    %v1812 = vld [vmem:[%s3 + $0x1208] sm:$0xff]
    %v1813 = vld [vmem:[%s3 + $0x1210] sm:$0xff]
    %v1814 = vld [vmem:[%s3 + $0x1218] sm:$0xff]
    %v1815 = vld [vmem:[%s3 + $0x1220] sm:$0xff]
    %v1816 = vld [vmem:[%s3 + $0x1228] sm:$0xff]
    %v1817 = vld [vmem:[%s3 + $0x1230] sm:$0xff]
    %v1818 = vld [vmem:[%s3 + $0x1238] sm:$0xff]
    %v1819 = vld [vmem:[%s3 + $0x1240] sm:$0xff]
    %v1820 = vld [vmem:[%s3 + $0x1248] sm:$0xff]
    %v1821 = vld [vmem:[%s3 + $0x1250] sm:$0xff]
    %v1822 = vld [vmem:[%s3 + $0x1258] sm:$0xff]
    %v1823 = vld [vmem:[%s3 + $0x1260] sm:$0xff]
    %v1824 = vld [vmem:[%s3 + $0x1268] sm:$0xff]
    %v1825 = vld [vmem:[%s3 + $0x1270] sm:$0xff]
    %v1826 = vld [vmem:[%s3 + $0x1278] sm:$0xff]
    %v1827 = vld [vmem:[%s3 + $0x1280] sm:$0xff]
    %v1828 = vld [vmem:[%s3 + $0x1288] sm:$0xff]
    %v1829 = vld [vmem:[%s3 + $0x1290] sm:$0xff]
    %v1830 = vld [vmem:[%s3 + $0x1298] sm:$0xff]
    %v1831 = vld [vmem:[%s3 + $0x12a0] sm:$0xff]
    %v1832 = vld [vmem:[%s3 + $0x12a8] sm:$0xff]
    %v1833 = vld [vmem:[%s3 + $0x12b0] sm:$0xff]
    %v1834 = vld [vmem:[%s3 + $0x12b8] sm:$0xff]
    %v1835 = vld [vmem:[%s3 + $0x12c0] sm:$0xff]
    %v1836 = vld [vmem:[%s3 + $0x12c8] sm:$0xff]
    %v1837 = vld [vmem:[%s3 + $0x12d0] sm:$0xff]
    %v1838 = vld [vmem:[%s3 + $0x12d8] sm:$0xff]
    %v1839 = vld [vmem:[%s3 + $0x12e0] sm:$0xff]
    %v1840 = vld [vmem:[%s3 + $0x12e8] sm:$0xff]
    %v1841 = vld [vmem:[%s3 + $0x12f0] sm:$0xff]
    %v1842 = vld [vmem:[%s3 + $0x12f8] sm:$0xff]
    %v1843 = vld [vmem:[%s3 + $0x1300] sm:$0xff]
    %v1844 = vld [vmem:[%s3 + $0x1308] sm:$0xff]
    %v1845 = vld [vmem:[%s3 + $0x1310] sm:$0xff]
    %v1846 = vld [vmem:[%s3 + $0x1318] sm:$0xff]
    %v1847 = vld [vmem:[%s3 + $0x1320] sm:$0xff]
    %v1848 = vld [vmem:[%s3 + $0x1328] sm:$0xff]
    %v1849 = vld [vmem:[%s3 + $0x1330] sm:$0xff]
    %v1850 = vld [vmem:[%s3 + $0x1338] sm:$0xff]
    %v1851 = vld [vmem:[%s3 + $0x1340] sm:$0xff]
    %v1852 = vld [vmem:[%s3 + $0x1348] sm:$0xff]
    %v1853 = vld [vmem:[%s3 + $0x1350] sm:$0xff]
    %v1854 = vld [vmem:[%s3 + $0x1358] sm:$0xff]
    %v1855 = vld [vmem:[%s3 + $0x1360] sm:$0xff]
    %v1856 = vld [vmem:[%s3 + $0x1368] sm:$0xff]
    %v1857 = vld [vmem:[%s3 + $0x1370] sm:$0xff]
    %v1858 = vld [vmem:[%s3 + $0x1378] sm:$0xff]
    %v1859 = vld [vmem:[%s3 + $0x1380] sm:$0xff]
    %v1860 = vld [vmem:[%s3 + $0x1388] sm:$0xff]
    %v1861 = vld [vmem:[%s3 + $0x1390] sm:$0xff]
    %v1862 = vld [vmem:[%s3 + $0x1398] sm:$0xff]
    %v1863 = vld [vmem:[%s3 + $0x13a0] sm:$0xff]
    %v1864 = vld [vmem:[%s3 + $0x13a8] sm:$0xff]
    %v1865 = vld [vmem:[%s3 + $0x13b0] sm:$0xff]
    %v1866 = vld [vmem:[%s3 + $0x13b8] sm:$0xff]
    %v1867 = vld [vmem:[%s3 + $0x13c0] sm:$0xff]
    %v1868 = vld [vmem:[%s3 + $0x13c8] sm:$0xff]
    %v1869 = vld [vmem:[%s3 + $0x13d0] sm:$0xff]
    %v1870 = vld [vmem:[%s3 + $0x13d8] sm:$0xff]
    %v1871 = vld [vmem:[%s3 + $0x13e0] sm:$0xff]
    %v1872 = vld [vmem:[%s3 + $0x13e8] sm:$0xff]
    %v1873 = vld [vmem:[%s3 + $0x13f0] sm:$0xff]
    %v1874 = vld [vmem:[%s3 + $0x13f8] sm:$0xff]
    %v1875 = vld [vmem:[%s3 + $0x1400] sm:$0xff]
    %v1876 = vld [vmem:[%s3 + $0x1408] sm:$0xff]
    %v1877 = vld [vmem:[%s3 + $0x1410] sm:$0xff]
    %v1878 = vld [vmem:[%s3 + $0x1418] sm:$0xff]
    %v1879 = vld [vmem:[%s3 + $0x1420] sm:$0xff]
    %v1880 = vld [vmem:[%s3 + $0x1428] sm:$0xff]
    %v1881 = vld [vmem:[%s3 + $0x1430] sm:$0xff]
    %v1882 = vld [vmem:[%s3 + $0x1438] sm:$0xff]
    %v1883 = vld [vmem:[%s3 + $0x1440] sm:$0xff]
    %v1884 = vld [vmem:[%s3 + $0x1448] sm:$0xff]
    %v1885 = vld [vmem:[%s3 + $0x1450] sm:$0xff]
    %v1886 = vld [vmem:[%s3 + $0x1458] sm:$0xff]
    %v1887 = vld [vmem:[%s3 + $0x1460] sm:$0xff]
    %v1888 = vld [vmem:[%s3 + $0x1468] sm:$0xff]
    %v1889 = vld [vmem:[%s3 + $0x1470] sm:$0xff]
    %v1890 = vld [vmem:[%s3 + $0x1478] sm:$0xff]
    %v1891 = vld [vmem:[%s3 + $0x1480] sm:$0xff]
    %v1892 = vld [vmem:[%s3 + $0x1488] sm:$0xff]
    %v1893 = vld [vmem:[%s3 + $0x1490] sm:$0xff]
    %v1894 = vld [vmem:[%s3 + $0x1498] sm:$0xff]
    %v1895 = vld [vmem:[%s3 + $0x14a0] sm:$0xff]
    %v1896 = vld [vmem:[%s3 + $0x14a8] sm:$0xff]
    %v1897 = vld [vmem:[%s3 + $0x14b0] sm:$0xff]
    %v1898 = vld [vmem:[%s3 + $0x14b8] sm:$0xff]
    %v1899 = vld [vmem:[%s3 + $0x14c0] sm:$0xff]
    %v1900 = vld [vmem:[%s3 + $0x14c8] sm:$0xff]
    %v1901 = vld [vmem:[%s3 + $0x14d0] sm:$0xff]
    %v1902 = vld [vmem:[%s3 + $0x14d8] sm:$0xff]
    %v1903 = vld [vmem:[%s3 + $0x14e0] sm:$0xff]
    %v1904 = vld [vmem:[%s3 + $0x14e8] sm:$0xff]
    %v1905 = vld [vmem:[%s3 + $0x14f0] sm:$0xff]
    %v1906 = vld [vmem:[%s3 + $0x14f8] sm:$0xff]
    %v1907 = vld [vmem:[%s3 + $0x1500] sm:$0xff]
    %v1908 = vld [vmem:[%s3 + $0x1508] sm:$0xff]
    %v1909 = vld [vmem:[%s3 + $0x1510] sm:$0xff]
    %v1910 = vld [vmem:[%s3 + $0x1518] sm:$0xff]
    %v1911 = vld [vmem:[%s3 + $0x1520] sm:$0xff]
    %v1912 = vld [vmem:[%s3 + $0x1528] sm:$0xff]
    %v1913 = vld [vmem:[%s3 + $0x1530] sm:$0xff]
    %v1914 = vld [vmem:[%s3 + $0x1538] sm:$0xff]
    %v1915 = vld [vmem:[%s3 + $0x1540] sm:$0xff]
    %v1916 = vld [vmem:[%s3 + $0x1548] sm:$0xff]
    %v1917 = vld [vmem:[%s3 + $0x1550] sm:$0xff]
    %v1918 = vld [vmem:[%s3 + $0x1558] sm:$0xff]
    %v1919 = vld [vmem:[%s3 + $0x1560] sm:$0xff]
    %v1920 = vld [vmem:[%s3 + $0x1568] sm:$0xff]
    %v1921 = vld [vmem:[%s3 + $0x1570] sm:$0xff]
    %v1922 = vld [vmem:[%s3 + $0x1578] sm:$0xff]
    %v1923 = vld [vmem:[%s3 + $0x1580] sm:$0xff]
    %v1924 = vld [vmem:[%s3 + $0x1588] sm:$0xff]
    %v1925 = vld [vmem:[%s3 + $0x1590] sm:$0xff]
    %v1926 = vld [vmem:[%s3 + $0x1598] sm:$0xff]
    %v1927 = vld [vmem:[%s3 + $0x15a0] sm:$0xff]
    %v1928 = vld [vmem:[%s3 + $0x15a8] sm:$0xff]
    %v1929 = vld [vmem:[%s3 + $0x15b0] sm:$0xff]
    %v1930 = vld [vmem:[%s3 + $0x15b8] sm:$0xff]
    %v1931 = vld [vmem:[%s3 + $0x15c0] sm:$0xff]
    %v1932 = vld [vmem:[%s3 + $0x15c8] sm:$0xff]
    %v1933 = vld [vmem:[%s3 + $0x15d0] sm:$0xff]
    %v1934 = vld [vmem:[%s3 + $0x15d8] sm:$0xff]
    %v1935 = vld [vmem:[%s3 + $0x15e0] sm:$0xff]
    %v1936 = vld [vmem:[%s3 + $0x15e8] sm:$0xff]
    %v1937 = vld [vmem:[%s3 + $0x15f0] sm:$0xff]
    %v1938 = vld [vmem:[%s3 + $0x15f8] sm:$0xff]
    %v1939 = vld [vmem:[%s3 + $0x1600] sm:$0xff]
    %v1940 = vld [vmem:[%s3 + $0x1608] sm:$0xff]
    %v1941 = vld [vmem:[%s3 + $0x1610] sm:$0xff]
    %v1942 = vld [vmem:[%s3 + $0x1618] sm:$0xff]
    %v1943 = vld [vmem:[%s3 + $0x1620] sm:$0xff]
    %v1944 = vld [vmem:[%s3 + $0x1628] sm:$0xff]
    %v1945 = vld [vmem:[%s3 + $0x1630] sm:$0xff]
    %v1946 = vld [vmem:[%s3 + $0x1638] sm:$0xff]
    %v1947 = vld [vmem:[%s3 + $0x1640] sm:$0xff]
    %v1948 = vld [vmem:[%s3 + $0x1648] sm:$0xff]
    %v1949 = vld [vmem:[%s3 + $0x1650] sm:$0xff]
    %v1950 = vld [vmem:[%s3 + $0x1658] sm:$0xff]
    %v1951 = vld [vmem:[%s3 + $0x1660] sm:$0xff]
    %v1952 = vld [vmem:[%s3 + $0x1668] sm:$0xff]
    %v1953 = vld [vmem:[%s3 + $0x1670] sm:$0xff]
    %v1954 = vld [vmem:[%s3 + $0x1678] sm:$0xff]
    %v1955 = vld [vmem:[%s3 + $0x1680] sm:$0xff]
    %v1956 = vld [vmem:[%s3 + $0x1688] sm:$0xff]
    %v1957 = vld [vmem:[%s3 + $0x1690] sm:$0xff]
    %v1958 = vld [vmem:[%s3 + $0x1698] sm:$0xff]
    %v1959 = vld [vmem:[%s3 + $0x16a0] sm:$0xff]
    %v1960 = vld [vmem:[%s3 + $0x16a8] sm:$0xff]
    %v1961 = vld [vmem:[%s3 + $0x16b0] sm:$0xff]
    %v1962 = vld [vmem:[%s3 + $0x16b8] sm:$0xff]
    %v1963 = vld [vmem:[%s3 + $0x16c0] sm:$0xff]
    %v1964 = vld [vmem:[%s3 + $0x16c8] sm:$0xff]
    %v1965 = vld [vmem:[%s3 + $0x16d0] sm:$0xff]
    %v1966 = vld [vmem:[%s3 + $0x16d8] sm:$0xff]
    %v1967 = vld [vmem:[%s3 + $0x16e0] sm:$0xff]
    %v1968 = vld [vmem:[%s3 + $0x16e8] sm:$0xff]
    %v1969 = vld [vmem:[%s3 + $0x16f0] sm:$0xff]
    %v1970 = vld [vmem:[%s3 + $0x16f8] sm:$0xff]
    %v1971 = vld [vmem:[%s3 + $0x1700] sm:$0xff]
    %v1972 = vld [vmem:[%s3 + $0x1708] sm:$0xff]
    %v1973 = vld [vmem:[%s3 + $0x1710] sm:$0xff]
    %v1974 = vld [vmem:[%s3 + $0x1718] sm:$0xff]
    %v1975 = vld [vmem:[%s3 + $0x1720] sm:$0xff]
    %v1976 = vld [vmem:[%s3 + $0x1728] sm:$0xff]
    %v1977 = vld [vmem:[%s3 + $0x1730] sm:$0xff]
    %v1978 = vld [vmem:[%s3 + $0x1738] sm:$0xff]
    %v1979 = vld [vmem:[%s3 + $0x1740] sm:$0xff]
    %v1980 = vld [vmem:[%s3 + $0x1748] sm:$0xff]
    %v1981 = vld [vmem:[%s3 + $0x1750] sm:$0xff]
    %v1982 = vld [vmem:[%s3 + $0x1758] sm:$0xff]
    %v1983 = vld [vmem:[%s3 + $0x1760] sm:$0xff]
    %v1984 = vld [vmem:[%s3 + $0x1768] sm:$0xff]
    %v1985 = vld [vmem:[%s3 + $0x1770] sm:$0xff]
    %v1986 = vld [vmem:[%s3 + $0x1778] sm:$0xff]
    %v1987 = vld [vmem:[%s3 + $0x1780] sm:$0xff]
    %v1988 = vld [vmem:[%s3 + $0x1788] sm:$0xff]
    %v1989 = vld [vmem:[%s3 + $0x1790] sm:$0xff]
    %v1990 = vld [vmem:[%s3 + $0x1798] sm:$0xff]
    %v1991 = vld [vmem:[%s3 + $0x17a0] sm:$0xff]
    %v1992 = vld [vmem:[%s3 + $0x17a8] sm:$0xff]
    %v1993 = vld [vmem:[%s3 + $0x17b0] sm:$0xff]
    %v1994 = vld [vmem:[%s3 + $0x17b8] sm:$0xff]
    %v1995 = vld [vmem:[%s3 + $0x17c0] sm:$0xff]
    %v1996 = vld [vmem:[%s3 + $0x17c8] sm:$0xff]
    %v1997 = vld [vmem:[%s3 + $0x17d0] sm:$0xff]
    %v1998 = vld [vmem:[%s3 + $0x17d8] sm:$0xff]
    %v1999 = vld [vmem:[%s3 + $0x17e0] sm:$0xff]
    %v2000 = vld [vmem:[%s3 + $0x17e8] sm:$0xff]
    %v2001 = vld [vmem:[%s3 + $0x17f0] sm:$0xff]
    %v2002 = vld [vmem:[%s3 + $0x17f8] sm:$0xff]
    %v2003 = vld [vmem:[%s3 + $0x1800] sm:$0xff]
    %v2004 = vld [vmem:[%s3 + $0x1808] sm:$0xff]
    %v2005 = vld [vmem:[%s3 + $0x1810] sm:$0xff]
    %v2006 = vld [vmem:[%s3 + $0x1818] sm:$0xff]
    %v2007 = vld [vmem:[%s3 + $0x1820] sm:$0xff]
    %v2008 = vld [vmem:[%s3 + $0x1828] sm:$0xff]
    %v2009 = vld [vmem:[%s3 + $0x1830] sm:$0xff]
    %v2010 = vld [vmem:[%s3 + $0x1838] sm:$0xff]
    %v2011 = vld [vmem:[%s3 + $0x1840] sm:$0xff]
    %v2012 = vld [vmem:[%s3 + $0x1848] sm:$0xff]
    %v2013 = vld [vmem:[%s3 + $0x1850] sm:$0xff]
    %v2014 = vld [vmem:[%s3 + $0x1858] sm:$0xff]
    %v2015 = vld [vmem:[%s3 + $0x1860] sm:$0xff]
    %v2016 = vld [vmem:[%s3 + $0x1868] sm:$0xff]
    %v2017 = vld [vmem:[%s3 + $0x1870] sm:$0xff]
    %v2018 = vld [vmem:[%s3 + $0x1878] sm:$0xff]
    %v2019 = vld [vmem:[%s3 + $0x1880] sm:$0xff]
    %v2020 = vld [vmem:[%s3 + $0x1888] sm:$0xff]
    %v2021 = vld [vmem:[%s3 + $0x1890] sm:$0xff]
    %v2022 = vld [vmem:[%s3 + $0x1898] sm:$0xff]
    %v2023 = vld [vmem:[%s3 + $0x18a0] sm:$0xff]
    %v2024 = vld [vmem:[%s3 + $0x18a8] sm:$0xff]
    %v2025 = vld [vmem:[%s3 + $0x18b0] sm:$0xff]
    %v2026 = vld [vmem:[%s3 + $0x18b8] sm:$0xff]
    %v2027 = vld [vmem:[%s3 + $0x18c0] sm:$0xff]
    %v2028 = vld [vmem:[%s3 + $0x18c8] sm:$0xff]
    %v2029 = vld [vmem:[%s3 + $0x18d0] sm:$0xff]
    %v2030 = vld [vmem:[%s3 + $0x18d8] sm:$0xff]
    %v2031 = vld [vmem:[%s3 + $0x18e0] sm:$0xff]
    %v2032 = vld [vmem:[%s3 + $0x18e8] sm:$0xff]
    %v2033 = vld [vmem:[%s3 + $0x18f0] sm:$0xff]
    %v2034 = vld [vmem:[%s3 + $0x18f8] sm:$0xff]
    %v2035 = vld [vmem:[%s3 + $0x1900] sm:$0xff]
    %v2036 = vld [vmem:[%s3 + $0x1908] sm:$0xff]
    %v2037 = vld [vmem:[%s3 + $0x1910] sm:$0xff]
    %v2038 = vld [vmem:[%s3 + $0x1918] sm:$0xff]
    %v2039 = vld [vmem:[%s3 + $0x1920] sm:$0xff]
    %v2040 = vld [vmem:[%s3 + $0x1928] sm:$0xff]
    %v2041 = vld [vmem:[%s3 + $0x1930] sm:$0xff]
    %v2042 = vld [vmem:[%s3 + $0x1938] sm:$0xff]
    %v2043 = vld [vmem:[%s3 + $0x1940] sm:$0xff]
    %v2044 = vld [vmem:[%s3 + $0x1948] sm:$0xff]
    %v2045 = vld [vmem:[%s3 + $0x1950] sm:$0xff]
    %v2046 = vld [vmem:[%s3 + $0x1958] sm:$0xff]
    %v2047 = vld [vmem:[%s3 + $0x1960] sm:$0xff]
    %v2048 = vld [vmem:[%s3 + $0x1968] sm:$0xff]
    %v2049 = vld [vmem:[%s3 + $0x1970] sm:$0xff]
    %v2050 = vld [vmem:[%s3 + $0x1978] sm:$0xff]
    %v2051 = vld [vmem:[%s3 + $0x1980] sm:$0xff]
    %v2052 = vld [vmem:[%s3 + $0x1988] sm:$0xff]
    %v2053 = vld [vmem:[%s3 + $0x1990] sm:$0xff]
    %v2054 = vld [vmem:[%s3 + $0x1998] sm:$0xff]
    %v2055 = vld [vmem:[%s3 + $0x19a0] sm:$0xff]
    %v2056 = vld [vmem:[%s3 + $0x19a8] sm:$0xff]
    %v2057 = vld [vmem:[%s3 + $0x19b0] sm:$0xff]
    %v2058 = vld [vmem:[%s3 + $0x19b8] sm:$0xff]
    %v2059 = vld [vmem:[%s3 + $0x19c0] sm:$0xff]
    %v2060 = vld [vmem:[%s3 + $0x19c8] sm:$0xff]
    %v2061 = vld [vmem:[%s3 + $0x19d0] sm:$0xff]
    %v2062 = vld [vmem:[%s3 + $0x19d8] sm:$0xff]
    %v2063 = vld [vmem:[%s3 + $0x19e0] sm:$0xff]
    %v2064 = vld [vmem:[%s3 + $0x19e8] sm:$0xff]
    %v2065 = vld [vmem:[%s3 + $0x19f0] sm:$0xff]
    %v2066 = vld [vmem:[%s3 + $0x19f8] sm:$0xff]
    %v2067 = vld [vmem:[%s3 + $0x1a00] sm:$0xff]
    %v2068 = vld [vmem:[%s3 + $0x1a08] sm:$0xff]
    %v2069 = vld [vmem:[%s3 + $0x1a10] sm:$0xff]
    %v2070 = vld [vmem:[%s3 + $0x1a18] sm:$0xff]
    %v2071 = vld [vmem:[%s3 + $0x1a20] sm:$0xff]
    %v2072 = vld [vmem:[%s3 + $0x1a28] sm:$0xff]
    %v2073 = vld [vmem:[%s3 + $0x1a30] sm:$0xff]
    %v2074 = vld [vmem:[%s3 + $0x1a38] sm:$0xff]
    %v2075 = vld [vmem:[%s3 + $0x1a40] sm:$0xff]
    %v2076 = vld [vmem:[%s3 + $0x1a48] sm:$0xff]
    %v2077 = vld [vmem:[%s3 + $0x1a50] sm:$0xff]
    %v2078 = vld [vmem:[%s3 + $0x1a58] sm:$0xff]
    %v2079 = vld [vmem:[%s3 + $0x1a60] sm:$0xff]
    %v2080 = vld [vmem:[%s3 + $0x1a68] sm:$0xff]
    %v2081 = vld [vmem:[%s3 + $0x1a70] sm:$0xff]
    %v2082 = vld [vmem:[%s3 + $0x1a78] sm:$0xff]
    %v2083 = vld [vmem:[%s3 + $0x1a80] sm:$0xff]
    %v2084 = vld [vmem:[%s3 + $0x1a88] sm:$0xff]
    %v2085 = vld [vmem:[%s3 + $0x1a90] sm:$0xff]
    %v2086 = vld [vmem:[%s3 + $0x1a98] sm:$0xff]
    %v2087 = vld [vmem:[%s3 + $0x1aa0] sm:$0xff]
    %v2088 = vld [vmem:[%s3 + $0x1aa8] sm:$0xff]
    %v2089 = vld [vmem:[%s3 + $0x1ab0] sm:$0xff]
    %v2090 = vld [vmem:[%s3 + $0x1ab8] sm:$0xff]
    %v2091 = vld [vmem:[%s3 + $0x1ac0] sm:$0xff]
    %v2092 = vld [vmem:[%s3 + $0x1ac8] sm:$0xff]
    %v2093 = vld [vmem:[%s3 + $0x1ad0] sm:$0xff]
    %v2094 = vld [vmem:[%s3 + $0x1ad8] sm:$0xff]
    %v2095 = vld [vmem:[%s3 + $0x1ae0] sm:$0xff]
    %v2096 = vld [vmem:[%s3 + $0x1ae8] sm:$0xff]
    %v2097 = vld [vmem:[%s3 + $0x1af0] sm:$0xff]
    %v2098 = vld [vmem:[%s3 + $0x1af8] sm:$0xff]
    %v2099 = vld [vmem:[%s3 + $0x1b00] sm:$0xff]
    %v2100 = vld [vmem:[%s3 + $0x1b08] sm:$0xff]
    %v2101 = vld [vmem:[%s3 + $0x1b10] sm:$0xff]
    %v2102 = vld [vmem:[%s3 + $0x1b18] sm:$0xff]
    %v2103 = vld [vmem:[%s3 + $0x1b20] sm:$0xff]
    %v2104 = vld [vmem:[%s3 + $0x1b28] sm:$0xff]
    %v2105 = vld [vmem:[%s3 + $0x1b30] sm:$0xff]
    %v2106 = vld [vmem:[%s3 + $0x1b38] sm:$0xff]
    %v2107 = vld [vmem:[%s3 + $0x1b40] sm:$0xff]
    %v2108 = vld [vmem:[%s3 + $0x1b48] sm:$0xff]
    %v2109 = vld [vmem:[%s3 + $0x1b50] sm:$0xff]
    %v2110 = vld [vmem:[%s3 + $0x1b58] sm:$0xff]
    %v2111 = vld [vmem:[%s3 + $0x1b60] sm:$0xff]
    %v2112 = vld [vmem:[%s3 + $0x1b68] sm:$0xff]
    %v2113 = vld [vmem:[%s3 + $0x1b70] sm:$0xff]
    %v2114 = vld [vmem:[%s3 + $0x1b78] sm:$0xff]
    %v2115 = vld [vmem:[%s3 + $0x1b80] sm:$0xff]
    %v2116 = vld [vmem:[%s3 + $0x1b88] sm:$0xff]
    %v2117 = vld [vmem:[%s3 + $0x1b90] sm:$0xff]
    %v2118 = vld [vmem:[%s3 + $0x1b98] sm:$0xff]
    %v2119 = vld [vmem:[%s3 + $0x1ba0] sm:$0xff]
    %v2120 = vld [vmem:[%s3 + $0x1ba8] sm:$0xff]
    %v2121 = vld [vmem:[%s3 + $0x1bb0] sm:$0xff]
    %v2122 = vld [vmem:[%s3 + $0x1bb8] sm:$0xff]
    %v2123 = vld [vmem:[%s3 + $0x1bc0] sm:$0xff]
    %v2124 = vld [vmem:[%s3 + $0x1bc8] sm:$0xff]
    %v2125 = vld [vmem:[%s3 + $0x1bd0] sm:$0xff]
    %v2126 = vld [vmem:[%s3 + $0x1bd8] sm:$0xff]
    %v2127 = vld [vmem:[%s3 + $0x1be0] sm:$0xff]
    %v2128 = vld [vmem:[%s3 + $0x1be8] sm:$0xff]
    %v2129 = vld [vmem:[%s3 + $0x1bf0] sm:$0xff]
    %v2130 = vld [vmem:[%s3 + $0x1bf8] sm:$0xff]
    %v2131 = vld [vmem:[%s3 + $0x1c00] sm:$0xff]
    %v2132 = vld [vmem:[%s3 + $0x1c08] sm:$0xff]
    %v2133 = vld [vmem:[%s3 + $0x1c10] sm:$0xff]
    %v2134 = vld [vmem:[%s3 + $0x1c18] sm:$0xff]
    %v2135 = vld [vmem:[%s3 + $0x1c20] sm:$0xff]
    %v2136 = vld [vmem:[%s3 + $0x1c28] sm:$0xff]
    %v2137 = vld [vmem:[%s3 + $0x1c30] sm:$0xff]
    %v2138 = vld [vmem:[%s3 + $0x1c38] sm:$0xff]
    %v2139 = vld [vmem:[%s3 + $0x1c40] sm:$0xff]
    %v2140 = vld [vmem:[%s3 + $0x1c48] sm:$0xff]
    %v2141 = vld [vmem:[%s3 + $0x1c50] sm:$0xff]
    %v2142 = vld [vmem:[%s3 + $0x1c58] sm:$0xff]
    %v2143 = vld [vmem:[%s3 + $0x1c60] sm:$0xff]
    %v2144 = vld [vmem:[%s3 + $0x1c68] sm:$0xff]
    %v2145 = vld [vmem:[%s3 + $0x1c70] sm:$0xff]
    %v2146 = vld [vmem:[%s3 + $0x1c78] sm:$0xff]
    %v2147 = vld [vmem:[%s3 + $0x1c80] sm:$0xff]
    %v2148 = vld [vmem:[%s3 + $0x1c88] sm:$0xff]
    %v2149 = vld [vmem:[%s3 + $0x1c90] sm:$0xff]
    %v2150 = vld [vmem:[%s3 + $0x1c98] sm:$0xff]
    %v2151 = vld [vmem:[%s3 + $0x1ca0] sm:$0xff]
    %v2152 = vld [vmem:[%s3 + $0x1ca8] sm:$0xff]
    %v2153 = vld [vmem:[%s3 + $0x1cb0] sm:$0xff]
    %v2154 = vld [vmem:[%s3 + $0x1cb8] sm:$0xff]
    %v2155 = vld [vmem:[%s3 + $0x1cc0] sm:$0xff]
    %v2156 = vld [vmem:[%s3 + $0x1cc8] sm:$0xff]
    %v2157 = vld [vmem:[%s3 + $0x1cd0] sm:$0xff]
    %v2158 = vld [vmem:[%s3 + $0x1cd8] sm:$0xff]
    %v2159 = vld [vmem:[%s3 + $0x1ce0] sm:$0xff]
    %v2160 = vld [vmem:[%s3 + $0x1ce8] sm:$0xff]
    %v2161 = vld [vmem:[%s3 + $0x1cf0] sm:$0xff]
    %v2162 = vld [vmem:[%s3 + $0x1cf8] sm:$0xff]
    %v2163 = vld [vmem:[%s3 + $0x1d00] sm:$0xff]
    %v2164 = vld [vmem:[%s3 + $0x1d08] sm:$0xff]
    %v2165 = vld [vmem:[%s3 + $0x1d10] sm:$0xff]
    %v2166 = vld [vmem:[%s3 + $0x1d18] sm:$0xff]
    %v2167 = vld [vmem:[%s3 + $0x1d20] sm:$0xff]
    %v2168 = vld [vmem:[%s3 + $0x1d28] sm:$0xff]
    %v2169 = vld [vmem:[%s3 + $0x1d30] sm:$0xff]
    %v2170 = vld [vmem:[%s3 + $0x1d38] sm:$0xff]
    %v2171 = vld [vmem:[%s3 + $0x1d40] sm:$0xff]
    %v2172 = vld [vmem:[%s3 + $0x1d48] sm:$0xff]
    %v2173 = vld [vmem:[%s3 + $0x1d50] sm:$0xff]
    %v2174 = vld [vmem:[%s3 + $0x1d58] sm:$0xff]
    %v2175 = vld [vmem:[%s3 + $0x1d60] sm:$0xff]
    %v2176 = vld [vmem:[%s3 + $0x1d68] sm:$0xff]
    %v2177 = vld [vmem:[%s3 + $0x1d70] sm:$0xff]
    %v2178 = vld [vmem:[%s3 + $0x1d78] sm:$0xff]
    %v2179 = vld [vmem:[%s3 + $0x1d80] sm:$0xff]
    %v2180 = vld [vmem:[%s3 + $0x1d88] sm:$0xff]
    %v2181 = vld [vmem:[%s3 + $0x1d90] sm:$0xff]
    %v2182 = vld [vmem:[%s3 + $0x1d98] sm:$0xff]
    %v2183 = vld [vmem:[%s3 + $0x1da0] sm:$0xff]
    %v2184 = vld [vmem:[%s3 + $0x1da8] sm:$0xff]
    %v2185 = vld [vmem:[%s3 + $0x1db0] sm:$0xff]
    %v2186 = vld [vmem:[%s3 + $0x1db8] sm:$0xff]
    %v2187 = vld [vmem:[%s3 + $0x1dc0] sm:$0xff]
    %v2188 = vld [vmem:[%s3 + $0x1dc8] sm:$0xff]
    %v2189 = vld [vmem:[%s3 + $0x1dd0] sm:$0xff]
    %v2190 = vld [vmem:[%s3 + $0x1dd8] sm:$0xff]
    %v2191 = vld [vmem:[%s3 + $0x1de0] sm:$0xff]
    %v2192 = vld [vmem:[%s3 + $0x1de8] sm:$0xff]
    %v2193 = vld [vmem:[%s3 + $0x1df0] sm:$0xff]
    %v2194 = vld [vmem:[%s3 + $0x1df8] sm:$0xff]
    %v2195 = vld [vmem:[%s3 + $0x1e00] sm:$0xff]
    %v2196 = vld [vmem:[%s3 + $0x1e08] sm:$0xff]
    %v2197 = vld [vmem:[%s3 + $0x1e10] sm:$0xff]
    %v2198 = vld [vmem:[%s3 + $0x1e18] sm:$0xff]
    %v2199 = vld [vmem:[%s3 + $0x1e20] sm:$0xff]
    %v2200 = vld [vmem:[%s3 + $0x1e28] sm:$0xff]
    %v2201 = vld [vmem:[%s3 + $0x1e30] sm:$0xff]
    %v2202 = vld [vmem:[%s3 + $0x1e38] sm:$0xff]
    %v2203 = vld [vmem:[%s3 + $0x1e40] sm:$0xff]
    %v2204 = vld [vmem:[%s3 + $0x1e48] sm:$0xff]
    %v2205 = vld [vmem:[%s3 + $0x1e50] sm:$0xff]
    %v2206 = vld [vmem:[%s3 + $0x1e58] sm:$0xff]
    %v2207 = vld [vmem:[%s3 + $0x1e60] sm:$0xff]
    %v2208 = vld [vmem:[%s3 + $0x1e68] sm:$0xff]
    %v2209 = vld [vmem:[%s3 + $0x1e70] sm:$0xff]
    %v2210 = vld [vmem:[%s3 + $0x1e78] sm:$0xff]
    %v2211 = vld [vmem:[%s3 + $0x1e80] sm:$0xff]
    %v2212 = vld [vmem:[%s3 + $0x1e88] sm:$0xff]
    %v2213 = vld [vmem:[%s3 + $0x1e90] sm:$0xff]
    %v2214 = vld [vmem:[%s3 + $0x1e98] sm:$0xff]
    %v2215 = vld [vmem:[%s3 + $0x1ea0] sm:$0xff]
    %v2216 = vld [vmem:[%s3 + $0x1ea8] sm:$0xff]
    %v2217 = vld [vmem:[%s3 + $0x1eb0] sm:$0xff]
    %v2218 = vld [vmem:[%s3 + $0x1eb8] sm:$0xff]
    %v2219 = vld [vmem:[%s3 + $0x1ec0] sm:$0xff]
    %v2220 = vld [vmem:[%s3 + $0x1ec8] sm:$0xff]
    %v2221 = vld [vmem:[%s3 + $0x1ed0] sm:$0xff]
    %v2222 = vld [vmem:[%s3 + $0x1ed8] sm:$0xff]
    %v2223 = vld [vmem:[%s3 + $0x1ee0] sm:$0xff]
    %v2224 = vld [vmem:[%s3 + $0x1ee8] sm:$0xff]
    %v2225 = vld [vmem:[%s3 + $0x1ef0] sm:$0xff]
    %v2226 = vld [vmem:[%s3 + $0x1ef8] sm:$0xff]
    %v2227 = vld [vmem:[%s3 + $0x1f00] sm:$0xff]
    %v2228 = vld [vmem:[%s3 + $0x1f08] sm:$0xff]
    %v2229 = vld [vmem:[%s3 + $0x1f10] sm:$0xff]
    %v2230 = vld [vmem:[%s3 + $0x1f18] sm:$0xff]
    %v2231 = vld [vmem:[%s3 + $0x1f20] sm:$0xff]
    %v2232 = vld [vmem:[%s3 + $0x1f28] sm:$0xff]
    %v2233 = vld [vmem:[%s3 + $0x1f30] sm:$0xff]
    %v2234 = vld [vmem:[%s3 + $0x1f38] sm:$0xff]
    %v2235 = vld [vmem:[%s3 + $0x1f40] sm:$0xff]
    %v2236 = vld [vmem:[%s3 + $0x1f48] sm:$0xff]
    %v2237 = vld [vmem:[%s3 + $0x1f50] sm:$0xff]
    %v2238 = vld [vmem:[%s3 + $0x1f58] sm:$0xff]
    %v2239 = vld [vmem:[%s3 + $0x1f60] sm:$0xff]
    %v2240 = vld [vmem:[%s3 + $0x1f68] sm:$0xff]
    %v2241 = vld [vmem:[%s3 + $0x1f70] sm:$0xff]
    %v2242 = vld [vmem:[%s3 + $0x1f78] sm:$0xff]
    %v2243 = vld [vmem:[%s3 + $0x1f80] sm:$0xff]
    %v2244 = vld [vmem:[%s3 + $0x1f88] sm:$0xff]
    %v2245 = vld [vmem:[%s3 + $0x1f90] sm:$0xff]
    %v2246 = vld [vmem:[%s3 + $0x1f98] sm:$0xff]
    %v2247 = vld [vmem:[%s3 + $0x1fa0] sm:$0xff]
    %v2248 = vld [vmem:[%s3 + $0x1fa8] sm:$0xff]
    %v2249 = vld [vmem:[%s3 + $0x1fb0] sm:$0xff]
    %v2250 = vld [vmem:[%s3 + $0x1fb8] sm:$0xff]
    %v2251 = vld [vmem:[%s3 + $0x1fc0] sm:$0xff]
    %v2252 = vld [vmem:[%s3 + $0x1fc8] sm:$0xff]
    %v2253 = vld [vmem:[%s3 + $0x1fd0] sm:$0xff]
    %v2254 = vld [vmem:[%s3 + $0x1fd8] sm:$0xff]
    %v2255 = vld [vmem:[%s3 + $0x1fe0] sm:$0xff]
    %v2256 = vld [vmem:[%s3 + $0x1fe8] sm:$0xff]
    %v2257 = vld [vmem:[%s3 + $0x1ff0] sm:$0xff]
    %v2258 = vld [vmem:[%s3 + $0x1ff8] sm:$0xff]
    %v2259 = vld [vmem:[%s4] sm:$0xff]
    %v2261 = vlaneseq
    %v2262 = vshrl.u32 %v2261, 7
    %v2263 = vsub.s32 0, %v2262
    %v2264 = vrot.slane %v2259, %v2263
    %v2265 = vlaneseq
    %v2266 = vshrl.u32 %v2265, 7
    %v2267 = vsub.s32 1, %v2266
    %v2268 = vrot.slane %v2259, %v2267
    %v2269 = vlaneseq
    %v2270 = vshrl.u32 %v2269, 7
    %v2271 = vsub.s32 2, %v2270
    %v2272 = vrot.slane %v2259, %v2271
    %v2273 = vlaneseq
    %v2274 = vshrl.u32 %v2273, 7
    %v2275 = vsub.s32 3, %v2274
    %v2276 = vrot.slane %v2259, %v2275
    %v2277 = vlaneseq
    %v2278 = vshrl.u32 %v2277, 7
    %v2279 = vsub.s32 4, %v2278
    %v2280 = vrot.slane %v2259, %v2279
    %v2281 = vlaneseq
    %v2282 = vshrl.u32 %v2281, 7
    %v2283 = vsub.s32 5, %v2282
    %v2284 = vrot.slane %v2259, %v2283
    %v2285 = vlaneseq
    %v2286 = vshrl.u32 %v2285, 7
    %v2287 = vsub.s32 6, %v2286
    %v2288 = vrot.slane %v2259, %v2287
    %v2289 = vlaneseq
    %v2290 = vshrl.u32 %v2289, 7
    %v2291 = vsub.s32 7, %v2290
    %v2292 = vrot.slane %v2259, %v2291
    %v3325 = vunpack.c.l.b16 %v1235
    %v3326 = vunpack.c.h.b16 %v1235
    %v3327 = vunpack.c.l.b16 %v1236
    %v3328 = vunpack.c.h.b16 %v1236
    %v3329 = vunpack.c.l.b16 %v1237
    %v3330 = vunpack.c.h.b16 %v1237
    %v3331 = vunpack.c.l.b16 %v1238
    %v3332 = vunpack.c.h.b16 %v1238
    %v3333 = vunpack.c.l.b16 %v1239
    %v3334 = vunpack.c.h.b16 %v1239
    %v3335 = vunpack.c.l.b16 %v1240
    %v3336 = vunpack.c.h.b16 %v1240
    %v3337 = vunpack.c.l.b16 %v1241
    %v3338 = vunpack.c.h.b16 %v1241
    %v3339 = vunpack.c.l.b16 %v1242
    %v3340 = vunpack.c.h.b16 %v1242
    %v3341 = vunpack.c.l.b16 %v1243
    %v3342 = vunpack.c.h.b16 %v1243
    %v3343 = vunpack.c.l.b16 %v1244
    %v3344 = vunpack.c.h.b16 %v1244
    %v3345 = vunpack.c.l.b16 %v1245
    %v3346 = vunpack.c.h.b16 %v1245
    %v3347 = vunpack.c.l.b16 %v1246
    %v3348 = vunpack.c.h.b16 %v1246
    %v3349 = vunpack.c.l.b16 %v1247
    %v3350 = vunpack.c.h.b16 %v1247
    %v3351 = vunpack.c.l.b16 %v1248
    %v3352 = vunpack.c.h.b16 %v1248
    %v3353 = vunpack.c.l.b16 %v1249
    %v3354 = vunpack.c.h.b16 %v1249
    %v3355 = vunpack.c.l.b16 %v1250
    %v3356 = vunpack.c.h.b16 %v1250
    %v3357 = vunpack.c.l.b16 %v1251
    %v3358 = vunpack.c.h.b16 %v1251
    %v3359 = vunpack.c.l.b16 %v1252
    %v3360 = vunpack.c.h.b16 %v1252
    %v3361 = vunpack.c.l.b16 %v1253
    %v3362 = vunpack.c.h.b16 %v1253
    %v3363 = vunpack.c.l.b16 %v1254
    %v3364 = vunpack.c.h.b16 %v1254
    %v3365 = vunpack.c.l.b16 %v1255
    %v3366 = vunpack.c.h.b16 %v1255
    %v3367 = vunpack.c.l.b16 %v1256
    %v3368 = vunpack.c.h.b16 %v1256
    %v3369 = vunpack.c.l.b16 %v1257
    %v3370 = vunpack.c.h.b16 %v1257
    %v3371 = vunpack.c.l.b16 %v1258
    %v3372 = vunpack.c.h.b16 %v1258
    %v3373 = vunpack.c.l.b16 %v1259
    %v3374 = vunpack.c.h.b16 %v1259
    %v3375 = vunpack.c.l.b16 %v1260
    %v3376 = vunpack.c.h.b16 %v1260
    %v3377 = vunpack.c.l.b16 %v1261
    %v3378 = vunpack.c.h.b16 %v1261
    %v3379 = vunpack.c.l.b16 %v1262
    %v3380 = vunpack.c.h.b16 %v1262
    %v3381 = vunpack.c.l.b16 %v1263
    %v3382 = vunpack.c.h.b16 %v1263
    %v3383 = vunpack.c.l.b16 %v1264
    %v3384 = vunpack.c.h.b16 %v1264
    %v3385 = vunpack.c.l.b16 %v1265
    %v3386 = vunpack.c.h.b16 %v1265
    %v3387 = vunpack.c.l.b16 %v1266
    %v3388 = vunpack.c.h.b16 %v1266
    %v3389 = vunpack.c.l.b16 %v1267
    %v3390 = vunpack.c.h.b16 %v1267
    %v3391 = vunpack.c.l.b16 %v1268
    %v3392 = vunpack.c.h.b16 %v1268
    %v3393 = vunpack.c.l.b16 %v1269
    %v3394 = vunpack.c.h.b16 %v1269
    %v3395 = vunpack.c.l.b16 %v1270
    %v3396 = vunpack.c.h.b16 %v1270
    %v3397 = vunpack.c.l.b16 %v1271
    %v3398 = vunpack.c.h.b16 %v1271
    %v3399 = vunpack.c.l.b16 %v1272
    %v3400 = vunpack.c.h.b16 %v1272
    %v3401 = vunpack.c.l.b16 %v1273
    %v3402 = vunpack.c.h.b16 %v1273
    %v3403 = vunpack.c.l.b16 %v1274
    %v3404 = vunpack.c.h.b16 %v1274
    %v3405 = vunpack.c.l.b16 %v1275
    %v3406 = vunpack.c.h.b16 %v1275
    %v3407 = vunpack.c.l.b16 %v1276
    %v3408 = vunpack.c.h.b16 %v1276
    %v3409 = vunpack.c.l.b16 %v1277
    %v3410 = vunpack.c.h.b16 %v1277
    %v3411 = vunpack.c.l.b16 %v1278
    %v3412 = vunpack.c.h.b16 %v1278
    %v3413 = vunpack.c.l.b16 %v1279
    %v3414 = vunpack.c.h.b16 %v1279
    %v3415 = vunpack.c.l.b16 %v1280
    %v3416 = vunpack.c.h.b16 %v1280
    %v3417 = vunpack.c.l.b16 %v1281
    %v3418 = vunpack.c.h.b16 %v1281
    %v3419 = vunpack.c.l.b16 %v1282
    %v3420 = vunpack.c.h.b16 %v1282
    %v3421 = vunpack.c.l.b16 %v1283
    %v3422 = vunpack.c.h.b16 %v1283
    %v3423 = vunpack.c.l.b16 %v1284
    %v3424 = vunpack.c.h.b16 %v1284
    %v3425 = vunpack.c.l.b16 %v1285
    %v3426 = vunpack.c.h.b16 %v1285
    %v3427 = vunpack.c.l.b16 %v1286
    %v3428 = vunpack.c.h.b16 %v1286
    %v3429 = vunpack.c.l.b16 %v1287
    %v3430 = vunpack.c.h.b16 %v1287
    %v3431 = vunpack.c.l.b16 %v1288
    %v3432 = vunpack.c.h.b16 %v1288
    %v3433 = vunpack.c.l.b16 %v1289
    %v3434 = vunpack.c.h.b16 %v1289
    %v3435 = vunpack.c.l.b16 %v1290
    %v3436 = vunpack.c.h.b16 %v1290
    %v3437 = vunpack.c.l.b16 %v1291
    %v3438 = vunpack.c.h.b16 %v1291
    %v3439 = vunpack.c.l.b16 %v1292
    %v3440 = vunpack.c.h.b16 %v1292
    %v3441 = vunpack.c.l.b16 %v1293
    %v3442 = vunpack.c.h.b16 %v1293
    %v3443 = vunpack.c.l.b16 %v1294
    %v3444 = vunpack.c.h.b16 %v1294
    %v3445 = vunpack.c.l.b16 %v1295
    %v3446 = vunpack.c.h.b16 %v1295
    %v3447 = vunpack.c.l.b16 %v1296
    %v3448 = vunpack.c.h.b16 %v1296
    %v3449 = vunpack.c.l.b16 %v1297
    %v3450 = vunpack.c.h.b16 %v1297
    %v3451 = vunpack.c.l.b16 %v1298
    %v3452 = vunpack.c.h.b16 %v1298
    %v3453 = vunpack.c.l.b16 %v1299
    %v3454 = vunpack.c.h.b16 %v1299
    %v3455 = vunpack.c.l.b16 %v1300
    %v3456 = vunpack.c.h.b16 %v1300
    %v3457 = vunpack.c.l.b16 %v1301
    %v3458 = vunpack.c.h.b16 %v1301
    %v3459 = vunpack.c.l.b16 %v1302
    %v3460 = vunpack.c.h.b16 %v1302
    %v3461 = vunpack.c.l.b16 %v1303
    %v3462 = vunpack.c.h.b16 %v1303
    %v3463 = vunpack.c.l.b16 %v1304
    %v3464 = vunpack.c.h.b16 %v1304
    %v3465 = vunpack.c.l.b16 %v1305
    %v3466 = vunpack.c.h.b16 %v1305
    %v3467 = vunpack.c.l.b16 %v1306
    %v3468 = vunpack.c.h.b16 %v1306
    %v3469 = vunpack.c.l.b16 %v1307
    %v3470 = vunpack.c.h.b16 %v1307
    %v3471 = vunpack.c.l.b16 %v1308
    %v3472 = vunpack.c.h.b16 %v1308
    %v3473 = vunpack.c.l.b16 %v1309
    %v3474 = vunpack.c.h.b16 %v1309
    %v3475 = vunpack.c.l.b16 %v1310
    %v3476 = vunpack.c.h.b16 %v1310
    %v3477 = vunpack.c.l.b16 %v1311
    %v3478 = vunpack.c.h.b16 %v1311
    %v3479 = vunpack.c.l.b16 %v1312
    %v3480 = vunpack.c.h.b16 %v1312
    %v3481 = vunpack.c.l.b16 %v1313
    %v3482 = vunpack.c.h.b16 %v1313
    %v3483 = vunpack.c.l.b16 %v1314
    %v3484 = vunpack.c.h.b16 %v1314
    %v3485 = vunpack.c.l.b16 %v1315
    %v3486 = vunpack.c.h.b16 %v1315
    %v3487 = vunpack.c.l.b16 %v1316
    %v3488 = vunpack.c.h.b16 %v1316
    %v3489 = vunpack.c.l.b16 %v1317
    %v3490 = vunpack.c.h.b16 %v1317
    %v3491 = vunpack.c.l.b16 %v1318
    %v3492 = vunpack.c.h.b16 %v1318
    %v3493 = vunpack.c.l.b16 %v1319
    %v3494 = vunpack.c.h.b16 %v1319
    %v3495 = vunpack.c.l.b16 %v1320
    %v3496 = vunpack.c.h.b16 %v1320
    %v3497 = vunpack.c.l.b16 %v1321
    %v3498 = vunpack.c.h.b16 %v1321
    %v3499 = vunpack.c.l.b16 %v1322
    %v3500 = vunpack.c.h.b16 %v1322
    %v3501 = vunpack.c.l.b16 %v1323
    %v3502 = vunpack.c.h.b16 %v1323
    %v3503 = vunpack.c.l.b16 %v1324
    %v3504 = vunpack.c.h.b16 %v1324
    %v3505 = vunpack.c.l.b16 %v1325
    %v3506 = vunpack.c.h.b16 %v1325
    %v3507 = vunpack.c.l.b16 %v1326
    %v3508 = vunpack.c.h.b16 %v1326
    %v3509 = vunpack.c.l.b16 %v1327
    %v3510 = vunpack.c.h.b16 %v1327
    %v3511 = vunpack.c.l.b16 %v1328
    %v3512 = vunpack.c.h.b16 %v1328
    %v3513 = vunpack.c.l.b16 %v1329
    %v3514 = vunpack.c.h.b16 %v1329
    %v3515 = vunpack.c.l.b16 %v1330
    %v3516 = vunpack.c.h.b16 %v1330
    %v3517 = vunpack.c.l.b16 %v1331
    %v3518 = vunpack.c.h.b16 %v1331
    %v3519 = vunpack.c.l.b16 %v1332
    %v3520 = vunpack.c.h.b16 %v1332
    %v3521 = vunpack.c.l.b16 %v1333
    %v3522 = vunpack.c.h.b16 %v1333
    %v3523 = vunpack.c.l.b16 %v1334
    %v3524 = vunpack.c.h.b16 %v1334
    %v3525 = vunpack.c.l.b16 %v1335
    %v3526 = vunpack.c.h.b16 %v1335
    %v3527 = vunpack.c.l.b16 %v1336
    %v3528 = vunpack.c.h.b16 %v1336
    %v3529 = vunpack.c.l.b16 %v1337
    %v3530 = vunpack.c.h.b16 %v1337
    %v3531 = vunpack.c.l.b16 %v1338
    %v3532 = vunpack.c.h.b16 %v1338
    %v3533 = vunpack.c.l.b16 %v1339
    %v3534 = vunpack.c.h.b16 %v1339
    %v3535 = vunpack.c.l.b16 %v1340
    %v3536 = vunpack.c.h.b16 %v1340
    %v3537 = vunpack.c.l.b16 %v1341
    %v3538 = vunpack.c.h.b16 %v1341
    %v3539 = vunpack.c.l.b16 %v1342
    %v3540 = vunpack.c.h.b16 %v1342
    %v3541 = vunpack.c.l.b16 %v1343
    %v3542 = vunpack.c.h.b16 %v1343
    %v3543 = vunpack.c.l.b16 %v1344
    %v3544 = vunpack.c.h.b16 %v1344
    %v3545 = vunpack.c.l.b16 %v1345
    %v3546 = vunpack.c.h.b16 %v1345
    %v3547 = vunpack.c.l.b16 %v1346
    %v3548 = vunpack.c.h.b16 %v1346
    %v3549 = vunpack.c.l.b16 %v1347
    %v3550 = vunpack.c.h.b16 %v1347
    %v3551 = vunpack.c.l.b16 %v1348
    %v3552 = vunpack.c.h.b16 %v1348
    %v3553 = vunpack.c.l.b16 %v1349
    %v3554 = vunpack.c.h.b16 %v1349
    %v3555 = vunpack.c.l.b16 %v1350
    %v3556 = vunpack.c.h.b16 %v1350
    %v3557 = vunpack.c.l.b16 %v1351
    %v3558 = vunpack.c.h.b16 %v1351
    %v3559 = vunpack.c.l.b16 %v1352
    %v3560 = vunpack.c.h.b16 %v1352
    %v3561 = vunpack.c.l.b16 %v1353
    %v3562 = vunpack.c.h.b16 %v1353
    %v3563 = vunpack.c.l.b16 %v1354
    %v3564 = vunpack.c.h.b16 %v1354
    %v3565 = vunpack.c.l.b16 %v1355
    %v3566 = vunpack.c.h.b16 %v1355
    %v3567 = vunpack.c.l.b16 %v1356
    %v3568 = vunpack.c.h.b16 %v1356
    %v3569 = vunpack.c.l.b16 %v1357
    %v3570 = vunpack.c.h.b16 %v1357
    %v3571 = vunpack.c.l.b16 %v1358
    %v3572 = vunpack.c.h.b16 %v1358
    %v3573 = vunpack.c.l.b16 %v1359
    %v3574 = vunpack.c.h.b16 %v1359
    %v3575 = vunpack.c.l.b16 %v1360
    %v3576 = vunpack.c.h.b16 %v1360
    %v3577 = vunpack.c.l.b16 %v1361
    %v3578 = vunpack.c.h.b16 %v1361
    %v3579 = vunpack.c.l.b16 %v1362
    %v3580 = vunpack.c.h.b16 %v1362
    %v3581 = vunpack.c.l.b16 %v1363
    %v3582 = vunpack.c.h.b16 %v1363
    %v3583 = vunpack.c.l.b16 %v1364
    %v3584 = vunpack.c.h.b16 %v1364
    %v3585 = vunpack.c.l.b16 %v1365
    %v3586 = vunpack.c.h.b16 %v1365
    %v3587 = vunpack.c.l.b16 %v1366
    %v3588 = vunpack.c.h.b16 %v1366
    %v3589 = vunpack.c.l.b16 %v1367
    %v3590 = vunpack.c.h.b16 %v1367
    %v3591 = vunpack.c.l.b16 %v1368
    %v3592 = vunpack.c.h.b16 %v1368
    %v3593 = vunpack.c.l.b16 %v1369
    %v3594 = vunpack.c.h.b16 %v1369
    %v3595 = vunpack.c.l.b16 %v1370
    %v3596 = vunpack.c.h.b16 %v1370
    %v3597 = vunpack.c.l.b16 %v1371
    %v3598 = vunpack.c.h.b16 %v1371
    %v3599 = vunpack.c.l.b16 %v1372
    %v3600 = vunpack.c.h.b16 %v1372
    %v3601 = vunpack.c.l.b16 %v1373
    %v3602 = vunpack.c.h.b16 %v1373
    %v3603 = vunpack.c.l.b16 %v1374
    %v3604 = vunpack.c.h.b16 %v1374
    %v3605 = vunpack.c.l.b16 %v1375
    %v3606 = vunpack.c.h.b16 %v1375
    %v3607 = vunpack.c.l.b16 %v1376
    %v3608 = vunpack.c.h.b16 %v1376
    %v3609 = vunpack.c.l.b16 %v1377
    %v3610 = vunpack.c.h.b16 %v1377
    %v3611 = vunpack.c.l.b16 %v1378
    %v3612 = vunpack.c.h.b16 %v1378
    %v3613 = vunpack.c.l.b16 %v1379
    %v3614 = vunpack.c.h.b16 %v1379
    %v3615 = vunpack.c.l.b16 %v1380
    %v3616 = vunpack.c.h.b16 %v1380
    %v3617 = vunpack.c.l.b16 %v1381
    %v3618 = vunpack.c.h.b16 %v1381
    %v3619 = vunpack.c.l.b16 %v1382
    %v3620 = vunpack.c.h.b16 %v1382
    %v3621 = vunpack.c.l.b16 %v1383
    %v3622 = vunpack.c.h.b16 %v1383
    %v3623 = vunpack.c.l.b16 %v1384
    %v3624 = vunpack.c.h.b16 %v1384
    %v3625 = vunpack.c.l.b16 %v1385
    %v3626 = vunpack.c.h.b16 %v1385
    %v3627 = vunpack.c.l.b16 %v1386
    %v3628 = vunpack.c.h.b16 %v1386
    %v3629 = vunpack.c.l.b16 %v1387
    %v3630 = vunpack.c.h.b16 %v1387
    %v3631 = vunpack.c.l.b16 %v1388
    %v3632 = vunpack.c.h.b16 %v1388
    %v3633 = vunpack.c.l.b16 %v1389
    %v3634 = vunpack.c.h.b16 %v1389
    %v3635 = vunpack.c.l.b16 %v1390
    %v3636 = vunpack.c.h.b16 %v1390
    %v3637 = vunpack.c.l.b16 %v1391
    %v3638 = vunpack.c.h.b16 %v1391
    %v3639 = vunpack.c.l.b16 %v1392
    %v3640 = vunpack.c.h.b16 %v1392
    %v3641 = vunpack.c.l.b16 %v1393
    %v3642 = vunpack.c.h.b16 %v1393
    %v3643 = vunpack.c.l.b16 %v1394
    %v3644 = vunpack.c.h.b16 %v1394
    %v3645 = vunpack.c.l.b16 %v1395
    %v3646 = vunpack.c.h.b16 %v1395
    %v3647 = vunpack.c.l.b16 %v1396
    %v3648 = vunpack.c.h.b16 %v1396
    %v3649 = vunpack.c.l.b16 %v1397
    %v3650 = vunpack.c.h.b16 %v1397
    %v3651 = vunpack.c.l.b16 %v1398
    %v3652 = vunpack.c.h.b16 %v1398
    %v3653 = vunpack.c.l.b16 %v1399
    %v3654 = vunpack.c.h.b16 %v1399
    %v3655 = vunpack.c.l.b16 %v1400
    %v3656 = vunpack.c.h.b16 %v1400
    %v3657 = vunpack.c.l.b16 %v1401
    %v3658 = vunpack.c.h.b16 %v1401
    %v3659 = vunpack.c.l.b16 %v1402
    %v3660 = vunpack.c.h.b16 %v1402
    %v3661 = vunpack.c.l.b16 %v1403
    %v3662 = vunpack.c.h.b16 %v1403
    %v3663 = vunpack.c.l.b16 %v1404
    %v3664 = vunpack.c.h.b16 %v1404
    %v3665 = vunpack.c.l.b16 %v1405
    %v3666 = vunpack.c.h.b16 %v1405
    %v3667 = vunpack.c.l.b16 %v1406
    %v3668 = vunpack.c.h.b16 %v1406
    %v3669 = vunpack.c.l.b16 %v1407
    %v3670 = vunpack.c.h.b16 %v1407
    %v3671 = vunpack.c.l.b16 %v1408
    %v3672 = vunpack.c.h.b16 %v1408
    %v3673 = vunpack.c.l.b16 %v1409
    %v3674 = vunpack.c.h.b16 %v1409
    %v3675 = vunpack.c.l.b16 %v1410
    %v3676 = vunpack.c.h.b16 %v1410
    %v3677 = vunpack.c.l.b16 %v1411
    %v3678 = vunpack.c.h.b16 %v1411
    %v3679 = vunpack.c.l.b16 %v1412
    %v3680 = vunpack.c.h.b16 %v1412
    %v3681 = vunpack.c.l.b16 %v1413
    %v3682 = vunpack.c.h.b16 %v1413
    %v3683 = vunpack.c.l.b16 %v1414
    %v3684 = vunpack.c.h.b16 %v1414
    %v3685 = vunpack.c.l.b16 %v1415
    %v3686 = vunpack.c.h.b16 %v1415
    %v3687 = vunpack.c.l.b16 %v1416
    %v3688 = vunpack.c.h.b16 %v1416
    %v3689 = vunpack.c.l.b16 %v1417
    %v3690 = vunpack.c.h.b16 %v1417
    %v3691 = vunpack.c.l.b16 %v1418
    %v3692 = vunpack.c.h.b16 %v1418
    %v3693 = vunpack.c.l.b16 %v1419
    %v3694 = vunpack.c.h.b16 %v1419
    %v3695 = vunpack.c.l.b16 %v1420
    %v3696 = vunpack.c.h.b16 %v1420
    %v3697 = vunpack.c.l.b16 %v1421
    %v3698 = vunpack.c.h.b16 %v1421
    %v3699 = vunpack.c.l.b16 %v1422
    %v3700 = vunpack.c.h.b16 %v1422
    %v3701 = vunpack.c.l.b16 %v1423
    %v3702 = vunpack.c.h.b16 %v1423
    %v3703 = vunpack.c.l.b16 %v1424
    %v3704 = vunpack.c.h.b16 %v1424
    %v3705 = vunpack.c.l.b16 %v1425
    %v3706 = vunpack.c.h.b16 %v1425
    %v3707 = vunpack.c.l.b16 %v1426
    %v3708 = vunpack.c.h.b16 %v1426
    %v3709 = vunpack.c.l.b16 %v1427
    %v3710 = vunpack.c.h.b16 %v1427
    %v3711 = vunpack.c.l.b16 %v1428
    %v3712 = vunpack.c.h.b16 %v1428
    %v3713 = vunpack.c.l.b16 %v1429
    %v3714 = vunpack.c.h.b16 %v1429
    %v3715 = vunpack.c.l.b16 %v1430
    %v3716 = vunpack.c.h.b16 %v1430
    %v3717 = vunpack.c.l.b16 %v1431
    %v3718 = vunpack.c.h.b16 %v1431
    %v3719 = vunpack.c.l.b16 %v1432
    %v3720 = vunpack.c.h.b16 %v1432
    %v3721 = vunpack.c.l.b16 %v1433
    %v3722 = vunpack.c.h.b16 %v1433
    %v3723 = vunpack.c.l.b16 %v1434
    %v3724 = vunpack.c.h.b16 %v1434
    %v3725 = vunpack.c.l.b16 %v1435
    %v3726 = vunpack.c.h.b16 %v1435
    %v3727 = vunpack.c.l.b16 %v1436
    %v3728 = vunpack.c.h.b16 %v1436
    %v3729 = vunpack.c.l.b16 %v1437
    %v3730 = vunpack.c.h.b16 %v1437
    %v3731 = vunpack.c.l.b16 %v1438
    %v3732 = vunpack.c.h.b16 %v1438
    %v3733 = vunpack.c.l.b16 %v1439
    %v3734 = vunpack.c.h.b16 %v1439
    %v3735 = vunpack.c.l.b16 %v1440
    %v3736 = vunpack.c.h.b16 %v1440
    %v3737 = vunpack.c.l.b16 %v1441
    %v3738 = vunpack.c.h.b16 %v1441
    %v3739 = vunpack.c.l.b16 %v1442
    %v3740 = vunpack.c.h.b16 %v1442
    %v3741 = vunpack.c.l.b16 %v1443
    %v3742 = vunpack.c.h.b16 %v1443
    %v3743 = vunpack.c.l.b16 %v1444
    %v3744 = vunpack.c.h.b16 %v1444
    %v3745 = vunpack.c.l.b16 %v1445
    %v3746 = vunpack.c.h.b16 %v1445
    %v3747 = vunpack.c.l.b16 %v1446
    %v3748 = vunpack.c.h.b16 %v1446
    %v3749 = vunpack.c.l.b16 %v1447
    %v3750 = vunpack.c.h.b16 %v1447
    %v3751 = vunpack.c.l.b16 %v1448
    %v3752 = vunpack.c.h.b16 %v1448
    %v3753 = vunpack.c.l.b16 %v1449
    %v3754 = vunpack.c.h.b16 %v1449
    %v3755 = vunpack.c.l.b16 %v1450
    %v3756 = vunpack.c.h.b16 %v1450
    %v3757 = vunpack.c.l.b16 %v1451
    %v3758 = vunpack.c.h.b16 %v1451
    %v3759 = vunpack.c.l.b16 %v1452
    %v3760 = vunpack.c.h.b16 %v1452
    %v3761 = vunpack.c.l.b16 %v1453
    %v3762 = vunpack.c.h.b16 %v1453
    %v3763 = vunpack.c.l.b16 %v1454
    %v3764 = vunpack.c.h.b16 %v1454
    %v3765 = vunpack.c.l.b16 %v1455
    %v3766 = vunpack.c.h.b16 %v1455
    %v3767 = vunpack.c.l.b16 %v1456
    %v3768 = vunpack.c.h.b16 %v1456
    %v3769 = vunpack.c.l.b16 %v1457
    %v3770 = vunpack.c.h.b16 %v1457
    %v3771 = vunpack.c.l.b16 %v1458
    %v3772 = vunpack.c.h.b16 %v1458
    %v3773 = vunpack.c.l.b16 %v1459
    %v3774 = vunpack.c.h.b16 %v1459
    %v3775 = vunpack.c.l.b16 %v1460
    %v3776 = vunpack.c.h.b16 %v1460
    %v3777 = vunpack.c.l.b16 %v1461
    %v3778 = vunpack.c.h.b16 %v1461
    %v3779 = vunpack.c.l.b16 %v1462
    %v3780 = vunpack.c.h.b16 %v1462
    %v3781 = vunpack.c.l.b16 %v1463
    %v3782 = vunpack.c.h.b16 %v1463
    %v3783 = vunpack.c.l.b16 %v1464
    %v3784 = vunpack.c.h.b16 %v1464
    %v3785 = vunpack.c.l.b16 %v1465
    %v3786 = vunpack.c.h.b16 %v1465
    %v3787 = vunpack.c.l.b16 %v1466
    %v3788 = vunpack.c.h.b16 %v1466
    %v3789 = vunpack.c.l.b16 %v1467
    %v3790 = vunpack.c.h.b16 %v1467
    %v3791 = vunpack.c.l.b16 %v1468
    %v3792 = vunpack.c.h.b16 %v1468
    %v3793 = vunpack.c.l.b16 %v1469
    %v3794 = vunpack.c.h.b16 %v1469
    %v3795 = vunpack.c.l.b16 %v1470
    %v3796 = vunpack.c.h.b16 %v1470
    %v3797 = vunpack.c.l.b16 %v1471
    %v3798 = vunpack.c.h.b16 %v1471
    %v3799 = vunpack.c.l.b16 %v1472
    %v3800 = vunpack.c.h.b16 %v1472
    %v3801 = vunpack.c.l.b16 %v1473
    %v3802 = vunpack.c.h.b16 %v1473
    %v3803 = vunpack.c.l.b16 %v1474
    %v3804 = vunpack.c.h.b16 %v1474
    %v3805 = vunpack.c.l.b16 %v1475
    %v3806 = vunpack.c.h.b16 %v1475
    %v3807 = vunpack.c.l.b16 %v1476
    %v3808 = vunpack.c.h.b16 %v1476
    %v3809 = vunpack.c.l.b16 %v1477
    %v3810 = vunpack.c.h.b16 %v1477
    %v3811 = vunpack.c.l.b16 %v1478
    %v3812 = vunpack.c.h.b16 %v1478
    %v3813 = vunpack.c.l.b16 %v1479
    %v3814 = vunpack.c.h.b16 %v1479
    %v3815 = vunpack.c.l.b16 %v1480
    %v3816 = vunpack.c.h.b16 %v1480
    %v3817 = vunpack.c.l.b16 %v1481
    %v3818 = vunpack.c.h.b16 %v1481
    %v3819 = vunpack.c.l.b16 %v1482
    %v3820 = vunpack.c.h.b16 %v1482
    %v3821 = vunpack.c.l.b16 %v1483
    %v3822 = vunpack.c.h.b16 %v1483
    %v3823 = vunpack.c.l.b16 %v1484
    %v3824 = vunpack.c.h.b16 %v1484
    %v3825 = vunpack.c.l.b16 %v1485
    %v3826 = vunpack.c.h.b16 %v1485
    %v3827 = vunpack.c.l.b16 %v1486
    %v3828 = vunpack.c.h.b16 %v1486
    %v3829 = vunpack.c.l.b16 %v1487
    %v3830 = vunpack.c.h.b16 %v1487
    %v3831 = vunpack.c.l.b16 %v1488
    %v3832 = vunpack.c.h.b16 %v1488
    %v3833 = vunpack.c.l.b16 %v1489
    %v3834 = vunpack.c.h.b16 %v1489
    %v3835 = vunpack.c.l.b16 %v1490
    %v3836 = vunpack.c.h.b16 %v1490
    %v3837 = vunpack.c.l.b16 %v1491
    %v3838 = vunpack.c.h.b16 %v1491
    %v3839 = vunpack.c.l.b16 %v1492
    %v3840 = vunpack.c.h.b16 %v1492
    %v3841 = vunpack.c.l.b16 %v1493
    %v3842 = vunpack.c.h.b16 %v1493
    %v3843 = vunpack.c.l.b16 %v1494
    %v3844 = vunpack.c.h.b16 %v1494
    %v3845 = vunpack.c.l.b16 %v1495
    %v3846 = vunpack.c.h.b16 %v1495
    %v3847 = vunpack.c.l.b16 %v1496
    %v3848 = vunpack.c.h.b16 %v1496
    %v3849 = vunpack.c.l.b16 %v1497
    %v3850 = vunpack.c.h.b16 %v1497
    %v3851 = vunpack.c.l.b16 %v1498
    %v3852 = vunpack.c.h.b16 %v1498
    %v3853 = vunpack.c.l.b16 %v1499
    %v3854 = vunpack.c.h.b16 %v1499
    %v3855 = vunpack.c.l.b16 %v1500
    %v3856 = vunpack.c.h.b16 %v1500
    %v3857 = vunpack.c.l.b16 %v1501
    %v3858 = vunpack.c.h.b16 %v1501
    %v3859 = vunpack.c.l.b16 %v1502
    %v3860 = vunpack.c.h.b16 %v1502
    %v3861 = vunpack.c.l.b16 %v1503
    %v3862 = vunpack.c.h.b16 %v1503
    %v3863 = vunpack.c.l.b16 %v1504
    %v3864 = vunpack.c.h.b16 %v1504
    %v3865 = vunpack.c.l.b16 %v1505
    %v3866 = vunpack.c.h.b16 %v1505
    %v3867 = vunpack.c.l.b16 %v1506
    %v3868 = vunpack.c.h.b16 %v1506
    %v3869 = vunpack.c.l.b16 %v1507
    %v3870 = vunpack.c.h.b16 %v1507
    %v3871 = vunpack.c.l.b16 %v1508
    %v3872 = vunpack.c.h.b16 %v1508
    %v3873 = vunpack.c.l.b16 %v1509
    %v3874 = vunpack.c.h.b16 %v1509
    %v3875 = vunpack.c.l.b16 %v1510
    %v3876 = vunpack.c.h.b16 %v1510
    %v3877 = vunpack.c.l.b16 %v1511
    %v3878 = vunpack.c.h.b16 %v1511
    %v3879 = vunpack.c.l.b16 %v1512
    %v3880 = vunpack.c.h.b16 %v1512
    %v3881 = vunpack.c.l.b16 %v1513
    %v3882 = vunpack.c.h.b16 %v1513
    %v3883 = vunpack.c.l.b16 %v1514
    %v3884 = vunpack.c.h.b16 %v1514
    %v3885 = vunpack.c.l.b16 %v1515
    %v3886 = vunpack.c.h.b16 %v1515
    %v3887 = vunpack.c.l.b16 %v1516
    %v3888 = vunpack.c.h.b16 %v1516
    %v3889 = vunpack.c.l.b16 %v1517
    %v3890 = vunpack.c.h.b16 %v1517
    %v3891 = vunpack.c.l.b16 %v1518
    %v3892 = vunpack.c.h.b16 %v1518
    %v3893 = vunpack.c.l.b16 %v1519
    %v3894 = vunpack.c.h.b16 %v1519
    %v3895 = vunpack.c.l.b16 %v1520
    %v3896 = vunpack.c.h.b16 %v1520
    %v3897 = vunpack.c.l.b16 %v1521
    %v3898 = vunpack.c.h.b16 %v1521
    %v3899 = vunpack.c.l.b16 %v1522
    %v3900 = vunpack.c.h.b16 %v1522
    %v3901 = vunpack.c.l.b16 %v1523
    %v3902 = vunpack.c.h.b16 %v1523
    %v3903 = vunpack.c.l.b16 %v1524
    %v3904 = vunpack.c.h.b16 %v1524
    %v3905 = vunpack.c.l.b16 %v1525
    %v3906 = vunpack.c.h.b16 %v1525
    %v3907 = vunpack.c.l.b16 %v1526
    %v3908 = vunpack.c.h.b16 %v1526
    %v3909 = vunpack.c.l.b16 %v1527
    %v3910 = vunpack.c.h.b16 %v1527
    %v3911 = vunpack.c.l.b16 %v1528
    %v3912 = vunpack.c.h.b16 %v1528
    %v3913 = vunpack.c.l.b16 %v1529
    %v3914 = vunpack.c.h.b16 %v1529
    %v3915 = vunpack.c.l.b16 %v1530
    %v3916 = vunpack.c.h.b16 %v1530
    %v3917 = vunpack.c.l.b16 %v1531
    %v3918 = vunpack.c.h.b16 %v1531
    %v3919 = vunpack.c.l.b16 %v1532
    %v3920 = vunpack.c.h.b16 %v1532
    %v3921 = vunpack.c.l.b16 %v1533
    %v3922 = vunpack.c.h.b16 %v1533
    %v3923 = vunpack.c.l.b16 %v1534
    %v3924 = vunpack.c.h.b16 %v1534
    %v3925 = vunpack.c.l.b16 %v1535
    %v3926 = vunpack.c.h.b16 %v1535
    %v3927 = vunpack.c.l.b16 %v1536
    %v3928 = vunpack.c.h.b16 %v1536
    %v3929 = vunpack.c.l.b16 %v1537
    %v3930 = vunpack.c.h.b16 %v1537
    %v3931 = vunpack.c.l.b16 %v1538
    %v3932 = vunpack.c.h.b16 %v1538
    %v3933 = vunpack.c.l.b16 %v1539
    %v3934 = vunpack.c.h.b16 %v1539
    %v3935 = vunpack.c.l.b16 %v1540
    %v3936 = vunpack.c.h.b16 %v1540
    %v3937 = vunpack.c.l.b16 %v1541
    %v3938 = vunpack.c.h.b16 %v1541
    %v3939 = vunpack.c.l.b16 %v1542
    %v3940 = vunpack.c.h.b16 %v1542
    %v3941 = vunpack.c.l.b16 %v1543
    %v3942 = vunpack.c.h.b16 %v1543
    %v3943 = vunpack.c.l.b16 %v1544
    %v3944 = vunpack.c.h.b16 %v1544
    %v3945 = vunpack.c.l.b16 %v1545
    %v3946 = vunpack.c.h.b16 %v1545
    %v3947 = vunpack.c.l.b16 %v1546
    %v3948 = vunpack.c.h.b16 %v1546
    %v3949 = vunpack.c.l.b16 %v1547
    %v3950 = vunpack.c.h.b16 %v1547
    %v3951 = vunpack.c.l.b16 %v1548
    %v3952 = vunpack.c.h.b16 %v1548
    %v3953 = vunpack.c.l.b16 %v1549
    %v3954 = vunpack.c.h.b16 %v1549
    %v3955 = vunpack.c.l.b16 %v1550
    %v3956 = vunpack.c.h.b16 %v1550
    %v3957 = vunpack.c.l.b16 %v1551
    %v3958 = vunpack.c.h.b16 %v1551
    %v3959 = vunpack.c.l.b16 %v1552
    %v3960 = vunpack.c.h.b16 %v1552
    %v3961 = vunpack.c.l.b16 %v1553
    %v3962 = vunpack.c.h.b16 %v1553
    %v3963 = vunpack.c.l.b16 %v1554
    %v3964 = vunpack.c.h.b16 %v1554
    %v3965 = vunpack.c.l.b16 %v1555
    %v3966 = vunpack.c.h.b16 %v1555
    %v3967 = vunpack.c.l.b16 %v1556
    %v3968 = vunpack.c.h.b16 %v1556
    %v3969 = vunpack.c.l.b16 %v1557
    %v3970 = vunpack.c.h.b16 %v1557
    %v3971 = vunpack.c.l.b16 %v1558
    %v3972 = vunpack.c.h.b16 %v1558
    %v3973 = vunpack.c.l.b16 %v1559
    %v3974 = vunpack.c.h.b16 %v1559
    %v3975 = vunpack.c.l.b16 %v1560
    %v3976 = vunpack.c.h.b16 %v1560
    %v3977 = vunpack.c.l.b16 %v1561
    %v3978 = vunpack.c.h.b16 %v1561
    %v3979 = vunpack.c.l.b16 %v1562
    %v3980 = vunpack.c.h.b16 %v1562
    %v3981 = vunpack.c.l.b16 %v1563
    %v3982 = vunpack.c.h.b16 %v1563
    %v3983 = vunpack.c.l.b16 %v1564
    %v3984 = vunpack.c.h.b16 %v1564
    %v3985 = vunpack.c.l.b16 %v1565
    %v3986 = vunpack.c.h.b16 %v1565
    %v3987 = vunpack.c.l.b16 %v1566
    %v3988 = vunpack.c.h.b16 %v1566
    %v3989 = vunpack.c.l.b16 %v1567
    %v3990 = vunpack.c.h.b16 %v1567
    %v3991 = vunpack.c.l.b16 %v1568
    %v3992 = vunpack.c.h.b16 %v1568
    %v3993 = vunpack.c.l.b16 %v1569
    %v3994 = vunpack.c.h.b16 %v1569
    %v3995 = vunpack.c.l.b16 %v1570
    %v3996 = vunpack.c.h.b16 %v1570
    %v3997 = vunpack.c.l.b16 %v1571
    %v3998 = vunpack.c.h.b16 %v1571
    %v3999 = vunpack.c.l.b16 %v1572
    %v4000 = vunpack.c.h.b16 %v1572
    %v4001 = vunpack.c.l.b16 %v1573
    %v4002 = vunpack.c.h.b16 %v1573
    %v4003 = vunpack.c.l.b16 %v1574
    %v4004 = vunpack.c.h.b16 %v1574
    %v4005 = vunpack.c.l.b16 %v1575
    %v4006 = vunpack.c.h.b16 %v1575
    %v4007 = vunpack.c.l.b16 %v1576
    %v4008 = vunpack.c.h.b16 %v1576
    %v4009 = vunpack.c.l.b16 %v1577
    %v4010 = vunpack.c.h.b16 %v1577
    %v4011 = vunpack.c.l.b16 %v1578
    %v4012 = vunpack.c.h.b16 %v1578
    %v4013 = vunpack.c.l.b16 %v1579
    %v4014 = vunpack.c.h.b16 %v1579
    %v4015 = vunpack.c.l.b16 %v1580
    %v4016 = vunpack.c.h.b16 %v1580
    %v4017 = vunpack.c.l.b16 %v1581
    %v4018 = vunpack.c.h.b16 %v1581
    %v4019 = vunpack.c.l.b16 %v1582
    %v4020 = vunpack.c.h.b16 %v1582
    %v4021 = vunpack.c.l.b16 %v1583
    %v4022 = vunpack.c.h.b16 %v1583
    %v4023 = vunpack.c.l.b16 %v1584
    %v4024 = vunpack.c.h.b16 %v1584
    %v4025 = vunpack.c.l.b16 %v1585
    %v4026 = vunpack.c.h.b16 %v1585
    %v4027 = vunpack.c.l.b16 %v1586
    %v4028 = vunpack.c.h.b16 %v1586
    %v4029 = vunpack.c.l.b16 %v1587
    %v4030 = vunpack.c.h.b16 %v1587
    %v4031 = vunpack.c.l.b16 %v1588
    %v4032 = vunpack.c.h.b16 %v1588
    %v4033 = vunpack.c.l.b16 %v1589
    %v4034 = vunpack.c.h.b16 %v1589
    %v4035 = vunpack.c.l.b16 %v1590
    %v4036 = vunpack.c.h.b16 %v1590
    %v4037 = vunpack.c.l.b16 %v1591
    %v4038 = vunpack.c.h.b16 %v1591
    %v4039 = vunpack.c.l.b16 %v1592
    %v4040 = vunpack.c.h.b16 %v1592
    %v4041 = vunpack.c.l.b16 %v1593
    %v4042 = vunpack.c.h.b16 %v1593
    %v4043 = vunpack.c.l.b16 %v1594
    %v4044 = vunpack.c.h.b16 %v1594
    %v4045 = vunpack.c.l.b16 %v1595
    %v4046 = vunpack.c.h.b16 %v1595
    %v4047 = vunpack.c.l.b16 %v1596
    %v4048 = vunpack.c.h.b16 %v1596
    %v4049 = vunpack.c.l.b16 %v1597
    %v4050 = vunpack.c.h.b16 %v1597
    %v4051 = vunpack.c.l.b16 %v1598
    %v4052 = vunpack.c.h.b16 %v1598
    %v4053 = vunpack.c.l.b16 %v1599
    %v4054 = vunpack.c.h.b16 %v1599
    %v4055 = vunpack.c.l.b16 %v1600
    %v4056 = vunpack.c.h.b16 %v1600
    %v4057 = vunpack.c.l.b16 %v1601
    %v4058 = vunpack.c.h.b16 %v1601
    %v4059 = vunpack.c.l.b16 %v1602
    %v4060 = vunpack.c.h.b16 %v1602
    %v4061 = vunpack.c.l.b16 %v1603
    %v4062 = vunpack.c.h.b16 %v1603
    %v4063 = vunpack.c.l.b16 %v1604
    %v4064 = vunpack.c.h.b16 %v1604
    %v4065 = vunpack.c.l.b16 %v1605
    %v4066 = vunpack.c.h.b16 %v1605
    %v4067 = vunpack.c.l.b16 %v1606
    %v4068 = vunpack.c.h.b16 %v1606
    %v4069 = vunpack.c.l.b16 %v1607
    %v4070 = vunpack.c.h.b16 %v1607
    %v4071 = vunpack.c.l.b16 %v1608
    %v4072 = vunpack.c.h.b16 %v1608
    %v4073 = vunpack.c.l.b16 %v1609
    %v4074 = vunpack.c.h.b16 %v1609
    %v4075 = vunpack.c.l.b16 %v1610
    %v4076 = vunpack.c.h.b16 %v1610
    %v4077 = vunpack.c.l.b16 %v1611
    %v4078 = vunpack.c.h.b16 %v1611
    %v4079 = vunpack.c.l.b16 %v1612
    %v4080 = vunpack.c.h.b16 %v1612
    %v4081 = vunpack.c.l.b16 %v1613
    %v4082 = vunpack.c.h.b16 %v1613
    %v4083 = vunpack.c.l.b16 %v1614
    %v4084 = vunpack.c.h.b16 %v1614
    %v4085 = vunpack.c.l.b16 %v1615
    %v4086 = vunpack.c.h.b16 %v1615
    %v4087 = vunpack.c.l.b16 %v1616
    %v4088 = vunpack.c.h.b16 %v1616
    %v4089 = vunpack.c.l.b16 %v1617
    %v4090 = vunpack.c.h.b16 %v1617
    %v4091 = vunpack.c.l.b16 %v1618
    %v4092 = vunpack.c.h.b16 %v1618
    %v4093 = vunpack.c.l.b16 %v1619
    %v4094 = vunpack.c.h.b16 %v1619
    %v4095 = vunpack.c.l.b16 %v1620
    %v4096 = vunpack.c.h.b16 %v1620
    %v4097 = vunpack.c.l.b16 %v1621
    %v4098 = vunpack.c.h.b16 %v1621
    %v4099 = vunpack.c.l.b16 %v1622
    %v4100 = vunpack.c.h.b16 %v1622
    %v4101 = vunpack.c.l.b16 %v1623
    %v4102 = vunpack.c.h.b16 %v1623
    %v4103 = vunpack.c.l.b16 %v1624
    %v4104 = vunpack.c.h.b16 %v1624
    %v4105 = vunpack.c.l.b16 %v1625
    %v4106 = vunpack.c.h.b16 %v1625
    %v4107 = vunpack.c.l.b16 %v1626
    %v4108 = vunpack.c.h.b16 %v1626
    %v4109 = vunpack.c.l.b16 %v1627
    %v4110 = vunpack.c.h.b16 %v1627
    %v4111 = vunpack.c.l.b16 %v1628
    %v4112 = vunpack.c.h.b16 %v1628
    %v4113 = vunpack.c.l.b16 %v1629
    %v4114 = vunpack.c.h.b16 %v1629
    %v4115 = vunpack.c.l.b16 %v1630
    %v4116 = vunpack.c.h.b16 %v1630
    %v4117 = vunpack.c.l.b16 %v1631
    %v4118 = vunpack.c.h.b16 %v1631
    %v4119 = vunpack.c.l.b16 %v1632
    %v4120 = vunpack.c.h.b16 %v1632
    %v4121 = vunpack.c.l.b16 %v1633
    %v4122 = vunpack.c.h.b16 %v1633
    %v4123 = vunpack.c.l.b16 %v1634
    %v4124 = vunpack.c.h.b16 %v1634
    %v4125 = vunpack.c.l.b16 %v1635
    %v4126 = vunpack.c.h.b16 %v1635
    %v4127 = vunpack.c.l.b16 %v1636
    %v4128 = vunpack.c.h.b16 %v1636
    %v4129 = vunpack.c.l.b16 %v1637
    %v4130 = vunpack.c.h.b16 %v1637
    %v4131 = vunpack.c.l.b16 %v1638
    %v4132 = vunpack.c.h.b16 %v1638
    %v4133 = vunpack.c.l.b16 %v1639
    %v4134 = vunpack.c.h.b16 %v1639
    %v4135 = vunpack.c.l.b16 %v1640
    %v4136 = vunpack.c.h.b16 %v1640
    %v4137 = vunpack.c.l.b16 %v1641
    %v4138 = vunpack.c.h.b16 %v1641
    %v4139 = vunpack.c.l.b16 %v1642
    %v4140 = vunpack.c.h.b16 %v1642
    %v4141 = vunpack.c.l.b16 %v1643
    %v4142 = vunpack.c.h.b16 %v1643
    %v4143 = vunpack.c.l.b16 %v1644
    %v4144 = vunpack.c.h.b16 %v1644
    %v4145 = vunpack.c.l.b16 %v1645
    %v4146 = vunpack.c.h.b16 %v1645
    %v4147 = vunpack.c.l.b16 %v1646
    %v4148 = vunpack.c.h.b16 %v1646
    %v4149 = vunpack.c.l.b16 %v1647
    %v4150 = vunpack.c.h.b16 %v1647
    %v4151 = vunpack.c.l.b16 %v1648
    %v4152 = vunpack.c.h.b16 %v1648
    %v4153 = vunpack.c.l.b16 %v1649
    %v4154 = vunpack.c.h.b16 %v1649
    %v4155 = vunpack.c.l.b16 %v1650
    %v4156 = vunpack.c.h.b16 %v1650
    %v4157 = vunpack.c.l.b16 %v1651
    %v4158 = vunpack.c.h.b16 %v1651
    %v4159 = vunpack.c.l.b16 %v1652
    %v4160 = vunpack.c.h.b16 %v1652
    %v4161 = vunpack.c.l.b16 %v1653
    %v4162 = vunpack.c.h.b16 %v1653
    %v4163 = vunpack.c.l.b16 %v1654
    %v4164 = vunpack.c.h.b16 %v1654
    %v4165 = vunpack.c.l.b16 %v1655
    %v4166 = vunpack.c.h.b16 %v1655
    %v4167 = vunpack.c.l.b16 %v1656
    %v4168 = vunpack.c.h.b16 %v1656
    %v4169 = vunpack.c.l.b16 %v1657
    %v4170 = vunpack.c.h.b16 %v1657
    %v4171 = vunpack.c.l.b16 %v1658
    %v4172 = vunpack.c.h.b16 %v1658
    %v4173 = vunpack.c.l.b16 %v1659
    %v4174 = vunpack.c.h.b16 %v1659
    %v4175 = vunpack.c.l.b16 %v1660
    %v4176 = vunpack.c.h.b16 %v1660
    %v4177 = vunpack.c.l.b16 %v1661
    %v4178 = vunpack.c.h.b16 %v1661
    %v4179 = vunpack.c.l.b16 %v1662
    %v4180 = vunpack.c.h.b16 %v1662
    %v4181 = vunpack.c.l.b16 %v1663
    %v4182 = vunpack.c.h.b16 %v1663
    %v4183 = vunpack.c.l.b16 %v1664
    %v4184 = vunpack.c.h.b16 %v1664
    %v4185 = vunpack.c.l.b16 %v1665
    %v4186 = vunpack.c.h.b16 %v1665
    %v4187 = vunpack.c.l.b16 %v1666
    %v4188 = vunpack.c.h.b16 %v1666
    %v4189 = vunpack.c.l.b16 %v1667
    %v4190 = vunpack.c.h.b16 %v1667
    %v4191 = vunpack.c.l.b16 %v1668
    %v4192 = vunpack.c.h.b16 %v1668
    %v4193 = vunpack.c.l.b16 %v1669
    %v4194 = vunpack.c.h.b16 %v1669
    %v4195 = vunpack.c.l.b16 %v1670
    %v4196 = vunpack.c.h.b16 %v1670
    %v4197 = vunpack.c.l.b16 %v1671
    %v4198 = vunpack.c.h.b16 %v1671
    %v4199 = vunpack.c.l.b16 %v1672
    %v4200 = vunpack.c.h.b16 %v1672
    %v4201 = vunpack.c.l.b16 %v1673
    %v4202 = vunpack.c.h.b16 %v1673
    %v4203 = vunpack.c.l.b16 %v1674
    %v4204 = vunpack.c.h.b16 %v1674
    %v4205 = vunpack.c.l.b16 %v1675
    %v4206 = vunpack.c.h.b16 %v1675
    %v4207 = vunpack.c.l.b16 %v1676
    %v4208 = vunpack.c.h.b16 %v1676
    %v4209 = vunpack.c.l.b16 %v1677
    %v4210 = vunpack.c.h.b16 %v1677
    %v4211 = vunpack.c.l.b16 %v1678
    %v4212 = vunpack.c.h.b16 %v1678
    %v4213 = vunpack.c.l.b16 %v1679
    %v4214 = vunpack.c.h.b16 %v1679
    %v4215 = vunpack.c.l.b16 %v1680
    %v4216 = vunpack.c.h.b16 %v1680
    %v4217 = vunpack.c.l.b16 %v1681
    %v4218 = vunpack.c.h.b16 %v1681
    %v4219 = vunpack.c.l.b16 %v1682
    %v4220 = vunpack.c.h.b16 %v1682
    %v4221 = vunpack.c.l.b16 %v1683
    %v4222 = vunpack.c.h.b16 %v1683
    %v4223 = vunpack.c.l.b16 %v1684
    %v4224 = vunpack.c.h.b16 %v1684
    %v4225 = vunpack.c.l.b16 %v1685
    %v4226 = vunpack.c.h.b16 %v1685
    %v4227 = vunpack.c.l.b16 %v1686
    %v4228 = vunpack.c.h.b16 %v1686
    %v4229 = vunpack.c.l.b16 %v1687
    %v4230 = vunpack.c.h.b16 %v1687
    %v4231 = vunpack.c.l.b16 %v1688
    %v4232 = vunpack.c.h.b16 %v1688
    %v4233 = vunpack.c.l.b16 %v1689
    %v4234 = vunpack.c.h.b16 %v1689
    %v4235 = vunpack.c.l.b16 %v1690
    %v4236 = vunpack.c.h.b16 %v1690
    %v4237 = vunpack.c.l.b16 %v1691
    %v4238 = vunpack.c.h.b16 %v1691
    %v4239 = vunpack.c.l.b16 %v1692
    %v4240 = vunpack.c.h.b16 %v1692
    %v4241 = vunpack.c.l.b16 %v1693
    %v4242 = vunpack.c.h.b16 %v1693
    %v4243 = vunpack.c.l.b16 %v1694
    %v4244 = vunpack.c.h.b16 %v1694
    %v4245 = vunpack.c.l.b16 %v1695
    %v4246 = vunpack.c.h.b16 %v1695
    %v4247 = vunpack.c.l.b16 %v1696
    %v4248 = vunpack.c.h.b16 %v1696
    %v4249 = vunpack.c.l.b16 %v1697
    %v4250 = vunpack.c.h.b16 %v1697
    %v4251 = vunpack.c.l.b16 %v1698
    %v4252 = vunpack.c.h.b16 %v1698
    %v4253 = vunpack.c.l.b16 %v1699
    %v4254 = vunpack.c.h.b16 %v1699
    %v4255 = vunpack.c.l.b16 %v1700
    %v4256 = vunpack.c.h.b16 %v1700
    %v4257 = vunpack.c.l.b16 %v1701
    %v4258 = vunpack.c.h.b16 %v1701
    %v4259 = vunpack.c.l.b16 %v1702
    %v4260 = vunpack.c.h.b16 %v1702
    %v4261 = vunpack.c.l.b16 %v1703
    %v4262 = vunpack.c.h.b16 %v1703
    %v4263 = vunpack.c.l.b16 %v1704
    %v4264 = vunpack.c.h.b16 %v1704
    %v4265 = vunpack.c.l.b16 %v1705
    %v4266 = vunpack.c.h.b16 %v1705
    %v4267 = vunpack.c.l.b16 %v1706
    %v4268 = vunpack.c.h.b16 %v1706
    %v4269 = vunpack.c.l.b16 %v1707
    %v4270 = vunpack.c.h.b16 %v1707
    %v4271 = vunpack.c.l.b16 %v1708
    %v4272 = vunpack.c.h.b16 %v1708
    %v4273 = vunpack.c.l.b16 %v1709
    %v4274 = vunpack.c.h.b16 %v1709
    %v4275 = vunpack.c.l.b16 %v1710
    %v4276 = vunpack.c.h.b16 %v1710
    %v4277 = vunpack.c.l.b16 %v1711
    %v4278 = vunpack.c.h.b16 %v1711
    %v4279 = vunpack.c.l.b16 %v1712
    %v4280 = vunpack.c.h.b16 %v1712
    %v4281 = vunpack.c.l.b16 %v1713
    %v4282 = vunpack.c.h.b16 %v1713
    %v4283 = vunpack.c.l.b16 %v1714
    %v4284 = vunpack.c.h.b16 %v1714
    %v4285 = vunpack.c.l.b16 %v1715
    %v4286 = vunpack.c.h.b16 %v1715
    %v4287 = vunpack.c.l.b16 %v1716
    %v4288 = vunpack.c.h.b16 %v1716
    %v4289 = vunpack.c.l.b16 %v1717
    %v4290 = vunpack.c.h.b16 %v1717
    %v4291 = vunpack.c.l.b16 %v1718
    %v4292 = vunpack.c.h.b16 %v1718
    %v4293 = vunpack.c.l.b16 %v1719
    %v4294 = vunpack.c.h.b16 %v1719
    %v4295 = vunpack.c.l.b16 %v1720
    %v4296 = vunpack.c.h.b16 %v1720
    %v4297 = vunpack.c.l.b16 %v1721
    %v4298 = vunpack.c.h.b16 %v1721
    %v4299 = vunpack.c.l.b16 %v1722
    %v4300 = vunpack.c.h.b16 %v1722
    %v4301 = vunpack.c.l.b16 %v1723
    %v4302 = vunpack.c.h.b16 %v1723
    %v4303 = vunpack.c.l.b16 %v1724
    %v4304 = vunpack.c.h.b16 %v1724
    %v4305 = vunpack.c.l.b16 %v1725
    %v4306 = vunpack.c.h.b16 %v1725
    %v4307 = vunpack.c.l.b16 %v1726
    %v4308 = vunpack.c.h.b16 %v1726
    %v4309 = vunpack.c.l.b16 %v1727
    %v4310 = vunpack.c.h.b16 %v1727
    %v4311 = vunpack.c.l.b16 %v1728
    %v4312 = vunpack.c.h.b16 %v1728
    %v4313 = vunpack.c.l.b16 %v1729
    %v4314 = vunpack.c.h.b16 %v1729
    %v4315 = vunpack.c.l.b16 %v1730
    %v4316 = vunpack.c.h.b16 %v1730
    %v4317 = vunpack.c.l.b16 %v1731
    %v4318 = vunpack.c.h.b16 %v1731
    %v4319 = vunpack.c.l.b16 %v1732
    %v4320 = vunpack.c.h.b16 %v1732
    %v4321 = vunpack.c.l.b16 %v1733
    %v4322 = vunpack.c.h.b16 %v1733
    %v4323 = vunpack.c.l.b16 %v1734
    %v4324 = vunpack.c.h.b16 %v1734
    %v4325 = vunpack.c.l.b16 %v1735
    %v4326 = vunpack.c.h.b16 %v1735
    %v4327 = vunpack.c.l.b16 %v1736
    %v4328 = vunpack.c.h.b16 %v1736
    %v4329 = vunpack.c.l.b16 %v1737
    %v4330 = vunpack.c.h.b16 %v1737
    %v4331 = vunpack.c.l.b16 %v1738
    %v4332 = vunpack.c.h.b16 %v1738
    %v4333 = vunpack.c.l.b16 %v1739
    %v4334 = vunpack.c.h.b16 %v1739
    %v4335 = vunpack.c.l.b16 %v1740
    %v4336 = vunpack.c.h.b16 %v1740
    %v4337 = vunpack.c.l.b16 %v1741
    %v4338 = vunpack.c.h.b16 %v1741
    %v4339 = vunpack.c.l.b16 %v1742
    %v4340 = vunpack.c.h.b16 %v1742
    %v4341 = vunpack.c.l.b16 %v1743
    %v4342 = vunpack.c.h.b16 %v1743
    %v4343 = vunpack.c.l.b16 %v1744
    %v4344 = vunpack.c.h.b16 %v1744
    %v4345 = vunpack.c.l.b16 %v1745
    %v4346 = vunpack.c.h.b16 %v1745
    %v4347 = vunpack.c.l.b16 %v1746
    %v4348 = vunpack.c.h.b16 %v1746
    %v4349 = vunpack.c.l.b16 %v1747
    %v4350 = vunpack.c.h.b16 %v1747
    %v4351 = vunpack.c.l.b16 %v1748
    %v4352 = vunpack.c.h.b16 %v1748
    %v4353 = vunpack.c.l.b16 %v1749
    %v4354 = vunpack.c.h.b16 %v1749
    %v4355 = vunpack.c.l.b16 %v1750
    %v4356 = vunpack.c.h.b16 %v1750
    %v4357 = vunpack.c.l.b16 %v1751
    %v4358 = vunpack.c.h.b16 %v1751
    %v4359 = vunpack.c.l.b16 %v1752
    %v4360 = vunpack.c.h.b16 %v1752
    %v4361 = vunpack.c.l.b16 %v1753
    %v4362 = vunpack.c.h.b16 %v1753
    %v4363 = vunpack.c.l.b16 %v1754
    %v4364 = vunpack.c.h.b16 %v1754
    %v4365 = vunpack.c.l.b16 %v1755
    %v4366 = vunpack.c.h.b16 %v1755
    %v4367 = vunpack.c.l.b16 %v1756
    %v4368 = vunpack.c.h.b16 %v1756
    %v4369 = vunpack.c.l.b16 %v1757
    %v4370 = vunpack.c.h.b16 %v1757
    %v4371 = vunpack.c.l.b16 %v1758
    %v4372 = vunpack.c.h.b16 %v1758
    %v4373 = vunpack.c.l.b16 %v1759
    %v4374 = vunpack.c.h.b16 %v1759
    %v4375 = vunpack.c.l.b16 %v1760
    %v4376 = vunpack.c.h.b16 %v1760
    %v4377 = vunpack.c.l.b16 %v1761
    %v4378 = vunpack.c.h.b16 %v1761
    %v4379 = vunpack.c.l.b16 %v1762
    %v4380 = vunpack.c.h.b16 %v1762
    %v4381 = vunpack.c.l.b16 %v1763
    %v4382 = vunpack.c.h.b16 %v1763
    %v4383 = vunpack.c.l.b16 %v1764
    %v4384 = vunpack.c.h.b16 %v1764
    %v4385 = vunpack.c.l.b16 %v1765
    %v4386 = vunpack.c.h.b16 %v1765
    %v4387 = vunpack.c.l.b16 %v1766
    %v4388 = vunpack.c.h.b16 %v1766
    %v4389 = vunpack.c.l.b16 %v1767
    %v4390 = vunpack.c.h.b16 %v1767
    %v4391 = vunpack.c.l.b16 %v1768
    %v4392 = vunpack.c.h.b16 %v1768
    %v4393 = vunpack.c.l.b16 %v1769
    %v4394 = vunpack.c.h.b16 %v1769
    %v4395 = vunpack.c.l.b16 %v1770
    %v4396 = vunpack.c.h.b16 %v1770
    %v4397 = vunpack.c.l.b16 %v1771
    %v4398 = vunpack.c.h.b16 %v1771
    %v4399 = vunpack.c.l.b16 %v1772
    %v4400 = vunpack.c.h.b16 %v1772
    %v4401 = vunpack.c.l.b16 %v1773
    %v4402 = vunpack.c.h.b16 %v1773
    %v4403 = vunpack.c.l.b16 %v1774
    %v4404 = vunpack.c.h.b16 %v1774
    %v4405 = vunpack.c.l.b16 %v1775
    %v4406 = vunpack.c.h.b16 %v1775
    %v4407 = vunpack.c.l.b16 %v1776
    %v4408 = vunpack.c.h.b16 %v1776
    %v4409 = vunpack.c.l.b16 %v1777
    %v4410 = vunpack.c.h.b16 %v1777
    %v4411 = vunpack.c.l.b16 %v1778
    %v4412 = vunpack.c.h.b16 %v1778
    %v4413 = vunpack.c.l.b16 %v1779
    %v4414 = vunpack.c.h.b16 %v1779
    %v4415 = vunpack.c.l.b16 %v1780
    %v4416 = vunpack.c.h.b16 %v1780
    %v4417 = vunpack.c.l.b16 %v1781
    %v4418 = vunpack.c.h.b16 %v1781
    %v4419 = vunpack.c.l.b16 %v1782
    %v4420 = vunpack.c.h.b16 %v1782
    %v4421 = vunpack.c.l.b16 %v1783
    %v4422 = vunpack.c.h.b16 %v1783
    %v4423 = vunpack.c.l.b16 %v1784
    %v4424 = vunpack.c.h.b16 %v1784
    %v4425 = vunpack.c.l.b16 %v1785
    %v4426 = vunpack.c.h.b16 %v1785
    %v4427 = vunpack.c.l.b16 %v1786
    %v4428 = vunpack.c.h.b16 %v1786
    %v4429 = vunpack.c.l.b16 %v1787
    %v4430 = vunpack.c.h.b16 %v1787
    %v4431 = vunpack.c.l.b16 %v1788
    %v4432 = vunpack.c.h.b16 %v1788
    %v4433 = vunpack.c.l.b16 %v1789
    %v4434 = vunpack.c.h.b16 %v1789
    %v4435 = vunpack.c.l.b16 %v1790
    %v4436 = vunpack.c.h.b16 %v1790
    %v4437 = vunpack.c.l.b16 %v1791
    %v4438 = vunpack.c.h.b16 %v1791
    %v4439 = vunpack.c.l.b16 %v1792
    %v4440 = vunpack.c.h.b16 %v1792
    %v4441 = vunpack.c.l.b16 %v1793
    %v4442 = vunpack.c.h.b16 %v1793
    %v4443 = vunpack.c.l.b16 %v1794
    %v4444 = vunpack.c.h.b16 %v1794
    %v4445 = vunpack.c.l.b16 %v1795
    %v4446 = vunpack.c.h.b16 %v1795
    %v4447 = vunpack.c.l.b16 %v1796
    %v4448 = vunpack.c.h.b16 %v1796
    %v4449 = vunpack.c.l.b16 %v1797
    %v4450 = vunpack.c.h.b16 %v1797
    %v4451 = vunpack.c.l.b16 %v1798
    %v4452 = vunpack.c.h.b16 %v1798
    %v4453 = vunpack.c.l.b16 %v1799
    %v4454 = vunpack.c.h.b16 %v1799
    %v4455 = vunpack.c.l.b16 %v1800
    %v4456 = vunpack.c.h.b16 %v1800
    %v4457 = vunpack.c.l.b16 %v1801
    %v4458 = vunpack.c.h.b16 %v1801
    %v4459 = vunpack.c.l.b16 %v1802
    %v4460 = vunpack.c.h.b16 %v1802
    %v4461 = vunpack.c.l.b16 %v1803
    %v4462 = vunpack.c.h.b16 %v1803
    %v4463 = vunpack.c.l.b16 %v1804
    %v4464 = vunpack.c.h.b16 %v1804
    %v4465 = vunpack.c.l.b16 %v1805
    %v4466 = vunpack.c.h.b16 %v1805
    %v4467 = vunpack.c.l.b16 %v1806
    %v4468 = vunpack.c.h.b16 %v1806
    %v4469 = vunpack.c.l.b16 %v1807
    %v4470 = vunpack.c.h.b16 %v1807
    %v4471 = vunpack.c.l.b16 %v1808
    %v4472 = vunpack.c.h.b16 %v1808
    %v4473 = vunpack.c.l.b16 %v1809
    %v4474 = vunpack.c.h.b16 %v1809
    %v4475 = vunpack.c.l.b16 %v1810
    %v4476 = vunpack.c.h.b16 %v1810
    %v4477 = vunpack.c.l.b16 %v1811
    %v4478 = vunpack.c.h.b16 %v1811
    %v4479 = vunpack.c.l.b16 %v1812
    %v4480 = vunpack.c.h.b16 %v1812
    %v4481 = vunpack.c.l.b16 %v1813
    %v4482 = vunpack.c.h.b16 %v1813
    %v4483 = vunpack.c.l.b16 %v1814
    %v4484 = vunpack.c.h.b16 %v1814
    %v4485 = vunpack.c.l.b16 %v1815
    %v4486 = vunpack.c.h.b16 %v1815
    %v4487 = vunpack.c.l.b16 %v1816
    %v4488 = vunpack.c.h.b16 %v1816
    %v4489 = vunpack.c.l.b16 %v1817
    %v4490 = vunpack.c.h.b16 %v1817
    %v4491 = vunpack.c.l.b16 %v1818
    %v4492 = vunpack.c.h.b16 %v1818
    %v4493 = vunpack.c.l.b16 %v1819
    %v4494 = vunpack.c.h.b16 %v1819
    %v4495 = vunpack.c.l.b16 %v1820
    %v4496 = vunpack.c.h.b16 %v1820
    %v4497 = vunpack.c.l.b16 %v1821
    %v4498 = vunpack.c.h.b16 %v1821
    %v4499 = vunpack.c.l.b16 %v1822
    %v4500 = vunpack.c.h.b16 %v1822
    %v4501 = vunpack.c.l.b16 %v1823
    %v4502 = vunpack.c.h.b16 %v1823
    %v4503 = vunpack.c.l.b16 %v1824
    %v4504 = vunpack.c.h.b16 %v1824
    %v4505 = vunpack.c.l.b16 %v1825
    %v4506 = vunpack.c.h.b16 %v1825
    %v4507 = vunpack.c.l.b16 %v1826
    %v4508 = vunpack.c.h.b16 %v1826
    %v4509 = vunpack.c.l.b16 %v1827
    %v4510 = vunpack.c.h.b16 %v1827
    %v4511 = vunpack.c.l.b16 %v1828
    %v4512 = vunpack.c.h.b16 %v1828
    %v4513 = vunpack.c.l.b16 %v1829
    %v4514 = vunpack.c.h.b16 %v1829
    %v4515 = vunpack.c.l.b16 %v1830
    %v4516 = vunpack.c.h.b16 %v1830
    %v4517 = vunpack.c.l.b16 %v1831
    %v4518 = vunpack.c.h.b16 %v1831
    %v4519 = vunpack.c.l.b16 %v1832
    %v4520 = vunpack.c.h.b16 %v1832
    %v4521 = vunpack.c.l.b16 %v1833
    %v4522 = vunpack.c.h.b16 %v1833
    %v4523 = vunpack.c.l.b16 %v1834
    %v4524 = vunpack.c.h.b16 %v1834
    %v4525 = vunpack.c.l.b16 %v1835
    %v4526 = vunpack.c.h.b16 %v1835
    %v4527 = vunpack.c.l.b16 %v1836
    %v4528 = vunpack.c.h.b16 %v1836
    %v4529 = vunpack.c.l.b16 %v1837
    %v4530 = vunpack.c.h.b16 %v1837
    %v4531 = vunpack.c.l.b16 %v1838
    %v4532 = vunpack.c.h.b16 %v1838
    %v4533 = vunpack.c.l.b16 %v1839
    %v4534 = vunpack.c.h.b16 %v1839
    %v4535 = vunpack.c.l.b16 %v1840
    %v4536 = vunpack.c.h.b16 %v1840
    %v4537 = vunpack.c.l.b16 %v1841
    %v4538 = vunpack.c.h.b16 %v1841
    %v4539 = vunpack.c.l.b16 %v1842
    %v4540 = vunpack.c.h.b16 %v1842
    %v4541 = vunpack.c.l.b16 %v1843
    %v4542 = vunpack.c.h.b16 %v1843
    %v4543 = vunpack.c.l.b16 %v1844
    %v4544 = vunpack.c.h.b16 %v1844
    %v4545 = vunpack.c.l.b16 %v1845
    %v4546 = vunpack.c.h.b16 %v1845
    %v4547 = vunpack.c.l.b16 %v1846
    %v4548 = vunpack.c.h.b16 %v1846
    %v4549 = vunpack.c.l.b16 %v1847
    %v4550 = vunpack.c.h.b16 %v1847
    %v4551 = vunpack.c.l.b16 %v1848
    %v4552 = vunpack.c.h.b16 %v1848
    %v4553 = vunpack.c.l.b16 %v1849
    %v4554 = vunpack.c.h.b16 %v1849
    %v4555 = vunpack.c.l.b16 %v1850
    %v4556 = vunpack.c.h.b16 %v1850
    %v4557 = vunpack.c.l.b16 %v1851
    %v4558 = vunpack.c.h.b16 %v1851
    %v4559 = vunpack.c.l.b16 %v1852
    %v4560 = vunpack.c.h.b16 %v1852
    %v4561 = vunpack.c.l.b16 %v1853
    %v4562 = vunpack.c.h.b16 %v1853
    %v4563 = vunpack.c.l.b16 %v1854
    %v4564 = vunpack.c.h.b16 %v1854
    %v4565 = vunpack.c.l.b16 %v1855
    %v4566 = vunpack.c.h.b16 %v1855
    %v4567 = vunpack.c.l.b16 %v1856
    %v4568 = vunpack.c.h.b16 %v1856
    %v4569 = vunpack.c.l.b16 %v1857
    %v4570 = vunpack.c.h.b16 %v1857
    %v4571 = vunpack.c.l.b16 %v1858
    %v4572 = vunpack.c.h.b16 %v1858
    %v4573 = vunpack.c.l.b16 %v1859
    %v4574 = vunpack.c.h.b16 %v1859
    %v4575 = vunpack.c.l.b16 %v1860
    %v4576 = vunpack.c.h.b16 %v1860
    %v4577 = vunpack.c.l.b16 %v1861
    %v4578 = vunpack.c.h.b16 %v1861
    %v4579 = vunpack.c.l.b16 %v1862
    %v4580 = vunpack.c.h.b16 %v1862
    %v4581 = vunpack.c.l.b16 %v1863
    %v4582 = vunpack.c.h.b16 %v1863
    %v4583 = vunpack.c.l.b16 %v1864
    %v4584 = vunpack.c.h.b16 %v1864
    %v4585 = vunpack.c.l.b16 %v1865
    %v4586 = vunpack.c.h.b16 %v1865
    %v4587 = vunpack.c.l.b16 %v1866
    %v4588 = vunpack.c.h.b16 %v1866
    %v4589 = vunpack.c.l.b16 %v1867
    %v4590 = vunpack.c.h.b16 %v1867
    %v4591 = vunpack.c.l.b16 %v1868
    %v4592 = vunpack.c.h.b16 %v1868
    %v4593 = vunpack.c.l.b16 %v1869
    %v4594 = vunpack.c.h.b16 %v1869
    %v4595 = vunpack.c.l.b16 %v1870
    %v4596 = vunpack.c.h.b16 %v1870
    %v4597 = vunpack.c.l.b16 %v1871
    %v4598 = vunpack.c.h.b16 %v1871
    %v4599 = vunpack.c.l.b16 %v1872
    %v4600 = vunpack.c.h.b16 %v1872
    %v4601 = vunpack.c.l.b16 %v1873
    %v4602 = vunpack.c.h.b16 %v1873
    %v4603 = vunpack.c.l.b16 %v1874
    %v4604 = vunpack.c.h.b16 %v1874
    %v4605 = vunpack.c.l.b16 %v1875
    %v4606 = vunpack.c.h.b16 %v1875
    %v4607 = vunpack.c.l.b16 %v1876
    %v4608 = vunpack.c.h.b16 %v1876
    %v4609 = vunpack.c.l.b16 %v1877
    %v4610 = vunpack.c.h.b16 %v1877
    %v4611 = vunpack.c.l.b16 %v1878
    %v4612 = vunpack.c.h.b16 %v1878
    %v4613 = vunpack.c.l.b16 %v1879
    %v4614 = vunpack.c.h.b16 %v1879
    %v4615 = vunpack.c.l.b16 %v1880
    %v4616 = vunpack.c.h.b16 %v1880
    %v4617 = vunpack.c.l.b16 %v1881
    %v4618 = vunpack.c.h.b16 %v1881
    %v4619 = vunpack.c.l.b16 %v1882
    %v4620 = vunpack.c.h.b16 %v1882
    %v4621 = vunpack.c.l.b16 %v1883
    %v4622 = vunpack.c.h.b16 %v1883
    %v4623 = vunpack.c.l.b16 %v1884
    %v4624 = vunpack.c.h.b16 %v1884
    %v4625 = vunpack.c.l.b16 %v1885
    %v4626 = vunpack.c.h.b16 %v1885
    %v4627 = vunpack.c.l.b16 %v1886
    %v4628 = vunpack.c.h.b16 %v1886
    %v4629 = vunpack.c.l.b16 %v1887
    %v4630 = vunpack.c.h.b16 %v1887
    %v4631 = vunpack.c.l.b16 %v1888
    %v4632 = vunpack.c.h.b16 %v1888
    %v4633 = vunpack.c.l.b16 %v1889
    %v4634 = vunpack.c.h.b16 %v1889
    %v4635 = vunpack.c.l.b16 %v1890
    %v4636 = vunpack.c.h.b16 %v1890
    %v4637 = vunpack.c.l.b16 %v1891
    %v4638 = vunpack.c.h.b16 %v1891
    %v4639 = vunpack.c.l.b16 %v1892
    %v4640 = vunpack.c.h.b16 %v1892
    %v4641 = vunpack.c.l.b16 %v1893
    %v4642 = vunpack.c.h.b16 %v1893
    %v4643 = vunpack.c.l.b16 %v1894
    %v4644 = vunpack.c.h.b16 %v1894
    %v4645 = vunpack.c.l.b16 %v1895
    %v4646 = vunpack.c.h.b16 %v1895
    %v4647 = vunpack.c.l.b16 %v1896
    %v4648 = vunpack.c.h.b16 %v1896
    %v4649 = vunpack.c.l.b16 %v1897
    %v4650 = vunpack.c.h.b16 %v1897
    %v4651 = vunpack.c.l.b16 %v1898
    %v4652 = vunpack.c.h.b16 %v1898
    %v4653 = vunpack.c.l.b16 %v1899
    %v4654 = vunpack.c.h.b16 %v1899
    %v4655 = vunpack.c.l.b16 %v1900
    %v4656 = vunpack.c.h.b16 %v1900
    %v4657 = vunpack.c.l.b16 %v1901
    %v4658 = vunpack.c.h.b16 %v1901
    %v4659 = vunpack.c.l.b16 %v1902
    %v4660 = vunpack.c.h.b16 %v1902
    %v4661 = vunpack.c.l.b16 %v1903
    %v4662 = vunpack.c.h.b16 %v1903
    %v4663 = vunpack.c.l.b16 %v1904
    %v4664 = vunpack.c.h.b16 %v1904
    %v4665 = vunpack.c.l.b16 %v1905
    %v4666 = vunpack.c.h.b16 %v1905
    %v4667 = vunpack.c.l.b16 %v1906
    %v4668 = vunpack.c.h.b16 %v1906
    %v4669 = vunpack.c.l.b16 %v1907
    %v4670 = vunpack.c.h.b16 %v1907
    %v4671 = vunpack.c.l.b16 %v1908
    %v4672 = vunpack.c.h.b16 %v1908
    %v4673 = vunpack.c.l.b16 %v1909
    %v4674 = vunpack.c.h.b16 %v1909
    %v4675 = vunpack.c.l.b16 %v1910
    %v4676 = vunpack.c.h.b16 %v1910
    %v4677 = vunpack.c.l.b16 %v1911
    %v4678 = vunpack.c.h.b16 %v1911
    %v4679 = vunpack.c.l.b16 %v1912
    %v4680 = vunpack.c.h.b16 %v1912
    %v4681 = vunpack.c.l.b16 %v1913
    %v4682 = vunpack.c.h.b16 %v1913
    %v4683 = vunpack.c.l.b16 %v1914
    %v4684 = vunpack.c.h.b16 %v1914
    %v4685 = vunpack.c.l.b16 %v1915
    %v4686 = vunpack.c.h.b16 %v1915
    %v4687 = vunpack.c.l.b16 %v1916
    %v4688 = vunpack.c.h.b16 %v1916
    %v4689 = vunpack.c.l.b16 %v1917
    %v4690 = vunpack.c.h.b16 %v1917
    %v4691 = vunpack.c.l.b16 %v1918
    %v4692 = vunpack.c.h.b16 %v1918
    %v4693 = vunpack.c.l.b16 %v1919
    %v4694 = vunpack.c.h.b16 %v1919
    %v4695 = vunpack.c.l.b16 %v1920
    %v4696 = vunpack.c.h.b16 %v1920
    %v4697 = vunpack.c.l.b16 %v1921
    %v4698 = vunpack.c.h.b16 %v1921
    %v4699 = vunpack.c.l.b16 %v1922
    %v4700 = vunpack.c.h.b16 %v1922
    %v4701 = vunpack.c.l.b16 %v1923
    %v4702 = vunpack.c.h.b16 %v1923
    %v4703 = vunpack.c.l.b16 %v1924
    %v4704 = vunpack.c.h.b16 %v1924
    %v4705 = vunpack.c.l.b16 %v1925
    %v4706 = vunpack.c.h.b16 %v1925
    %v4707 = vunpack.c.l.b16 %v1926
    %v4708 = vunpack.c.h.b16 %v1926
    %v4709 = vunpack.c.l.b16 %v1927
    %v4710 = vunpack.c.h.b16 %v1927
    %v4711 = vunpack.c.l.b16 %v1928
    %v4712 = vunpack.c.h.b16 %v1928
    %v4713 = vunpack.c.l.b16 %v1929
    %v4714 = vunpack.c.h.b16 %v1929
    %v4715 = vunpack.c.l.b16 %v1930
    %v4716 = vunpack.c.h.b16 %v1930
    %v4717 = vunpack.c.l.b16 %v1931
    %v4718 = vunpack.c.h.b16 %v1931
    %v4719 = vunpack.c.l.b16 %v1932
    %v4720 = vunpack.c.h.b16 %v1932
    %v4721 = vunpack.c.l.b16 %v1933
    %v4722 = vunpack.c.h.b16 %v1933
    %v4723 = vunpack.c.l.b16 %v1934
    %v4724 = vunpack.c.h.b16 %v1934
    %v4725 = vunpack.c.l.b16 %v1935
    %v4726 = vunpack.c.h.b16 %v1935
    %v4727 = vunpack.c.l.b16 %v1936
    %v4728 = vunpack.c.h.b16 %v1936
    %v4729 = vunpack.c.l.b16 %v1937
    %v4730 = vunpack.c.h.b16 %v1937
    %v4731 = vunpack.c.l.b16 %v1938
    %v4732 = vunpack.c.h.b16 %v1938
    %v4733 = vunpack.c.l.b16 %v1939
    %v4734 = vunpack.c.h.b16 %v1939
    %v4735 = vunpack.c.l.b16 %v1940
    %v4736 = vunpack.c.h.b16 %v1940
    %v4737 = vunpack.c.l.b16 %v1941
    %v4738 = vunpack.c.h.b16 %v1941
    %v4739 = vunpack.c.l.b16 %v1942
    %v4740 = vunpack.c.h.b16 %v1942
    %v4741 = vunpack.c.l.b16 %v1943
    %v4742 = vunpack.c.h.b16 %v1943
    %v4743 = vunpack.c.l.b16 %v1944
    %v4744 = vunpack.c.h.b16 %v1944
    %v4745 = vunpack.c.l.b16 %v1945
    %v4746 = vunpack.c.h.b16 %v1945
    %v4747 = vunpack.c.l.b16 %v1946
    %v4748 = vunpack.c.h.b16 %v1946
    %v4749 = vunpack.c.l.b16 %v1947
    %v4750 = vunpack.c.h.b16 %v1947
    %v4751 = vunpack.c.l.b16 %v1948
    %v4752 = vunpack.c.h.b16 %v1948
    %v4753 = vunpack.c.l.b16 %v1949
    %v4754 = vunpack.c.h.b16 %v1949
    %v4755 = vunpack.c.l.b16 %v1950
    %v4756 = vunpack.c.h.b16 %v1950
    %v4757 = vunpack.c.l.b16 %v1951
    %v4758 = vunpack.c.h.b16 %v1951
    %v4759 = vunpack.c.l.b16 %v1952
    %v4760 = vunpack.c.h.b16 %v1952
    %v4761 = vunpack.c.l.b16 %v1953
    %v4762 = vunpack.c.h.b16 %v1953
    %v4763 = vunpack.c.l.b16 %v1954
    %v4764 = vunpack.c.h.b16 %v1954
    %v4765 = vunpack.c.l.b16 %v1955
    %v4766 = vunpack.c.h.b16 %v1955
    %v4767 = vunpack.c.l.b16 %v1956
    %v4768 = vunpack.c.h.b16 %v1956
    %v4769 = vunpack.c.l.b16 %v1957
    %v4770 = vunpack.c.h.b16 %v1957
    %v4771 = vunpack.c.l.b16 %v1958
    %v4772 = vunpack.c.h.b16 %v1958
    %v4773 = vunpack.c.l.b16 %v1959
    %v4774 = vunpack.c.h.b16 %v1959
    %v4775 = vunpack.c.l.b16 %v1960
    %v4776 = vunpack.c.h.b16 %v1960
    %v4777 = vunpack.c.l.b16 %v1961
    %v4778 = vunpack.c.h.b16 %v1961
    %v4779 = vunpack.c.l.b16 %v1962
    %v4780 = vunpack.c.h.b16 %v1962
    %v4781 = vunpack.c.l.b16 %v1963
    %v4782 = vunpack.c.h.b16 %v1963
    %v4783 = vunpack.c.l.b16 %v1964
    %v4784 = vunpack.c.h.b16 %v1964
    %v4785 = vunpack.c.l.b16 %v1965
    %v4786 = vunpack.c.h.b16 %v1965
    %v4787 = vunpack.c.l.b16 %v1966
    %v4788 = vunpack.c.h.b16 %v1966
    %v4789 = vunpack.c.l.b16 %v1967
    %v4790 = vunpack.c.h.b16 %v1967
    %v4791 = vunpack.c.l.b16 %v1968
    %v4792 = vunpack.c.h.b16 %v1968
    %v4793 = vunpack.c.l.b16 %v1969
    %v4794 = vunpack.c.h.b16 %v1969
    %v4795 = vunpack.c.l.b16 %v1970
    %v4796 = vunpack.c.h.b16 %v1970
    %v4797 = vunpack.c.l.b16 %v1971
    %v4798 = vunpack.c.h.b16 %v1971
    %v4799 = vunpack.c.l.b16 %v1972
    %v4800 = vunpack.c.h.b16 %v1972
    %v4801 = vunpack.c.l.b16 %v1973
    %v4802 = vunpack.c.h.b16 %v1973
    %v4803 = vunpack.c.l.b16 %v1974
    %v4804 = vunpack.c.h.b16 %v1974
    %v4805 = vunpack.c.l.b16 %v1975
    %v4806 = vunpack.c.h.b16 %v1975
    %v4807 = vunpack.c.l.b16 %v1976
    %v4808 = vunpack.c.h.b16 %v1976
    %v4809 = vunpack.c.l.b16 %v1977
    %v4810 = vunpack.c.h.b16 %v1977
    %v4811 = vunpack.c.l.b16 %v1978
    %v4812 = vunpack.c.h.b16 %v1978
    %v4813 = vunpack.c.l.b16 %v1979
    %v4814 = vunpack.c.h.b16 %v1979
    %v4815 = vunpack.c.l.b16 %v1980
    %v4816 = vunpack.c.h.b16 %v1980
    %v4817 = vunpack.c.l.b16 %v1981
    %v4818 = vunpack.c.h.b16 %v1981
    %v4819 = vunpack.c.l.b16 %v1982
    %v4820 = vunpack.c.h.b16 %v1982
    %v4821 = vunpack.c.l.b16 %v1983
    %v4822 = vunpack.c.h.b16 %v1983
    %v4823 = vunpack.c.l.b16 %v1984
    %v4824 = vunpack.c.h.b16 %v1984
    %v4825 = vunpack.c.l.b16 %v1985
    %v4826 = vunpack.c.h.b16 %v1985
    %v4827 = vunpack.c.l.b16 %v1986
    %v4828 = vunpack.c.h.b16 %v1986
    %v4829 = vunpack.c.l.b16 %v1987
    %v4830 = vunpack.c.h.b16 %v1987
    %v4831 = vunpack.c.l.b16 %v1988
    %v4832 = vunpack.c.h.b16 %v1988
    %v4833 = vunpack.c.l.b16 %v1989
    %v4834 = vunpack.c.h.b16 %v1989
    %v4835 = vunpack.c.l.b16 %v1990
    %v4836 = vunpack.c.h.b16 %v1990
    %v4837 = vunpack.c.l.b16 %v1991
    %v4838 = vunpack.c.h.b16 %v1991
    %v4839 = vunpack.c.l.b16 %v1992
    %v4840 = vunpack.c.h.b16 %v1992
    %v4841 = vunpack.c.l.b16 %v1993
    %v4842 = vunpack.c.h.b16 %v1993
    %v4843 = vunpack.c.l.b16 %v1994
    %v4844 = vunpack.c.h.b16 %v1994
    %v4845 = vunpack.c.l.b16 %v1995
    %v4846 = vunpack.c.h.b16 %v1995
    %v4847 = vunpack.c.l.b16 %v1996
    %v4848 = vunpack.c.h.b16 %v1996
    %v4849 = vunpack.c.l.b16 %v1997
    %v4850 = vunpack.c.h.b16 %v1997
    %v4851 = vunpack.c.l.b16 %v1998
    %v4852 = vunpack.c.h.b16 %v1998
    %v4853 = vunpack.c.l.b16 %v1999
    %v4854 = vunpack.c.h.b16 %v1999
    %v4855 = vunpack.c.l.b16 %v2000
    %v4856 = vunpack.c.h.b16 %v2000
    %v4857 = vunpack.c.l.b16 %v2001
    %v4858 = vunpack.c.h.b16 %v2001
    %v4859 = vunpack.c.l.b16 %v2002
    %v4860 = vunpack.c.h.b16 %v2002
    %v4861 = vunpack.c.l.b16 %v2003
    %v4862 = vunpack.c.h.b16 %v2003
    %v4863 = vunpack.c.l.b16 %v2004
    %v4864 = vunpack.c.h.b16 %v2004
    %v4865 = vunpack.c.l.b16 %v2005
    %v4866 = vunpack.c.h.b16 %v2005
    %v4867 = vunpack.c.l.b16 %v2006
    %v4868 = vunpack.c.h.b16 %v2006
    %v4869 = vunpack.c.l.b16 %v2007
    %v4870 = vunpack.c.h.b16 %v2007
    %v4871 = vunpack.c.l.b16 %v2008
    %v4872 = vunpack.c.h.b16 %v2008
    %v4873 = vunpack.c.l.b16 %v2009
    %v4874 = vunpack.c.h.b16 %v2009
    %v4875 = vunpack.c.l.b16 %v2010
    %v4876 = vunpack.c.h.b16 %v2010
    %v4877 = vunpack.c.l.b16 %v2011
    %v4878 = vunpack.c.h.b16 %v2011
    %v4879 = vunpack.c.l.b16 %v2012
    %v4880 = vunpack.c.h.b16 %v2012
    %v4881 = vunpack.c.l.b16 %v2013
    %v4882 = vunpack.c.h.b16 %v2013
    %v4883 = vunpack.c.l.b16 %v2014
    %v4884 = vunpack.c.h.b16 %v2014
    %v4885 = vunpack.c.l.b16 %v2015
    %v4886 = vunpack.c.h.b16 %v2015
    %v4887 = vunpack.c.l.b16 %v2016
    %v4888 = vunpack.c.h.b16 %v2016
    %v4889 = vunpack.c.l.b16 %v2017
    %v4890 = vunpack.c.h.b16 %v2017
    %v4891 = vunpack.c.l.b16 %v2018
    %v4892 = vunpack.c.h.b16 %v2018
    %v4893 = vunpack.c.l.b16 %v2019
    %v4894 = vunpack.c.h.b16 %v2019
    %v4895 = vunpack.c.l.b16 %v2020
    %v4896 = vunpack.c.h.b16 %v2020
    %v4897 = vunpack.c.l.b16 %v2021
    %v4898 = vunpack.c.h.b16 %v2021
    %v4899 = vunpack.c.l.b16 %v2022
    %v4900 = vunpack.c.h.b16 %v2022
    %v4901 = vunpack.c.l.b16 %v2023
    %v4902 = vunpack.c.h.b16 %v2023
    %v4903 = vunpack.c.l.b16 %v2024
    %v4904 = vunpack.c.h.b16 %v2024
    %v4905 = vunpack.c.l.b16 %v2025
    %v4906 = vunpack.c.h.b16 %v2025
    %v4907 = vunpack.c.l.b16 %v2026
    %v4908 = vunpack.c.h.b16 %v2026
    %v4909 = vunpack.c.l.b16 %v2027
    %v4910 = vunpack.c.h.b16 %v2027
    %v4911 = vunpack.c.l.b16 %v2028
    %v4912 = vunpack.c.h.b16 %v2028
    %v4913 = vunpack.c.l.b16 %v2029
    %v4914 = vunpack.c.h.b16 %v2029
    %v4915 = vunpack.c.l.b16 %v2030
    %v4916 = vunpack.c.h.b16 %v2030
    %v4917 = vunpack.c.l.b16 %v2031
    %v4918 = vunpack.c.h.b16 %v2031
    %v4919 = vunpack.c.l.b16 %v2032
    %v4920 = vunpack.c.h.b16 %v2032
    %v4921 = vunpack.c.l.b16 %v2033
    %v4922 = vunpack.c.h.b16 %v2033
    %v4923 = vunpack.c.l.b16 %v2034
    %v4924 = vunpack.c.h.b16 %v2034
    %v4925 = vunpack.c.l.b16 %v2035
    %v4926 = vunpack.c.h.b16 %v2035
    %v4927 = vunpack.c.l.b16 %v2036
    %v4928 = vunpack.c.h.b16 %v2036
    %v4929 = vunpack.c.l.b16 %v2037
    %v4930 = vunpack.c.h.b16 %v2037
    %v4931 = vunpack.c.l.b16 %v2038
    %v4932 = vunpack.c.h.b16 %v2038
    %v4933 = vunpack.c.l.b16 %v2039
    %v4934 = vunpack.c.h.b16 %v2039
    %v4935 = vunpack.c.l.b16 %v2040
    %v4936 = vunpack.c.h.b16 %v2040
    %v4937 = vunpack.c.l.b16 %v2041
    %v4938 = vunpack.c.h.b16 %v2041
    %v4939 = vunpack.c.l.b16 %v2042
    %v4940 = vunpack.c.h.b16 %v2042
    %v4941 = vunpack.c.l.b16 %v2043
    %v4942 = vunpack.c.h.b16 %v2043
    %v4943 = vunpack.c.l.b16 %v2044
    %v4944 = vunpack.c.h.b16 %v2044
    %v4945 = vunpack.c.l.b16 %v2045
    %v4946 = vunpack.c.h.b16 %v2045
    %v4947 = vunpack.c.l.b16 %v2046
    %v4948 = vunpack.c.h.b16 %v2046
    %v4949 = vunpack.c.l.b16 %v2047
    %v4950 = vunpack.c.h.b16 %v2047
    %v4951 = vunpack.c.l.b16 %v2048
    %v4952 = vunpack.c.h.b16 %v2048
    %v4953 = vunpack.c.l.b16 %v2049
    %v4954 = vunpack.c.h.b16 %v2049
    %v4955 = vunpack.c.l.b16 %v2050
    %v4956 = vunpack.c.h.b16 %v2050
    %v4957 = vunpack.c.l.b16 %v2051
    %v4958 = vunpack.c.h.b16 %v2051
    %v4959 = vunpack.c.l.b16 %v2052
    %v4960 = vunpack.c.h.b16 %v2052
    %v4961 = vunpack.c.l.b16 %v2053
    %v4962 = vunpack.c.h.b16 %v2053
    %v4963 = vunpack.c.l.b16 %v2054
    %v4964 = vunpack.c.h.b16 %v2054
    %v4965 = vunpack.c.l.b16 %v2055
    %v4966 = vunpack.c.h.b16 %v2055
    %v4967 = vunpack.c.l.b16 %v2056
    %v4968 = vunpack.c.h.b16 %v2056
    %v4969 = vunpack.c.l.b16 %v2057
    %v4970 = vunpack.c.h.b16 %v2057
    %v4971 = vunpack.c.l.b16 %v2058
    %v4972 = vunpack.c.h.b16 %v2058
    %v4973 = vunpack.c.l.b16 %v2059
    %v4974 = vunpack.c.h.b16 %v2059
    %v4975 = vunpack.c.l.b16 %v2060
    %v4976 = vunpack.c.h.b16 %v2060
    %v4977 = vunpack.c.l.b16 %v2061
    %v4978 = vunpack.c.h.b16 %v2061
    %v4979 = vunpack.c.l.b16 %v2062
    %v4980 = vunpack.c.h.b16 %v2062
    %v4981 = vunpack.c.l.b16 %v2063
    %v4982 = vunpack.c.h.b16 %v2063
    %v4983 = vunpack.c.l.b16 %v2064
    %v4984 = vunpack.c.h.b16 %v2064
    %v4985 = vunpack.c.l.b16 %v2065
    %v4986 = vunpack.c.h.b16 %v2065
    %v4987 = vunpack.c.l.b16 %v2066
    %v4988 = vunpack.c.h.b16 %v2066
    %v4989 = vunpack.c.l.b16 %v2067
    %v4990 = vunpack.c.h.b16 %v2067
    %v4991 = vunpack.c.l.b16 %v2068
    %v4992 = vunpack.c.h.b16 %v2068
    %v4993 = vunpack.c.l.b16 %v2069
    %v4994 = vunpack.c.h.b16 %v2069
    %v4995 = vunpack.c.l.b16 %v2070
    %v4996 = vunpack.c.h.b16 %v2070
    %v4997 = vunpack.c.l.b16 %v2071
    %v4998 = vunpack.c.h.b16 %v2071
    %v4999 = vunpack.c.l.b16 %v2072
    %v5000 = vunpack.c.h.b16 %v2072
    %v5001 = vunpack.c.l.b16 %v2073
    %v5002 = vunpack.c.h.b16 %v2073
    %v5003 = vunpack.c.l.b16 %v2074
    %v5004 = vunpack.c.h.b16 %v2074
    %v5005 = vunpack.c.l.b16 %v2075
    %v5006 = vunpack.c.h.b16 %v2075
    %v5007 = vunpack.c.l.b16 %v2076
    %v5008 = vunpack.c.h.b16 %v2076
    %v5009 = vunpack.c.l.b16 %v2077
    %v5010 = vunpack.c.h.b16 %v2077
    %v5011 = vunpack.c.l.b16 %v2078
    %v5012 = vunpack.c.h.b16 %v2078
    %v5013 = vunpack.c.l.b16 %v2079
    %v5014 = vunpack.c.h.b16 %v2079
    %v5015 = vunpack.c.l.b16 %v2080
    %v5016 = vunpack.c.h.b16 %v2080
    %v5017 = vunpack.c.l.b16 %v2081
    %v5018 = vunpack.c.h.b16 %v2081
    %v5019 = vunpack.c.l.b16 %v2082
    %v5020 = vunpack.c.h.b16 %v2082
    %v5021 = vunpack.c.l.b16 %v2083
    %v5022 = vunpack.c.h.b16 %v2083
    %v5023 = vunpack.c.l.b16 %v2084
    %v5024 = vunpack.c.h.b16 %v2084
    %v5025 = vunpack.c.l.b16 %v2085
    %v5026 = vunpack.c.h.b16 %v2085
    %v5027 = vunpack.c.l.b16 %v2086
    %v5028 = vunpack.c.h.b16 %v2086
    %v5029 = vunpack.c.l.b16 %v2087
    %v5030 = vunpack.c.h.b16 %v2087
    %v5031 = vunpack.c.l.b16 %v2088
    %v5032 = vunpack.c.h.b16 %v2088
    %v5033 = vunpack.c.l.b16 %v2089
    %v5034 = vunpack.c.h.b16 %v2089
    %v5035 = vunpack.c.l.b16 %v2090
    %v5036 = vunpack.c.h.b16 %v2090
    %v5037 = vunpack.c.l.b16 %v2091
    %v5038 = vunpack.c.h.b16 %v2091
    %v5039 = vunpack.c.l.b16 %v2092
    %v5040 = vunpack.c.h.b16 %v2092
    %v5041 = vunpack.c.l.b16 %v2093
    %v5042 = vunpack.c.h.b16 %v2093
    %v5043 = vunpack.c.l.b16 %v2094
    %v5044 = vunpack.c.h.b16 %v2094
    %v5045 = vunpack.c.l.b16 %v2095
    %v5046 = vunpack.c.h.b16 %v2095
    %v5047 = vunpack.c.l.b16 %v2096
    %v5048 = vunpack.c.h.b16 %v2096
    %v5049 = vunpack.c.l.b16 %v2097
    %v5050 = vunpack.c.h.b16 %v2097
    %v5051 = vunpack.c.l.b16 %v2098
    %v5052 = vunpack.c.h.b16 %v2098
    %v5053 = vunpack.c.l.b16 %v2099
    %v5054 = vunpack.c.h.b16 %v2099
    %v5055 = vunpack.c.l.b16 %v2100
    %v5056 = vunpack.c.h.b16 %v2100
    %v5057 = vunpack.c.l.b16 %v2101
    %v5058 = vunpack.c.h.b16 %v2101
    %v5059 = vunpack.c.l.b16 %v2102
    %v5060 = vunpack.c.h.b16 %v2102
    %v5061 = vunpack.c.l.b16 %v2103
    %v5062 = vunpack.c.h.b16 %v2103
    %v5063 = vunpack.c.l.b16 %v2104
    %v5064 = vunpack.c.h.b16 %v2104
    %v5065 = vunpack.c.l.b16 %v2105
    %v5066 = vunpack.c.h.b16 %v2105
    %v5067 = vunpack.c.l.b16 %v2106
    %v5068 = vunpack.c.h.b16 %v2106
    %v5069 = vunpack.c.l.b16 %v2107
    %v5070 = vunpack.c.h.b16 %v2107
    %v5071 = vunpack.c.l.b16 %v2108
    %v5072 = vunpack.c.h.b16 %v2108
    %v5073 = vunpack.c.l.b16 %v2109
    %v5074 = vunpack.c.h.b16 %v2109
    %v5075 = vunpack.c.l.b16 %v2110
    %v5076 = vunpack.c.h.b16 %v2110
    %v5077 = vunpack.c.l.b16 %v2111
    %v5078 = vunpack.c.h.b16 %v2111
    %v5079 = vunpack.c.l.b16 %v2112
    %v5080 = vunpack.c.h.b16 %v2112
    %v5081 = vunpack.c.l.b16 %v2113
    %v5082 = vunpack.c.h.b16 %v2113
    %v5083 = vunpack.c.l.b16 %v2114
    %v5084 = vunpack.c.h.b16 %v2114
    %v5085 = vunpack.c.l.b16 %v2115
    %v5086 = vunpack.c.h.b16 %v2115
    %v5087 = vunpack.c.l.b16 %v2116
    %v5088 = vunpack.c.h.b16 %v2116
    %v5089 = vunpack.c.l.b16 %v2117
    %v5090 = vunpack.c.h.b16 %v2117
    %v5091 = vunpack.c.l.b16 %v2118
    %v5092 = vunpack.c.h.b16 %v2118
    %v5093 = vunpack.c.l.b16 %v2119
    %v5094 = vunpack.c.h.b16 %v2119
    %v5095 = vunpack.c.l.b16 %v2120
    %v5096 = vunpack.c.h.b16 %v2120
    %v5097 = vunpack.c.l.b16 %v2121
    %v5098 = vunpack.c.h.b16 %v2121
    %v5099 = vunpack.c.l.b16 %v2122
    %v5100 = vunpack.c.h.b16 %v2122
    %v5101 = vunpack.c.l.b16 %v2123
    %v5102 = vunpack.c.h.b16 %v2123
    %v5103 = vunpack.c.l.b16 %v2124
    %v5104 = vunpack.c.h.b16 %v2124
    %v5105 = vunpack.c.l.b16 %v2125
    %v5106 = vunpack.c.h.b16 %v2125
    %v5107 = vunpack.c.l.b16 %v2126
    %v5108 = vunpack.c.h.b16 %v2126
    %v5109 = vunpack.c.l.b16 %v2127
    %v5110 = vunpack.c.h.b16 %v2127
    %v5111 = vunpack.c.l.b16 %v2128
    %v5112 = vunpack.c.h.b16 %v2128
    %v5113 = vunpack.c.l.b16 %v2129
    %v5114 = vunpack.c.h.b16 %v2129
    %v5115 = vunpack.c.l.b16 %v2130
    %v5116 = vunpack.c.h.b16 %v2130
    %v5117 = vunpack.c.l.b16 %v2131
    %v5118 = vunpack.c.h.b16 %v2131
    %v5119 = vunpack.c.l.b16 %v2132
    %v5120 = vunpack.c.h.b16 %v2132
    %v5121 = vunpack.c.l.b16 %v2133
    %v5122 = vunpack.c.h.b16 %v2133
    %v5123 = vunpack.c.l.b16 %v2134
    %v5124 = vunpack.c.h.b16 %v2134
    %v5125 = vunpack.c.l.b16 %v2135
    %v5126 = vunpack.c.h.b16 %v2135
    %v5127 = vunpack.c.l.b16 %v2136
    %v5128 = vunpack.c.h.b16 %v2136
    %v5129 = vunpack.c.l.b16 %v2137
    %v5130 = vunpack.c.h.b16 %v2137
    %v5131 = vunpack.c.l.b16 %v2138
    %v5132 = vunpack.c.h.b16 %v2138
    %v5133 = vunpack.c.l.b16 %v2139
    %v5134 = vunpack.c.h.b16 %v2139
    %v5135 = vunpack.c.l.b16 %v2140
    %v5136 = vunpack.c.h.b16 %v2140
    %v5137 = vunpack.c.l.b16 %v2141
    %v5138 = vunpack.c.h.b16 %v2141
    %v5139 = vunpack.c.l.b16 %v2142
    %v5140 = vunpack.c.h.b16 %v2142
    %v5141 = vunpack.c.l.b16 %v2143
    %v5142 = vunpack.c.h.b16 %v2143
    %v5143 = vunpack.c.l.b16 %v2144
    %v5144 = vunpack.c.h.b16 %v2144
    %v5145 = vunpack.c.l.b16 %v2145
    %v5146 = vunpack.c.h.b16 %v2145
    %v5147 = vunpack.c.l.b16 %v2146
    %v5148 = vunpack.c.h.b16 %v2146
    %v5149 = vunpack.c.l.b16 %v2147
    %v5150 = vunpack.c.h.b16 %v2147
    %v5151 = vunpack.c.l.b16 %v2148
    %v5152 = vunpack.c.h.b16 %v2148
    %v5153 = vunpack.c.l.b16 %v2149
    %v5154 = vunpack.c.h.b16 %v2149
    %v5155 = vunpack.c.l.b16 %v2150
    %v5156 = vunpack.c.h.b16 %v2150
    %v5157 = vunpack.c.l.b16 %v2151
    %v5158 = vunpack.c.h.b16 %v2151
    %v5159 = vunpack.c.l.b16 %v2152
    %v5160 = vunpack.c.h.b16 %v2152
    %v5161 = vunpack.c.l.b16 %v2153
    %v5162 = vunpack.c.h.b16 %v2153
    %v5163 = vunpack.c.l.b16 %v2154
    %v5164 = vunpack.c.h.b16 %v2154
    %v5165 = vunpack.c.l.b16 %v2155
    %v5166 = vunpack.c.h.b16 %v2155
    %v5167 = vunpack.c.l.b16 %v2156
    %v5168 = vunpack.c.h.b16 %v2156
    %v5169 = vunpack.c.l.b16 %v2157
    %v5170 = vunpack.c.h.b16 %v2157
    %v5171 = vunpack.c.l.b16 %v2158
    %v5172 = vunpack.c.h.b16 %v2158
    %v5173 = vunpack.c.l.b16 %v2159
    %v5174 = vunpack.c.h.b16 %v2159
    %v5175 = vunpack.c.l.b16 %v2160
    %v5176 = vunpack.c.h.b16 %v2160
    %v5177 = vunpack.c.l.b16 %v2161
    %v5178 = vunpack.c.h.b16 %v2161
    %v5179 = vunpack.c.l.b16 %v2162
    %v5180 = vunpack.c.h.b16 %v2162
    %v5181 = vunpack.c.l.b16 %v2163
    %v5182 = vunpack.c.h.b16 %v2163
    %v5183 = vunpack.c.l.b16 %v2164
    %v5184 = vunpack.c.h.b16 %v2164
    %v5185 = vunpack.c.l.b16 %v2165
    %v5186 = vunpack.c.h.b16 %v2165
    %v5187 = vunpack.c.l.b16 %v2166
    %v5188 = vunpack.c.h.b16 %v2166
    %v5189 = vunpack.c.l.b16 %v2167
    %v5190 = vunpack.c.h.b16 %v2167
    %v5191 = vunpack.c.l.b16 %v2168
    %v5192 = vunpack.c.h.b16 %v2168
    %v5193 = vunpack.c.l.b16 %v2169
    %v5194 = vunpack.c.h.b16 %v2169
    %v5195 = vunpack.c.l.b16 %v2170
    %v5196 = vunpack.c.h.b16 %v2170
    %v5197 = vunpack.c.l.b16 %v2171
    %v5198 = vunpack.c.h.b16 %v2171
    %v5199 = vunpack.c.l.b16 %v2172
    %v5200 = vunpack.c.h.b16 %v2172
    %v5201 = vunpack.c.l.b16 %v2173
    %v5202 = vunpack.c.h.b16 %v2173
    %v5203 = vunpack.c.l.b16 %v2174
    %v5204 = vunpack.c.h.b16 %v2174
    %v5205 = vunpack.c.l.b16 %v2175
    %v5206 = vunpack.c.h.b16 %v2175
    %v5207 = vunpack.c.l.b16 %v2176
    %v5208 = vunpack.c.h.b16 %v2176
    %v5209 = vunpack.c.l.b16 %v2177
    %v5210 = vunpack.c.h.b16 %v2177
    %v5211 = vunpack.c.l.b16 %v2178
    %v5212 = vunpack.c.h.b16 %v2178
    %v5213 = vunpack.c.l.b16 %v2179
    %v5214 = vunpack.c.h.b16 %v2179
    %v5215 = vunpack.c.l.b16 %v2180
    %v5216 = vunpack.c.h.b16 %v2180
    %v5217 = vunpack.c.l.b16 %v2181
    %v5218 = vunpack.c.h.b16 %v2181
    %v5219 = vunpack.c.l.b16 %v2182
    %v5220 = vunpack.c.h.b16 %v2182
    %v5221 = vunpack.c.l.b16 %v2183
    %v5222 = vunpack.c.h.b16 %v2183
    %v5223 = vunpack.c.l.b16 %v2184
    %v5224 = vunpack.c.h.b16 %v2184
    %v5225 = vunpack.c.l.b16 %v2185
    %v5226 = vunpack.c.h.b16 %v2185
    %v5227 = vunpack.c.l.b16 %v2186
    %v5228 = vunpack.c.h.b16 %v2186
    %v5229 = vunpack.c.l.b16 %v2187
    %v5230 = vunpack.c.h.b16 %v2187
    %v5231 = vunpack.c.l.b16 %v2188
    %v5232 = vunpack.c.h.b16 %v2188
    %v5233 = vunpack.c.l.b16 %v2189
    %v5234 = vunpack.c.h.b16 %v2189
    %v5235 = vunpack.c.l.b16 %v2190
    %v5236 = vunpack.c.h.b16 %v2190
    %v5237 = vunpack.c.l.b16 %v2191
    %v5238 = vunpack.c.h.b16 %v2191
    %v5239 = vunpack.c.l.b16 %v2192
    %v5240 = vunpack.c.h.b16 %v2192
    %v5241 = vunpack.c.l.b16 %v2193
    %v5242 = vunpack.c.h.b16 %v2193
    %v5243 = vunpack.c.l.b16 %v2194
    %v5244 = vunpack.c.h.b16 %v2194
    %v5245 = vunpack.c.l.b16 %v2195
    %v5246 = vunpack.c.h.b16 %v2195
    %v5247 = vunpack.c.l.b16 %v2196
    %v5248 = vunpack.c.h.b16 %v2196
    %v5249 = vunpack.c.l.b16 %v2197
    %v5250 = vunpack.c.h.b16 %v2197
    %v5251 = vunpack.c.l.b16 %v2198
    %v5252 = vunpack.c.h.b16 %v2198
    %v5253 = vunpack.c.l.b16 %v2199
    %v5254 = vunpack.c.h.b16 %v2199
    %v5255 = vunpack.c.l.b16 %v2200
    %v5256 = vunpack.c.h.b16 %v2200
    %v5257 = vunpack.c.l.b16 %v2201
    %v5258 = vunpack.c.h.b16 %v2201
    %v5259 = vunpack.c.l.b16 %v2202
    %v5260 = vunpack.c.h.b16 %v2202
    %v5261 = vunpack.c.l.b16 %v2203
    %v5262 = vunpack.c.h.b16 %v2203
    %v5263 = vunpack.c.l.b16 %v2204
    %v5264 = vunpack.c.h.b16 %v2204
    %v5265 = vunpack.c.l.b16 %v2205
    %v5266 = vunpack.c.h.b16 %v2205
    %v5267 = vunpack.c.l.b16 %v2206
    %v5268 = vunpack.c.h.b16 %v2206
    %v5269 = vunpack.c.l.b16 %v2207
    %v5270 = vunpack.c.h.b16 %v2207
    %v5271 = vunpack.c.l.b16 %v2208
    %v5272 = vunpack.c.h.b16 %v2208
    %v5273 = vunpack.c.l.b16 %v2209
    %v5274 = vunpack.c.h.b16 %v2209
    %v5275 = vunpack.c.l.b16 %v2210
    %v5276 = vunpack.c.h.b16 %v2210
    %v5277 = vunpack.c.l.b16 %v2211
    %v5278 = vunpack.c.h.b16 %v2211
    %v5279 = vunpack.c.l.b16 %v2212
    %v5280 = vunpack.c.h.b16 %v2212
    %v5281 = vunpack.c.l.b16 %v2213
    %v5282 = vunpack.c.h.b16 %v2213
    %v5283 = vunpack.c.l.b16 %v2214
    %v5284 = vunpack.c.h.b16 %v2214
    %v5285 = vunpack.c.l.b16 %v2215
    %v5286 = vunpack.c.h.b16 %v2215
    %v5287 = vunpack.c.l.b16 %v2216
    %v5288 = vunpack.c.h.b16 %v2216
    %v5289 = vunpack.c.l.b16 %v2217
    %v5290 = vunpack.c.h.b16 %v2217
    %v5291 = vunpack.c.l.b16 %v2218
    %v5292 = vunpack.c.h.b16 %v2218
    %v5293 = vunpack.c.l.b16 %v2219
    %v5294 = vunpack.c.h.b16 %v2219
    %v5295 = vunpack.c.l.b16 %v2220
    %v5296 = vunpack.c.h.b16 %v2220
    %v5297 = vunpack.c.l.b16 %v2221
    %v5298 = vunpack.c.h.b16 %v2221
    %v5299 = vunpack.c.l.b16 %v2222
    %v5300 = vunpack.c.h.b16 %v2222
    %v5301 = vunpack.c.l.b16 %v2223
    %v5302 = vunpack.c.h.b16 %v2223
    %v5303 = vunpack.c.l.b16 %v2224
    %v5304 = vunpack.c.h.b16 %v2224
    %v5305 = vunpack.c.l.b16 %v2225
    %v5306 = vunpack.c.h.b16 %v2225
    %v5307 = vunpack.c.l.b16 %v2226
    %v5308 = vunpack.c.h.b16 %v2226
    %v5309 = vunpack.c.l.b16 %v2227
    %v5310 = vunpack.c.h.b16 %v2227
    %v5311 = vunpack.c.l.b16 %v2228
    %v5312 = vunpack.c.h.b16 %v2228
    %v5313 = vunpack.c.l.b16 %v2229
    %v5314 = vunpack.c.h.b16 %v2229
    %v5315 = vunpack.c.l.b16 %v2230
    %v5316 = vunpack.c.h.b16 %v2230
    %v5317 = vunpack.c.l.b16 %v2231
    %v5318 = vunpack.c.h.b16 %v2231
    %v5319 = vunpack.c.l.b16 %v2232
    %v5320 = vunpack.c.h.b16 %v2232
    %v5321 = vunpack.c.l.b16 %v2233
    %v5322 = vunpack.c.h.b16 %v2233
    %v5323 = vunpack.c.l.b16 %v2234
    %v5324 = vunpack.c.h.b16 %v2234
    %v5325 = vunpack.c.l.b16 %v2235
    %v5326 = vunpack.c.h.b16 %v2235
    %v5327 = vunpack.c.l.b16 %v2236
    %v5328 = vunpack.c.h.b16 %v2236
    %v5329 = vunpack.c.l.b16 %v2237
    %v5330 = vunpack.c.h.b16 %v2237
    %v5331 = vunpack.c.l.b16 %v2238
    %v5332 = vunpack.c.h.b16 %v2238
    %v5333 = vunpack.c.l.b16 %v2239
    %v5334 = vunpack.c.h.b16 %v2239
    %v5335 = vunpack.c.l.b16 %v2240
    %v5336 = vunpack.c.h.b16 %v2240
    %v5337 = vunpack.c.l.b16 %v2241
    %v5338 = vunpack.c.h.b16 %v2241
    %v5339 = vunpack.c.l.b16 %v2242
    %v5340 = vunpack.c.h.b16 %v2242
    %v5341 = vunpack.c.l.b16 %v2243
    %v5342 = vunpack.c.h.b16 %v2243
    %v5343 = vunpack.c.l.b16 %v2244
    %v5344 = vunpack.c.h.b16 %v2244
    %v5345 = vunpack.c.l.b16 %v2245
    %v5346 = vunpack.c.h.b16 %v2245
    %v5347 = vunpack.c.l.b16 %v2246
    %v5348 = vunpack.c.h.b16 %v2246
    %v5349 = vunpack.c.l.b16 %v2247
    %v5350 = vunpack.c.h.b16 %v2247
    %v5351 = vunpack.c.l.b16 %v2248
    %v5352 = vunpack.c.h.b16 %v2248
    %v5353 = vunpack.c.l.b16 %v2249
    %v5354 = vunpack.c.h.b16 %v2249
    %v5355 = vunpack.c.l.b16 %v2250
    %v5356 = vunpack.c.h.b16 %v2250
    %v5357 = vunpack.c.l.b16 %v2251
    %v5358 = vunpack.c.h.b16 %v2251
    %v5359 = vunpack.c.l.b16 %v2252
    %v5360 = vunpack.c.h.b16 %v2252
    %v5361 = vunpack.c.l.b16 %v2253
    %v5362 = vunpack.c.h.b16 %v2253
    %v5363 = vunpack.c.l.b16 %v2254
    %v5364 = vunpack.c.h.b16 %v2254
    %v5365 = vunpack.c.l.b16 %v2255
    %v5366 = vunpack.c.h.b16 %v2255
    %v5367 = vunpack.c.l.b16 %v2256
    %v5368 = vunpack.c.h.b16 %v2256
    %v5369 = vunpack.c.l.b16 %v2257
    %v5370 = vunpack.c.h.b16 %v2257
    %v5371 = vunpack.c.l.b16 %v2258
    %v5372 = vunpack.c.h.b16 %v2258
    %v5373 = vpack.c.b16 %v3333, %v3325
    %v5374 = vpack.c.b16 %v3334, %v3326
    %v5375 = vpack.c.b16 %v3335, %v3327
    %v5376 = vpack.c.b16 %v3336, %v3328
    %v5377 = vpack.c.b16 %v3337, %v3329
    %v5378 = vpack.c.b16 %v3338, %v3330
    %v5379 = vpack.c.b16 %v3339, %v3331
    %v5380 = vpack.c.b16 %v3340, %v3332
    %v5381 = vpack.c.b16 %v3349, %v3341
    %v5382 = vpack.c.b16 %v3350, %v3342
    %v5383 = vpack.c.b16 %v3351, %v3343
    %v5384 = vpack.c.b16 %v3352, %v3344
    %v5385 = vpack.c.b16 %v3353, %v3345
    %v5386 = vpack.c.b16 %v3354, %v3346
    %v5387 = vpack.c.b16 %v3355, %v3347
    %v5388 = vpack.c.b16 %v3356, %v3348
    %v5389 = vpack.c.b16 %v3365, %v3357
    %v5390 = vpack.c.b16 %v3366, %v3358
    %v5391 = vpack.c.b16 %v3367, %v3359
    %v5392 = vpack.c.b16 %v3368, %v3360
    %v5393 = vpack.c.b16 %v3369, %v3361
    %v5394 = vpack.c.b16 %v3370, %v3362
    %v5395 = vpack.c.b16 %v3371, %v3363
    %v5396 = vpack.c.b16 %v3372, %v3364
    %v5397 = vpack.c.b16 %v3381, %v3373
    %v5398 = vpack.c.b16 %v3382, %v3374
    %v5399 = vpack.c.b16 %v3383, %v3375
    %v5400 = vpack.c.b16 %v3384, %v3376
    %v5401 = vpack.c.b16 %v3385, %v3377
    %v5402 = vpack.c.b16 %v3386, %v3378
    %v5403 = vpack.c.b16 %v3387, %v3379
    %v5404 = vpack.c.b16 %v3388, %v3380
    %v5405 = vpack.c.b16 %v3397, %v3389
    %v5406 = vpack.c.b16 %v3398, %v3390
    %v5407 = vpack.c.b16 %v3399, %v3391
    %v5408 = vpack.c.b16 %v3400, %v3392
    %v5409 = vpack.c.b16 %v3401, %v3393
    %v5410 = vpack.c.b16 %v3402, %v3394
    %v5411 = vpack.c.b16 %v3403, %v3395
    %v5412 = vpack.c.b16 %v3404, %v3396
    %v5413 = vpack.c.b16 %v3413, %v3405
    %v5414 = vpack.c.b16 %v3414, %v3406
    %v5415 = vpack.c.b16 %v3415, %v3407
    %v5416 = vpack.c.b16 %v3416, %v3408
    %v5417 = vpack.c.b16 %v3417, %v3409
    %v5418 = vpack.c.b16 %v3418, %v3410
    %v5419 = vpack.c.b16 %v3419, %v3411
    %v5420 = vpack.c.b16 %v3420, %v3412
    %v5421 = vpack.c.b16 %v3429, %v3421
    %v5422 = vpack.c.b16 %v3430, %v3422
    %v5423 = vpack.c.b16 %v3431, %v3423
    %v5424 = vpack.c.b16 %v3432, %v3424
    %v5425 = vpack.c.b16 %v3433, %v3425
    %v5426 = vpack.c.b16 %v3434, %v3426
    %v5427 = vpack.c.b16 %v3435, %v3427
    %v5428 = vpack.c.b16 %v3436, %v3428
    %v5429 = vpack.c.b16 %v3445, %v3437
    %v5430 = vpack.c.b16 %v3446, %v3438
    %v5431 = vpack.c.b16 %v3447, %v3439
    %v5432 = vpack.c.b16 %v3448, %v3440
    %v5433 = vpack.c.b16 %v3449, %v3441
    %v5434 = vpack.c.b16 %v3450, %v3442
    %v5435 = vpack.c.b16 %v3451, %v3443
    %v5436 = vpack.c.b16 %v3452, %v3444
    %v5437 = vpack.c.b16 %v3461, %v3453
    %v5438 = vpack.c.b16 %v3462, %v3454
    %v5439 = vpack.c.b16 %v3463, %v3455
    %v5440 = vpack.c.b16 %v3464, %v3456
    %v5441 = vpack.c.b16 %v3465, %v3457
    %v5442 = vpack.c.b16 %v3466, %v3458
    %v5443 = vpack.c.b16 %v3467, %v3459
    %v5444 = vpack.c.b16 %v3468, %v3460
    %v5445 = vpack.c.b16 %v3477, %v3469
    %v5446 = vpack.c.b16 %v3478, %v3470
    %v5447 = vpack.c.b16 %v3479, %v3471
    %v5448 = vpack.c.b16 %v3480, %v3472
    %v5449 = vpack.c.b16 %v3481, %v3473
    %v5450 = vpack.c.b16 %v3482, %v3474
    %v5451 = vpack.c.b16 %v3483, %v3475
    %v5452 = vpack.c.b16 %v3484, %v3476
    %v5453 = vpack.c.b16 %v3493, %v3485
    %v5454 = vpack.c.b16 %v3494, %v3486
    %v5455 = vpack.c.b16 %v3495, %v3487
    %v5456 = vpack.c.b16 %v3496, %v3488
    %v5457 = vpack.c.b16 %v3497, %v3489
    %v5458 = vpack.c.b16 %v3498, %v3490
    %v5459 = vpack.c.b16 %v3499, %v3491
    %v5460 = vpack.c.b16 %v3500, %v3492
    %v5461 = vpack.c.b16 %v3509, %v3501
    %v5462 = vpack.c.b16 %v3510, %v3502
    %v5463 = vpack.c.b16 %v3511, %v3503
    %v5464 = vpack.c.b16 %v3512, %v3504
    %v5465 = vpack.c.b16 %v3513, %v3505
    %v5466 = vpack.c.b16 %v3514, %v3506
    %v5467 = vpack.c.b16 %v3515, %v3507
    %v5468 = vpack.c.b16 %v3516, %v3508
    %v5469 = vpack.c.b16 %v3525, %v3517
    %v5470 = vpack.c.b16 %v3526, %v3518
    %v5471 = vpack.c.b16 %v3527, %v3519
    %v5472 = vpack.c.b16 %v3528, %v3520
    %v5473 = vpack.c.b16 %v3529, %v3521
    %v5474 = vpack.c.b16 %v3530, %v3522
    %v5475 = vpack.c.b16 %v3531, %v3523
    %v5476 = vpack.c.b16 %v3532, %v3524
    %v5477 = vpack.c.b16 %v3541, %v3533
    %v5478 = vpack.c.b16 %v3542, %v3534
    %v5479 = vpack.c.b16 %v3543, %v3535
    %v5480 = vpack.c.b16 %v3544, %v3536
    %v5481 = vpack.c.b16 %v3545, %v3537
    %v5482 = vpack.c.b16 %v3546, %v3538
    %v5483 = vpack.c.b16 %v3547, %v3539
    %v5484 = vpack.c.b16 %v3548, %v3540
    %v5485 = vpack.c.b16 %v3557, %v3549
    %v5486 = vpack.c.b16 %v3558, %v3550
    %v5487 = vpack.c.b16 %v3559, %v3551
    %v5488 = vpack.c.b16 %v3560, %v3552
    %v5489 = vpack.c.b16 %v3561, %v3553
    %v5490 = vpack.c.b16 %v3562, %v3554
    %v5491 = vpack.c.b16 %v3563, %v3555
    %v5492 = vpack.c.b16 %v3564, %v3556
    %v5493 = vpack.c.b16 %v3573, %v3565
    %v5494 = vpack.c.b16 %v3574, %v3566
    %v5495 = vpack.c.b16 %v3575, %v3567
    %v5496 = vpack.c.b16 %v3576, %v3568
    %v5497 = vpack.c.b16 %v3577, %v3569
    %v5498 = vpack.c.b16 %v3578, %v3570
    %v5499 = vpack.c.b16 %v3579, %v3571
    %v5500 = vpack.c.b16 %v3580, %v3572
    %v5501 = vpack.c.b16 %v3589, %v3581
    %v5502 = vpack.c.b16 %v3590, %v3582
    %v5503 = vpack.c.b16 %v3591, %v3583
    %v5504 = vpack.c.b16 %v3592, %v3584
    %v5505 = vpack.c.b16 %v3593, %v3585
    %v5506 = vpack.c.b16 %v3594, %v3586
    %v5507 = vpack.c.b16 %v3595, %v3587
    %v5508 = vpack.c.b16 %v3596, %v3588
    %v5509 = vpack.c.b16 %v3605, %v3597
    %v5510 = vpack.c.b16 %v3606, %v3598
    %v5511 = vpack.c.b16 %v3607, %v3599
    %v5512 = vpack.c.b16 %v3608, %v3600
    %v5513 = vpack.c.b16 %v3609, %v3601
    %v5514 = vpack.c.b16 %v3610, %v3602
    %v5515 = vpack.c.b16 %v3611, %v3603
    %v5516 = vpack.c.b16 %v3612, %v3604
    %v5517 = vpack.c.b16 %v3621, %v3613
    %v5518 = vpack.c.b16 %v3622, %v3614
    %v5519 = vpack.c.b16 %v3623, %v3615
    %v5520 = vpack.c.b16 %v3624, %v3616
    %v5521 = vpack.c.b16 %v3625, %v3617
    %v5522 = vpack.c.b16 %v3626, %v3618
    %v5523 = vpack.c.b16 %v3627, %v3619
    %v5524 = vpack.c.b16 %v3628, %v3620
    %v5525 = vpack.c.b16 %v3637, %v3629
    %v5526 = vpack.c.b16 %v3638, %v3630
    %v5527 = vpack.c.b16 %v3639, %v3631
    %v5528 = vpack.c.b16 %v3640, %v3632
    %v5529 = vpack.c.b16 %v3641, %v3633
    %v5530 = vpack.c.b16 %v3642, %v3634
    %v5531 = vpack.c.b16 %v3643, %v3635
    %v5532 = vpack.c.b16 %v3644, %v3636
    %v5533 = vpack.c.b16 %v3653, %v3645
    %v5534 = vpack.c.b16 %v3654, %v3646
    %v5535 = vpack.c.b16 %v3655, %v3647
    %v5536 = vpack.c.b16 %v3656, %v3648
    %v5537 = vpack.c.b16 %v3657, %v3649
    %v5538 = vpack.c.b16 %v3658, %v3650
    %v5539 = vpack.c.b16 %v3659, %v3651
    %v5540 = vpack.c.b16 %v3660, %v3652
    %v5541 = vpack.c.b16 %v3669, %v3661
    %v5542 = vpack.c.b16 %v3670, %v3662
    %v5543 = vpack.c.b16 %v3671, %v3663
    %v5544 = vpack.c.b16 %v3672, %v3664
    %v5545 = vpack.c.b16 %v3673, %v3665
    %v5546 = vpack.c.b16 %v3674, %v3666
    %v5547 = vpack.c.b16 %v3675, %v3667
    %v5548 = vpack.c.b16 %v3676, %v3668
    %v5549 = vpack.c.b16 %v3685, %v3677
    %v5550 = vpack.c.b16 %v3686, %v3678
    %v5551 = vpack.c.b16 %v3687, %v3679
    %v5552 = vpack.c.b16 %v3688, %v3680
    %v5553 = vpack.c.b16 %v3689, %v3681
    %v5554 = vpack.c.b16 %v3690, %v3682
    %v5555 = vpack.c.b16 %v3691, %v3683
    %v5556 = vpack.c.b16 %v3692, %v3684
    %v5557 = vpack.c.b16 %v3701, %v3693
    %v5558 = vpack.c.b16 %v3702, %v3694
    %v5559 = vpack.c.b16 %v3703, %v3695
    %v5560 = vpack.c.b16 %v3704, %v3696
    %v5561 = vpack.c.b16 %v3705, %v3697
    %v5562 = vpack.c.b16 %v3706, %v3698
    %v5563 = vpack.c.b16 %v3707, %v3699
    %v5564 = vpack.c.b16 %v3708, %v3700
    %v5565 = vpack.c.b16 %v3717, %v3709
    %v5566 = vpack.c.b16 %v3718, %v3710
    %v5567 = vpack.c.b16 %v3719, %v3711
    %v5568 = vpack.c.b16 %v3720, %v3712
    %v5569 = vpack.c.b16 %v3721, %v3713
    %v5570 = vpack.c.b16 %v3722, %v3714
    %v5571 = vpack.c.b16 %v3723, %v3715
    %v5572 = vpack.c.b16 %v3724, %v3716
    %v5573 = vpack.c.b16 %v3733, %v3725
    %v5574 = vpack.c.b16 %v3734, %v3726
    %v5575 = vpack.c.b16 %v3735, %v3727
    %v5576 = vpack.c.b16 %v3736, %v3728
    %v5577 = vpack.c.b16 %v3737, %v3729
    %v5578 = vpack.c.b16 %v3738, %v3730
    %v5579 = vpack.c.b16 %v3739, %v3731
    %v5580 = vpack.c.b16 %v3740, %v3732
    %v5581 = vpack.c.b16 %v3749, %v3741
    %v5582 = vpack.c.b16 %v3750, %v3742
    %v5583 = vpack.c.b16 %v3751, %v3743
    %v5584 = vpack.c.b16 %v3752, %v3744
    %v5585 = vpack.c.b16 %v3753, %v3745
    %v5586 = vpack.c.b16 %v3754, %v3746
    %v5587 = vpack.c.b16 %v3755, %v3747
    %v5588 = vpack.c.b16 %v3756, %v3748
    %v5589 = vpack.c.b16 %v3765, %v3757
    %v5590 = vpack.c.b16 %v3766, %v3758
    %v5591 = vpack.c.b16 %v3767, %v3759
    %v5592 = vpack.c.b16 %v3768, %v3760
    %v5593 = vpack.c.b16 %v3769, %v3761
    %v5594 = vpack.c.b16 %v3770, %v3762
    %v5595 = vpack.c.b16 %v3771, %v3763
    %v5596 = vpack.c.b16 %v3772, %v3764
    %v5597 = vpack.c.b16 %v3781, %v3773
    %v5598 = vpack.c.b16 %v3782, %v3774
    %v5599 = vpack.c.b16 %v3783, %v3775
    %v5600 = vpack.c.b16 %v3784, %v3776
    %v5601 = vpack.c.b16 %v3785, %v3777
    %v5602 = vpack.c.b16 %v3786, %v3778
    %v5603 = vpack.c.b16 %v3787, %v3779
    %v5604 = vpack.c.b16 %v3788, %v3780
    %v5605 = vpack.c.b16 %v3797, %v3789
    %v5606 = vpack.c.b16 %v3798, %v3790
    %v5607 = vpack.c.b16 %v3799, %v3791
    %v5608 = vpack.c.b16 %v3800, %v3792
    %v5609 = vpack.c.b16 %v3801, %v3793
    %v5610 = vpack.c.b16 %v3802, %v3794
    %v5611 = vpack.c.b16 %v3803, %v3795
    %v5612 = vpack.c.b16 %v3804, %v3796
    %v5613 = vpack.c.b16 %v3813, %v3805
    %v5614 = vpack.c.b16 %v3814, %v3806
    %v5615 = vpack.c.b16 %v3815, %v3807
    %v5616 = vpack.c.b16 %v3816, %v3808
    %v5617 = vpack.c.b16 %v3817, %v3809
    %v5618 = vpack.c.b16 %v3818, %v3810
    %v5619 = vpack.c.b16 %v3819, %v3811
    %v5620 = vpack.c.b16 %v3820, %v3812
    %v5621 = vpack.c.b16 %v3829, %v3821
    %v5622 = vpack.c.b16 %v3830, %v3822
    %v5623 = vpack.c.b16 %v3831, %v3823
    %v5624 = vpack.c.b16 %v3832, %v3824
    %v5625 = vpack.c.b16 %v3833, %v3825
    %v5626 = vpack.c.b16 %v3834, %v3826
    %v5627 = vpack.c.b16 %v3835, %v3827
    %v5628 = vpack.c.b16 %v3836, %v3828
    %v5629 = vpack.c.b16 %v3845, %v3837
    %v5630 = vpack.c.b16 %v3846, %v3838
    %v5631 = vpack.c.b16 %v3847, %v3839
    %v5632 = vpack.c.b16 %v3848, %v3840
    %v5633 = vpack.c.b16 %v3849, %v3841
    %v5634 = vpack.c.b16 %v3850, %v3842
    %v5635 = vpack.c.b16 %v3851, %v3843
    %v5636 = vpack.c.b16 %v3852, %v3844
    %v5637 = vpack.c.b16 %v3861, %v3853
    %v5638 = vpack.c.b16 %v3862, %v3854
    %v5639 = vpack.c.b16 %v3863, %v3855
    %v5640 = vpack.c.b16 %v3864, %v3856
    %v5641 = vpack.c.b16 %v3865, %v3857
    %v5642 = vpack.c.b16 %v3866, %v3858
    %v5643 = vpack.c.b16 %v3867, %v3859
    %v5644 = vpack.c.b16 %v3868, %v3860
    %v5645 = vpack.c.b16 %v3877, %v3869
    %v5646 = vpack.c.b16 %v3878, %v3870
    %v5647 = vpack.c.b16 %v3879, %v3871
    %v5648 = vpack.c.b16 %v3880, %v3872
    %v5649 = vpack.c.b16 %v3881, %v3873
    %v5650 = vpack.c.b16 %v3882, %v3874
    %v5651 = vpack.c.b16 %v3883, %v3875
    %v5652 = vpack.c.b16 %v3884, %v3876
    %v5653 = vpack.c.b16 %v3893, %v3885
    %v5654 = vpack.c.b16 %v3894, %v3886
    %v5655 = vpack.c.b16 %v3895, %v3887
    %v5656 = vpack.c.b16 %v3896, %v3888
    %v5657 = vpack.c.b16 %v3897, %v3889
    %v5658 = vpack.c.b16 %v3898, %v3890
    %v5659 = vpack.c.b16 %v3899, %v3891
    %v5660 = vpack.c.b16 %v3900, %v3892
    %v5661 = vpack.c.b16 %v3909, %v3901
    %v5662 = vpack.c.b16 %v3910, %v3902
    %v5663 = vpack.c.b16 %v3911, %v3903
    %v5664 = vpack.c.b16 %v3912, %v3904
    %v5665 = vpack.c.b16 %v3913, %v3905
    %v5666 = vpack.c.b16 %v3914, %v3906
    %v5667 = vpack.c.b16 %v3915, %v3907
    %v5668 = vpack.c.b16 %v3916, %v3908
    %v5669 = vpack.c.b16 %v3925, %v3917
    %v5670 = vpack.c.b16 %v3926, %v3918
    %v5671 = vpack.c.b16 %v3927, %v3919
    %v5672 = vpack.c.b16 %v3928, %v3920
    %v5673 = vpack.c.b16 %v3929, %v3921
    %v5674 = vpack.c.b16 %v3930, %v3922
    %v5675 = vpack.c.b16 %v3931, %v3923
    %v5676 = vpack.c.b16 %v3932, %v3924
    %v5677 = vpack.c.b16 %v3941, %v3933
    %v5678 = vpack.c.b16 %v3942, %v3934
    %v5679 = vpack.c.b16 %v3943, %v3935
    %v5680 = vpack.c.b16 %v3944, %v3936
    %v5681 = vpack.c.b16 %v3945, %v3937
    %v5682 = vpack.c.b16 %v3946, %v3938
    %v5683 = vpack.c.b16 %v3947, %v3939
    %v5684 = vpack.c.b16 %v3948, %v3940
    %v5685 = vpack.c.b16 %v3957, %v3949
    %v5686 = vpack.c.b16 %v3958, %v3950
    %v5687 = vpack.c.b16 %v3959, %v3951
    %v5688 = vpack.c.b16 %v3960, %v3952
    %v5689 = vpack.c.b16 %v3961, %v3953
    %v5690 = vpack.c.b16 %v3962, %v3954
    %v5691 = vpack.c.b16 %v3963, %v3955
    %v5692 = vpack.c.b16 %v3964, %v3956
    %v5693 = vpack.c.b16 %v3973, %v3965
    %v5694 = vpack.c.b16 %v3974, %v3966
    %v5695 = vpack.c.b16 %v3975, %v3967
    %v5696 = vpack.c.b16 %v3976, %v3968
    %v5697 = vpack.c.b16 %v3977, %v3969
    %v5698 = vpack.c.b16 %v3978, %v3970
    %v5699 = vpack.c.b16 %v3979, %v3971
    %v5700 = vpack.c.b16 %v3980, %v3972
    %v5701 = vpack.c.b16 %v3989, %v3981
    %v5702 = vpack.c.b16 %v3990, %v3982
    %v5703 = vpack.c.b16 %v3991, %v3983
    %v5704 = vpack.c.b16 %v3992, %v3984
    %v5705 = vpack.c.b16 %v3993, %v3985
    %v5706 = vpack.c.b16 %v3994, %v3986
    %v5707 = vpack.c.b16 %v3995, %v3987
    %v5708 = vpack.c.b16 %v3996, %v3988
    %v5709 = vpack.c.b16 %v4005, %v3997
    %v5710 = vpack.c.b16 %v4006, %v3998
    %v5711 = vpack.c.b16 %v4007, %v3999
    %v5712 = vpack.c.b16 %v4008, %v4000
    %v5713 = vpack.c.b16 %v4009, %v4001
    %v5714 = vpack.c.b16 %v4010, %v4002
    %v5715 = vpack.c.b16 %v4011, %v4003
    %v5716 = vpack.c.b16 %v4012, %v4004
    %v5717 = vpack.c.b16 %v4021, %v4013
    %v5718 = vpack.c.b16 %v4022, %v4014
    %v5719 = vpack.c.b16 %v4023, %v4015
    %v5720 = vpack.c.b16 %v4024, %v4016
    %v5721 = vpack.c.b16 %v4025, %v4017
    %v5722 = vpack.c.b16 %v4026, %v4018
    %v5723 = vpack.c.b16 %v4027, %v4019
    %v5724 = vpack.c.b16 %v4028, %v4020
    %v5725 = vpack.c.b16 %v4037, %v4029
    %v5726 = vpack.c.b16 %v4038, %v4030
    %v5727 = vpack.c.b16 %v4039, %v4031
    %v5728 = vpack.c.b16 %v4040, %v4032
    %v5729 = vpack.c.b16 %v4041, %v4033
    %v5730 = vpack.c.b16 %v4042, %v4034
    %v5731 = vpack.c.b16 %v4043, %v4035
    %v5732 = vpack.c.b16 %v4044, %v4036
    %v5733 = vpack.c.b16 %v4053, %v4045
    %v5734 = vpack.c.b16 %v4054, %v4046
    %v5735 = vpack.c.b16 %v4055, %v4047
    %v5736 = vpack.c.b16 %v4056, %v4048
    %v5737 = vpack.c.b16 %v4057, %v4049
    %v5738 = vpack.c.b16 %v4058, %v4050
    %v5739 = vpack.c.b16 %v4059, %v4051
    %v5740 = vpack.c.b16 %v4060, %v4052
    %v5741 = vpack.c.b16 %v4069, %v4061
    %v5742 = vpack.c.b16 %v4070, %v4062
    %v5743 = vpack.c.b16 %v4071, %v4063
    %v5744 = vpack.c.b16 %v4072, %v4064
    %v5745 = vpack.c.b16 %v4073, %v4065
    %v5746 = vpack.c.b16 %v4074, %v4066
    %v5747 = vpack.c.b16 %v4075, %v4067
    %v5748 = vpack.c.b16 %v4076, %v4068
    %v5749 = vpack.c.b16 %v4085, %v4077
    %v5750 = vpack.c.b16 %v4086, %v4078
    %v5751 = vpack.c.b16 %v4087, %v4079
    %v5752 = vpack.c.b16 %v4088, %v4080
    %v5753 = vpack.c.b16 %v4089, %v4081
    %v5754 = vpack.c.b16 %v4090, %v4082
    %v5755 = vpack.c.b16 %v4091, %v4083
    %v5756 = vpack.c.b16 %v4092, %v4084
    %v5757 = vpack.c.b16 %v4101, %v4093
    %v5758 = vpack.c.b16 %v4102, %v4094
    %v5759 = vpack.c.b16 %v4103, %v4095
    %v5760 = vpack.c.b16 %v4104, %v4096
    %v5761 = vpack.c.b16 %v4105, %v4097
    %v5762 = vpack.c.b16 %v4106, %v4098
    %v5763 = vpack.c.b16 %v4107, %v4099
    %v5764 = vpack.c.b16 %v4108, %v4100
    %v5765 = vpack.c.b16 %v4117, %v4109
    %v5766 = vpack.c.b16 %v4118, %v4110
    %v5767 = vpack.c.b16 %v4119, %v4111
    %v5768 = vpack.c.b16 %v4120, %v4112
    %v5769 = vpack.c.b16 %v4121, %v4113
    %v5770 = vpack.c.b16 %v4122, %v4114
    %v5771 = vpack.c.b16 %v4123, %v4115
    %v5772 = vpack.c.b16 %v4124, %v4116
    %v5773 = vpack.c.b16 %v4133, %v4125
    %v5774 = vpack.c.b16 %v4134, %v4126
    %v5775 = vpack.c.b16 %v4135, %v4127
    %v5776 = vpack.c.b16 %v4136, %v4128
    %v5777 = vpack.c.b16 %v4137, %v4129
    %v5778 = vpack.c.b16 %v4138, %v4130
    %v5779 = vpack.c.b16 %v4139, %v4131
    %v5780 = vpack.c.b16 %v4140, %v4132
    %v5781 = vpack.c.b16 %v4149, %v4141
    %v5782 = vpack.c.b16 %v4150, %v4142
    %v5783 = vpack.c.b16 %v4151, %v4143
    %v5784 = vpack.c.b16 %v4152, %v4144
    %v5785 = vpack.c.b16 %v4153, %v4145
    %v5786 = vpack.c.b16 %v4154, %v4146
    %v5787 = vpack.c.b16 %v4155, %v4147
    %v5788 = vpack.c.b16 %v4156, %v4148
    %v5789 = vpack.c.b16 %v4165, %v4157
    %v5790 = vpack.c.b16 %v4166, %v4158
    %v5791 = vpack.c.b16 %v4167, %v4159
    %v5792 = vpack.c.b16 %v4168, %v4160
    %v5793 = vpack.c.b16 %v4169, %v4161
    %v5794 = vpack.c.b16 %v4170, %v4162
    %v5795 = vpack.c.b16 %v4171, %v4163
    %v5796 = vpack.c.b16 %v4172, %v4164
    %v5797 = vpack.c.b16 %v4181, %v4173
    %v5798 = vpack.c.b16 %v4182, %v4174
    %v5799 = vpack.c.b16 %v4183, %v4175
    %v5800 = vpack.c.b16 %v4184, %v4176
    %v5801 = vpack.c.b16 %v4185, %v4177
    %v5802 = vpack.c.b16 %v4186, %v4178
    %v5803 = vpack.c.b16 %v4187, %v4179
    %v5804 = vpack.c.b16 %v4188, %v4180
    %v5805 = vpack.c.b16 %v4197, %v4189
    %v5806 = vpack.c.b16 %v4198, %v4190
    %v5807 = vpack.c.b16 %v4199, %v4191
    %v5808 = vpack.c.b16 %v4200, %v4192
    %v5809 = vpack.c.b16 %v4201, %v4193
    %v5810 = vpack.c.b16 %v4202, %v4194
    %v5811 = vpack.c.b16 %v4203, %v4195
    %v5812 = vpack.c.b16 %v4204, %v4196
    %v5813 = vpack.c.b16 %v4213, %v4205
    %v5814 = vpack.c.b16 %v4214, %v4206
    %v5815 = vpack.c.b16 %v4215, %v4207
    %v5816 = vpack.c.b16 %v4216, %v4208
    %v5817 = vpack.c.b16 %v4217, %v4209
    %v5818 = vpack.c.b16 %v4218, %v4210
    %v5819 = vpack.c.b16 %v4219, %v4211
    %v5820 = vpack.c.b16 %v4220, %v4212
    %v5821 = vpack.c.b16 %v4229, %v4221
    %v5822 = vpack.c.b16 %v4230, %v4222
    %v5823 = vpack.c.b16 %v4231, %v4223
    %v5824 = vpack.c.b16 %v4232, %v4224
    %v5825 = vpack.c.b16 %v4233, %v4225
    %v5826 = vpack.c.b16 %v4234, %v4226
    %v5827 = vpack.c.b16 %v4235, %v4227
    %v5828 = vpack.c.b16 %v4236, %v4228
    %v5829 = vpack.c.b16 %v4245, %v4237
    %v5830 = vpack.c.b16 %v4246, %v4238
    %v5831 = vpack.c.b16 %v4247, %v4239
    %v5832 = vpack.c.b16 %v4248, %v4240
    %v5833 = vpack.c.b16 %v4249, %v4241
    %v5834 = vpack.c.b16 %v4250, %v4242
    %v5835 = vpack.c.b16 %v4251, %v4243
    %v5836 = vpack.c.b16 %v4252, %v4244
    %v5837 = vpack.c.b16 %v4261, %v4253
    %v5838 = vpack.c.b16 %v4262, %v4254
    %v5839 = vpack.c.b16 %v4263, %v4255
    %v5840 = vpack.c.b16 %v4264, %v4256
    %v5841 = vpack.c.b16 %v4265, %v4257
    %v5842 = vpack.c.b16 %v4266, %v4258
    %v5843 = vpack.c.b16 %v4267, %v4259
    %v5844 = vpack.c.b16 %v4268, %v4260
    %v5845 = vpack.c.b16 %v4277, %v4269
    %v5846 = vpack.c.b16 %v4278, %v4270
    %v5847 = vpack.c.b16 %v4279, %v4271
    %v5848 = vpack.c.b16 %v4280, %v4272
    %v5849 = vpack.c.b16 %v4281, %v4273
    %v5850 = vpack.c.b16 %v4282, %v4274
    %v5851 = vpack.c.b16 %v4283, %v4275
    %v5852 = vpack.c.b16 %v4284, %v4276
    %v5853 = vpack.c.b16 %v4293, %v4285
    %v5854 = vpack.c.b16 %v4294, %v4286
    %v5855 = vpack.c.b16 %v4295, %v4287
    %v5856 = vpack.c.b16 %v4296, %v4288
    %v5857 = vpack.c.b16 %v4297, %v4289
    %v5858 = vpack.c.b16 %v4298, %v4290
    %v5859 = vpack.c.b16 %v4299, %v4291
    %v5860 = vpack.c.b16 %v4300, %v4292
    %v5861 = vpack.c.b16 %v4309, %v4301
    %v5862 = vpack.c.b16 %v4310, %v4302
    %v5863 = vpack.c.b16 %v4311, %v4303
    %v5864 = vpack.c.b16 %v4312, %v4304
    %v5865 = vpack.c.b16 %v4313, %v4305
    %v5866 = vpack.c.b16 %v4314, %v4306
    %v5867 = vpack.c.b16 %v4315, %v4307
    %v5868 = vpack.c.b16 %v4316, %v4308
    %v5869 = vpack.c.b16 %v4325, %v4317
    %v5870 = vpack.c.b16 %v4326, %v4318
    %v5871 = vpack.c.b16 %v4327, %v4319
    %v5872 = vpack.c.b16 %v4328, %v4320
    %v5873 = vpack.c.b16 %v4329, %v4321
    %v5874 = vpack.c.b16 %v4330, %v4322
    %v5875 = vpack.c.b16 %v4331, %v4323
    %v5876 = vpack.c.b16 %v4332, %v4324
    %v5877 = vpack.c.b16 %v4341, %v4333
    %v5878 = vpack.c.b16 %v4342, %v4334
    %v5879 = vpack.c.b16 %v4343, %v4335
    %v5880 = vpack.c.b16 %v4344, %v4336
    %v5881 = vpack.c.b16 %v4345, %v4337
    %v5882 = vpack.c.b16 %v4346, %v4338
    %v5883 = vpack.c.b16 %v4347, %v4339
    %v5884 = vpack.c.b16 %v4348, %v4340
    %v5885 = vpack.c.b16 %v4357, %v4349
    %v5886 = vpack.c.b16 %v4358, %v4350
    %v5887 = vpack.c.b16 %v4359, %v4351
    %v5888 = vpack.c.b16 %v4360, %v4352
    %v5889 = vpack.c.b16 %v4361, %v4353
    %v5890 = vpack.c.b16 %v4362, %v4354
    %v5891 = vpack.c.b16 %v4363, %v4355
    %v5892 = vpack.c.b16 %v4364, %v4356
    %v5893 = vpack.c.b16 %v4373, %v4365
    %v5894 = vpack.c.b16 %v4374, %v4366
    %v5895 = vpack.c.b16 %v4375, %v4367
    %v5896 = vpack.c.b16 %v4376, %v4368
    %v5897 = vpack.c.b16 %v4377, %v4369
    %v5898 = vpack.c.b16 %v4378, %v4370
    %v5899 = vpack.c.b16 %v4379, %v4371
    %v5900 = vpack.c.b16 %v4380, %v4372
    %v5901 = vpack.c.b16 %v4389, %v4381
    %v5902 = vpack.c.b16 %v4390, %v4382
    %v5903 = vpack.c.b16 %v4391, %v4383
    %v5904 = vpack.c.b16 %v4392, %v4384
    %v5905 = vpack.c.b16 %v4393, %v4385
    %v5906 = vpack.c.b16 %v4394, %v4386
    %v5907 = vpack.c.b16 %v4395, %v4387
    %v5908 = vpack.c.b16 %v4396, %v4388
    %v5909 = vpack.c.b16 %v4405, %v4397
    %v5910 = vpack.c.b16 %v4406, %v4398
    %v5911 = vpack.c.b16 %v4407, %v4399
    %v5912 = vpack.c.b16 %v4408, %v4400
    %v5913 = vpack.c.b16 %v4409, %v4401
    %v5914 = vpack.c.b16 %v4410, %v4402
    %v5915 = vpack.c.b16 %v4411, %v4403
    %v5916 = vpack.c.b16 %v4412, %v4404
    %v5917 = vpack.c.b16 %v4421, %v4413
    %v5918 = vpack.c.b16 %v4422, %v4414
    %v5919 = vpack.c.b16 %v4423, %v4415
    %v5920 = vpack.c.b16 %v4424, %v4416
    %v5921 = vpack.c.b16 %v4425, %v4417
    %v5922 = vpack.c.b16 %v4426, %v4418
    %v5923 = vpack.c.b16 %v4427, %v4419
    %v5924 = vpack.c.b16 %v4428, %v4420
    %v5925 = vpack.c.b16 %v4437, %v4429
    %v5926 = vpack.c.b16 %v4438, %v4430
    %v5927 = vpack.c.b16 %v4439, %v4431
    %v5928 = vpack.c.b16 %v4440, %v4432
    %v5929 = vpack.c.b16 %v4441, %v4433
    %v5930 = vpack.c.b16 %v4442, %v4434
    %v5931 = vpack.c.b16 %v4443, %v4435
    %v5932 = vpack.c.b16 %v4444, %v4436
    %v5933 = vpack.c.b16 %v4453, %v4445
    %v5934 = vpack.c.b16 %v4454, %v4446
    %v5935 = vpack.c.b16 %v4455, %v4447
    %v5936 = vpack.c.b16 %v4456, %v4448
    %v5937 = vpack.c.b16 %v4457, %v4449
    %v5938 = vpack.c.b16 %v4458, %v4450
    %v5939 = vpack.c.b16 %v4459, %v4451
    %v5940 = vpack.c.b16 %v4460, %v4452
    %v5941 = vpack.c.b16 %v4469, %v4461
    %v5942 = vpack.c.b16 %v4470, %v4462
    %v5943 = vpack.c.b16 %v4471, %v4463
    %v5944 = vpack.c.b16 %v4472, %v4464
    %v5945 = vpack.c.b16 %v4473, %v4465
    %v5946 = vpack.c.b16 %v4474, %v4466
    %v5947 = vpack.c.b16 %v4475, %v4467
    %v5948 = vpack.c.b16 %v4476, %v4468
    %v5949 = vpack.c.b16 %v4485, %v4477
    %v5950 = vpack.c.b16 %v4486, %v4478
    %v5951 = vpack.c.b16 %v4487, %v4479
    %v5952 = vpack.c.b16 %v4488, %v4480
    %v5953 = vpack.c.b16 %v4489, %v4481
    %v5954 = vpack.c.b16 %v4490, %v4482
    %v5955 = vpack.c.b16 %v4491, %v4483
    %v5956 = vpack.c.b16 %v4492, %v4484
    %v5957 = vpack.c.b16 %v4501, %v4493
    %v5958 = vpack.c.b16 %v4502, %v4494
    %v5959 = vpack.c.b16 %v4503, %v4495
    %v5960 = vpack.c.b16 %v4504, %v4496
    %v5961 = vpack.c.b16 %v4505, %v4497
    %v5962 = vpack.c.b16 %v4506, %v4498
    %v5963 = vpack.c.b16 %v4507, %v4499
    %v5964 = vpack.c.b16 %v4508, %v4500
    %v5965 = vpack.c.b16 %v4517, %v4509
    %v5966 = vpack.c.b16 %v4518, %v4510
    %v5967 = vpack.c.b16 %v4519, %v4511
    %v5968 = vpack.c.b16 %v4520, %v4512
    %v5969 = vpack.c.b16 %v4521, %v4513
    %v5970 = vpack.c.b16 %v4522, %v4514
    %v5971 = vpack.c.b16 %v4523, %v4515
    %v5972 = vpack.c.b16 %v4524, %v4516
    %v5973 = vpack.c.b16 %v4533, %v4525
    %v5974 = vpack.c.b16 %v4534, %v4526
    %v5975 = vpack.c.b16 %v4535, %v4527
    %v5976 = vpack.c.b16 %v4536, %v4528
    %v5977 = vpack.c.b16 %v4537, %v4529
    %v5978 = vpack.c.b16 %v4538, %v4530
    %v5979 = vpack.c.b16 %v4539, %v4531
    %v5980 = vpack.c.b16 %v4540, %v4532
    %v5981 = vpack.c.b16 %v4549, %v4541
    %v5982 = vpack.c.b16 %v4550, %v4542
    %v5983 = vpack.c.b16 %v4551, %v4543
    %v5984 = vpack.c.b16 %v4552, %v4544
    %v5985 = vpack.c.b16 %v4553, %v4545
    %v5986 = vpack.c.b16 %v4554, %v4546
    %v5987 = vpack.c.b16 %v4555, %v4547
    %v5988 = vpack.c.b16 %v4556, %v4548
    %v5989 = vpack.c.b16 %v4565, %v4557
    %v5990 = vpack.c.b16 %v4566, %v4558
    %v5991 = vpack.c.b16 %v4567, %v4559
    %v5992 = vpack.c.b16 %v4568, %v4560
    %v5993 = vpack.c.b16 %v4569, %v4561
    %v5994 = vpack.c.b16 %v4570, %v4562
    %v5995 = vpack.c.b16 %v4571, %v4563
    %v5996 = vpack.c.b16 %v4572, %v4564
    %v5997 = vpack.c.b16 %v4581, %v4573
    %v5998 = vpack.c.b16 %v4582, %v4574
    %v5999 = vpack.c.b16 %v4583, %v4575
    %v6000 = vpack.c.b16 %v4584, %v4576
    %v6001 = vpack.c.b16 %v4585, %v4577
    %v6002 = vpack.c.b16 %v4586, %v4578
    %v6003 = vpack.c.b16 %v4587, %v4579
    %v6004 = vpack.c.b16 %v4588, %v4580
    %v6005 = vpack.c.b16 %v4597, %v4589
    %v6006 = vpack.c.b16 %v4598, %v4590
    %v6007 = vpack.c.b16 %v4599, %v4591
    %v6008 = vpack.c.b16 %v4600, %v4592
    %v6009 = vpack.c.b16 %v4601, %v4593
    %v6010 = vpack.c.b16 %v4602, %v4594
    %v6011 = vpack.c.b16 %v4603, %v4595
    %v6012 = vpack.c.b16 %v4604, %v4596
    %v6013 = vpack.c.b16 %v4613, %v4605
    %v6014 = vpack.c.b16 %v4614, %v4606
    %v6015 = vpack.c.b16 %v4615, %v4607
    %v6016 = vpack.c.b16 %v4616, %v4608
    %v6017 = vpack.c.b16 %v4617, %v4609
    %v6018 = vpack.c.b16 %v4618, %v4610
    %v6019 = vpack.c.b16 %v4619, %v4611
    %v6020 = vpack.c.b16 %v4620, %v4612
    %v6021 = vpack.c.b16 %v4629, %v4621
    %v6022 = vpack.c.b16 %v4630, %v4622
    %v6023 = vpack.c.b16 %v4631, %v4623
    %v6024 = vpack.c.b16 %v4632, %v4624
    %v6025 = vpack.c.b16 %v4633, %v4625
    %v6026 = vpack.c.b16 %v4634, %v4626
    %v6027 = vpack.c.b16 %v4635, %v4627
    %v6028 = vpack.c.b16 %v4636, %v4628
    %v6029 = vpack.c.b16 %v4645, %v4637
    %v6030 = vpack.c.b16 %v4646, %v4638
    %v6031 = vpack.c.b16 %v4647, %v4639
    %v6032 = vpack.c.b16 %v4648, %v4640
    %v6033 = vpack.c.b16 %v4649, %v4641
    %v6034 = vpack.c.b16 %v4650, %v4642
    %v6035 = vpack.c.b16 %v4651, %v4643
    %v6036 = vpack.c.b16 %v4652, %v4644
    %v6037 = vpack.c.b16 %v4661, %v4653
    %v6038 = vpack.c.b16 %v4662, %v4654
    %v6039 = vpack.c.b16 %v4663, %v4655
    %v6040 = vpack.c.b16 %v4664, %v4656
    %v6041 = vpack.c.b16 %v4665, %v4657
    %v6042 = vpack.c.b16 %v4666, %v4658
    %v6043 = vpack.c.b16 %v4667, %v4659
    %v6044 = vpack.c.b16 %v4668, %v4660
    %v6045 = vpack.c.b16 %v4677, %v4669
    %v6046 = vpack.c.b16 %v4678, %v4670
    %v6047 = vpack.c.b16 %v4679, %v4671
    %v6048 = vpack.c.b16 %v4680, %v4672
    %v6049 = vpack.c.b16 %v4681, %v4673
    %v6050 = vpack.c.b16 %v4682, %v4674
    %v6051 = vpack.c.b16 %v4683, %v4675
    %v6052 = vpack.c.b16 %v4684, %v4676
    %v6053 = vpack.c.b16 %v4693, %v4685
    %v6054 = vpack.c.b16 %v4694, %v4686
    %v6055 = vpack.c.b16 %v4695, %v4687
    %v6056 = vpack.c.b16 %v4696, %v4688
    %v6057 = vpack.c.b16 %v4697, %v4689
    %v6058 = vpack.c.b16 %v4698, %v4690
    %v6059 = vpack.c.b16 %v4699, %v4691
    %v6060 = vpack.c.b16 %v4700, %v4692
    %v6061 = vpack.c.b16 %v4709, %v4701
    %v6062 = vpack.c.b16 %v4710, %v4702
    %v6063 = vpack.c.b16 %v4711, %v4703
    %v6064 = vpack.c.b16 %v4712, %v4704
    %v6065 = vpack.c.b16 %v4713, %v4705
    %v6066 = vpack.c.b16 %v4714, %v4706
    %v6067 = vpack.c.b16 %v4715, %v4707
    %v6068 = vpack.c.b16 %v4716, %v4708
    %v6069 = vpack.c.b16 %v4725, %v4717
    %v6070 = vpack.c.b16 %v4726, %v4718
    %v6071 = vpack.c.b16 %v4727, %v4719
    %v6072 = vpack.c.b16 %v4728, %v4720
    %v6073 = vpack.c.b16 %v4729, %v4721
    %v6074 = vpack.c.b16 %v4730, %v4722
    %v6075 = vpack.c.b16 %v4731, %v4723
    %v6076 = vpack.c.b16 %v4732, %v4724
    %v6077 = vpack.c.b16 %v4741, %v4733
    %v6078 = vpack.c.b16 %v4742, %v4734
    %v6079 = vpack.c.b16 %v4743, %v4735
    %v6080 = vpack.c.b16 %v4744, %v4736
    %v6081 = vpack.c.b16 %v4745, %v4737
    %v6082 = vpack.c.b16 %v4746, %v4738
    %v6083 = vpack.c.b16 %v4747, %v4739
    %v6084 = vpack.c.b16 %v4748, %v4740
    %v6085 = vpack.c.b16 %v4757, %v4749
    %v6086 = vpack.c.b16 %v4758, %v4750
    %v6087 = vpack.c.b16 %v4759, %v4751
    %v6088 = vpack.c.b16 %v4760, %v4752
    %v6089 = vpack.c.b16 %v4761, %v4753
    %v6090 = vpack.c.b16 %v4762, %v4754
    %v6091 = vpack.c.b16 %v4763, %v4755
    %v6092 = vpack.c.b16 %v4764, %v4756
    %v6093 = vpack.c.b16 %v4773, %v4765
    %v6094 = vpack.c.b16 %v4774, %v4766
    %v6095 = vpack.c.b16 %v4775, %v4767
    %v6096 = vpack.c.b16 %v4776, %v4768
    %v6097 = vpack.c.b16 %v4777, %v4769
    %v6098 = vpack.c.b16 %v4778, %v4770
    %v6099 = vpack.c.b16 %v4779, %v4771
    %v6100 = vpack.c.b16 %v4780, %v4772
    %v6101 = vpack.c.b16 %v4789, %v4781
    %v6102 = vpack.c.b16 %v4790, %v4782
    %v6103 = vpack.c.b16 %v4791, %v4783
    %v6104 = vpack.c.b16 %v4792, %v4784
    %v6105 = vpack.c.b16 %v4793, %v4785
    %v6106 = vpack.c.b16 %v4794, %v4786
    %v6107 = vpack.c.b16 %v4795, %v4787
    %v6108 = vpack.c.b16 %v4796, %v4788
    %v6109 = vpack.c.b16 %v4805, %v4797
    %v6110 = vpack.c.b16 %v4806, %v4798
    %v6111 = vpack.c.b16 %v4807, %v4799
    %v6112 = vpack.c.b16 %v4808, %v4800
    %v6113 = vpack.c.b16 %v4809, %v4801
    %v6114 = vpack.c.b16 %v4810, %v4802
    %v6115 = vpack.c.b16 %v4811, %v4803
    %v6116 = vpack.c.b16 %v4812, %v4804
    %v6117 = vpack.c.b16 %v4821, %v4813
    %v6118 = vpack.c.b16 %v4822, %v4814
    %v6119 = vpack.c.b16 %v4823, %v4815
    %v6120 = vpack.c.b16 %v4824, %v4816
    %v6121 = vpack.c.b16 %v4825, %v4817
    %v6122 = vpack.c.b16 %v4826, %v4818
    %v6123 = vpack.c.b16 %v4827, %v4819
    %v6124 = vpack.c.b16 %v4828, %v4820
    %v6125 = vpack.c.b16 %v4837, %v4829
    %v6126 = vpack.c.b16 %v4838, %v4830
    %v6127 = vpack.c.b16 %v4839, %v4831
    %v6128 = vpack.c.b16 %v4840, %v4832
    %v6129 = vpack.c.b16 %v4841, %v4833
    %v6130 = vpack.c.b16 %v4842, %v4834
    %v6131 = vpack.c.b16 %v4843, %v4835
    %v6132 = vpack.c.b16 %v4844, %v4836
    %v6133 = vpack.c.b16 %v4853, %v4845
    %v6134 = vpack.c.b16 %v4854, %v4846
    %v6135 = vpack.c.b16 %v4855, %v4847
    %v6136 = vpack.c.b16 %v4856, %v4848
    %v6137 = vpack.c.b16 %v4857, %v4849
    %v6138 = vpack.c.b16 %v4858, %v4850
    %v6139 = vpack.c.b16 %v4859, %v4851
    %v6140 = vpack.c.b16 %v4860, %v4852
    %v6141 = vpack.c.b16 %v4869, %v4861
    %v6142 = vpack.c.b16 %v4870, %v4862
    %v6143 = vpack.c.b16 %v4871, %v4863
    %v6144 = vpack.c.b16 %v4872, %v4864
    %v6145 = vpack.c.b16 %v4873, %v4865
    %v6146 = vpack.c.b16 %v4874, %v4866
    %v6147 = vpack.c.b16 %v4875, %v4867
    %v6148 = vpack.c.b16 %v4876, %v4868
    %v6149 = vpack.c.b16 %v4885, %v4877
    %v6150 = vpack.c.b16 %v4886, %v4878
    %v6151 = vpack.c.b16 %v4887, %v4879
    %v6152 = vpack.c.b16 %v4888, %v4880
    %v6153 = vpack.c.b16 %v4889, %v4881
    %v6154 = vpack.c.b16 %v4890, %v4882
    %v6155 = vpack.c.b16 %v4891, %v4883
    %v6156 = vpack.c.b16 %v4892, %v4884
    %v6157 = vpack.c.b16 %v4901, %v4893
    %v6158 = vpack.c.b16 %v4902, %v4894
    %v6159 = vpack.c.b16 %v4903, %v4895
    %v6160 = vpack.c.b16 %v4904, %v4896
    %v6161 = vpack.c.b16 %v4905, %v4897
    %v6162 = vpack.c.b16 %v4906, %v4898
    %v6163 = vpack.c.b16 %v4907, %v4899
    %v6164 = vpack.c.b16 %v4908, %v4900
    %v6165 = vpack.c.b16 %v4917, %v4909
    %v6166 = vpack.c.b16 %v4918, %v4910
    %v6167 = vpack.c.b16 %v4919, %v4911
    %v6168 = vpack.c.b16 %v4920, %v4912
    %v6169 = vpack.c.b16 %v4921, %v4913
    %v6170 = vpack.c.b16 %v4922, %v4914
    %v6171 = vpack.c.b16 %v4923, %v4915
    %v6172 = vpack.c.b16 %v4924, %v4916
    %v6173 = vpack.c.b16 %v4933, %v4925
    %v6174 = vpack.c.b16 %v4934, %v4926
    %v6175 = vpack.c.b16 %v4935, %v4927
    %v6176 = vpack.c.b16 %v4936, %v4928
    %v6177 = vpack.c.b16 %v4937, %v4929
    %v6178 = vpack.c.b16 %v4938, %v4930
    %v6179 = vpack.c.b16 %v4939, %v4931
    %v6180 = vpack.c.b16 %v4940, %v4932
    %v6181 = vpack.c.b16 %v4949, %v4941
    %v6182 = vpack.c.b16 %v4950, %v4942
    %v6183 = vpack.c.b16 %v4951, %v4943
    %v6184 = vpack.c.b16 %v4952, %v4944
    %v6185 = vpack.c.b16 %v4953, %v4945
    %v6186 = vpack.c.b16 %v4954, %v4946
    %v6187 = vpack.c.b16 %v4955, %v4947
    %v6188 = vpack.c.b16 %v4956, %v4948
    %v6189 = vpack.c.b16 %v4965, %v4957
    %v6190 = vpack.c.b16 %v4966, %v4958
    %v6191 = vpack.c.b16 %v4967, %v4959
    %v6192 = vpack.c.b16 %v4968, %v4960
    %v6193 = vpack.c.b16 %v4969, %v4961
    %v6194 = vpack.c.b16 %v4970, %v4962
    %v6195 = vpack.c.b16 %v4971, %v4963
    %v6196 = vpack.c.b16 %v4972, %v4964
    %v6197 = vpack.c.b16 %v4981, %v4973
    %v6198 = vpack.c.b16 %v4982, %v4974
    %v6199 = vpack.c.b16 %v4983, %v4975
    %v6200 = vpack.c.b16 %v4984, %v4976
    %v6201 = vpack.c.b16 %v4985, %v4977
    %v6202 = vpack.c.b16 %v4986, %v4978
    %v6203 = vpack.c.b16 %v4987, %v4979
    %v6204 = vpack.c.b16 %v4988, %v4980
    %v6205 = vpack.c.b16 %v4997, %v4989
    %v6206 = vpack.c.b16 %v4998, %v4990
    %v6207 = vpack.c.b16 %v4999, %v4991
    %v6208 = vpack.c.b16 %v5000, %v4992
    %v6209 = vpack.c.b16 %v5001, %v4993
    %v6210 = vpack.c.b16 %v5002, %v4994
    %v6211 = vpack.c.b16 %v5003, %v4995
    %v6212 = vpack.c.b16 %v5004, %v4996
    %v6213 = vpack.c.b16 %v5013, %v5005
    %v6214 = vpack.c.b16 %v5014, %v5006
    %v6215 = vpack.c.b16 %v5015, %v5007
    %v6216 = vpack.c.b16 %v5016, %v5008
    %v6217 = vpack.c.b16 %v5017, %v5009
    %v6218 = vpack.c.b16 %v5018, %v5010
    %v6219 = vpack.c.b16 %v5019, %v5011
    %v6220 = vpack.c.b16 %v5020, %v5012
    %v6221 = vpack.c.b16 %v5029, %v5021
    %v6222 = vpack.c.b16 %v5030, %v5022
    %v6223 = vpack.c.b16 %v5031, %v5023
    %v6224 = vpack.c.b16 %v5032, %v5024
    %v6225 = vpack.c.b16 %v5033, %v5025
    %v6226 = vpack.c.b16 %v5034, %v5026
    %v6227 = vpack.c.b16 %v5035, %v5027
    %v6228 = vpack.c.b16 %v5036, %v5028
    %v6229 = vpack.c.b16 %v5045, %v5037
    %v6230 = vpack.c.b16 %v5046, %v5038
    %v6231 = vpack.c.b16 %v5047, %v5039
    %v6232 = vpack.c.b16 %v5048, %v5040
    %v6233 = vpack.c.b16 %v5049, %v5041
    %v6234 = vpack.c.b16 %v5050, %v5042
    %v6235 = vpack.c.b16 %v5051, %v5043
    %v6236 = vpack.c.b16 %v5052, %v5044
    %v6237 = vpack.c.b16 %v5061, %v5053
    %v6238 = vpack.c.b16 %v5062, %v5054
    %v6239 = vpack.c.b16 %v5063, %v5055
    %v6240 = vpack.c.b16 %v5064, %v5056
    %v6241 = vpack.c.b16 %v5065, %v5057
    %v6242 = vpack.c.b16 %v5066, %v5058
    %v6243 = vpack.c.b16 %v5067, %v5059
    %v6244 = vpack.c.b16 %v5068, %v5060
    %v6245 = vpack.c.b16 %v5077, %v5069
    %v6246 = vpack.c.b16 %v5078, %v5070
    %v6247 = vpack.c.b16 %v5079, %v5071
    %v6248 = vpack.c.b16 %v5080, %v5072
    %v6249 = vpack.c.b16 %v5081, %v5073
    %v6250 = vpack.c.b16 %v5082, %v5074
    %v6251 = vpack.c.b16 %v5083, %v5075
    %v6252 = vpack.c.b16 %v5084, %v5076
    %v6253 = vpack.c.b16 %v5093, %v5085
    %v6254 = vpack.c.b16 %v5094, %v5086
    %v6255 = vpack.c.b16 %v5095, %v5087
    %v6256 = vpack.c.b16 %v5096, %v5088
    %v6257 = vpack.c.b16 %v5097, %v5089
    %v6258 = vpack.c.b16 %v5098, %v5090
    %v6259 = vpack.c.b16 %v5099, %v5091
    %v6260 = vpack.c.b16 %v5100, %v5092
    %v6261 = vpack.c.b16 %v5109, %v5101
    %v6262 = vpack.c.b16 %v5110, %v5102
    %v6263 = vpack.c.b16 %v5111, %v5103
    %v6264 = vpack.c.b16 %v5112, %v5104
    %v6265 = vpack.c.b16 %v5113, %v5105
    %v6266 = vpack.c.b16 %v5114, %v5106
    %v6267 = vpack.c.b16 %v5115, %v5107
    %v6268 = vpack.c.b16 %v5116, %v5108
    %v6269 = vpack.c.b16 %v5125, %v5117
    %v6270 = vpack.c.b16 %v5126, %v5118
    %v6271 = vpack.c.b16 %v5127, %v5119
    %v6272 = vpack.c.b16 %v5128, %v5120
    %v6273 = vpack.c.b16 %v5129, %v5121
    %v6274 = vpack.c.b16 %v5130, %v5122
    %v6275 = vpack.c.b16 %v5131, %v5123
    %v6276 = vpack.c.b16 %v5132, %v5124
    %v6277 = vpack.c.b16 %v5141, %v5133
    %v6278 = vpack.c.b16 %v5142, %v5134
    %v6279 = vpack.c.b16 %v5143, %v5135
    %v6280 = vpack.c.b16 %v5144, %v5136
    %v6281 = vpack.c.b16 %v5145, %v5137
    %v6282 = vpack.c.b16 %v5146, %v5138
    %v6283 = vpack.c.b16 %v5147, %v5139
    %v6284 = vpack.c.b16 %v5148, %v5140
    %v6285 = vpack.c.b16 %v5157, %v5149
    %v6286 = vpack.c.b16 %v5158, %v5150
    %v6287 = vpack.c.b16 %v5159, %v5151
    %v6288 = vpack.c.b16 %v5160, %v5152
    %v6289 = vpack.c.b16 %v5161, %v5153
    %v6290 = vpack.c.b16 %v5162, %v5154
    %v6291 = vpack.c.b16 %v5163, %v5155
    %v6292 = vpack.c.b16 %v5164, %v5156
    %v6293 = vpack.c.b16 %v5173, %v5165
    %v6294 = vpack.c.b16 %v5174, %v5166
    %v6295 = vpack.c.b16 %v5175, %v5167
    %v6296 = vpack.c.b16 %v5176, %v5168
    %v6297 = vpack.c.b16 %v5177, %v5169
    %v6298 = vpack.c.b16 %v5178, %v5170
    %v6299 = vpack.c.b16 %v5179, %v5171
    %v6300 = vpack.c.b16 %v5180, %v5172
    %v6301 = vpack.c.b16 %v5189, %v5181
    %v6302 = vpack.c.b16 %v5190, %v5182
    %v6303 = vpack.c.b16 %v5191, %v5183
    %v6304 = vpack.c.b16 %v5192, %v5184
    %v6305 = vpack.c.b16 %v5193, %v5185
    %v6306 = vpack.c.b16 %v5194, %v5186
    %v6307 = vpack.c.b16 %v5195, %v5187
    %v6308 = vpack.c.b16 %v5196, %v5188
    %v6309 = vpack.c.b16 %v5205, %v5197
    %v6310 = vpack.c.b16 %v5206, %v5198
    %v6311 = vpack.c.b16 %v5207, %v5199
    %v6312 = vpack.c.b16 %v5208, %v5200
    %v6313 = vpack.c.b16 %v5209, %v5201
    %v6314 = vpack.c.b16 %v5210, %v5202
    %v6315 = vpack.c.b16 %v5211, %v5203
    %v6316 = vpack.c.b16 %v5212, %v5204
    %v6317 = vpack.c.b16 %v5221, %v5213
    %v6318 = vpack.c.b16 %v5222, %v5214
    %v6319 = vpack.c.b16 %v5223, %v5215
    %v6320 = vpack.c.b16 %v5224, %v5216
    %v6321 = vpack.c.b16 %v5225, %v5217
    %v6322 = vpack.c.b16 %v5226, %v5218
    %v6323 = vpack.c.b16 %v5227, %v5219
    %v6324 = vpack.c.b16 %v5228, %v5220
    %v6325 = vpack.c.b16 %v5237, %v5229
    %v6326 = vpack.c.b16 %v5238, %v5230
    %v6327 = vpack.c.b16 %v5239, %v5231
    %v6328 = vpack.c.b16 %v5240, %v5232
    %v6329 = vpack.c.b16 %v5241, %v5233
    %v6330 = vpack.c.b16 %v5242, %v5234
    %v6331 = vpack.c.b16 %v5243, %v5235
    %v6332 = vpack.c.b16 %v5244, %v5236
    %v6333 = vpack.c.b16 %v5253, %v5245
    %v6334 = vpack.c.b16 %v5254, %v5246
    %v6335 = vpack.c.b16 %v5255, %v5247
    %v6336 = vpack.c.b16 %v5256, %v5248
    %v6337 = vpack.c.b16 %v5257, %v5249
    %v6338 = vpack.c.b16 %v5258, %v5250
    %v6339 = vpack.c.b16 %v5259, %v5251
    %v6340 = vpack.c.b16 %v5260, %v5252
    %v6341 = vpack.c.b16 %v5269, %v5261
    %v6342 = vpack.c.b16 %v5270, %v5262
    %v6343 = vpack.c.b16 %v5271, %v5263
    %v6344 = vpack.c.b16 %v5272, %v5264
    %v6345 = vpack.c.b16 %v5273, %v5265
    %v6346 = vpack.c.b16 %v5274, %v5266
    %v6347 = vpack.c.b16 %v5275, %v5267
    %v6348 = vpack.c.b16 %v5276, %v5268
    %v6349 = vpack.c.b16 %v5285, %v5277
    %v6350 = vpack.c.b16 %v5286, %v5278
    %v6351 = vpack.c.b16 %v5287, %v5279
    %v6352 = vpack.c.b16 %v5288, %v5280
    %v6353 = vpack.c.b16 %v5289, %v5281
    %v6354 = vpack.c.b16 %v5290, %v5282
    %v6355 = vpack.c.b16 %v5291, %v5283
    %v6356 = vpack.c.b16 %v5292, %v5284
    %v6357 = vpack.c.b16 %v5301, %v5293
    %v6358 = vpack.c.b16 %v5302, %v5294
    %v6359 = vpack.c.b16 %v5303, %v5295
    %v6360 = vpack.c.b16 %v5304, %v5296
    %v6361 = vpack.c.b16 %v5305, %v5297
    %v6362 = vpack.c.b16 %v5306, %v5298
    %v6363 = vpack.c.b16 %v5307, %v5299
    %v6364 = vpack.c.b16 %v5308, %v5300
    %v6365 = vpack.c.b16 %v5317, %v5309
    %v6366 = vpack.c.b16 %v5318, %v5310
    %v6367 = vpack.c.b16 %v5319, %v5311
    %v6368 = vpack.c.b16 %v5320, %v5312
    %v6369 = vpack.c.b16 %v5321, %v5313
    %v6370 = vpack.c.b16 %v5322, %v5314
    %v6371 = vpack.c.b16 %v5323, %v5315
    %v6372 = vpack.c.b16 %v5324, %v5316
    %v6373 = vpack.c.b16 %v5333, %v5325
    %v6374 = vpack.c.b16 %v5334, %v5326
    %v6375 = vpack.c.b16 %v5335, %v5327
    %v6376 = vpack.c.b16 %v5336, %v5328
    %v6377 = vpack.c.b16 %v5337, %v5329
    %v6378 = vpack.c.b16 %v5338, %v5330
    %v6379 = vpack.c.b16 %v5339, %v5331
    %v6380 = vpack.c.b16 %v5340, %v5332
    %v6381 = vpack.c.b16 %v5349, %v5341
    %v6382 = vpack.c.b16 %v5350, %v5342
    %v6383 = vpack.c.b16 %v5351, %v5343
    %v6384 = vpack.c.b16 %v5352, %v5344
    %v6385 = vpack.c.b16 %v5353, %v5345
    %v6386 = vpack.c.b16 %v5354, %v5346
    %v6387 = vpack.c.b16 %v5355, %v5347
    %v6388 = vpack.c.b16 %v5356, %v5348
    %v6389 = vpack.c.b16 %v5365, %v5357
    %v6390 = vpack.c.b16 %v5366, %v5358
    %v6391 = vpack.c.b16 %v5367, %v5359
    %v6392 = vpack.c.b16 %v5368, %v5360
    %v6393 = vpack.c.b16 %v5369, %v5361
    %v6394 = vpack.c.b16 %v5370, %v5362
    %v6395 = vpack.c.b16 %v5371, %v5363
    %v6396 = vpack.c.b16 %v5372, %v5364
    %7421 = vmatprep.subr.bf16.mxu0 %v5430
    %7422 = vmatpush1.bf16.msra.mxu0 %v5429
    %7423 = vmatprep.subr.bf16.mxu0 %v5422
    %7424 = vmatpush1.bf16.msra.mxu0 %v5421
    %7425 = vmatprep.subr.bf16.mxu0 %v5414
    %7426 = vmatpush1.bf16.msra.mxu0 %v5413
    %7427 = vmatprep.subr.bf16.mxu0 %v5406
    %7428 = vmatpush1.bf16.msra.mxu0 %v5405
    %7429 = vmatprep.subr.bf16.mxu0 %v5398
    %7430 = vmatpush1.bf16.msra.mxu0 %v5397
    %7431 = vmatprep.subr.bf16.mxu0 %v5390
    %7432 = vmatpush1.bf16.msra.mxu0 %v5389
    %7433 = vmatprep.subr.bf16.mxu0 %v5382
    %7434 = vmatpush1.bf16.msra.mxu0 %v5381
    %7435 = vmatprep.subr.bf16.mxu0 %v5374
    %7436 = vmatpush1.bf16.msra.mxu0 %v5373
    %7437 = vmatprep.subr.bf16.mxu0 %v5494
    %7438 = vmatpush2.bf16.msra.mxu0 %v5493
    %7439 = vmatprep.subr.bf16.mxu0 %v5486
    %7440 = vmatpush2.bf16.msra.mxu0 %v5485
    %7441 = vmatprep.subr.bf16.mxu0 %v5478
    %7442 = vmatpush2.bf16.msra.mxu0 %v5477
    %7443 = vmatprep.subr.bf16.mxu0 %v5470
    %7444 = vmatpush2.bf16.msra.mxu0 %v5469
    %7445 = vmatprep.subr.bf16.mxu0 %v5462
    %7446 = vmatpush2.bf16.msra.mxu0 %v5461
    %7447 = vmatprep.subr.bf16.mxu0 %v5454
    %7448 = vmatpush2.bf16.msra.mxu0 %v5453
    %7449 = vmatprep.subr.bf16.mxu0 %v5446
    %7450 = vmatpush2.bf16.msra.mxu0 %v5445
    %7451 = vmatprep.subr.bf16.mxu0 %v5438
    %7452 = vmatpush2.bf16.msra.mxu0 %v5437
    %7453 = vmatprep.mubr.bf16.mxu0 %v1220
    %7454 = vmatmul.mubr.bf16.gmra.mxu0 %v1219
    %v7455 = vpop.f32.mrf.mxu0
    %v7456 = vadd.f32 %v2264, %v7455
    %v7457 = vpop.f32.mrf.mxu0
    %v7458 = vadd.f32 %v2268, %v7457
    %v7459 = vpop.f32.mrf.mxu0
    %v7460 = vpop.f32.mrf.mxu0
    %7461 = vdwg.mxu0
    %7462 = vmatprep.subr.bf16.mxu0 %v5558
    %7463 = vmatpush1.bf16.msra.mxu0 %v5557
    %7464 = vmatprep.subr.bf16.mxu0 %v5550
    %7465 = vmatpush1.bf16.msra.mxu0 %v5549
    %7466 = vmatprep.subr.bf16.mxu0 %v5542
    %7467 = vmatpush1.bf16.msra.mxu0 %v5541
    %7468 = vmatprep.subr.bf16.mxu0 %v5534
    %7469 = vmatpush1.bf16.msra.mxu0 %v5533
    %7470 = vmatprep.subr.bf16.mxu0 %v5526
    %7471 = vmatpush1.bf16.msra.mxu0 %v5525
    %7472 = vmatprep.subr.bf16.mxu0 %v5518
    %7473 = vmatpush1.bf16.msra.mxu0 %v5517
    %7474 = vmatprep.subr.bf16.mxu0 %v5510
    %7475 = vmatpush1.bf16.msra.mxu0 %v5509
    %7476 = vmatprep.subr.bf16.mxu0 %v5502
    %7477 = vmatpush1.bf16.msra.mxu0 %v5501
    %7478 = vmatprep.subr.bf16.mxu0 %v5622
    %7479 = vmatpush2.bf16.msra.mxu0 %v5621
    %7480 = vmatprep.subr.bf16.mxu0 %v5614
    %7481 = vmatpush2.bf16.msra.mxu0 %v5613
    %7482 = vmatprep.subr.bf16.mxu0 %v5606
    %7483 = vmatpush2.bf16.msra.mxu0 %v5605
    %7484 = vmatprep.subr.bf16.mxu0 %v5598
    %7485 = vmatpush2.bf16.msra.mxu0 %v5597
    %7486 = vmatprep.subr.bf16.mxu0 %v5590
    %7487 = vmatpush2.bf16.msra.mxu0 %v5589
    %7488 = vmatprep.subr.bf16.mxu0 %v5582
    %7489 = vmatpush2.bf16.msra.mxu0 %v5581
    %7490 = vmatprep.subr.bf16.mxu0 %v5574
    %7491 = vmatpush2.bf16.msra.mxu0 %v5573
    %7492 = vmatprep.subr.bf16.mxu0 %v5566
    %7493 = vmatpush2.bf16.msra.mxu0 %v5565
    %7494 = vmatprep.mubr.bf16.mxu0 %v1222
    %7495 = vmatmul.mubr.bf16.gmra.mxu0 %v1221
    %v7496 = vpop.f32.mrf.mxu0
    %v7497 = vadd.f32 %v7456, %v7496
    %v7498 = vpop.f32.mrf.mxu0
    %v7499 = vadd.f32 %v7458, %v7498
    %v7500 = vpop.f32.mrf.mxu0
    %v7501 = vpop.f32.mrf.mxu0
    %7502 = vdwg.mxu0
    %7503 = vmatprep.subr.bf16.mxu0 %v5686
    %7504 = vmatpush1.bf16.msra.mxu0 %v5685
    %7505 = vmatprep.subr.bf16.mxu0 %v5678
    %7506 = vmatpush1.bf16.msra.mxu0 %v5677
    %7507 = vmatprep.subr.bf16.mxu0 %v5670
    %7508 = vmatpush1.bf16.msra.mxu0 %v5669
    %7509 = vmatprep.subr.bf16.mxu0 %v5662
    %7510 = vmatpush1.bf16.msra.mxu0 %v5661
    %7511 = vmatprep.subr.bf16.mxu0 %v5654
    %7512 = vmatpush1.bf16.msra.mxu0 %v5653
    %7513 = vmatprep.subr.bf16.mxu0 %v5646
    %7514 = vmatpush1.bf16.msra.mxu0 %v5645
    %7515 = vmatprep.subr.bf16.mxu0 %v5638
    %7516 = vmatpush1.bf16.msra.mxu0 %v5637
    %7517 = vmatprep.subr.bf16.mxu0 %v5630
    %7518 = vmatpush1.bf16.msra.mxu0 %v5629
    %7519 = vmatprep.subr.bf16.mxu0 %v5750
    %7520 = vmatpush2.bf16.msra.mxu0 %v5749
    %7521 = vmatprep.subr.bf16.mxu0 %v5742
    %7522 = vmatpush2.bf16.msra.mxu0 %v5741
    %7523 = vmatprep.subr.bf16.mxu0 %v5734
    %7524 = vmatpush2.bf16.msra.mxu0 %v5733
    %7525 = vmatprep.subr.bf16.mxu0 %v5726
    %7526 = vmatpush2.bf16.msra.mxu0 %v5725
    %7527 = vmatprep.subr.bf16.mxu0 %v5718
    %7528 = vmatpush2.bf16.msra.mxu0 %v5717
    %7529 = vmatprep.subr.bf16.mxu0 %v5710
    %7530 = vmatpush2.bf16.msra.mxu0 %v5709
    %7531 = vmatprep.subr.bf16.mxu0 %v5702
    %7532 = vmatpush2.bf16.msra.mxu0 %v5701
    %7533 = vmatprep.subr.bf16.mxu0 %v5694
    %7534 = vmatpush2.bf16.msra.mxu0 %v5693
    %7535 = vmatprep.mubr.bf16.mxu0 %v1224
    %7536 = vmatmul.mubr.bf16.gmra.mxu0 %v1223
    %v7537 = vpop.f32.mrf.mxu0
    %v7538 = vadd.f32 %v7497, %v7537
    %v7539 = vpop.f32.mrf.mxu0
    %v7540 = vadd.f32 %v7499, %v7539
    %v7541 = vpop.f32.mrf.mxu0
    %v7542 = vpop.f32.mrf.mxu0
    %7543 = vdwg.mxu0
    %7544 = vmatprep.subr.bf16.mxu0 %v5814
    %7545 = vmatpush1.bf16.msra.mxu0 %v5813
    %7546 = vmatprep.subr.bf16.mxu0 %v5806
    %7547 = vmatpush1.bf16.msra.mxu0 %v5805
    %7548 = vmatprep.subr.bf16.mxu0 %v5798
    %7549 = vmatpush1.bf16.msra.mxu0 %v5797
    %7550 = vmatprep.subr.bf16.mxu0 %v5790
    %7551 = vmatpush1.bf16.msra.mxu0 %v5789
    %7552 = vmatprep.subr.bf16.mxu0 %v5782
    %7553 = vmatpush1.bf16.msra.mxu0 %v5781
    %7554 = vmatprep.subr.bf16.mxu0 %v5774
    %7555 = vmatpush1.bf16.msra.mxu0 %v5773
    %7556 = vmatprep.subr.bf16.mxu0 %v5766
    %7557 = vmatpush1.bf16.msra.mxu0 %v5765
    %7558 = vmatprep.subr.bf16.mxu0 %v5758
    %7559 = vmatpush1.bf16.msra.mxu0 %v5757
    %7560 = vmatprep.subr.bf16.mxu0 %v5878
    %7561 = vmatpush2.bf16.msra.mxu0 %v5877
    %7562 = vmatprep.subr.bf16.mxu0 %v5870
    %7563 = vmatpush2.bf16.msra.mxu0 %v5869
    %7564 = vmatprep.subr.bf16.mxu0 %v5862
    %7565 = vmatpush2.bf16.msra.mxu0 %v5861
    %7566 = vmatprep.subr.bf16.mxu0 %v5854
    %7567 = vmatpush2.bf16.msra.mxu0 %v5853
    %7568 = vmatprep.subr.bf16.mxu0 %v5846
    %7569 = vmatpush2.bf16.msra.mxu0 %v5845
    %7570 = vmatprep.subr.bf16.mxu0 %v5838
    %7571 = vmatpush2.bf16.msra.mxu0 %v5837
    %7572 = vmatprep.subr.bf16.mxu0 %v5830
    %7573 = vmatpush2.bf16.msra.mxu0 %v5829
    %7574 = vmatprep.subr.bf16.mxu0 %v5822
    %7575 = vmatpush2.bf16.msra.mxu0 %v5821
    %7576 = vmatprep.mubr.bf16.mxu0 %v1226
    %7577 = vmatmul.mubr.bf16.gmra.mxu0 %v1225
    %v7578 = vpop.f32.mrf.mxu0
    %v7579 = vadd.f32 %v7538, %v7578
    %v7580 = vpop.f32.mrf.mxu0
    %v7581 = vadd.f32 %v7540, %v7580
    %v7582 = vpop.f32.mrf.mxu0
    %v7583 = vpop.f32.mrf.mxu0
    %7584 = vdwg.mxu0
    %7585 = vmatprep.subr.bf16.mxu0 %v5942
    %7586 = vmatpush1.bf16.msra.mxu0 %v5941
    %7587 = vmatprep.subr.bf16.mxu0 %v5934
    %7588 = vmatpush1.bf16.msra.mxu0 %v5933
    %7589 = vmatprep.subr.bf16.mxu0 %v5926
    %7590 = vmatpush1.bf16.msra.mxu0 %v5925
    %7591 = vmatprep.subr.bf16.mxu0 %v5918
    %7592 = vmatpush1.bf16.msra.mxu0 %v5917
    %7593 = vmatprep.subr.bf16.mxu0 %v5910
    %7594 = vmatpush1.bf16.msra.mxu0 %v5909
    %7595 = vmatprep.subr.bf16.mxu0 %v5902
    %7596 = vmatpush1.bf16.msra.mxu0 %v5901
    %7597 = vmatprep.subr.bf16.mxu0 %v5894
    %7598 = vmatpush1.bf16.msra.mxu0 %v5893
    %7599 = vmatprep.subr.bf16.mxu0 %v5886
    %7600 = vmatpush1.bf16.msra.mxu0 %v5885
    %7601 = vmatprep.subr.bf16.mxu0 %v6006
    %7602 = vmatpush2.bf16.msra.mxu0 %v6005
    %7603 = vmatprep.subr.bf16.mxu0 %v5998
    %7604 = vmatpush2.bf16.msra.mxu0 %v5997
    %7605 = vmatprep.subr.bf16.mxu0 %v5990
    %7606 = vmatpush2.bf16.msra.mxu0 %v5989
    %7607 = vmatprep.subr.bf16.mxu0 %v5982
    %7608 = vmatpush2.bf16.msra.mxu0 %v5981
    %7609 = vmatprep.subr.bf16.mxu0 %v5974
    %7610 = vmatpush2.bf16.msra.mxu0 %v5973
    %7611 = vmatprep.subr.bf16.mxu0 %v5966
    %7612 = vmatpush2.bf16.msra.mxu0 %v5965
    %7613 = vmatprep.subr.bf16.mxu0 %v5958
    %7614 = vmatpush2.bf16.msra.mxu0 %v5957
    %7615 = vmatprep.subr.bf16.mxu0 %v5950
    %7616 = vmatpush2.bf16.msra.mxu0 %v5949
    %7617 = vmatprep.mubr.bf16.mxu0 %v1228
    %7618 = vmatmul.mubr.bf16.gmra.mxu0 %v1227
    %v7619 = vpop.f32.mrf.mxu0
    %v7620 = vadd.f32 %v7579, %v7619
    %v7621 = vpop.f32.mrf.mxu0
    %v7622 = vadd.f32 %v7581, %v7621
    %v7623 = vpop.f32.mrf.mxu0
    %v7624 = vpop.f32.mrf.mxu0
    %7625 = vdwg.mxu0
    %7626 = vmatprep.subr.bf16.mxu0 %v6070
    %7627 = vmatpush1.bf16.msra.mxu0 %v6069
    %7628 = vmatprep.subr.bf16.mxu0 %v6062
    %7629 = vmatpush1.bf16.msra.mxu0 %v6061
    %7630 = vmatprep.subr.bf16.mxu0 %v6054
    %7631 = vmatpush1.bf16.msra.mxu0 %v6053
    %7632 = vmatprep.subr.bf16.mxu0 %v6046
    %7633 = vmatpush1.bf16.msra.mxu0 %v6045
    %7634 = vmatprep.subr.bf16.mxu0 %v6038
    %7635 = vmatpush1.bf16.msra.mxu0 %v6037
    %7636 = vmatprep.subr.bf16.mxu0 %v6030
    %7637 = vmatpush1.bf16.msra.mxu0 %v6029
    %7638 = vmatprep.subr.bf16.mxu0 %v6022
    %7639 = vmatpush1.bf16.msra.mxu0 %v6021
    %7640 = vmatprep.subr.bf16.mxu0 %v6014
    %7641 = vmatpush1.bf16.msra.mxu0 %v6013
    %7642 = vmatprep.subr.bf16.mxu0 %v6134
    %7643 = vmatpush2.bf16.msra.mxu0 %v6133
    %7644 = vmatprep.subr.bf16.mxu0 %v6126
    %7645 = vmatpush2.bf16.msra.mxu0 %v6125
    %7646 = vmatprep.subr.bf16.mxu0 %v6118
    %7647 = vmatpush2.bf16.msra.mxu0 %v6117
    %7648 = vmatprep.subr.bf16.mxu0 %v6110
    %7649 = vmatpush2.bf16.msra.mxu0 %v6109
    %7650 = vmatprep.subr.bf16.mxu0 %v6102
    %7651 = vmatpush2.bf16.msra.mxu0 %v6101
    %7652 = vmatprep.subr.bf16.mxu0 %v6094
    %7653 = vmatpush2.bf16.msra.mxu0 %v6093
    %7654 = vmatprep.subr.bf16.mxu0 %v6086
    %7655 = vmatpush2.bf16.msra.mxu0 %v6085
    %7656 = vmatprep.subr.bf16.mxu0 %v6078
    %7657 = vmatpush2.bf16.msra.mxu0 %v6077
    %7658 = vmatprep.mubr.bf16.mxu0 %v1230
    %7659 = vmatmul.mubr.bf16.gmra.mxu0 %v1229
    %v7660 = vpop.f32.mrf.mxu0
    %v7661 = vadd.f32 %v7620, %v7660
    %v7662 = vpop.f32.mrf.mxu0
    %v7663 = vadd.f32 %v7622, %v7662
    %v7664 = vpop.f32.mrf.mxu0
    %v7665 = vpop.f32.mrf.mxu0
    %7666 = vdwg.mxu0
    %7667 = vmatprep.subr.bf16.mxu0 %v6198
    %7668 = vmatpush1.bf16.msra.mxu0 %v6197
    %7669 = vmatprep.subr.bf16.mxu0 %v6190
    %7670 = vmatpush1.bf16.msra.mxu0 %v6189
    %7671 = vmatprep.subr.bf16.mxu0 %v6182
    %7672 = vmatpush1.bf16.msra.mxu0 %v6181
    %7673 = vmatprep.subr.bf16.mxu0 %v6174
    %7674 = vmatpush1.bf16.msra.mxu0 %v6173
    %7675 = vmatprep.subr.bf16.mxu0 %v6166
    %7676 = vmatpush1.bf16.msra.mxu0 %v6165
    %7677 = vmatprep.subr.bf16.mxu0 %v6158
    %7678 = vmatpush1.bf16.msra.mxu0 %v6157
    %7679 = vmatprep.subr.bf16.mxu0 %v6150
    %7680 = vmatpush1.bf16.msra.mxu0 %v6149
    %7681 = vmatprep.subr.bf16.mxu0 %v6142
    %7682 = vmatpush1.bf16.msra.mxu0 %v6141
    %7683 = vmatprep.subr.bf16.mxu0 %v6262
    %7684 = vmatpush2.bf16.msra.mxu0 %v6261
    %7685 = vmatprep.subr.bf16.mxu0 %v6254
    %7686 = vmatpush2.bf16.msra.mxu0 %v6253
    %7687 = vmatprep.subr.bf16.mxu0 %v6246
    %7688 = vmatpush2.bf16.msra.mxu0 %v6245
    %7689 = vmatprep.subr.bf16.mxu0 %v6238
    %7690 = vmatpush2.bf16.msra.mxu0 %v6237
    %7691 = vmatprep.subr.bf16.mxu0 %v6230
    %7692 = vmatpush2.bf16.msra.mxu0 %v6229
    %7693 = vmatprep.subr.bf16.mxu0 %v6222
    %7694 = vmatpush2.bf16.msra.mxu0 %v6221
    %7695 = vmatprep.subr.bf16.mxu0 %v6214
    %7696 = vmatpush2.bf16.msra.mxu0 %v6213
    %7697 = vmatprep.subr.bf16.mxu0 %v6206
    %7698 = vmatpush2.bf16.msra.mxu0 %v6205
    %7699 = vmatprep.mubr.bf16.mxu0 %v1232
    %7700 = vmatmul.mubr.bf16.gmra.mxu0 %v1231
    %v7701 = vpop.f32.mrf.mxu0
    %v7702 = vadd.f32 %v7661, %v7701
    %v7703 = vpop.f32.mrf.mxu0
    %v7704 = vadd.f32 %v7663, %v7703
    %v7705 = vpop.f32.mrf.mxu0
    %v7706 = vpop.f32.mrf.mxu0
    %7707 = vdwg.mxu0
    %7708 = vmatprep.subr.bf16.mxu0 %v6326
    %7709 = vmatpush1.bf16.msra.mxu0 %v6325
    %7710 = vmatprep.subr.bf16.mxu0 %v6318
    %7711 = vmatpush1.bf16.msra.mxu0 %v6317
    %7712 = vmatprep.subr.bf16.mxu0 %v6310
    %7713 = vmatpush1.bf16.msra.mxu0 %v6309
    %7714 = vmatprep.subr.bf16.mxu0 %v6302
    %7715 = vmatpush1.bf16.msra.mxu0 %v6301
    %7716 = vmatprep.subr.bf16.mxu0 %v6294
    %7717 = vmatpush1.bf16.msra.mxu0 %v6293
    %7718 = vmatprep.subr.bf16.mxu0 %v6286
    %7719 = vmatpush1.bf16.msra.mxu0 %v6285
    %7720 = vmatprep.subr.bf16.mxu0 %v6278
    %7721 = vmatpush1.bf16.msra.mxu0 %v6277
    %7722 = vmatprep.subr.bf16.mxu0 %v6270
    %7723 = vmatpush1.bf16.msra.mxu0 %v6269
    %7724 = vmatprep.subr.bf16.mxu0 %v6390
    %7725 = vmatpush2.bf16.msra.mxu0 %v6389
    %7726 = vmatprep.subr.bf16.mxu0 %v6382
    %7727 = vmatpush2.bf16.msra.mxu0 %v6381
    %7728 = vmatprep.subr.bf16.mxu0 %v6374
    %7729 = vmatpush2.bf16.msra.mxu0 %v6373
    %7730 = vmatprep.subr.bf16.mxu0 %v6366
    %7731 = vmatpush2.bf16.msra.mxu0 %v6365
    %7732 = vmatprep.subr.bf16.mxu0 %v6358
    %7733 = vmatpush2.bf16.msra.mxu0 %v6357
    %7734 = vmatprep.subr.bf16.mxu0 %v6350
    %7735 = vmatpush2.bf16.msra.mxu0 %v6349
    %7736 = vmatprep.subr.bf16.mxu0 %v6342
    %7737 = vmatpush2.bf16.msra.mxu0 %v6341
    %7738 = vmatprep.subr.bf16.mxu0 %v6334
    %7739 = vmatpush2.bf16.msra.mxu0 %v6333
    %7740 = vmatprep.mubr.bf16.mxu0 %v1234
    %7741 = vmatmul.mubr.bf16.gmra.mxu0 %v1233
    %v7742 = vpop.f32.mrf.mxu0
    %v7743 = vadd.f32 %v7702, %v7742
    %v7744 = vpop.f32.mrf.mxu0
    %v7745 = vadd.f32 %v7704, %v7744
    %v7746 = vpop.f32.mrf.mxu0
    %v7747 = vpop.f32.mrf.mxu0
    %7748 = vdwg.mxu0
    %7749 = vmatprep.subr.bf16.mxu0 %v5432
    %7750 = vmatpush1.bf16.msra.mxu0 %v5431
    %7751 = vmatprep.subr.bf16.mxu0 %v5424
    %7752 = vmatpush1.bf16.msra.mxu0 %v5423
    %7753 = vmatprep.subr.bf16.mxu0 %v5416
    %7754 = vmatpush1.bf16.msra.mxu0 %v5415
    %7755 = vmatprep.subr.bf16.mxu0 %v5408
    %7756 = vmatpush1.bf16.msra.mxu0 %v5407
    %7757 = vmatprep.subr.bf16.mxu0 %v5400
    %7758 = vmatpush1.bf16.msra.mxu0 %v5399
    %7759 = vmatprep.subr.bf16.mxu0 %v5392
    %7760 = vmatpush1.bf16.msra.mxu0 %v5391
    %7761 = vmatprep.subr.bf16.mxu0 %v5384
    %7762 = vmatpush1.bf16.msra.mxu0 %v5383
    %7763 = vmatprep.subr.bf16.mxu0 %v5376
    %7764 = vmatpush1.bf16.msra.mxu0 %v5375
    %7765 = vmatprep.subr.bf16.mxu0 %v5496
    %7766 = vmatpush2.bf16.msra.mxu0 %v5495
    %7767 = vmatprep.subr.bf16.mxu0 %v5488
    %7768 = vmatpush2.bf16.msra.mxu0 %v5487
    %7769 = vmatprep.subr.bf16.mxu0 %v5480
    %7770 = vmatpush2.bf16.msra.mxu0 %v5479
    %7771 = vmatprep.subr.bf16.mxu0 %v5472
    %7772 = vmatpush2.bf16.msra.mxu0 %v5471
    %7773 = vmatprep.subr.bf16.mxu0 %v5464
    %7774 = vmatpush2.bf16.msra.mxu0 %v5463
    %7775 = vmatprep.subr.bf16.mxu0 %v5456
    %7776 = vmatpush2.bf16.msra.mxu0 %v5455
    %7777 = vmatprep.subr.bf16.mxu0 %v5448
    %7778 = vmatpush2.bf16.msra.mxu0 %v5447
    %7779 = vmatprep.subr.bf16.mxu0 %v5440
    %7780 = vmatpush2.bf16.msra.mxu0 %v5439
    %7781 = vmatprep.mubr.bf16.mxu0 %v1220
    %7782 = vmatmul.mubr.bf16.gmra.mxu0 %v1219
    %v7783 = vpop.f32.mrf.mxu0
    %v7784 = vadd.f32 %v2272, %v7783
    %v7785 = vpop.f32.mrf.mxu0
    %v7786 = vadd.f32 %v2276, %v7785
    %v7787 = vpop.f32.mrf.mxu0
    %v7788 = vpop.f32.mrf.mxu0
    %7789 = vdwg.mxu0
    %7790 = vmatprep.subr.bf16.mxu0 %v5560
    %7791 = vmatpush1.bf16.msra.mxu0 %v5559
    %7792 = vmatprep.subr.bf16.mxu0 %v5552
    %7793 = vmatpush1.bf16.msra.mxu0 %v5551
    %7794 = vmatprep.subr.bf16.mxu0 %v5544
    %7795 = vmatpush1.bf16.msra.mxu0 %v5543
    %7796 = vmatprep.subr.bf16.mxu0 %v5536
    %7797 = vmatpush1.bf16.msra.mxu0 %v5535
    %7798 = vmatprep.subr.bf16.mxu0 %v5528
    %7799 = vmatpush1.bf16.msra.mxu0 %v5527
    %7800 = vmatprep.subr.bf16.mxu0 %v5520
    %7801 = vmatpush1.bf16.msra.mxu0 %v5519
    %7802 = vmatprep.subr.bf16.mxu0 %v5512
    %7803 = vmatpush1.bf16.msra.mxu0 %v5511
    %7804 = vmatprep.subr.bf16.mxu0 %v5504
    %7805 = vmatpush1.bf16.msra.mxu0 %v5503
    %7806 = vmatprep.subr.bf16.mxu0 %v5624
    %7807 = vmatpush2.bf16.msra.mxu0 %v5623
    %7808 = vmatprep.subr.bf16.mxu0 %v5616
    %7809 = vmatpush2.bf16.msra.mxu0 %v5615
    %7810 = vmatprep.subr.bf16.mxu0 %v5608
    %7811 = vmatpush2.bf16.msra.mxu0 %v5607
    %7812 = vmatprep.subr.bf16.mxu0 %v5600
    %7813 = vmatpush2.bf16.msra.mxu0 %v5599
    %7814 = vmatprep.subr.bf16.mxu0 %v5592
    %7815 = vmatpush2.bf16.msra.mxu0 %v5591
    %7816 = vmatprep.subr.bf16.mxu0 %v5584
    %7817 = vmatpush2.bf16.msra.mxu0 %v5583
    %7818 = vmatprep.subr.bf16.mxu0 %v5576
    %7819 = vmatpush2.bf16.msra.mxu0 %v5575
    %7820 = vmatprep.subr.bf16.mxu0 %v5568
    %7821 = vmatpush2.bf16.msra.mxu0 %v5567
    %7822 = vmatprep.mubr.bf16.mxu0 %v1222
    %7823 = vmatmul.mubr.bf16.gmra.mxu0 %v1221
    %v7824 = vpop.f32.mrf.mxu0
    %v7825 = vadd.f32 %v7784, %v7824
    %v7826 = vpop.f32.mrf.mxu0
    %v7827 = vadd.f32 %v7786, %v7826
    %v7828 = vpop.f32.mrf.mxu0
    %v7829 = vpop.f32.mrf.mxu0
    %7830 = vdwg.mxu0
    %7831 = vmatprep.subr.bf16.mxu0 %v5688
    %7832 = vmatpush1.bf16.msra.mxu0 %v5687
    %7833 = vmatprep.subr.bf16.mxu0 %v5680
    %7834 = vmatpush1.bf16.msra.mxu0 %v5679
    %7835 = vmatprep.subr.bf16.mxu0 %v5672
    %7836 = vmatpush1.bf16.msra.mxu0 %v5671
    %7837 = vmatprep.subr.bf16.mxu0 %v5664
    %7838 = vmatpush1.bf16.msra.mxu0 %v5663
    %7839 = vmatprep.subr.bf16.mxu0 %v5656
    %7840 = vmatpush1.bf16.msra.mxu0 %v5655
    %7841 = vmatprep.subr.bf16.mxu0 %v5648
    %7842 = vmatpush1.bf16.msra.mxu0 %v5647
    %7843 = vmatprep.subr.bf16.mxu0 %v5640
    %7844 = vmatpush1.bf16.msra.mxu0 %v5639
    %7845 = vmatprep.subr.bf16.mxu0 %v5632
    %7846 = vmatpush1.bf16.msra.mxu0 %v5631
    %7847 = vmatprep.subr.bf16.mxu0 %v5752
    %7848 = vmatpush2.bf16.msra.mxu0 %v5751
    %7849 = vmatprep.subr.bf16.mxu0 %v5744
    %7850 = vmatpush2.bf16.msra.mxu0 %v5743
    %7851 = vmatprep.subr.bf16.mxu0 %v5736
    %7852 = vmatpush2.bf16.msra.mxu0 %v5735
    %7853 = vmatprep.subr.bf16.mxu0 %v5728
    %7854 = vmatpush2.bf16.msra.mxu0 %v5727
    %7855 = vmatprep.subr.bf16.mxu0 %v5720
    %7856 = vmatpush2.bf16.msra.mxu0 %v5719
    %7857 = vmatprep.subr.bf16.mxu0 %v5712
    %7858 = vmatpush2.bf16.msra.mxu0 %v5711
    %7859 = vmatprep.subr.bf16.mxu0 %v5704
    %7860 = vmatpush2.bf16.msra.mxu0 %v5703
    %7861 = vmatprep.subr.bf16.mxu0 %v5696
    %7862 = vmatpush2.bf16.msra.mxu0 %v5695
    %7863 = vmatprep.mubr.bf16.mxu0 %v1224
    %7864 = vmatmul.mubr.bf16.gmra.mxu0 %v1223
    %v7865 = vpop.f32.mrf.mxu0
    %v7866 = vadd.f32 %v7825, %v7865
    %v7867 = vpop.f32.mrf.mxu0
    %v7868 = vadd.f32 %v7827, %v7867
    %v7869 = vpop.f32.mrf.mxu0
    %v7870 = vpop.f32.mrf.mxu0
    %7871 = vdwg.mxu0
    %7872 = vmatprep.subr.bf16.mxu0 %v5816
    %7873 = vmatpush1.bf16.msra.mxu0 %v5815
    %7874 = vmatprep.subr.bf16.mxu0 %v5808
    %7875 = vmatpush1.bf16.msra.mxu0 %v5807
    %7876 = vmatprep.subr.bf16.mxu0 %v5800
    %7877 = vmatpush1.bf16.msra.mxu0 %v5799
    %7878 = vmatprep.subr.bf16.mxu0 %v5792
    %7879 = vmatpush1.bf16.msra.mxu0 %v5791
    %7880 = vmatprep.subr.bf16.mxu0 %v5784
    %7881 = vmatpush1.bf16.msra.mxu0 %v5783
    %7882 = vmatprep.subr.bf16.mxu0 %v5776
    %7883 = vmatpush1.bf16.msra.mxu0 %v5775
    %7884 = vmatprep.subr.bf16.mxu0 %v5768
    %7885 = vmatpush1.bf16.msra.mxu0 %v5767
    %7886 = vmatprep.subr.bf16.mxu0 %v5760
    %7887 = vmatpush1.bf16.msra.mxu0 %v5759
    %7888 = vmatprep.subr.bf16.mxu0 %v5880
    %7889 = vmatpush2.bf16.msra.mxu0 %v5879
    %7890 = vmatprep.subr.bf16.mxu0 %v5872
    %7891 = vmatpush2.bf16.msra.mxu0 %v5871
    %7892 = vmatprep.subr.bf16.mxu0 %v5864
    %7893 = vmatpush2.bf16.msra.mxu0 %v5863
    %7894 = vmatprep.subr.bf16.mxu0 %v5856
    %7895 = vmatpush2.bf16.msra.mxu0 %v5855
    %7896 = vmatprep.subr.bf16.mxu0 %v5848
    %7897 = vmatpush2.bf16.msra.mxu0 %v5847
    %7898 = vmatprep.subr.bf16.mxu0 %v5840
    %7899 = vmatpush2.bf16.msra.mxu0 %v5839
    %7900 = vmatprep.subr.bf16.mxu0 %v5832
    %7901 = vmatpush2.bf16.msra.mxu0 %v5831
    %7902 = vmatprep.subr.bf16.mxu0 %v5824
    %7903 = vmatpush2.bf16.msra.mxu0 %v5823
    %7904 = vmatprep.mubr.bf16.mxu0 %v1226
    %7905 = vmatmul.mubr.bf16.gmra.mxu0 %v1225
    %v7906 = vpop.f32.mrf.mxu0
    %v7907 = vadd.f32 %v7866, %v7906
    %v7908 = vpop.f32.mrf.mxu0
    %v7909 = vadd.f32 %v7868, %v7908
    %v7910 = vpop.f32.mrf.mxu0
    %v7911 = vpop.f32.mrf.mxu0
    %7912 = vdwg.mxu0
    %7913 = vmatprep.subr.bf16.mxu0 %v5944
    %7914 = vmatpush1.bf16.msra.mxu0 %v5943
    %7915 = vmatprep.subr.bf16.mxu0 %v5936
    %7916 = vmatpush1.bf16.msra.mxu0 %v5935
    %7917 = vmatprep.subr.bf16.mxu0 %v5928
    %7918 = vmatpush1.bf16.msra.mxu0 %v5927
    %7919 = vmatprep.subr.bf16.mxu0 %v5920
    %7920 = vmatpush1.bf16.msra.mxu0 %v5919
    %7921 = vmatprep.subr.bf16.mxu0 %v5912
    %7922 = vmatpush1.bf16.msra.mxu0 %v5911
    %7923 = vmatprep.subr.bf16.mxu0 %v5904
    %7924 = vmatpush1.bf16.msra.mxu0 %v5903
    %7925 = vmatprep.subr.bf16.mxu0 %v5896
    %7926 = vmatpush1.bf16.msra.mxu0 %v5895
    %7927 = vmatprep.subr.bf16.mxu0 %v5888
    %7928 = vmatpush1.bf16.msra.mxu0 %v5887
    %7929 = vmatprep.subr.bf16.mxu0 %v6008
    %7930 = vmatpush2.bf16.msra.mxu0 %v6007
    %7931 = vmatprep.subr.bf16.mxu0 %v6000
    %7932 = vmatpush2.bf16.msra.mxu0 %v5999
    %7933 = vmatprep.subr.bf16.mxu0 %v5992
    %7934 = vmatpush2.bf16.msra.mxu0 %v5991
    %7935 = vmatprep.subr.bf16.mxu0 %v5984
    %7936 = vmatpush2.bf16.msra.mxu0 %v5983
    %7937 = vmatprep.subr.bf16.mxu0 %v5976
    %7938 = vmatpush2.bf16.msra.mxu0 %v5975
    %7939 = vmatprep.subr.bf16.mxu0 %v5968
    %7940 = vmatpush2.bf16.msra.mxu0 %v5967
    %7941 = vmatprep.subr.bf16.mxu0 %v5960
    %7942 = vmatpush2.bf16.msra.mxu0 %v5959
    %7943 = vmatprep.subr.bf16.mxu0 %v5952
    %7944 = vmatpush2.bf16.msra.mxu0 %v5951
    %7945 = vmatprep.mubr.bf16.mxu0 %v1228
    %7946 = vmatmul.mubr.bf16.gmra.mxu0 %v1227
    %v7947 = vpop.f32.mrf.mxu0
    %v7948 = vadd.f32 %v7907, %v7947
    %v7949 = vpop.f32.mrf.mxu0
    %v7950 = vadd.f32 %v7909, %v7949
    %v7951 = vpop.f32.mrf.mxu0
    %v7952 = vpop.f32.mrf.mxu0
    %7953 = vdwg.mxu0
    %7954 = vmatprep.subr.bf16.mxu0 %v6072
    %7955 = vmatpush1.bf16.msra.mxu0 %v6071
    %7956 = vmatprep.subr.bf16.mxu0 %v6064
    %7957 = vmatpush1.bf16.msra.mxu0 %v6063
    %7958 = vmatprep.subr.bf16.mxu0 %v6056
    %7959 = vmatpush1.bf16.msra.mxu0 %v6055
    %7960 = vmatprep.subr.bf16.mxu0 %v6048
    %7961 = vmatpush1.bf16.msra.mxu0 %v6047
    %7962 = vmatprep.subr.bf16.mxu0 %v6040
    %7963 = vmatpush1.bf16.msra.mxu0 %v6039
    %7964 = vmatprep.subr.bf16.mxu0 %v6032
    %7965 = vmatpush1.bf16.msra.mxu0 %v6031
    %7966 = vmatprep.subr.bf16.mxu0 %v6024
    %7967 = vmatpush1.bf16.msra.mxu0 %v6023
    %7968 = vmatprep.subr.bf16.mxu0 %v6016
    %7969 = vmatpush1.bf16.msra.mxu0 %v6015
    %7970 = vmatprep.subr.bf16.mxu0 %v6136
    %7971 = vmatpush2.bf16.msra.mxu0 %v6135
    %7972 = vmatprep.subr.bf16.mxu0 %v6128
    %7973 = vmatpush2.bf16.msra.mxu0 %v6127
    %7974 = vmatprep.subr.bf16.mxu0 %v6120
    %7975 = vmatpush2.bf16.msra.mxu0 %v6119
    %7976 = vmatprep.subr.bf16.mxu0 %v6112
    %7977 = vmatpush2.bf16.msra.mxu0 %v6111
    %7978 = vmatprep.subr.bf16.mxu0 %v6104
    %7979 = vmatpush2.bf16.msra.mxu0 %v6103
    %7980 = vmatprep.subr.bf16.mxu0 %v6096
    %7981 = vmatpush2.bf16.msra.mxu0 %v6095
    %7982 = vmatprep.subr.bf16.mxu0 %v6088
    %7983 = vmatpush2.bf16.msra.mxu0 %v6087
    %7984 = vmatprep.subr.bf16.mxu0 %v6080
    %7985 = vmatpush2.bf16.msra.mxu0 %v6079
    %7986 = vmatprep.mubr.bf16.mxu0 %v1230
    %7987 = vmatmul.mubr.bf16.gmra.mxu0 %v1229
    %v7988 = vpop.f32.mrf.mxu0
    %v7989 = vadd.f32 %v7948, %v7988
    %v7990 = vpop.f32.mrf.mxu0
    %v7991 = vadd.f32 %v7950, %v7990
    %v7992 = vpop.f32.mrf.mxu0
    %v7993 = vpop.f32.mrf.mxu0
    %7994 = vdwg.mxu0
    %7995 = vmatprep.subr.bf16.mxu0 %v6200
    %7996 = vmatpush1.bf16.msra.mxu0 %v6199
    %7997 = vmatprep.subr.bf16.mxu0 %v6192
    %7998 = vmatpush1.bf16.msra.mxu0 %v6191
    %7999 = vmatprep.subr.bf16.mxu0 %v6184
    %8000 = vmatpush1.bf16.msra.mxu0 %v6183
    %8001 = vmatprep.subr.bf16.mxu0 %v6176
    %8002 = vmatpush1.bf16.msra.mxu0 %v6175
    %8003 = vmatprep.subr.bf16.mxu0 %v6168
    %8004 = vmatpush1.bf16.msra.mxu0 %v6167
    %8005 = vmatprep.subr.bf16.mxu0 %v6160
    %8006 = vmatpush1.bf16.msra.mxu0 %v6159
    %8007 = vmatprep.subr.bf16.mxu0 %v6152
    %8008 = vmatpush1.bf16.msra.mxu0 %v6151
    %8009 = vmatprep.subr.bf16.mxu0 %v6144
    %8010 = vmatpush1.bf16.msra.mxu0 %v6143
    %8011 = vmatprep.subr.bf16.mxu0 %v6264
    %8012 = vmatpush2.bf16.msra.mxu0 %v6263
    %8013 = vmatprep.subr.bf16.mxu0 %v6256
    %8014 = vmatpush2.bf16.msra.mxu0 %v6255
    %8015 = vmatprep.subr.bf16.mxu0 %v6248
    %8016 = vmatpush2.bf16.msra.mxu0 %v6247
    %8017 = vmatprep.subr.bf16.mxu0 %v6240
    %8018 = vmatpush2.bf16.msra.mxu0 %v6239
    %8019 = vmatprep.subr.bf16.mxu0 %v6232
    %8020 = vmatpush2.bf16.msra.mxu0 %v6231
    %8021 = vmatprep.subr.bf16.mxu0 %v6224
    %8022 = vmatpush2.bf16.msra.mxu0 %v6223
    %8023 = vmatprep.subr.bf16.mxu0 %v6216
    %8024 = vmatpush2.bf16.msra.mxu0 %v6215
    %8025 = vmatprep.subr.bf16.mxu0 %v6208
    %8026 = vmatpush2.bf16.msra.mxu0 %v6207
    %8027 = vmatprep.mubr.bf16.mxu0 %v1232
    %8028 = vmatmul.mubr.bf16.gmra.mxu0 %v1231
    %v8029 = vpop.f32.mrf.mxu0
    %v8030 = vadd.f32 %v7989, %v8029
    %v8031 = vpop.f32.mrf.mxu0
    %v8032 = vadd.f32 %v7991, %v8031
    %v8033 = vpop.f32.mrf.mxu0
    %v8034 = vpop.f32.mrf.mxu0
    %8035 = vdwg.mxu0
    %8036 = vmatprep.subr.bf16.mxu0 %v6328
    %8037 = vmatpush1.bf16.msra.mxu0 %v6327
    %8038 = vmatprep.subr.bf16.mxu0 %v6320
    %8039 = vmatpush1.bf16.msra.mxu0 %v6319
    %8040 = vmatprep.subr.bf16.mxu0 %v6312
    %8041 = vmatpush1.bf16.msra.mxu0 %v6311
    %8042 = vmatprep.subr.bf16.mxu0 %v6304
    %8043 = vmatpush1.bf16.msra.mxu0 %v6303
    %8044 = vmatprep.subr.bf16.mxu0 %v6296
    %8045 = vmatpush1.bf16.msra.mxu0 %v6295
    %8046 = vmatprep.subr.bf16.mxu0 %v6288
    %8047 = vmatpush1.bf16.msra.mxu0 %v6287
    %8048 = vmatprep.subr.bf16.mxu0 %v6280
    %8049 = vmatpush1.bf16.msra.mxu0 %v6279
    %8050 = vmatprep.subr.bf16.mxu0 %v6272
    %8051 = vmatpush1.bf16.msra.mxu0 %v6271
    %8052 = vmatprep.subr.bf16.mxu0 %v6392
    %8053 = vmatpush2.bf16.msra.mxu0 %v6391
    %8054 = vmatprep.subr.bf16.mxu0 %v6384
    %8055 = vmatpush2.bf16.msra.mxu0 %v6383
    %8056 = vmatprep.subr.bf16.mxu0 %v6376
    %8057 = vmatpush2.bf16.msra.mxu0 %v6375
    %8058 = vmatprep.subr.bf16.mxu0 %v6368
    %8059 = vmatpush2.bf16.msra.mxu0 %v6367
    %8060 = vmatprep.subr.bf16.mxu0 %v6360
    %8061 = vmatpush2.bf16.msra.mxu0 %v6359
    %8062 = vmatprep.subr.bf16.mxu0 %v6352
    %8063 = vmatpush2.bf16.msra.mxu0 %v6351
    %8064 = vmatprep.subr.bf16.mxu0 %v6344
    %8065 = vmatpush2.bf16.msra.mxu0 %v6343
    %8066 = vmatprep.subr.bf16.mxu0 %v6336
    %8067 = vmatpush2.bf16.msra.mxu0 %v6335
    %8068 = vmatprep.mubr.bf16.mxu0 %v1234
    %8069 = vmatmul.mubr.bf16.gmra.mxu0 %v1233
    %v8070 = vpop.f32.mrf.mxu0
    %v8071 = vadd.f32 %v8030, %v8070
    %v8072 = vpop.f32.mrf.mxu0
    %v8073 = vadd.f32 %v8032, %v8072
    %v8074 = vpop.f32.mrf.mxu0
    %v8075 = vpop.f32.mrf.mxu0
    %8076 = vdwg.mxu0
    %8077 = vmatprep.subr.bf16.mxu0 %v5434
    %8078 = vmatpush1.bf16.msra.mxu0 %v5433
    %8079 = vmatprep.subr.bf16.mxu0 %v5426
    %8080 = vmatpush1.bf16.msra.mxu0 %v5425
    %8081 = vmatprep.subr.bf16.mxu0 %v5418
    %8082 = vmatpush1.bf16.msra.mxu0 %v5417
    %8083 = vmatprep.subr.bf16.mxu0 %v5410
    %8084 = vmatpush1.bf16.msra.mxu0 %v5409
    %8085 = vmatprep.subr.bf16.mxu0 %v5402
    %8086 = vmatpush1.bf16.msra.mxu0 %v5401
    %8087 = vmatprep.subr.bf16.mxu0 %v5394
    %8088 = vmatpush1.bf16.msra.mxu0 %v5393
    %8089 = vmatprep.subr.bf16.mxu0 %v5386
    %8090 = vmatpush1.bf16.msra.mxu0 %v5385
    %8091 = vmatprep.subr.bf16.mxu0 %v5378
    %8092 = vmatpush1.bf16.msra.mxu0 %v5377
    %8093 = vmatprep.subr.bf16.mxu0 %v5498
    %8094 = vmatpush2.bf16.msra.mxu0 %v5497
    %8095 = vmatprep.subr.bf16.mxu0 %v5490
    %8096 = vmatpush2.bf16.msra.mxu0 %v5489
    %8097 = vmatprep.subr.bf16.mxu0 %v5482
    %8098 = vmatpush2.bf16.msra.mxu0 %v5481
    %8099 = vmatprep.subr.bf16.mxu0 %v5474
    %8100 = vmatpush2.bf16.msra.mxu0 %v5473
    %8101 = vmatprep.subr.bf16.mxu0 %v5466
    %8102 = vmatpush2.bf16.msra.mxu0 %v5465
    %8103 = vmatprep.subr.bf16.mxu0 %v5458
    %8104 = vmatpush2.bf16.msra.mxu0 %v5457
    %8105 = vmatprep.subr.bf16.mxu0 %v5450
    %8106 = vmatpush2.bf16.msra.mxu0 %v5449
    %8107 = vmatprep.subr.bf16.mxu0 %v5442
    %8108 = vmatpush2.bf16.msra.mxu0 %v5441
    %8109 = vmatprep.mubr.bf16.mxu0 %v1220
    %8110 = vmatmul.mubr.bf16.gmra.mxu0 %v1219
    %v8111 = vpop.f32.mrf.mxu0
    %v8112 = vadd.f32 %v2280, %v8111
    %v8113 = vpop.f32.mrf.mxu0
    %v8114 = vadd.f32 %v2284, %v8113
    %v8115 = vpop.f32.mrf.mxu0
    %v8116 = vpop.f32.mrf.mxu0
    %8117 = vdwg.mxu0
    %8118 = vmatprep.subr.bf16.mxu0 %v5562
    %8119 = vmatpush1.bf16.msra.mxu0 %v5561
    %8120 = vmatprep.subr.bf16.mxu0 %v5554
    %8121 = vmatpush1.bf16.msra.mxu0 %v5553
    %8122 = vmatprep.subr.bf16.mxu0 %v5546
    %8123 = vmatpush1.bf16.msra.mxu0 %v5545
    %8124 = vmatprep.subr.bf16.mxu0 %v5538
    %8125 = vmatpush1.bf16.msra.mxu0 %v5537
    %8126 = vmatprep.subr.bf16.mxu0 %v5530
    %8127 = vmatpush1.bf16.msra.mxu0 %v5529
    %8128 = vmatprep.subr.bf16.mxu0 %v5522
    %8129 = vmatpush1.bf16.msra.mxu0 %v5521
    %8130 = vmatprep.subr.bf16.mxu0 %v5514
    %8131 = vmatpush1.bf16.msra.mxu0 %v5513
    %8132 = vmatprep.subr.bf16.mxu0 %v5506
    %8133 = vmatpush1.bf16.msra.mxu0 %v5505
    %8134 = vmatprep.subr.bf16.mxu0 %v5626
    %8135 = vmatpush2.bf16.msra.mxu0 %v5625
    %8136 = vmatprep.subr.bf16.mxu0 %v5618
    %8137 = vmatpush2.bf16.msra.mxu0 %v5617
    %8138 = vmatprep.subr.bf16.mxu0 %v5610
    %8139 = vmatpush2.bf16.msra.mxu0 %v5609
    %8140 = vmatprep.subr.bf16.mxu0 %v5602
    %8141 = vmatpush2.bf16.msra.mxu0 %v5601
    %8142 = vmatprep.subr.bf16.mxu0 %v5594
    %8143 = vmatpush2.bf16.msra.mxu0 %v5593
    %8144 = vmatprep.subr.bf16.mxu0 %v5586
    %8145 = vmatpush2.bf16.msra.mxu0 %v5585
    %8146 = vmatprep.subr.bf16.mxu0 %v5578
    %8147 = vmatpush2.bf16.msra.mxu0 %v5577
    %8148 = vmatprep.subr.bf16.mxu0 %v5570
    %8149 = vmatpush2.bf16.msra.mxu0 %v5569
    %8150 = vmatprep.mubr.bf16.mxu0 %v1222
    %8151 = vmatmul.mubr.bf16.gmra.mxu0 %v1221
    %v8152 = vpop.f32.mrf.mxu0
    %v8153 = vadd.f32 %v8112, %v8152
    %v8154 = vpop.f32.mrf.mxu0
    %v8155 = vadd.f32 %v8114, %v8154
    %v8156 = vpop.f32.mrf.mxu0
    %v8157 = vpop.f32.mrf.mxu0
    %8158 = vdwg.mxu0
    %8159 = vmatprep.subr.bf16.mxu0 %v5690
    %8160 = vmatpush1.bf16.msra.mxu0 %v5689
    %8161 = vmatprep.subr.bf16.mxu0 %v5682
    %8162 = vmatpush1.bf16.msra.mxu0 %v5681
    %8163 = vmatprep.subr.bf16.mxu0 %v5674
    %8164 = vmatpush1.bf16.msra.mxu0 %v5673
    %8165 = vmatprep.subr.bf16.mxu0 %v5666
    %8166 = vmatpush1.bf16.msra.mxu0 %v5665
    %8167 = vmatprep.subr.bf16.mxu0 %v5658
    %8168 = vmatpush1.bf16.msra.mxu0 %v5657
    %8169 = vmatprep.subr.bf16.mxu0 %v5650
    %8170 = vmatpush1.bf16.msra.mxu0 %v5649
    %8171 = vmatprep.subr.bf16.mxu0 %v5642
    %8172 = vmatpush1.bf16.msra.mxu0 %v5641
    %8173 = vmatprep.subr.bf16.mxu0 %v5634
    %8174 = vmatpush1.bf16.msra.mxu0 %v5633
    %8175 = vmatprep.subr.bf16.mxu0 %v5754
    %8176 = vmatpush2.bf16.msra.mxu0 %v5753
    %8177 = vmatprep.subr.bf16.mxu0 %v5746
    %8178 = vmatpush2.bf16.msra.mxu0 %v5745
    %8179 = vmatprep.subr.bf16.mxu0 %v5738
    %8180 = vmatpush2.bf16.msra.mxu0 %v5737
    %8181 = vmatprep.subr.bf16.mxu0 %v5730
    %8182 = vmatpush2.bf16.msra.mxu0 %v5729
    %8183 = vmatprep.subr.bf16.mxu0 %v5722
    %8184 = vmatpush2.bf16.msra.mxu0 %v5721
    %8185 = vmatprep.subr.bf16.mxu0 %v5714
    %8186 = vmatpush2.bf16.msra.mxu0 %v5713
    %8187 = vmatprep.subr.bf16.mxu0 %v5706
    %8188 = vmatpush2.bf16.msra.mxu0 %v5705
    %8189 = vmatprep.subr.bf16.mxu0 %v5698
    %8190 = vmatpush2.bf16.msra.mxu0 %v5697
    %8191 = vmatprep.mubr.bf16.mxu0 %v1224
    %8192 = vmatmul.mubr.bf16.gmra.mxu0 %v1223
    %v8193 = vpop.f32.mrf.mxu0
    %v8194 = vadd.f32 %v8153, %v8193
    %v8195 = vpop.f32.mrf.mxu0
    %v8196 = vadd.f32 %v8155, %v8195
    %v8197 = vpop.f32.mrf.mxu0
    %v8198 = vpop.f32.mrf.mxu0
    %8199 = vdwg.mxu0
    %8200 = vmatprep.subr.bf16.mxu0 %v5818
    %8201 = vmatpush1.bf16.msra.mxu0 %v5817
    %8202 = vmatprep.subr.bf16.mxu0 %v5810
    %8203 = vmatpush1.bf16.msra.mxu0 %v5809
    %8204 = vmatprep.subr.bf16.mxu0 %v5802
    %8205 = vmatpush1.bf16.msra.mxu0 %v5801
    %8206 = vmatprep.subr.bf16.mxu0 %v5794
    %8207 = vmatpush1.bf16.msra.mxu0 %v5793
    %8208 = vmatprep.subr.bf16.mxu0 %v5786
    %8209 = vmatpush1.bf16.msra.mxu0 %v5785
    %8210 = vmatprep.subr.bf16.mxu0 %v5778
    %8211 = vmatpush1.bf16.msra.mxu0 %v5777
    %8212 = vmatprep.subr.bf16.mxu0 %v5770
    %8213 = vmatpush1.bf16.msra.mxu0 %v5769
    %8214 = vmatprep.subr.bf16.mxu0 %v5762
    %8215 = vmatpush1.bf16.msra.mxu0 %v5761
    %8216 = vmatprep.subr.bf16.mxu0 %v5882
    %8217 = vmatpush2.bf16.msra.mxu0 %v5881
    %8218 = vmatprep.subr.bf16.mxu0 %v5874
    %8219 = vmatpush2.bf16.msra.mxu0 %v5873
    %8220 = vmatprep.subr.bf16.mxu0 %v5866
    %8221 = vmatpush2.bf16.msra.mxu0 %v5865
    %8222 = vmatprep.subr.bf16.mxu0 %v5858
    %8223 = vmatpush2.bf16.msra.mxu0 %v5857
    %8224 = vmatprep.subr.bf16.mxu0 %v5850
    %8225 = vmatpush2.bf16.msra.mxu0 %v5849
    %8226 = vmatprep.subr.bf16.mxu0 %v5842
    %8227 = vmatpush2.bf16.msra.mxu0 %v5841
    %8228 = vmatprep.subr.bf16.mxu0 %v5834
    %8229 = vmatpush2.bf16.msra.mxu0 %v5833
    %8230 = vmatprep.subr.bf16.mxu0 %v5826
    %8231 = vmatpush2.bf16.msra.mxu0 %v5825
    %8232 = vmatprep.mubr.bf16.mxu0 %v1226
    %8233 = vmatmul.mubr.bf16.gmra.mxu0 %v1225
    %v8234 = vpop.f32.mrf.mxu0
    %v8235 = vadd.f32 %v8194, %v8234
    %v8236 = vpop.f32.mrf.mxu0
    %v8237 = vadd.f32 %v8196, %v8236
    %v8238 = vpop.f32.mrf.mxu0
    %v8239 = vpop.f32.mrf.mxu0
    %8240 = vdwg.mxu0
    %8241 = vmatprep.subr.bf16.mxu0 %v5946
    %8242 = vmatpush1.bf16.msra.mxu0 %v5945
    %8243 = vmatprep.subr.bf16.mxu0 %v5938
    %8244 = vmatpush1.bf16.msra.mxu0 %v5937
    %8245 = vmatprep.subr.bf16.mxu0 %v5930
    %8246 = vmatpush1.bf16.msra.mxu0 %v5929
    %8247 = vmatprep.subr.bf16.mxu0 %v5922
    %8248 = vmatpush1.bf16.msra.mxu0 %v5921
    %8249 = vmatprep.subr.bf16.mxu0 %v5914
    %8250 = vmatpush1.bf16.msra.mxu0 %v5913
    %8251 = vmatprep.subr.bf16.mxu0 %v5906
    %8252 = vmatpush1.bf16.msra.mxu0 %v5905
    %8253 = vmatprep.subr.bf16.mxu0 %v5898
    %8254 = vmatpush1.bf16.msra.mxu0 %v5897
    %8255 = vmatprep.subr.bf16.mxu0 %v5890
    %8256 = vmatpush1.bf16.msra.mxu0 %v5889
    %8257 = vmatprep.subr.bf16.mxu0 %v6010
    %8258 = vmatpush2.bf16.msra.mxu0 %v6009
    %8259 = vmatprep.subr.bf16.mxu0 %v6002
    %8260 = vmatpush2.bf16.msra.mxu0 %v6001
    %8261 = vmatprep.subr.bf16.mxu0 %v5994
    %8262 = vmatpush2.bf16.msra.mxu0 %v5993
    %8263 = vmatprep.subr.bf16.mxu0 %v5986
    %8264 = vmatpush2.bf16.msra.mxu0 %v5985
    %8265 = vmatprep.subr.bf16.mxu0 %v5978
    %8266 = vmatpush2.bf16.msra.mxu0 %v5977
    %8267 = vmatprep.subr.bf16.mxu0 %v5970
    %8268 = vmatpush2.bf16.msra.mxu0 %v5969
    %8269 = vmatprep.subr.bf16.mxu0 %v5962
    %8270 = vmatpush2.bf16.msra.mxu0 %v5961
    %8271 = vmatprep.subr.bf16.mxu0 %v5954
    %8272 = vmatpush2.bf16.msra.mxu0 %v5953
    %8273 = vmatprep.mubr.bf16.mxu0 %v1228
    %8274 = vmatmul.mubr.bf16.gmra.mxu0 %v1227
    %v8275 = vpop.f32.mrf.mxu0
    %v8276 = vadd.f32 %v8235, %v8275
    %v8277 = vpop.f32.mrf.mxu0
    %v8278 = vadd.f32 %v8237, %v8277
    %v8279 = vpop.f32.mrf.mxu0
    %v8280 = vpop.f32.mrf.mxu0
    %8281 = vdwg.mxu0
    %8282 = vmatprep.subr.bf16.mxu0 %v6074
    %8283 = vmatpush1.bf16.msra.mxu0 %v6073
    %8284 = vmatprep.subr.bf16.mxu0 %v6066
    %8285 = vmatpush1.bf16.msra.mxu0 %v6065
    %8286 = vmatprep.subr.bf16.mxu0 %v6058
    %8287 = vmatpush1.bf16.msra.mxu0 %v6057
    %8288 = vmatprep.subr.bf16.mxu0 %v6050
    %8289 = vmatpush1.bf16.msra.mxu0 %v6049
    %8290 = vmatprep.subr.bf16.mxu0 %v6042
    %8291 = vmatpush1.bf16.msra.mxu0 %v6041
    %8292 = vmatprep.subr.bf16.mxu0 %v6034
    %8293 = vmatpush1.bf16.msra.mxu0 %v6033
    %8294 = vmatprep.subr.bf16.mxu0 %v6026
    %8295 = vmatpush1.bf16.msra.mxu0 %v6025
    %8296 = vmatprep.subr.bf16.mxu0 %v6018
    %8297 = vmatpush1.bf16.msra.mxu0 %v6017
    %8298 = vmatprep.subr.bf16.mxu0 %v6138
    %8299 = vmatpush2.bf16.msra.mxu0 %v6137
    %8300 = vmatprep.subr.bf16.mxu0 %v6130
    %8301 = vmatpush2.bf16.msra.mxu0 %v6129
    %8302 = vmatprep.subr.bf16.mxu0 %v6122
    %8303 = vmatpush2.bf16.msra.mxu0 %v6121
    %8304 = vmatprep.subr.bf16.mxu0 %v6114
    %8305 = vmatpush2.bf16.msra.mxu0 %v6113
    %8306 = vmatprep.subr.bf16.mxu0 %v6106
    %8307 = vmatpush2.bf16.msra.mxu0 %v6105
    %8308 = vmatprep.subr.bf16.mxu0 %v6098
    %8309 = vmatpush2.bf16.msra.mxu0 %v6097
    %8310 = vmatprep.subr.bf16.mxu0 %v6090
    %8311 = vmatpush2.bf16.msra.mxu0 %v6089
    %8312 = vmatprep.subr.bf16.mxu0 %v6082
    %8313 = vmatpush2.bf16.msra.mxu0 %v6081
    %8314 = vmatprep.mubr.bf16.mxu0 %v1230
    %8315 = vmatmul.mubr.bf16.gmra.mxu0 %v1229
    %v8316 = vpop.f32.mrf.mxu0
    %v8317 = vadd.f32 %v8276, %v8316
    %v8318 = vpop.f32.mrf.mxu0
    %v8319 = vadd.f32 %v8278, %v8318
    %v8320 = vpop.f32.mrf.mxu0
    %v8321 = vpop.f32.mrf.mxu0
    %8322 = vdwg.mxu0
    %8323 = vmatprep.subr.bf16.mxu0 %v6202
    %8324 = vmatpush1.bf16.msra.mxu0 %v6201
    %8325 = vmatprep.subr.bf16.mxu0 %v6194
    %8326 = vmatpush1.bf16.msra.mxu0 %v6193
    %8327 = vmatprep.subr.bf16.mxu0 %v6186
    %8328 = vmatpush1.bf16.msra.mxu0 %v6185
    %8329 = vmatprep.subr.bf16.mxu0 %v6178
    %8330 = vmatpush1.bf16.msra.mxu0 %v6177
    %8331 = vmatprep.subr.bf16.mxu0 %v6170
    %8332 = vmatpush1.bf16.msra.mxu0 %v6169
    %8333 = vmatprep.subr.bf16.mxu0 %v6162
    %8334 = vmatpush1.bf16.msra.mxu0 %v6161
    %8335 = vmatprep.subr.bf16.mxu0 %v6154
    %8336 = vmatpush1.bf16.msra.mxu0 %v6153
    %8337 = vmatprep.subr.bf16.mxu0 %v6146
    %8338 = vmatpush1.bf16.msra.mxu0 %v6145
    %8339 = vmatprep.subr.bf16.mxu0 %v6266
    %8340 = vmatpush2.bf16.msra.mxu0 %v6265
    %8341 = vmatprep.subr.bf16.mxu0 %v6258
    %8342 = vmatpush2.bf16.msra.mxu0 %v6257
    %8343 = vmatprep.subr.bf16.mxu0 %v6250
    %8344 = vmatpush2.bf16.msra.mxu0 %v6249
    %8345 = vmatprep.subr.bf16.mxu0 %v6242
    %8346 = vmatpush2.bf16.msra.mxu0 %v6241
    %8347 = vmatprep.subr.bf16.mxu0 %v6234
    %8348 = vmatpush2.bf16.msra.mxu0 %v6233
    %8349 = vmatprep.subr.bf16.mxu0 %v6226
    %8350 = vmatpush2.bf16.msra.mxu0 %v6225
    %8351 = vmatprep.subr.bf16.mxu0 %v6218
    %8352 = vmatpush2.bf16.msra.mxu0 %v6217
    %8353 = vmatprep.subr.bf16.mxu0 %v6210
    %8354 = vmatpush2.bf16.msra.mxu0 %v6209
    %8355 = vmatprep.mubr.bf16.mxu0 %v1232
    %8356 = vmatmul.mubr.bf16.gmra.mxu0 %v1231
    %v8357 = vpop.f32.mrf.mxu0
    %v8358 = vadd.f32 %v8317, %v8357
    %v8359 = vpop.f32.mrf.mxu0
    %v8360 = vadd.f32 %v8319, %v8359
    %v8361 = vpop.f32.mrf.mxu0
    %v8362 = vpop.f32.mrf.mxu0
    %8363 = vdwg.mxu0
    %8364 = vmatprep.subr.bf16.mxu0 %v6330
    %8365 = vmatpush1.bf16.msra.mxu0 %v6329
    %8366 = vmatprep.subr.bf16.mxu0 %v6322
    %8367 = vmatpush1.bf16.msra.mxu0 %v6321
    %8368 = vmatprep.subr.bf16.mxu0 %v6314
    %8369 = vmatpush1.bf16.msra.mxu0 %v6313
    %8370 = vmatprep.subr.bf16.mxu0 %v6306
    %8371 = vmatpush1.bf16.msra.mxu0 %v6305
    %8372 = vmatprep.subr.bf16.mxu0 %v6298
    %8373 = vmatpush1.bf16.msra.mxu0 %v6297
    %8374 = vmatprep.subr.bf16.mxu0 %v6290
    %8375 = vmatpush1.bf16.msra.mxu0 %v6289
    %8376 = vmatprep.subr.bf16.mxu0 %v6282
    %8377 = vmatpush1.bf16.msra.mxu0 %v6281
    %8378 = vmatprep.subr.bf16.mxu0 %v6274
    %8379 = vmatpush1.bf16.msra.mxu0 %v6273
    %8380 = vmatprep.subr.bf16.mxu0 %v6394
    %8381 = vmatpush2.bf16.msra.mxu0 %v6393
    %8382 = vmatprep.subr.bf16.mxu0 %v6386
    %8383 = vmatpush2.bf16.msra.mxu0 %v6385
    %8384 = vmatprep.subr.bf16.mxu0 %v6378
    %8385 = vmatpush2.bf16.msra.mxu0 %v6377
    %8386 = vmatprep.subr.bf16.mxu0 %v6370
    %8387 = vmatpush2.bf16.msra.mxu0 %v6369
    %8388 = vmatprep.subr.bf16.mxu0 %v6362
    %8389 = vmatpush2.bf16.msra.mxu0 %v6361
    %8390 = vmatprep.subr.bf16.mxu0 %v6354
    %8391 = vmatpush2.bf16.msra.mxu0 %v6353
    %8392 = vmatprep.subr.bf16.mxu0 %v6346
    %8393 = vmatpush2.bf16.msra.mxu0 %v6345
    %8394 = vmatprep.subr.bf16.mxu0 %v6338
    %8395 = vmatpush2.bf16.msra.mxu0 %v6337
    %8396 = vmatprep.mubr.bf16.mxu0 %v1234
    %8397 = vmatmul.mubr.bf16.gmra.mxu0 %v1233
    %v8398 = vpop.f32.mrf.mxu0
    %v8399 = vadd.f32 %v8358, %v8398
    %v8400 = vpop.f32.mrf.mxu0
    %v8401 = vadd.f32 %v8360, %v8400
    %v8402 = vpop.f32.mrf.mxu0
    %v8403 = vpop.f32.mrf.mxu0
    %8404 = vdwg.mxu0
    %8405 = vmatprep.subr.bf16.mxu0 %v5436
    %8406 = vmatpush1.bf16.msra.mxu0 %v5435
    %8407 = vmatprep.subr.bf16.mxu0 %v5428
    %8408 = vmatpush1.bf16.msra.mxu0 %v5427
    %8409 = vmatprep.subr.bf16.mxu0 %v5420
    %8410 = vmatpush1.bf16.msra.mxu0 %v5419
    %8411 = vmatprep.subr.bf16.mxu0 %v5412
    %8412 = vmatpush1.bf16.msra.mxu0 %v5411
    %8413 = vmatprep.subr.bf16.mxu0 %v5404
    %8414 = vmatpush1.bf16.msra.mxu0 %v5403
    %8415 = vmatprep.subr.bf16.mxu0 %v5396
    %8416 = vmatpush1.bf16.msra.mxu0 %v5395
    %8417 = vmatprep.subr.bf16.mxu0 %v5388
    %8418 = vmatpush1.bf16.msra.mxu0 %v5387
    %8419 = vmatprep.subr.bf16.mxu0 %v5380
    %8420 = vmatpush1.bf16.msra.mxu0 %v5379
    %8421 = vmatprep.subr.bf16.mxu0 %v5500
    %8422 = vmatpush2.bf16.msra.mxu0 %v5499
    %8423 = vmatprep.subr.bf16.mxu0 %v5492
    %8424 = vmatpush2.bf16.msra.mxu0 %v5491
    %8425 = vmatprep.subr.bf16.mxu0 %v5484
    %8426 = vmatpush2.bf16.msra.mxu0 %v5483
    %8427 = vmatprep.subr.bf16.mxu0 %v5476
    %8428 = vmatpush2.bf16.msra.mxu0 %v5475
    %8429 = vmatprep.subr.bf16.mxu0 %v5468
    %8430 = vmatpush2.bf16.msra.mxu0 %v5467
    %8431 = vmatprep.subr.bf16.mxu0 %v5460
    %8432 = vmatpush2.bf16.msra.mxu0 %v5459
    %8433 = vmatprep.subr.bf16.mxu0 %v5452
    %8434 = vmatpush2.bf16.msra.mxu0 %v5451
    %8435 = vmatprep.subr.bf16.mxu0 %v5444
    %8436 = vmatpush2.bf16.msra.mxu0 %v5443
    %8437 = vmatprep.mubr.bf16.mxu0 %v1220
    %8438 = vmatmul.mubr.bf16.gmra.mxu0 %v1219
    %v8439 = vpop.f32.mrf.mxu0
    %v8440 = vadd.f32 %v2288, %v8439
    %v8441 = vpop.f32.mrf.mxu0
    %v8442 = vadd.f32 %v2292, %v8441
    %v8443 = vpop.f32.mrf.mxu0
    %v8444 = vpop.f32.mrf.mxu0
    %8445 = vdwg.mxu0
    %8446 = vmatprep.subr.bf16.mxu0 %v5564
    %8447 = vmatpush1.bf16.msra.mxu0 %v5563
    %8448 = vmatprep.subr.bf16.mxu0 %v5556
    %8449 = vmatpush1.bf16.msra.mxu0 %v5555
    %8450 = vmatprep.subr.bf16.mxu0 %v5548
    %8451 = vmatpush1.bf16.msra.mxu0 %v5547
    %8452 = vmatprep.subr.bf16.mxu0 %v5540
    %8453 = vmatpush1.bf16.msra.mxu0 %v5539
    %8454 = vmatprep.subr.bf16.mxu0 %v5532
    %8455 = vmatpush1.bf16.msra.mxu0 %v5531
    %8456 = vmatprep.subr.bf16.mxu0 %v5524
    %8457 = vmatpush1.bf16.msra.mxu0 %v5523
    %8458 = vmatprep.subr.bf16.mxu0 %v5516
    %8459 = vmatpush1.bf16.msra.mxu0 %v5515
    %8460 = vmatprep.subr.bf16.mxu0 %v5508
    %8461 = vmatpush1.bf16.msra.mxu0 %v5507
    %8462 = vmatprep.subr.bf16.mxu0 %v5628
    %8463 = vmatpush2.bf16.msra.mxu0 %v5627
    %8464 = vmatprep.subr.bf16.mxu0 %v5620
    %8465 = vmatpush2.bf16.msra.mxu0 %v5619
    %8466 = vmatprep.subr.bf16.mxu0 %v5612
    %8467 = vmatpush2.bf16.msra.mxu0 %v5611
    %8468 = vmatprep.subr.bf16.mxu0 %v5604
    %8469 = vmatpush2.bf16.msra.mxu0 %v5603
    %8470 = vmatprep.subr.bf16.mxu0 %v5596
    %8471 = vmatpush2.bf16.msra.mxu0 %v5595
    %8472 = vmatprep.subr.bf16.mxu0 %v5588
    %8473 = vmatpush2.bf16.msra.mxu0 %v5587
    %8474 = vmatprep.subr.bf16.mxu0 %v5580
    %8475 = vmatpush2.bf16.msra.mxu0 %v5579
    %8476 = vmatprep.subr.bf16.mxu0 %v5572
    %8477 = vmatpush2.bf16.msra.mxu0 %v5571
    %8478 = vmatprep.mubr.bf16.mxu0 %v1222
    %8479 = vmatmul.mubr.bf16.gmra.mxu0 %v1221
    %v8480 = vpop.f32.mrf.mxu0
    %v8481 = vadd.f32 %v8440, %v8480
    %v8482 = vpop.f32.mrf.mxu0
    %v8483 = vadd.f32 %v8442, %v8482
    %v8484 = vpop.f32.mrf.mxu0
    %v8485 = vpop.f32.mrf.mxu0
    %8486 = vdwg.mxu0
    %8487 = vmatprep.subr.bf16.mxu0 %v5692
    %8488 = vmatpush1.bf16.msra.mxu0 %v5691
    %8489 = vmatprep.subr.bf16.mxu0 %v5684
    %8490 = vmatpush1.bf16.msra.mxu0 %v5683
    %8491 = vmatprep.subr.bf16.mxu0 %v5676
    %8492 = vmatpush1.bf16.msra.mxu0 %v5675
    %8493 = vmatprep.subr.bf16.mxu0 %v5668
    %8494 = vmatpush1.bf16.msra.mxu0 %v5667
    %8495 = vmatprep.subr.bf16.mxu0 %v5660
    %8496 = vmatpush1.bf16.msra.mxu0 %v5659
    %8497 = vmatprep.subr.bf16.mxu0 %v5652
    %8498 = vmatpush1.bf16.msra.mxu0 %v5651
    %8499 = vmatprep.subr.bf16.mxu0 %v5644
    %8500 = vmatpush1.bf16.msra.mxu0 %v5643
    %8501 = vmatprep.subr.bf16.mxu0 %v5636
    %8502 = vmatpush1.bf16.msra.mxu0 %v5635
    %8503 = vmatprep.subr.bf16.mxu0 %v5756
    %8504 = vmatpush2.bf16.msra.mxu0 %v5755
    %8505 = vmatprep.subr.bf16.mxu0 %v5748
    %8506 = vmatpush2.bf16.msra.mxu0 %v5747
    %8507 = vmatprep.subr.bf16.mxu0 %v5740
    %8508 = vmatpush2.bf16.msra.mxu0 %v5739
    %8509 = vmatprep.subr.bf16.mxu0 %v5732
    %8510 = vmatpush2.bf16.msra.mxu0 %v5731
    %8511 = vmatprep.subr.bf16.mxu0 %v5724
    %8512 = vmatpush2.bf16.msra.mxu0 %v5723
    %8513 = vmatprep.subr.bf16.mxu0 %v5716
    %8514 = vmatpush2.bf16.msra.mxu0 %v5715
    %8515 = vmatprep.subr.bf16.mxu0 %v5708
    %8516 = vmatpush2.bf16.msra.mxu0 %v5707
    %8517 = vmatprep.subr.bf16.mxu0 %v5700
    %8518 = vmatpush2.bf16.msra.mxu0 %v5699
    %8519 = vmatprep.mubr.bf16.mxu0 %v1224
    %8520 = vmatmul.mubr.bf16.gmra.mxu0 %v1223
    %v8521 = vpop.f32.mrf.mxu0
    %v8522 = vadd.f32 %v8481, %v8521
    %v8523 = vpop.f32.mrf.mxu0
    %v8524 = vadd.f32 %v8483, %v8523
    %v8525 = vpop.f32.mrf.mxu0
    %v8526 = vpop.f32.mrf.mxu0
    %8527 = vdwg.mxu0
    %8528 = vmatprep.subr.bf16.mxu0 %v5820
    %8529 = vmatpush1.bf16.msra.mxu0 %v5819
    %8530 = vmatprep.subr.bf16.mxu0 %v5812
    %8531 = vmatpush1.bf16.msra.mxu0 %v5811
    %8532 = vmatprep.subr.bf16.mxu0 %v5804
    %8533 = vmatpush1.bf16.msra.mxu0 %v5803
    %8534 = vmatprep.subr.bf16.mxu0 %v5796
    %8535 = vmatpush1.bf16.msra.mxu0 %v5795
    %8536 = vmatprep.subr.bf16.mxu0 %v5788
    %8537 = vmatpush1.bf16.msra.mxu0 %v5787
    %8538 = vmatprep.subr.bf16.mxu0 %v5780
    %8539 = vmatpush1.bf16.msra.mxu0 %v5779
    %8540 = vmatprep.subr.bf16.mxu0 %v5772
    %8541 = vmatpush1.bf16.msra.mxu0 %v5771
    %8542 = vmatprep.subr.bf16.mxu0 %v5764
    %8543 = vmatpush1.bf16.msra.mxu0 %v5763
    %8544 = vmatprep.subr.bf16.mxu0 %v5884
    %8545 = vmatpush2.bf16.msra.mxu0 %v5883
    %8546 = vmatprep.subr.bf16.mxu0 %v5876
    %8547 = vmatpush2.bf16.msra.mxu0 %v5875
    %8548 = vmatprep.subr.bf16.mxu0 %v5868
    %8549 = vmatpush2.bf16.msra.mxu0 %v5867
    %8550 = vmatprep.subr.bf16.mxu0 %v5860
    %8551 = vmatpush2.bf16.msra.mxu0 %v5859
    %8552 = vmatprep.subr.bf16.mxu0 %v5852
    %8553 = vmatpush2.bf16.msra.mxu0 %v5851
    %8554 = vmatprep.subr.bf16.mxu0 %v5844
    %8555 = vmatpush2.bf16.msra.mxu0 %v5843
    %8556 = vmatprep.subr.bf16.mxu0 %v5836
    %8557 = vmatpush2.bf16.msra.mxu0 %v5835
    %8558 = vmatprep.subr.bf16.mxu0 %v5828
    %8559 = vmatpush2.bf16.msra.mxu0 %v5827
    %8560 = vmatprep.mubr.bf16.mxu0 %v1226
    %8561 = vmatmul.mubr.bf16.gmra.mxu0 %v1225
    %v8562 = vpop.f32.mrf.mxu0
    %v8563 = vadd.f32 %v8522, %v8562
    %v8564 = vpop.f32.mrf.mxu0
    %v8565 = vadd.f32 %v8524, %v8564
    %v8566 = vpop.f32.mrf.mxu0
    %v8567 = vpop.f32.mrf.mxu0
    %8568 = vdwg.mxu0
    %8569 = vmatprep.subr.bf16.mxu0 %v5948
    %8570 = vmatpush1.bf16.msra.mxu0 %v5947
    %8571 = vmatprep.subr.bf16.mxu0 %v5940
    %8572 = vmatpush1.bf16.msra.mxu0 %v5939
    %8573 = vmatprep.subr.bf16.mxu0 %v5932
    %8574 = vmatpush1.bf16.msra.mxu0 %v5931
    %8575 = vmatprep.subr.bf16.mxu0 %v5924
    %8576 = vmatpush1.bf16.msra.mxu0 %v5923
    %8577 = vmatprep.subr.bf16.mxu0 %v5916
    %8578 = vmatpush1.bf16.msra.mxu0 %v5915
    %8579 = vmatprep.subr.bf16.mxu0 %v5908
    %8580 = vmatpush1.bf16.msra.mxu0 %v5907
    %8581 = vmatprep.subr.bf16.mxu0 %v5900
    %8582 = vmatpush1.bf16.msra.mxu0 %v5899
    %8583 = vmatprep.subr.bf16.mxu0 %v5892
    %8584 = vmatpush1.bf16.msra.mxu0 %v5891
    %8585 = vmatprep.subr.bf16.mxu0 %v6012
    %8586 = vmatpush2.bf16.msra.mxu0 %v6011
    %8587 = vmatprep.subr.bf16.mxu0 %v6004
    %8588 = vmatpush2.bf16.msra.mxu0 %v6003
    %8589 = vmatprep.subr.bf16.mxu0 %v5996
    %8590 = vmatpush2.bf16.msra.mxu0 %v5995
    %8591 = vmatprep.subr.bf16.mxu0 %v5988
    %8592 = vmatpush2.bf16.msra.mxu0 %v5987
    %8593 = vmatprep.subr.bf16.mxu0 %v5980
    %8594 = vmatpush2.bf16.msra.mxu0 %v5979
    %8595 = vmatprep.subr.bf16.mxu0 %v5972
    %8596 = vmatpush2.bf16.msra.mxu0 %v5971
    %8597 = vmatprep.subr.bf16.mxu0 %v5964
    %8598 = vmatpush2.bf16.msra.mxu0 %v5963
    %8599 = vmatprep.subr.bf16.mxu0 %v5956
    %8600 = vmatpush2.bf16.msra.mxu0 %v5955
    %8601 = vmatprep.mubr.bf16.mxu0 %v1228
    %8602 = vmatmul.mubr.bf16.gmra.mxu0 %v1227
    %v8603 = vpop.f32.mrf.mxu0
    %v8604 = vadd.f32 %v8563, %v8603
    %v8605 = vpop.f32.mrf.mxu0
    %v8606 = vadd.f32 %v8565, %v8605
    %v8607 = vpop.f32.mrf.mxu0
    %v8608 = vpop.f32.mrf.mxu0
    %8609 = vdwg.mxu0
    %8610 = vmatprep.subr.bf16.mxu0 %v6076
    %8611 = vmatpush1.bf16.msra.mxu0 %v6075
    %8612 = vmatprep.subr.bf16.mxu0 %v6068
    %8613 = vmatpush1.bf16.msra.mxu0 %v6067
    %8614 = vmatprep.subr.bf16.mxu0 %v6060
    %8615 = vmatpush1.bf16.msra.mxu0 %v6059
    %8616 = vmatprep.subr.bf16.mxu0 %v6052
    %8617 = vmatpush1.bf16.msra.mxu0 %v6051
    %8618 = vmatprep.subr.bf16.mxu0 %v6044
    %8619 = vmatpush1.bf16.msra.mxu0 %v6043
    %8620 = vmatprep.subr.bf16.mxu0 %v6036
    %8621 = vmatpush1.bf16.msra.mxu0 %v6035
    %8622 = vmatprep.subr.bf16.mxu0 %v6028
    %8623 = vmatpush1.bf16.msra.mxu0 %v6027
    %8624 = vmatprep.subr.bf16.mxu0 %v6020
    %8625 = vmatpush1.bf16.msra.mxu0 %v6019
    %8626 = vmatprep.subr.bf16.mxu0 %v6140
    %8627 = vmatpush2.bf16.msra.mxu0 %v6139
    %8628 = vmatprep.subr.bf16.mxu0 %v6132
    %8629 = vmatpush2.bf16.msra.mxu0 %v6131
    %8630 = vmatprep.subr.bf16.mxu0 %v6124
    %8631 = vmatpush2.bf16.msra.mxu0 %v6123
    %8632 = vmatprep.subr.bf16.mxu0 %v6116
    %8633 = vmatpush2.bf16.msra.mxu0 %v6115
    %8634 = vmatprep.subr.bf16.mxu0 %v6108
    %8635 = vmatpush2.bf16.msra.mxu0 %v6107
    %8636 = vmatprep.subr.bf16.mxu0 %v6100
    %8637 = vmatpush2.bf16.msra.mxu0 %v6099
    %8638 = vmatprep.subr.bf16.mxu0 %v6092
    %8639 = vmatpush2.bf16.msra.mxu0 %v6091
    %8640 = vmatprep.subr.bf16.mxu0 %v6084
    %8641 = vmatpush2.bf16.msra.mxu0 %v6083
    %8642 = vmatprep.mubr.bf16.mxu0 %v1230
    %8643 = vmatmul.mubr.bf16.gmra.mxu0 %v1229
    %v8644 = vpop.f32.mrf.mxu0
    %v8645 = vadd.f32 %v8604, %v8644
    %v8646 = vpop.f32.mrf.mxu0
    %v8647 = vadd.f32 %v8606, %v8646
    %v8648 = vpop.f32.mrf.mxu0
    %v8649 = vpop.f32.mrf.mxu0
    %8650 = vdwg.mxu0
    %8651 = vmatprep.subr.bf16.mxu0 %v6204
    %8652 = vmatpush1.bf16.msra.mxu0 %v6203
    %8653 = vmatprep.subr.bf16.mxu0 %v6196
    %8654 = vmatpush1.bf16.msra.mxu0 %v6195
    %8655 = vmatprep.subr.bf16.mxu0 %v6188
    %8656 = vmatpush1.bf16.msra.mxu0 %v6187
    %8657 = vmatprep.subr.bf16.mxu0 %v6180
    %8658 = vmatpush1.bf16.msra.mxu0 %v6179
    %8659 = vmatprep.subr.bf16.mxu0 %v6172
    %8660 = vmatpush1.bf16.msra.mxu0 %v6171
    %8661 = vmatprep.subr.bf16.mxu0 %v6164
    %8662 = vmatpush1.bf16.msra.mxu0 %v6163
    %8663 = vmatprep.subr.bf16.mxu0 %v6156
    %8664 = vmatpush1.bf16.msra.mxu0 %v6155
    %8665 = vmatprep.subr.bf16.mxu0 %v6148
    %8666 = vmatpush1.bf16.msra.mxu0 %v6147
    %8667 = vmatprep.subr.bf16.mxu0 %v6268
    %8668 = vmatpush2.bf16.msra.mxu0 %v6267
    %8669 = vmatprep.subr.bf16.mxu0 %v6260
    %8670 = vmatpush2.bf16.msra.mxu0 %v6259
    %8671 = vmatprep.subr.bf16.mxu0 %v6252
    %8672 = vmatpush2.bf16.msra.mxu0 %v6251
    %8673 = vmatprep.subr.bf16.mxu0 %v6244
    %8674 = vmatpush2.bf16.msra.mxu0 %v6243
    %8675 = vmatprep.subr.bf16.mxu0 %v6236
    %8676 = vmatpush2.bf16.msra.mxu0 %v6235
    %8677 = vmatprep.subr.bf16.mxu0 %v6228
    %8678 = vmatpush2.bf16.msra.mxu0 %v6227
    %8679 = vmatprep.subr.bf16.mxu0 %v6220
    %8680 = vmatpush2.bf16.msra.mxu0 %v6219
    %8681 = vmatprep.subr.bf16.mxu0 %v6212
    %8682 = vmatpush2.bf16.msra.mxu0 %v6211
    %8683 = vmatprep.mubr.bf16.mxu0 %v1232
    %8684 = vmatmul.mubr.bf16.gmra.mxu0 %v1231
    %v8685 = vpop.f32.mrf.mxu0
    %v8686 = vadd.f32 %v8645, %v8685
    %v8687 = vpop.f32.mrf.mxu0
    %v8688 = vadd.f32 %v8647, %v8687
    %v8689 = vpop.f32.mrf.mxu0
    %v8690 = vpop.f32.mrf.mxu0
    %8691 = vdwg.mxu0
    %8692 = vmatprep.subr.bf16.mxu0 %v6332
    %8693 = vmatpush1.bf16.msra.mxu0 %v6331
    %8694 = vmatprep.subr.bf16.mxu0 %v6324
    %8695 = vmatpush1.bf16.msra.mxu0 %v6323
    %8696 = vmatprep.subr.bf16.mxu0 %v6316
    %8697 = vmatpush1.bf16.msra.mxu0 %v6315
    %8698 = vmatprep.subr.bf16.mxu0 %v6308
    %8699 = vmatpush1.bf16.msra.mxu0 %v6307
    %8700 = vmatprep.subr.bf16.mxu0 %v6300
    %8701 = vmatpush1.bf16.msra.mxu0 %v6299
    %8702 = vmatprep.subr.bf16.mxu0 %v6292
    %8703 = vmatpush1.bf16.msra.mxu0 %v6291
    %8704 = vmatprep.subr.bf16.mxu0 %v6284
    %8705 = vmatpush1.bf16.msra.mxu0 %v6283
    %8706 = vmatprep.subr.bf16.mxu0 %v6276
    %8707 = vmatpush1.bf16.msra.mxu0 %v6275
    %8708 = vmatprep.subr.bf16.mxu0 %v6396
    %8709 = vmatpush2.bf16.msra.mxu0 %v6395
    %8710 = vmatprep.subr.bf16.mxu0 %v6388
    %8711 = vmatpush2.bf16.msra.mxu0 %v6387
    %8712 = vmatprep.subr.bf16.mxu0 %v6380
    %8713 = vmatpush2.bf16.msra.mxu0 %v6379
    %8714 = vmatprep.subr.bf16.mxu0 %v6372
    %8715 = vmatpush2.bf16.msra.mxu0 %v6371
    %8716 = vmatprep.subr.bf16.mxu0 %v6364
    %8717 = vmatpush2.bf16.msra.mxu0 %v6363
    %8718 = vmatprep.subr.bf16.mxu0 %v6356
    %8719 = vmatpush2.bf16.msra.mxu0 %v6355
    %8720 = vmatprep.subr.bf16.mxu0 %v6348
    %8721 = vmatpush2.bf16.msra.mxu0 %v6347
    %8722 = vmatprep.subr.bf16.mxu0 %v6340
    %8723 = vmatpush2.bf16.msra.mxu0 %v6339
    %8724 = vmatprep.mubr.bf16.mxu0 %v1234
    %8725 = vmatmul.mubr.bf16.gmra.mxu0 %v1233
    %v8726 = vpop.f32.mrf.mxu0
    %v8727 = vadd.f32 %v8686, %v8726
    %v8728 = vpop.f32.mrf.mxu0
    %v8729 = vadd.f32 %v8688, %v8728
    %v8730 = vpop.f32.mrf.mxu0
    %v8731 = vpop.f32.mrf.mxu0
    %8732 = vdwg.mxu0
    %v8741 = vcombine.low %v7743, %v7745
    %v8742 = vcombine.low %v8071, %v8073
    %v8744 = vunpack.c.l.s4 1983009808
    %v8745 = vunpack.c.0.s8 %v8744
    %v8746 = vlaneseq
    %v8747 = vshrl.u32 %v8746, 7
    %v8748 = vsub.s32 %v8745, %v8747
    %v8749 = vrot.slane %v8741, %v8748
    %v8751 = vunpack.c.l.s4 1983009808
    %v8752 = vunpack.c.0.s8 %v8751
    %v8753 = vlaneseq
    %v8754 = vshrl.u32 %v8753, 7
    %v8755 = vsub.s32 %v8752, %v8754
    %v8756 = vrot.slane %v8742, %v8755
    %v8757 = vcombine.low %v8749, %v8756
    %v8758 = vcombine.low %v8399, %v8401
    %v8759 = vcombine.low %v8727, %v8729
    %v8761 = vunpack.c.l.s4 1983009808
    %v8762 = vunpack.c.0.s8 %v8761
    %v8763 = vlaneseq
    %v8764 = vshrl.u32 %v8763, 7
    %v8765 = vsub.s32 %v8762, %v8764
    %v8766 = vrot.slane %v8758, %v8765
    %v8768 = vunpack.c.l.s4 1983009808
    %v8769 = vunpack.c.0.s8 %v8768
    %v8770 = vlaneseq
    %v8771 = vshrl.u32 %v8770, 7
    %v8772 = vsub.s32 %v8769, %v8771
    %v8773 = vrot.slane %v8759, %v8772
    %v8774 = vcombine.low %v8766, %v8773
    %8777 = vst [vmem:[#allocation2] sm:$0xff] %v8757
    %8778 = vst [vmem:[#allocation2 + $0x8] sm:$0xff] %v8774
    // Predicated region
    $region22: #{haf_forward.7} parent=1 // pred_check
      _
    $region23: #{haf_forward.7} parent=1 // pred_check_branch
      %8780 = sbr.rel (0) target = $region25
    $region24: #{haf_forward.7} parent=1 // pred_region
      %s8782 = ssub.s32 256, 256
      %8783 = vsyncadd [#allocation3], %s8782
      %s8785 = sshll.u32 [#allocation2], 4
      %s8786 = int_to_ptr.vmem [resolvable:$true] %s8785
      %8788 = dma.vmem_to_hbm [thread:$0]  %s8786, 256, %s5, [#allocation3]
    $region25: #{haf_forward.7} parent=1 // pred_fallthru
      _
    // Predicated region
    $region26: #{haf_forward.7} parent=1 // pred_check
      _
    $region27: #{haf_forward.7} parent=1 // pred_check_branch
      %8790 = sbr.rel (0) target = $region29
    $region28: #{haf_forward.7} parent=1 // pred_region
      %8791 = dma.done [#allocation3], 256
    $region29: #{haf_forward.7} parent=1 // pred_fallthru
      _
    %8792 = vsyncpa [#allocation3], 1

</llo_original>
